<compile_context>
chip_gen: v6e
topology: v6e:2x2x1
jax: 0.10.0
libtpu: 0.0.40
codegen_flags: <defaults>
</compile_context>

<pallas_src>
import jax
import jax.numpy as jnp
import numpy as np
from jax.experimental import pallas as pl
from jax.experimental.pallas import tpu as pltpu


# ----------------------------------------------------------------------------
# Pallas kernels
# ----------------------------------------------------------------------------
def _matmul_bias_relu_kernel(x_ref, w_ref, b_ref, o_ref):
    """out = relu(x @ w + b); one row-tile per grid step."""
    o_ref[...] = jnp.maximum(
        jnp.dot(x_ref[...], w_ref[...], preferred_element_type=jnp.float32)
        + b_ref[...], 0.0).astype(o_ref.dtype)


def _conv3x3x3_bias_relu_kernel(x0_ref, x1_ref, x2_ref, w_ref, b_ref, o_ref):
    """3x3x3 SAME conv (stride 1) + bias + ReLU for one (n, t) output frame.

    x{0,1,2}_ref: the three T-shifted padded frames, each (H+2, W+2, Cin).
    w_ref: (27, Cin, Cout) taps.  o_ref: (H*W, Cout)."""
    hw, cout = o_ref.shape
    hp, wp, cin = x0_ref.shape
    hh, ww = hp - 2, wp - 2
    frames = (x0_ref, x1_ref, x2_ref)
    acc = jnp.zeros((hw, cout), jnp.float32)
    for dt in range(3):
        for dh in range(3):
            for dw in range(3):
                xs = frames[dt][dh:dh + hh, dw:dw + ww, :].reshape(hw, cin)
                acc = acc + jnp.dot(xs, w_ref[dt * 9 + dh * 3 + dw],
                                    preferred_element_type=jnp.float32)
    o_ref[...] = jnp.maximum(acc + b_ref[...], 0.0).astype(o_ref.dtype)


def _maxpool3x3x3_conv1x1_relu_kernel(x0_ref, x1_ref, x2_ref, w_ref, b_ref,
                                      o_ref):
    """MaxPool3d 3x3x3 (stride 1, zero pad) + 1x1x1 conv + bias + ReLU for one
    (n, t) output frame.  All 27 taps reduced in this single grid step."""
    hw, cout = o_ref.shape
    hp, wp, cin = x0_ref.shape
    hh, ww = hp - 2, wp - 2
    frames = (x0_ref, x1_ref, x2_ref)
    mx = None
    for dt in range(3):
        for dh in range(3):
            for dw in range(3):
                s = frames[dt][dh:dh + hh, dw:dw + ww, :]
                mx = s if mx is None else jnp.maximum(mx, s)
    mx2 = mx.reshape(hw, cin)
    o_ref[...] = jnp.maximum(
        jnp.dot(mx2, w_ref[...], preferred_element_type=jnp.float32)
        + b_ref[...], 0.0).astype(o_ref.dtype)


# ----------------------------------------------------------------------------
# pallas_call wrappers
# ----------------------------------------------------------------------------
def _round_up(v, m):
    return (v + m - 1) // m * m


def _pick_tile(m, tm_max=512):
    """Large row tiles (HBM roofline), but keep >=2 blocks when possible so a
    'parallel' grid axis can be sharded across v7x's two TensorCores."""
    half = _round_up((m + 1) // 2, 8)
    return max(8, min(tm_max, half))


def _conv1x1_fused_relu(x, w, b):
    """Pointwise Unit3D (possibly with fused/concatenated weights):
    x:(N,T,H,W,Cin), w:(Cin,Cout), b:(Cout,) -> (N,T,H,W,Cout)."""
    n, t, h, wd, cin = x.shape
    cout = w.shape[-1]
    m = n * t * h * wd
    tm = _pick_tile(m)
    mp = _round_up(m, tm)
    x2 = x.reshape(m, cin)
    if mp != m:
        x2 = jnp.pad(x2, ((0, mp - m), (0, 0)))
    out = pl.pallas_call(
        _matmul_bias_relu_kernel,
        out_shape=jax.ShapeDtypeStruct((mp, cout), x.dtype),
        grid_spec=pltpu.PrefetchScalarGridSpec(
            num_scalar_prefetch=0,
            grid=(mp // tm,),
            in_specs=[
                pl.BlockSpec((tm, cin), lambda i: (i, 0)),
                pl.BlockSpec((cin, cout), lambda i: (0, 0)),
                pl.BlockSpec((1, cout), lambda i: (0, 0)),
            ],
            out_specs=pl.BlockSpec((tm, cout), lambda i: (i, 0)),
        ),
        compiler_params=pltpu.CompilerParams(
            dimension_semantics=("parallel",)),
    )(x2, w, b.reshape(1, cout))
    return out[:m].reshape(n, t, h, wd, cout)


def _shifted_frame_spec(dt, h, wd, cin):
    # Padded input (N, T+2, H+2, W+2, C): pick frame t+dt via the index_map
    # (block size 1 along T => block index == element index).  Passing the
    # padded array three times gives the three T-shifts without any im2col.
    return pl.BlockSpec((None, None, h + 2, wd + 2, cin),
                        lambda ni, ti: (ni, ti + dt, 0, 0, 0))


def _conv3x3x3_relu(x, w, b):
    """Unit3D: 3x3x3 SAME conv (stride 1) + bias + ReLU.
    x:(N,T,H,W,Cin), w:(3,3,3,Cin,Cout), b:(Cout,)."""
    n, t, h, wd, cin = x.shape
    cout = w.shape[-1]
    xp = jnp.pad(x, ((0, 0), (1, 1), (1, 1), (1, 1), (0, 0)))
    ws = w.reshape(27, cin, cout)
    out = pl.pallas_call(
        _conv3x3x3_bias_relu_kernel,
        out_shape=jax.ShapeDtypeStruct((n, t, h * wd, cout), x.dtype),
        grid_spec=pltpu.PrefetchScalarGridSpec(
            num_scalar_prefetch=0,
            grid=(n, t),
            in_specs=[
                _shifted_frame_spec(0, h, wd, cin),
                _shifted_frame_spec(1, h, wd, cin),
                _shifted_frame_spec(2, h, wd, cin),
                pl.BlockSpec((27, cin, cout), lambda ni, ti: (0, 0, 0)),
                pl.BlockSpec((1, cout), lambda ni, ti: (0, 0)),
            ],
            out_specs=pl.BlockSpec((None, None, h * wd, cout),
                                   lambda ni, ti: (ni, ti, 0, 0)),
        ),
        compiler_params=pltpu.CompilerParams(
            dimension_semantics=("parallel", "parallel")),
    )(xp, xp, xp, ws, b.reshape(1, cout))
    return out.reshape(n, t, h, wd, cout)


def _maxpool3_conv1x1_relu(x, w, b):
    """MaxPool3dSamePadding(3,3,3, stride 1, zero pad) fused with 1x1x1 conv +
    bias + ReLU.  x:(N,T,H,W,Cin), w:(Cin,Cout), b:(Cout,)."""
    n, t, h, wd, cin = x.shape
    cout = w.shape[-1]
    xp = jnp.pad(x, ((0, 0), (1, 1), (1, 1), (1, 1), (0, 0)))
    out = pl.pallas_call(
        _maxpool3x3x3_conv1x1_relu_kernel,
        out_shape=jax.ShapeDtypeStruct((n, t, h * wd, cout), x.dtype),
        grid_spec=pltpu.PrefetchScalarGridSpec(
            num_scalar_prefetch=0,
            grid=(n, t),
            in_specs=[
                _shifted_frame_spec(0, h, wd, cin),
                _shifted_frame_spec(1, h, wd, cin),
                _shifted_frame_spec(2, h, wd, cin),
                pl.BlockSpec((cin, cout), lambda ni, ti: (0, 0)),
                pl.BlockSpec((1, cout), lambda ni, ti: (0, 0)),
            ],
            out_specs=pl.BlockSpec((None, None, h * wd, cout),
                                   lambda ni, ti: (ni, ti, 0, 0)),
        ),
        compiler_params=pltpu.CompilerParams(
            dimension_semantics=("parallel", "parallel")),
    )(xp, xp, xp, w, b.reshape(1, cout))
    return out.reshape(n, t, h, wd, cout)


# ----------------------------------------------------------------------------
# InceptionModule forward (Pallas) and parameter init
# ----------------------------------------------------------------------------
def init_params(key, in_channels, out_channels):
    """Matches Unit3D init inside InceptionModule: weights ~ N(0, 0.01),
    biases = 0 (use_bias=True, use_batch_norm=False)."""
    ks = jax.random.split(key, 6)

    def w(k, shape):
        return (0.01 * jax.random.normal(k, shape)).astype(jnp.float32)

    oc = out_channels
    return {
        "b0_w":  w(ks[0], (1, 1, 1, in_channels, oc[0])),
        "b0_b":  jnp.zeros((oc[0],), jnp.float32),
        "b1a_w": w(ks[1], (1, 1, 1, in_channels, oc[1])),
        "b1a_b": jnp.zeros((oc[1],), jnp.float32),
        "b1b_w": w(ks[2], (3, 3, 3, oc[1], oc[2])),
        "b1b_b": jnp.zeros((oc[2],), jnp.float32),
        "b2a_w": w(ks[3], (1, 1, 1, in_channels, oc[3])),
        "b2a_b": jnp.zeros((oc[3],), jnp.float32),
        "b2b_w": w(ks[4], (3, 3, 3, oc[3], oc[4])),
        "b2b_b": jnp.zeros((oc[4],), jnp.float32),
        "b3b_w": w(ks[5], (in_channels, oc[5])),
        "b3b_b": jnp.zeros((oc[5],), jnp.float32),
    }


def _inception_ndhwc(x, p):
    cin = x.shape[-1]
    oc0 = p["b0_w"].shape[-1]
    oc1 = p["b1a_w"].shape[-1]
    oc3 = p["b2a_w"].shape[-1]
    # Fuse the three 1x1x1 convs that read x into one matmul (x read once).
    w_pw = jnp.concatenate([p["b0_w"].reshape(cin, oc0),
                            p["b1a_w"].reshape(cin, oc1),
                            p["b2a_w"].reshape(cin, oc3)], axis=1)
    b_pw = jnp.concatenate([p["b0_b"], p["b1a_b"], p["b2a_b"]])
    pw = _conv1x1_fused_relu(x, w_pw, b_pw)
    b0 = pw[..., :oc0]
    b1a = pw[..., oc0:oc0 + oc1]
    b2a = pw[..., oc0 + oc1:]
    b1 = _conv3x3x3_relu(b1a, p["b1b_w"], p["b1b_b"])
    b2 = _conv3x3x3_relu(b2a, p["b2b_w"], p["b2b_b"])
    b3 = _maxpool3_conv1x1_relu(x, p["b3b_w"], p["b3b_b"])
    return jnp.concatenate([b0, b1, b2, b3], axis=-1)


@jax.jit
def inception_module(x_ncdhw, p):
    # NCDHW (PyTorch) -> NDHWC at the module boundary; when chaining several
    # inception modules, keep NDHWC end-to-end and transpose only once.
    x = jnp.transpose(x_ncdhw, (0, 2, 3, 4, 1))
    out = _inception_ndhwc(x, p)
    return jnp.transpose(out, (0, 4, 1, 2, 3))   # back to NCDHW (torch.cat dim=1)


# ----------------------------------------------------------------------------
# Pure-JAX reference (independent of the Pallas path) for verification
# ----------------------------------------------------------------------------
def _unit3d_ref(x, w, b):
    y = jax.lax.conv_general_dilated(
        x, w, window_strides=(1, 1, 1), padding="SAME",
        dimension_numbers=("NDHWC", "DHWIO", "NDHWC"))
    return jnp.maximum(y + b, 0.0)


def inception_ref(x_ncdhw, p):
    x = jnp.transpose(x_ncdhw, (0, 2, 3, 4, 1))
    b0 = _unit3d_ref(x, p["b0_w"], p["b0_b"])
    b1 = _unit3d_ref(_unit3d_ref(x, p["b1a_w"], p["b1a_b"]), p["b1b_w"], p["b1b_b"])
    b2 = _unit3d_ref(_unit3d_ref(x, p["b2a_w"], p["b2a_b"]), p["b2b_w"], p["b2b_b"])
    # PyTorch MaxPool3dSamePadding: F.pad with zeros, then max pool (VALID).
    xp = jnp.pad(x, ((0, 0), (1, 1), (1, 1), (1, 1), (0, 0)))
    pooled = jax.lax.reduce_window(xp, -jnp.inf, jax.lax.max,
                                   (1, 3, 3, 3, 1), (1, 1, 1, 1, 1), "VALID")
    cin, cout = p["b3b_w"].shape
    b3 = _unit3d_ref(pooled, p["b3b_w"].reshape(1, 1, 1, cin, cout), p["b3b_b"])
    return jnp.transpose(jnp.concatenate([b0, b1, b2, b3], -1), (0, 4, 1, 2, 3))


# ----------------------------------------------------------------------------
if __name__ == "__main__":
    key = jax.random.PRNGKey(0)
    kx, kp = jax.random.split(key)

    # Small shapes: batch=2, in_channels=4, T=4, H=W=8 (NCDHW like PyTorch).
    N, Cin, T, H, W = 2, 4, 4, 8, 8
    out_channels = [8, 4, 8, 4, 8, 8]   # [b0, b1a, b1b, b2a, b2b, b3b]

    x = jax.random.normal(kx, (N, Cin, T, H, W), jnp.float32)
    params = init_params(kp, Cin, out_channels)

    y = inception_module(x, params)
    jax.block_until_ready(y)

    total_c = out_channels[0] + out_channels[2] + out_channels[4] + out_channels[5]
    assert y.shape == (N, total_c, T, H, W), y.shape

    y_ref = inception_ref(x, params)
    np.testing.assert_allclose(np.asarray(y), np.asarray(y_ref),
                               rtol=1e-4, atol=1e-4)

    print("KERNEL_OK")
</pallas_src>

<mosaic_0001>
module attributes {stable_mosaic.version = 11 : i64} {
  func.func @_matmul_bias_relu_kernel(%arg0: i32, %arg1: memref<256x4xf32, #tpu.memory_space<vmem>>, %arg2: memref<4x16xf32, #tpu.memory_space<vmem>>, %arg3: memref<1x16xf32, #tpu.memory_space<vmem>>, %arg4: memref<256x16xf32, #tpu.memory_space<vmem>>) attributes {dimension_semantics = [#tpu.dimension_semantics<parallel>], iteration_bounds = array<i64: 2>, scalar_prefetch = 0 : i64, scratch_operands = 0 : i64, tpu.core_type = #tpu.core_type<tc>, window_params = [{transform_indices = @transform_0, window_bounds = array<i64: 256, 4>}, {pipeline_mode = #tpu.pipeline_mode<synchronous>, transform_indices = @transform_1, window_bounds = array<i64: 4, 16>}, {pipeline_mode = #tpu.pipeline_mode<synchronous>, transform_indices = @transform_2, window_bounds = array<i64: 1, 16>}, {transform_indices = @transform_3, window_bounds = array<i64: 256, 16>}]} {
    %c0 = arith.constant 0 : index
    %c0_0 = arith.constant 0 : index
    %0 = vector.load %arg1[%c0, %c0_0] : memref<256x4xf32, #tpu.memory_space<vmem>>, vector<256x4xf32>
    %c0_1 = arith.constant 0 : index
    %c0_2 = arith.constant 0 : index
    %1 = vector.load %arg2[%c0_1, %c0_2] : memref<4x16xf32, #tpu.memory_space<vmem>>, vector<4x16xf32>
    %cst = arith.constant dense<0.000000e+00> : vector<256x16xf32>
    %2 = tpu.matmul %0, %1, %cst {dimension_numbers = #tpu.dot_dimension_numbers<[1], [0], [0], [1], [0, 0, 1, 1], [], []>} : vector<256x4xf32>, vector<4x16xf32>, vector<256x16xf32> -> vector<256x16xf32>
    %c0_3 = arith.constant 0 : index
    %c0_4 = arith.constant 0 : index
    %3 = vector.load %arg3[%c0_3, %c0_4] : memref<1x16xf32, #tpu.memory_space<vmem>>, vector<1x16xf32>
    %4 = vector.broadcast %3 : vector<1x16xf32> to vector<256x16xf32>
    %5 = arith.addf %2, %4 : vector<256x16xf32>
    %cst_5 = arith.constant 0.000000e+00 : f32
    %6 = vector.broadcast %cst_5 : f32 to vector<256x16xf32>
    %7 = arith.maximumf %5, %6 : vector<256x16xf32>
    %c0_6 = arith.constant 0 : index
    %c0_7 = arith.constant 0 : index
    %8 = vector.load %arg4[%c0_6, %c0_7] : memref<256x16xf32, #tpu.memory_space<vmem>>, vector<256x16xf32>
    tpu.vector_store %arg4[%c0_6, %c0_7], %7 {strides = array<i32>} : memref<256x16xf32, #tpu.memory_space<vmem>>, vector<256x16xf32>,
    return
  }
  func.func @transform_0(%arg0: i32) -> (i32, i32) {
    %c0_i32 = arith.constant 0 : i32
    %c0_i32_0 = arith.constant 0 : i32
    return %arg0, %c0_i32 : i32, i32
  }
  func.func @transform_1(%arg0: i32) -> (i32, i32) {
    %c0_i32 = arith.constant 0 : i32
    %c0_i32_0 = arith.constant 0 : i32
    %c0_i32_1 = arith.constant 0 : i32
    return %c0_i32, %c0_i32_0 : i32, i32
  }
  func.func @transform_2(%arg0: i32) -> (i32, i32) {
    %c0_i32 = arith.constant 0 : i32
    %c0_i32_0 = arith.constant 0 : i32
    %c0_i32_1 = arith.constant 0 : i32
    return %c0_i32, %c0_i32_0 : i32, i32
  }
  func.func @transform_3(%arg0: i32) -> (i32, i32) {
    %c0_i32 = arith.constant 0 : i32
    %c0_i32_0 = arith.constant 0 : i32
    return %arg0, %c0_i32 : i32, i32
  }
}

module attributes {stable_mosaic.version = 11 : i64} {
  func.func @_conv3x3x3_bias_relu_kernel(%arg0: i32, %arg1: i32, %arg2: memref<1x1x10x10x4xf32, #tpu.memory_space<vmem>>, %arg3: memref<1x1x10x10x4xf32, #tpu.memory_space<vmem>>, %arg4: memref<1x1x10x10x4xf32, #tpu.memory_space<vmem>>, %arg5: memref<27x4x8xf32, #tpu.memory_space<vmem>>, %arg6: memref<1x8xf32, #tpu.memory_space<vmem>>, %arg7: memref<1x1x64x8xf32, #tpu.memory_space<vmem>>) attributes {dimension_semantics = [#tpu.dimension_semantics<parallel>, #tpu.dimension_semantics<parallel>], iteration_bounds = array<i64: 2, 4>, scalar_prefetch = 0 : i64, scratch_operands = 0 : i64, tpu.core_type = #tpu.core_type<tc>, window_params = [{transform_indices = @transform_0, window_bounds = array<i64: 1, 1, 10, 10, 4>}, {transform_indices = @transform_1, window_bounds = array<i64: 1, 1, 10, 10, 4>}, {transform_indices = @transform_2, window_bounds = array<i64: 1, 1, 10, 10, 4>}, {pipeline_mode = #tpu.pipeline_mode<synchronous>, transform_indices = @transform_3, window_bounds = array<i64: 27, 4, 8>}, {pipeline_mode = #tpu.pipeline_mode<synchronous>, transform_indices = @transform_4, window_bounds = array<i64: 1, 8>}, {transform_indices = @transform_5, window_bounds = array<i64: 1, 1, 64, 8>}]} {
    %cst = arith.constant 0.000000e+00 : f32
    %0 = vector.broadcast %cst : f32 to vector<64x8xf32>
    %c0 = arith.constant 0 : index
    %c0_0 = arith.constant 0 : index
    %c0_1 = arith.constant 0 : index
    %c0_2 = arith.constant 0 : index
    %c0_3 = arith.constant 0 : index
    %1 = vector.load %arg2[%c0, %c0_0, %c0_1, %c0_2, %c0_3] : memref<1x1x10x10x4xf32, #tpu.memory_space<vmem>>, vector<1x1x8x8x4xf32>
    %2 = vector.shape_cast %1 : vector<1x1x8x8x4xf32> to vector<8x8x4xf32>
    %3 = vector.shape_cast %2 : vector<8x8x4xf32> to vector<64x4xf32>
    %c0_4 = arith.constant 0 : index
    %c0_5 = arith.constant 0 : index
    %c0_6 = arith.constant 0 : index
    %4 = vector.load %arg5[%c0_4, %c0_5, %c0_6] : memref<27x4x8xf32, #tpu.memory_space<vmem>>, vector<1x4x8xf32>
    %5 = vector.shape_cast %4 : vector<1x4x8xf32> to vector<4x8xf32>
    %cst_7 = arith.constant dense<0.000000e+00> : vector<64x8xf32>
    %6 = tpu.matmul %3, %5, %cst_7 {dimension_numbers = #tpu.dot_dimension_numbers<[1], [0], [0], [1], [0, 0, 1, 1], [], []>} : vector<64x4xf32>, vector<4x8xf32>, vector<64x8xf32> -> vector<64x8xf32>
    %7 = arith.addf %0, %6 : vector<64x8xf32>
    %c0_8 = arith.constant 0 : index
    %c0_9 = arith.constant 0 : index
    %c0_10 = arith.constant 0 : index
    %c1 = arith.constant 1 : index
    %c0_11 = arith.constant 0 : index
    %8 = vector.load %arg2[%c0_8, %c0_9, %c0_10, %c1, %c0_11] : memref<1x1x10x10x4xf32, #tpu.memory_space<vmem>>, vector<1x1x8x8x4xf32>
    %9 = vector.shape_cast %8 : vector<1x1x8x8x4xf32> to vector<8x8x4xf32>
    %10 = vector.shape_cast %9 : vector<8x8x4xf32> to vector<64x4xf32>
    %c1_12 = arith.constant 1 : index
    %c0_13 = arith.constant 0 : index
    %c0_14 = arith.constant 0 : index
    %11 = vector.load %arg5[%c1_12, %c0_13, %c0_14] : memref<27x4x8xf32, #tpu.memory_space<vmem>>, vector<1x4x8xf32>
    %12 = vector.shape_cast %11 : vector<1x4x8xf32> to vector<4x8xf32>
    %cst_15 = arith.constant dense<0.000000e+00> : vector<64x8xf32>
    %13 = tpu.matmul %10, %12, %cst_15 {dimension_numbers = #tpu.dot_dimension_numbers<[1], [0], [0], [1], [0, 0, 1, 1], [], []>} : vector<64x4xf32>, vector<4x8xf32>, vector<64x8xf32> -> vector<64x8xf32>
    %14 = arith.addf %7, %13 : vector<64x8xf32>
    %c0_16 = arith.constant 0 : index
    %c0_17 = arith.constant 0 : index
    %c0_18 = arith.constant 0 : index
    %c2 = arith.constant 2 : index
    %c0_19 = arith.constant 0 : index
    %15 = vector.load %arg2[%c0_16, %c0_17, %c0_18, %c2, %c0_19] : memref<1x1x10x10x4xf32, #tpu.memory_space<vmem>>, vector<1x1x8x8x4xf32>
    %16 = vector.shape_cast %15 : vector<1x1x8x8x4xf32> to vector<8x8x4xf32>
    %17 = vector.shape_cast %16 : vector<8x8x4xf32> to vector<64x4xf32>
    %c2_20 = arith.constant 2 : index
    %c0_21 = arith.constant 0 : index
    %c0_22 = arith.constant 0 : index
    %18 = vector.load %arg5[%c2_20, %c0_21, %c0_22] : memref<27x4x8xf32, #tpu.memory_space<vmem>>, vector<1x4x8xf32>
    %19 = vector.shape_cast %18 : vector<1x4x8xf32> to vector<4x8xf32>
    %cst_23 = arith.constant dense<0.000000e+00> : vector<64x8xf32>
    %20 = tpu.matmul %17, %19, %cst_23 {dimension_numbers = #tpu.dot_dimension_numbers<[1], [0], [0], [1], [0, 0, 1, 1], [], []>} : vector<64x4xf32>, vector<4x8xf32>, vector<64x8xf32> -> vector<64x8xf32>
    %21 = arith.addf %14, %20 : vector<64x8xf32>
    %c0_24 = arith.constant 0 : index
    %c0_25 = arith.constant 0 : index
    %c1_26 = arith.constant 1 : index
    %c0_27 = arith.constant 0 : index
    %c0_28 = arith.constant 0 : index
    %22 = vector.load %arg2[%c0_24, %c0_25, %c1_26, %c0_27, %c0_28] : memref<1x1x10x10x4xf32, #tpu.memory_space<vmem>>, vector<1x1x8x8x4xf32>
    %23 = vector.shape_cast %22 : vector<1x1x8x8x4xf32> to vector<8x8x4xf32>
    %24 = vector.shape_cast %23 : vector<8x8x4xf32> to vector<64x4xf32>
    %c3 = arith.constant 3 : index
    %c0_29 = arith.constant 0 : index
    %c0_30 = arith.constant 0 : index
    %25 = vector.load %arg5[%c3, %c0_29, %c0_30] : memref<27x4x8xf32, #tpu.memory_space<vmem>>, vector<1x4x8xf32>
    %26 = vector.shape_cast %25 : vector<1x4x8xf32> to vector<4x8xf32>
    %cst_31 = arith.constant dense<0.000000e+00> : vector<64x8xf32>
    %27 = tpu.matmul %24, %26, %cst_31 {dimension_numbers = #tpu.dot_dimension_numbers<[1], [0], [0], [1], [0, 0, 1, 1], [], []>} : vector<64x4xf32>, vector<4x8xf32>, vector<64x8xf32> -> vector<64x8xf32>
    %28 = arith.addf %21, %27 : vector<64x8xf32>
    %c0_32 = arith.constant 0 : index
    %c0_33 = arith.constant 0 : index
    %c1_34 = arith.constant 1 : index
    %c1_35 = arith.constant 1 : index
    %c0_36 = arith.constant 0 : index
    %29 = vector.load %arg2[%c0_32, %c0_33, %c1_34, %c1_35, %c0_36] : memref<1x1x10x10x4xf32, #tpu.memory_space<vmem>>, vector<1x1x8x8x4xf32>
    %30 = vector.shape_cast %29 : vector<1x1x8x8x4xf32> to vector<8x8x4xf32>
    %31 = vector.shape_cast %30 : vector<8x8x4xf32> to vector<64x4xf32>
    %c4 = arith.constant 4 : index
    %c0_37 = arith.constant 0 : index
    %c0_38 = arith.constant 0 : index
    %32 = vector.load %arg5[%c4, %c0_37, %c0_38] : memref<27x4x8xf32, #tpu.memory_space<vmem>>, vector<1x4x8xf32>
    %33 = vector.shape_cast %32 : vector<1x4x8xf32> to vector<4x8xf32>
    %cst_39 = arith.constant dense<0.000000e+00> : vector<64x8xf32>
    %34 = tpu.matmul %31, %33, %cst_39 {dimension_numbers = #tpu.dot_dimension_numbers<[1], [0], [0], [1], [0, 0, 1, 1], [], []>} : vector<64x4xf32>, vector<4x8xf32>, vector<64x8xf32> -> vector<64x8xf32>
    %35 = arith.addf %28, %34 : vector<64x8xf32>
    %c0_40 = arith.constant 0 : index
    %c0_41 = arith.constant 0 : index
    %c1_42 = arith.constant 1 : index
    %c2_43 = arith.constant 2 : index
    %c0_44 = arith.constant 0 : index
    %36 = vector.load %arg2[%c0_40, %c0_41, %c1_42, %c2_43, %c0_44] : memref<1x1x10x10x4xf32, #tpu.memory_space<vmem>>, vector<1x1x8x8x4xf32>
    %37 = vector.shape_cast %36 : vector<1x1x8x8x4xf32> to vector<8x8x4xf32>
    %38 = vector.shape_cast %37 : vector<8x8x4xf32> to vector<64x4xf32>
    %c5 = arith.constant 5 : index
    %c0_45 = arith.constant 0 : index
    %c0_46 = arith.constant 0 : index
    %39 = vector.load %arg5[%c5, %c0_45, %c0_46] : memref<27x4x8xf32, #tpu.memory_space<vmem>>, vector<1x4x8xf32>
    %40 = vector.shape_cast %39 : vector<1x4x8xf32> to vector<4x8xf32>
    %cst_47 = arith.constant dense<0.000000e+00> : vector<64x8xf32>
    %41 = tpu.matmul %38, %40, %cst_47 {dimension_numbers = #tpu.dot_dimension_numbers<[1], [0], [0], [1], [0, 0, 1, 1], [], []>} : vector<64x4xf32>, vector<4x8xf32>, vector<64x8xf32> -> vector<64x8xf32>
    %42 = arith.addf %35, %41 : vector<64x8xf32>
    %c0_48 = arith.constant 0 : index
    %c0_49 = arith.constant 0 : index
    %c2_50 = arith.constant 2 : index
    %c0_51 = arith.constant 0 : index
    %c0_52 = arith.constant 0 : index
    %43 = vector.load %arg2[%c0_48, %c0_49, %c2_50, %c0_51, %c0_52] : memref<1x1x10x10x4xf32, #tpu.memory_space<vmem>>, vector<1x1x8x8x4xf32>
    %44 = vector.shape_cast %43 : vector<1x1x8x8x4xf32> to vector<8x8x4xf32>
    %45 = vector.shape_cast %44 : vector<8x8x4xf32> to vector<64x4xf32>
    %c6 = arith.constant 6 : index
    %c0_53 = arith.constant 0 : index
    %c0_54 = arith.constant 0 : index
    %46 = vector.load %arg5[%c6, %c0_53, %c0_54] : memref<27x4x8xf32, #tpu.memory_space<vmem>>, vector<1x4x8xf32>
    %47 = vector.shape_cast %46 : vector<1x4x8xf32> to vector<4x8xf32>
    %cst_55 = arith.constant dense<0.000000e+00> : vector<64x8xf32>
    %48 = tpu.matmul %45, %47, %cst_55 {dimension_numbers = #tpu.dot_dimension_numbers<[1], [0], [0], [1], [0, 0, 1, 1], [], []>} : vector<64x4xf32>, vector<4x8xf32>, vector<64x8xf32> -> vector<64x8xf32>
    %49 = arith.addf %42, %48 : vector<64x8xf32>
    %c0_56 = arith.constant 0 : index
    %c0_57 = arith.constant 0 : index
    %c2_58 = arith.constant 2 : index
    %c1_59 = arith.constant 1 : index
    %c0_60 = arith.constant 0 : index
    %50 = vector.load %arg2[%c0_56, %c0_57, %c2_58, %c1_59, %c0_60] : memref<1x1x10x10x4xf32, #tpu.memory_space<vmem>>, vector<1x1x8x8x4xf32>
    %51 = vector.shape_cast %50 : vector<1x1x8x8x4xf32> to vector<8x8x4xf32>
    %52 = vector.shape_cast %51 : vector<8x8x4xf32> to vector<64x4xf32>
    %c7 = arith.constant 7 : index
    %c0_61 = arith.constant 0 : index
    %c0_62 = arith.constant 0 : index
    %53 = vector.load %arg5[%c7, %c0_61, %c0_62] : memref<27x4x8xf32, #tpu.memory_space<vmem>>, vector<1x4x8xf32>
    %54 = vector.shape_cast %53 : vector<1x4x8xf32> to vector<4x8xf32>
    %cst_63 = arith.constant dense<0.000000e+00> : vector<64x8xf32>
    %55 = tpu.matmul %52, %54, %cst_63 {dimension_numbers = #tpu.dot_dimension_numbers<[1], [0], [0], [1], [0, 0, 1, 1], [], []>} : vector<64x4xf32>, vector<4x8xf32>, vector<64x8xf32> -> vector<64x8xf32>
    %56 = arith.addf %49, %55 : vector<64x8xf32>
    %c0_64 = arith.constant 0 : index
    %c0_65 = arith.constant 0 : index
    %c2_66 = arith.constant 2 : index
    %c2_67 = arith.constant 2 : index
    %c0_68 = arith.constant 0 : index
    %57 = vector.load %arg2[%c0_64, %c0_65, %c2_66, %c2_67, %c0_68] : memref<1x1x10x10x4xf32, #tpu.memory_space<vmem>>, vector<1x1x8x8x4xf32>
    %58 = vector.shape_cast %57 : vector<1x1x8x8x4xf32> to vector<8x8x4xf32>
    %59 = vector.shape_cast %58 : vector<8x8x4xf32> to vector<64x4xf32>
    %c8 = arith.constant 8 : index
    %c0_69 = arith.constant 0 : index
    %c0_70 = arith.constant 0 : index
    %60 = vector.load %arg5[%c8, %c0_69, %c0_70] : memref<27x4x8xf32, #tpu.memory_space<vmem>>, vector<1x4x8xf32>
    %61 = vector.shape_cast %60 : vector<1x4x8xf32> to vector<4x8xf32>
    %cst_71 = arith.constant dense<0.000000e+00> : vector<64x8xf32>
    %62 = tpu.matmul %59, %61, %cst_71 {dimension_numbers = #tpu.dot_dimension_numbers<[1], [0], [0], [1], [0, 0, 1, 1], [], []>} : vector<64x4xf32>, vector<4x8xf32>, vector<64x8xf32> -> vector<64x8xf32>
    %63 = arith.addf %56, %62 : vector<64x8xf32>
    %c0_72 = arith.constant 0 : index
    %c0_73 = arith.constant 0 : index
    %c0_74 = arith.constant 0 : index
    %c0_75 = arith.constant 0 : index
    %c0_76 = arith.constant 0 : index
    %64 = vector.load %arg3[%c0_72, %c0_73, %c0_74, %c0_75, %c0_76] : memref<1x1x10x10x4xf32, #tpu.memory_space<vmem>>, vector<1x1x8x8x4xf32>
    %65 = vector.shape_cast %64 : vector<1x1x8x8x4xf32> to vector<8x8x4xf32>
    %66 = vector.shape_cast %65 : vector<8x8x4xf32> to vector<64x4xf32>
    %c9 = arith.constant 9 : index
    %c0_77 = arith.constant 0 : index
    %c0_78 = arith.constant 0 : index
    %67 = vector.load %arg5[%c9, %c0_77, %c0_78] : memref<27x4x8xf32, #tpu.memory_space<vmem>>, vector<1x4x8xf32>
    %68 = vector.shape_cast %67 : vector<1x4x8xf32> to vector<4x8xf32>
    %cst_79 = arith.constant dense<0.000000e+00> : vector<64x8xf32>
    %69 = tpu.matmul %66, %68, %cst_79 {dimension_numbers = #tpu.dot_dimension_numbers<[1], [0], [0], [1], [0, 0, 1, 1], [], []>} : vector<64x4xf32>, vector<4x8xf32>, vector<64x8xf32> -> vector<64x8xf32>
    %70 = arith.addf %63, %69 : vector<64x8xf32>
    %c0_80 = arith.constant 0 : index
    %c0_81 = arith.constant 0 : index
    %c0_82 = arith.constant 0 : index
    %c1_83 = arith.constant 1 : index
    %c0_84 = arith.constant 0 : index
    %71 = vector.load %arg3[%c0_80, %c0_81, %c0_82, %c1_83, %c0_84] : memref<1x1x10x10x4xf32, #tpu.memory_space<vmem>>, vector<1x1x8x8x4xf32>
    %72 = vector.shape_cast %71 : vector<1x1x8x8x4xf32> to vector<8x8x4xf32>
    %73 = vector.shape_cast %72 : vector<8x8x4xf32> to vector<64x4xf32>
    %c10 = arith.constant 10 : index
    %c0_85 = arith.constant 0 : index
    %c0_86 = arith.constant 0 : index
    %74 = vector.load %arg5[%c10, %c0_85, %c0_86] : memref<27x4x8xf32, #tpu.memory_space<vmem>>, vector<1x4x8xf32>
    %75 = vector.shape_cast %74 : vector<1x4x8xf32> to vector<4x8xf32>
    %cst_87 = arith.constant dense<0.000000e+00> : vector<64x8xf32>
    %76 = tpu.matmul %73, %75, %cst_87 {dimension_numbers = #tpu.dot_dimension_numbers<[1], [0], [0], [1], [0, 0, 1, 1], [], []>} : vector<64x4xf32>, vector<4x8xf32>, vector<64x8xf32> -> vector<64x8xf32>
    %77 = arith.addf %70, %76 : vector<64x8xf32>
    %c0_88 = arith.constant 0 : index
    %c0_89 = arith.constant 0 : index
    %c0_90 = arith.constant 0 : index
    %c2_91 = arith.constant 2 : index
    %c0_92 = arith.constant 0 : index
    %78 = vector.load %arg3[%c0_88, %c0_89, %c0_90, %c2_91, %c0_92] : memref<1x1x10x10x4xf32, #tpu.memory_space<vmem>>, vector<1x1x8x8x4xf32>
    %79 = vector.shape_cast %78 : vector<1x1x8x8x4xf32> to vector<8x8x4xf32>
    %80 = vector.shape_cast %79 : vector<8x8x4xf32> to vector<64x4xf32>
    %c11 = arith.constant 11 : index
    %c0_93 = arith.constant 0 : index
    %c0_94 = arith.constant 0 : index
    %81 = vector.load %arg5[%c11, %c0_93, %c0_94] : memref<27x4x8xf32, #tpu.memory_space<vmem>>, vector<1x4x8xf32>
    %82 = vector.shape_cast %81 : vector<1x4x8xf32> to vector<4x8xf32>
    %cst_95 = arith.constant dense<0.000000e+00> : vector<64x8xf32>
    %83 = tpu.matmul %80, %82, %cst_95 {dimension_numbers = #tpu.dot_dimension_numbers<[1], [0], [0], [1], [0, 0, 1, 1], [], []>} : vector<64x4xf32>, vector<4x8xf32>, vector<64x8xf32> -> vector<64x8xf32>
    %84 = arith.addf %77, %83 : vector<64x8xf32>
    %c0_96 = arith.constant 0 : index
    %c0_97 = arith.constant 0 : index
    %c1_98 = arith.constant 1 : index
    %c0_99 = arith.constant 0 : index
    %c0_100 = arith.constant 0 : index
    %85 = vector.load %arg3[%c0_96, %c0_97, %c1_98, %c0_99, %c0_100] : memref<1x1x10x10x4xf32, #tpu.memory_space<vmem>>, vector<1x1x8x8x4xf32>
    %86 = vector.shape_cast %85 : vector<1x1x8x8x4xf32> to vector<8x8x4xf32>
    %87 = vector.shape_cast %86 : vector<8x8x4xf32> to vector<64x4xf32>
    %c12 = arith.constant 12 : index
    %c0_101 = arith.constant 0 : index
    %c0_102 = arith.constant 0 : index
    %88 = vector.load %arg5[%c12, %c0_101, %c0_102] : memref<27x4x8xf32, #tpu.memory_space<vmem>>, vector<1x4x8xf32>
    %89 = vector.shape_cast %88 : vector<1x4x8xf32> to vector<4x8xf32>
    %cst_103 = arith.constant dense<0.000000e+00> : vector<64x8xf32>
    %90 = tpu.matmul %87, %89, %cst_103 {dimension_numbers = #tpu.dot_dimension_numbers<[1], [0], [0], [1], [0, 0, 1, 1], [], []>} : vector<64x4xf32>, vector<4x8xf32>, vector<64x8xf32> -> vector<64x8xf32>
    %91 = arith.addf %84, %90 : vector<64x8xf32>
    %c0_104 = arith.constant 0 : index
    %c0_105 = arith.constant 0 : index
    %c1_106 = arith.constant 1 : index
    %c1_107 = arith.constant 1 : index
    %c0_108 = arith.constant 0 : index
    %92 = vector.load %arg3[%c0_104, %c0_105, %c1_106, %c1_107, %c0_108] : memref<1x1x10x10x4xf32, #tpu.memory_space<vmem>>, vector<1x1x8x8x4xf32>
    %93 = vector.shape_cast %92 : vector<1x1x8x8x4xf32> to vector<8x8x4xf32>
    %94 = vector.shape_cast %93 : vector<8x8x4xf32> to vector<64x4xf32>
    %c13 = arith.constant 13 : index
    %c0_109 = arith.constant 0 : index
    %c0_110 = arith.constant 0 : index
    %95 = vector.load %arg5[%c13, %c0_109, %c0_110] : memref<27x4x8xf32, #tpu.memory_space<vmem>>, vector<1x4x8xf32>
    %96 = vector.shape_cast %95 : vector<1x4x8xf32> to vector<4x8xf32>
    %cst_111 = arith.constant dense<0.000000e+00> : vector<64x8xf32>
    %97 = tpu.matmul %94, %96, %cst_111 {dimension_numbers = #tpu.dot_dimension_numbers<[1], [0], [0], [1], [0, 0, 1, 1], [], []>} : vector<64x4xf32>, vector<4x8xf32>, vector<64x8xf32> -> vector<64x8xf32>
    %98 = arith.addf %91, %97 : vector<64x8xf32>
    %c0_112 = arith.constant 0 : index
    %c0_113 = arith.constant 0 : index
    %c1_114 = arith.constant 1 : index
    %c2_115 = arith.constant 2 : index
    %c0_116 = arith.constant 0 : index
    %99 = vector.load %arg3[%c0_112, %c0_113, %c1_114, %c2_115, %c0_116] : memref<1x1x10x10x4xf32, #tpu.memory_space<vmem>>, vector<1x1x8x8x4xf32>
    %100 = vector.shape_cast %99 : vector<1x1x8x8x4xf32> to vector<8x8x4xf32>
    %101 = vector.shape_cast %100 : vector<8x8x4xf32> to vector<64x4xf32>
    %c14 = arith.constant 14 : index
    %c0_117 = arith.constant 0 : index
    %c0_118 = arith.constant 0 : index
    %102 = vector.load %arg5[%c14, %c0_117, %c0_118] : memref<27x4x8xf32, #tpu.memory_space<vmem>>, vector<1x4x8xf32>
    %103 = vector.shape_cast %102 : vector<1x4x8xf32> to vector<4x8xf32>
    %cst_119 = arith.constant dense<0.000000e+00> : vector<64x8xf32>
    %104 = tpu.matmul %101, %103, %cst_119 {dimension_numbers = #tpu.dot_dimension_numbers<[1], [0], [0], [1], [0, 0, 1, 1], [], []>} : vector<64x4xf32>, vector<4x8xf32>, vector<64x8xf32> -> vector<64x8xf32>
    %105 = arith.addf %98, %104 : vector<64x8xf32>
    %c0_120 = arith.constant 0 : index
    %c0_121 = arith.constant 0 : index
    %c2_122 = arith.constant 2 : index
    %c0_123 = arith.constant 0 : index
    %c0_124 = arith.constant 0 : index
    %106 = vector.load %arg3[%c0_120, %c0_121, %c2_122, %c0_123, %c0_124] : memref<1x1x10x10x4xf32, #tpu.memory_space<vmem>>, vector<1x1x8x8x4xf32>
    %107 = vector.shape_cast %106 : vector<1x1x8x8x4xf32> to vector<8x8x4xf32>
    %108 = vector.shape_cast %107 : vector<8x8x4xf32> to vector<64x4xf32>
    %c15 = arith.constant 15 : index
    %c0_125 = arith.constant 0 : index
    %c0_126 = arith.constant 0 : index
    %109 = vector.load %arg5[%c15, %c0_125, %c0_126] : memref<27x4x8xf32, #tpu.memory_space<vmem>>, vector<1x4x8xf32>
    %110 = vector.shape_cast %109 : vector<1x4x8xf32> to vector<4x8xf32>
    %cst_127 = arith.constant dense<0.000000e+00> : vector<64x8xf32>
    %111 = tpu.matmul %108, %110, %cst_127 {dimension_numbers = #tpu.dot_dimension_numbers<[1], [0], [0], [1], [0, 0, 1, 1], [], []>} : vector<64x4xf32>, vector<4x8xf32>, vector<64x8xf32> -> vector<64x8xf32>
    %112 = arith.addf %105, %111 : vector<64x8xf32>
    %c0_128 = arith.constant 0 : index
    %c0_129 = arith.constant 0 : index
    %c2_130 = arith.constant 2 : index
    %c1_131 = arith.constant 1 : index
    %c0_132 = arith.constant 0 : index
    %113 = vector.load %arg3[%c0_128, %c0_129, %c2_130, %c1_131, %c0_132] : memref<1x1x10x10x4xf32, #tpu.memory_space<vmem>>, vector<1x1x8x8x4xf32>
    %114 = vector.shape_cast %113 : vector<1x1x8x8x4xf32> to vector<8x8x4xf32>
    %115 = vector.shape_cast %114 : vector<8x8x4xf32> to vector<64x4xf32>
    %c16 = arith.constant 16 : index
    %c0_133 = arith.constant 0 : index
    %c0_134 = arith.constant 0 : index
    %116 = vector.load %arg5[%c16, %c0_133, %c0_134] : memref<27x4x8xf32, #tpu.memory_space<vmem>>, vector<1x4x8xf32>
    %117 = vector.shape_cast %116 : vector<1x4x8xf32> to vector<4x8xf32>
    %cst_135 = arith.constant dense<0.000000e+00> : vector<64x8xf32>
    %118 = tpu.matmul %115, %117, %cst_135 {dimension_numbers = #tpu.dot_dimension_numbers<[1], [0], [0], [1], [0, 0, 1, 1], [], []>} : vector<64x4xf32>, vector<4x8xf32>, vector<64x8xf32> -> vector<64x8xf32>
    %119 = arith.addf %112, %118 : vector<64x8xf32>
    %c0_136 = arith.constant 0 : index
    %c0_137 = arith.constant 0 : index
    %c2_138 = arith.constant 2 : index
    %c2_139 = arith.constant 2 : index
    %c0_140 = arith.constant 0 : index
    %120 = vector.load %arg3[%c0_136, %c0_137, %c2_138, %c2_139, %c0_140] : memref<1x1x10x10x4xf32, #tpu.memory_space<vmem>>, vector<1x1x8x8x4xf32>
    %121 = vector.shape_cast %120 : vector<1x1x8x8x4xf32> to vector<8x8x4xf32>
    %122 = vector.shape_cast %121 : vector<8x8x4xf32> to vector<64x4xf32>
    %c17 = arith.constant 17 : index
    %c0_141 = arith.constant 0 : index
    %c0_142 = arith.constant 0 : index
    %123 = vector.load %arg5[%c17, %c0_141, %c0_142] : memref<27x4x8xf32, #tpu.memory_space<vmem>>, vector<1x4x8xf32>
    %124 = vector.shape_cast %123 : vector<1x4x8xf32> to vector<4x8xf32>
    %cst_143 = arith.constant dense<0.000000e+00> : vector<64x8xf32>
    %125 = tpu.matmul %122, %124, %cst_143 {dimension_numbers = #tpu.dot_dimension_numbers<[1], [0], [0], [1], [0, 0, 1, 1], [], []>} : vector<64x4xf32>, vector<4x8xf32>, vector<64x8xf32> -> vector<64x8xf32>
    %126 = arith.addf %119, %125 : vector<64x8xf32>
    %c0_144 = arith.constant 0 : index
    %c0_145 = arith.constant 0 : index
    %c0_146 = arith.constant 0 : index
    %c0_147 = arith.constant 0 : index
    %c0_148 = arith.constant 0 : index
    %127 = vector.load %arg4[%c0_144, %c0_145, %c0_146, %c0_147, %c0_148] : memref<1x1x10x10x4xf32, #tpu.memory_space<vmem>>, vector<1x1x8x8x4xf32>
    %128 = vector.shape_cast %127 : vector<1x1x8x8x4xf32> to vector<8x8x4xf32>
    %129 = vector.shape_cast %128 : vector<8x8x4xf32> to vector<64x4xf32>
    %c18 = arith.constant 18 : index
    %c0_149 = arith.constant 0 : index
    %c0_150 = arith.constant 0 : index
    %130 = vector.load %arg5[%c18, %c0_149, %c0_150] : memref<27x4x8xf32, #tpu.memory_space<vmem>>, vector<1x4x8xf32>
    %131 = vector.shape_cast %130 : vector<1x4x8xf32> to vector<4x8xf32>
    %cst_151 = arith.constant dense<0.000000e+00> : vector<64x8xf32>
    %132 = tpu.matmul %129, %131, %cst_151 {dimension_numbers = #tpu.dot_dimension_numbers<[1], [0], [0], [1], [0, 0, 1, 1], [], []>} : vector<64x4xf32>, vector<4x8xf32>, vector<64x8xf32> -> vector<64x8xf32>
    %133 = arith.addf %126, %132 : vector<64x8xf32>
    %c0_152 = arith.constant 0 : index
    %c0_153 = arith.constant 0 : index
    %c0_154 = arith.constant 0 : index
    %c1_155 = arith.constant 1 : index
    %c0_156 = arith.constant 0 : index
    %134 = vector.load %arg4[%c0_152, %c0_153, %c0_154, %c1_155, %c0_156] : memref<1x1x10x10x4xf32, #tpu.memory_space<vmem>>, vector<1x1x8x8x4xf32>
    %135 = vector.shape_cast %134 : vector<1x1x8x8x4xf32> to vector<8x8x4xf32>
    %136 = vector.shape_cast %135 : vector<8x8x4xf32> to vector<64x4xf32>
    %c19 = arith.constant 19 : index
    %c0_157 = arith.constant 0 : index
    %c0_158 = arith.constant 0 : index
    %137 = vector.load %arg5[%c19, %c0_157, %c0_158] : memref<27x4x8xf32, #tpu.memory_space<vmem>>, vector<1x4x8xf32>
    %138 = vector.shape_cast %137 : vector<1x4x8xf32> to vector<4x8xf32>
    %cst_159 = arith.constant dense<0.000000e+00> : vector<64x8xf32>
    %139 = tpu.matmul %136, %138, %cst_159 {dimension_numbers = #tpu.dot_dimension_numbers<[1], [0], [0], [1], [0, 0, 1, 1], [], []>} : vector<64x4xf32>, vector<4x8xf32>, vector<64x8xf32> -> vector<64x8xf32>
    %140 = arith.addf %133, %139 : vector<64x8xf32>
    %c0_160 = arith.constant 0 : index
    %c0_161 = arith.constant 0 : index
    %c0_162 = arith.constant 0 : index
    %c2_163 = arith.constant 2 : index
    %c0_164 = arith.constant 0 : index
    %141 = vector.load %arg4[%c0_160, %c0_161, %c0_162, %c2_163, %c0_164] : memref<1x1x10x10x4xf32, #tpu.memory_space<vmem>>, vector<1x1x8x8x4xf32>
    %142 = vector.shape_cast %141 : vector<1x1x8x8x4xf32> to vector<8x8x4xf32>
    %143 = vector.shape_cast %142 : vector<8x8x4xf32> to vector<64x4xf32>
    %c20 = arith.constant 20 : index
    %c0_165 = arith.constant 0 : index
    %c0_166 = arith.constant 0 : index
    %144 = vector.load %arg5[%c20, %c0_165, %c0_166] : memref<27x4x8xf32, #tpu.memory_space<vmem>>, vector<1x4x8xf32>
    %145 = vector.shape_cast %144 : vector<1x4x8xf32> to vector<4x8xf32>
    %cst_167 = arith.constant dense<0.000000e+00> : vector<64x8xf32>
    %146 = tpu.matmul %143, %145, %cst_167 {dimension_numbers = #tpu.dot_dimension_numbers<[1], [0], [0], [1], [0, 0, 1, 1], [], []>} : vector<64x4xf32>, vector<4x8xf32>, vector<64x8xf32> -> vector<64x8xf32>
    %147 = arith.addf %140, %146 : vector<64x8xf32>
    %c0_168 = arith.constant 0 : index
    %c0_169 = arith.constant 0 : index
    %c1_170 = arith.constant 1 : index
    %c0_171 = arith.constant 0 : index
    %c0_172 = arith.constant 0 : index
    %148 = vector.load %arg4[%c0_168, %c0_169, %c1_170, %c0_171, %c0_172] : memref<1x1x10x10x4xf32, #tpu.memory_space<vmem>>, vector<1x1x8x8x4xf32>
    %149 = vector.shape_cast %148 : vector<1x1x8x8x4xf32> to vector<8x8x4xf32>
    %150 = vector.shape_cast %149 : vector<8x8x4xf32> to vector<64x4xf32>
    %c21 = arith.constant 21 : index
    %c0_173 = arith.constant 0 : index
    %c0_174 = arith.constant 0 : index
    %151 = vector.load %arg5[%c21, %c0_173, %c0_174] : memref<27x4x8xf32, #tpu.memory_space<vmem>>, vector<1x4x8xf32>
    %152 = vector.shape_cast %151 : vector<1x4x8xf32> to vector<4x8xf32>
    %cst_175 = arith.constant dense<0.000000e+00> : vector<64x8xf32>
    %153 = tpu.matmul %150, %152, %cst_175 {dimension_numbers = #tpu.dot_dimension_numbers<[1], [0], [0], [1], [0, 0, 1, 1], [], []>} : vector<64x4xf32>, vector<4x8xf32>, vector<64x8xf32> -> vector<64x8xf32>
    %154 = arith.addf %147, %153 : vector<64x8xf32>
    %c0_176 = arith.constant 0 : index
    %c0_177 = arith.constant 0 : index
    %c1_178 = arith.constant 1 : index
    %c1_179 = arith.constant 1 : index
    %c0_180 = arith.constant 0 : index
    %155 = vector.load %arg4[%c0_176, %c0_177, %c1_178, %c1_179, %c0_180] : memref<1x1x10x10x4xf32, #tpu.memory_space<vmem>>, vector<1x1x8x8x4xf32>
    %156 = vector.shape_cast %155 : vector<1x1x8x8x4xf32> to vector<8x8x4xf32>
    %157 = vector.shape_cast %156 : vector<8x8x4xf32> to vector<64x4xf32>
    %c22 = arith.constant 22 : index
    %c0_181 = arith.constant 0 : index
    %c0_182 = arith.constant 0 : index
    %158 = vector.load %arg5[%c22, %c0_181, %c0_182] : memref<27x4x8xf32, #tpu.memory_space<vmem>>, vector<1x4x8xf32>
    %159 = vector.shape_cast %158 : vector<1x4x8xf32> to vector<4x8xf32>
    %cst_183 = arith.constant dense<0.000000e+00> : vector<64x8xf32>
    %160 = tpu.matmul %157, %159, %cst_183 {dimension_numbers = #tpu.dot_dimension_numbers<[1], [0], [0], [1], [0, 0, 1, 1], [], []>} : vector<64x4xf32>, vector<4x8xf32>, vector<64x8xf32> -> vector<64x8xf32>
    %161 = arith.addf %154, %160 : vector<64x8xf32>
    %c0_184 = arith.constant 0 : index
    %c0_185 = arith.constant 0 : index
    %c1_186 = arith.constant 1 : index
    %c2_187 = arith.constant 2 : index
    %c0_188 = arith.constant 0 : index
    %162 = vector.load %arg4[%c0_184, %c0_185, %c1_186, %c2_187, %c0_188] : memref<1x1x10x10x4xf32, #tpu.memory_space<vmem>>, vector<1x1x8x8x4xf32>
    %163 = vector.shape_cast %162 : vector<1x1x8x8x4xf32> to vector<8x8x4xf32>
    %164 = vector.shape_cast %163 : vector<8x8x4xf32> to vector<64x4xf32>
    %c23 = arith.constant 23 : index
    %c0_189 = arith.constant 0 : index
    %c0_190 = arith.constant 0 : index
    %165 = vector.load %arg5[%c23, %c0_189, %c0_190] : memref<27x4x8xf32, #tpu.memory_space<vmem>>, vector<1x4x8xf32>
    %166 = vector.shape_cast %165 : vector<1x4x8xf32> to vector<4x8xf32>
    %cst_191 = arith.constant dense<0.000000e+00> : vector<64x8xf32>
    %167 = tpu.matmul %164, %166, %cst_191 {dimension_numbers = #tpu.dot_dimension_numbers<[1], [0], [0], [1], [0, 0, 1, 1], [], []>} : vector<64x4xf32>, vector<4x8xf32>, vector<64x8xf32> -> vector<64x8xf32>
    %168 = arith.addf %161, %167 : vector<64x8xf32>
    %c0_192 = arith.constant 0 : index
    %c0_193 = arith.constant 0 : index
    %c2_194 = arith.constant 2 : index
    %c0_195 = arith.constant 0 : index
    %c0_196 = arith.constant 0 : index
    %169 = vector.load %arg4[%c0_192, %c0_193, %c2_194, %c0_195, %c0_196] : memref<1x1x10x10x4xf32, #tpu.memory_space<vmem>>, vector<1x1x8x8x4xf32>
    %170 = vector.shape_cast %169 : vector<1x1x8x8x4xf32> to vector<8x8x4xf32>
    %171 = vector.shape_cast %170 : vector<8x8x4xf32> to vector<64x4xf32>
    %c24 = arith.constant 24 : index
    %c0_197 = arith.constant 0 : index
    %c0_198 = arith.constant 0 : index
    %172 = vector.load %arg5[%c24, %c0_197, %c0_198] : memref<27x4x8xf32, #tpu.memory_space<vmem>>, vector<1x4x8xf32>
    %173 = vector.shape_cast %172 : vector<1x4x8xf32> to vector<4x8xf32>
    %cst_199 = arith.constant dense<0.000000e+00> : vector<64x8xf32>
    %174 = tpu.matmul %171, %173, %cst_199 {dimension_numbers = #tpu.dot_dimension_numbers<[1], [0], [0], [1], [0, 0, 1, 1], [], []>} : vector<64x4xf32>, vector<4x8xf32>, vector<64x8xf32> -> vector<64x8xf32>
    %175 = arith.addf %168, %174 : vector<64x8xf32>
    %c0_200 = arith.constant 0 : index
    %c0_201 = arith.constant 0 : index
    %c2_202 = arith.constant 2 : index
    %c1_203 = arith.constant 1 : index
    %c0_204 = arith.constant 0 : index
    %176 = vector.load %arg4[%c0_200, %c0_201, %c2_202, %c1_203, %c0_204] : memref<1x1x10x10x4xf32, #tpu.memory_space<vmem>>, vector<1x1x8x8x4xf32>
    %177 = vector.shape_cast %176 : vector<1x1x8x8x4xf32> to vector<8x8x4xf32>
    %178 = vector.shape_cast %177 : vector<8x8x4xf32> to vector<64x4xf32>
    %c25 = arith.constant 25 : index
    %c0_205 = arith.constant 0 : index
    %c0_206 = arith.constant 0 : index
    %179 = vector.load %arg5[%c25, %c0_205, %c0_206] : memref<27x4x8xf32, #tpu.memory_space<vmem>>, vector<1x4x8xf32>
    %180 = vector.shape_cast %179 : vector<1x4x8xf32> to vector<4x8xf32>
    %cst_207 = arith.constant dense<0.000000e+00> : vector<64x8xf32>
    %181 = tpu.matmul %178, %180, %cst_207 {dimension_numbers = #tpu.dot_dimension_numbers<[1], [0], [0], [1], [0, 0, 1, 1], [], []>} : vector<64x4xf32>, vector<4x8xf32>, vector<64x8xf32> -> vector<64x8xf32>
    %182 = arith.addf %175, %181 : vector<64x8xf32>
    %c0_208 = arith.constant 0 : index
    %c0_209 = arith.constant 0 : index
    %c2_210 = arith.constant 2 : index
    %c2_211 = arith.constant 2 : index
    %c0_212 = arith.constant 0 : index
    %183 = vector.load %arg4[%c0_208, %c0_209, %c2_210, %c2_211, %c0_212] : memref<1x1x10x10x4xf32, #tpu.memory_space<vmem>>, vector<1x1x8x8x4xf32>
    %184 = vector.shape_cast %183 : vector<1x1x8x8x4xf32> to vector<8x8x4xf32>
    %185 = vector.shape_cast %184 : vector<8x8x4xf32> to vector<64x4xf32>
    %c26 = arith.constant 26 : index
    %c0_213 = arith.constant 0 : index
    %c0_214 = arith.constant 0 : index
    %186 = vector.load %arg5[%c26, %c0_213, %c0_214] : memref<27x4x8xf32, #tpu.memory_space<vmem>>, vector<1x4x8xf32>
    %187 = vector.shape_cast %186 : vector<1x4x8xf32> to vector<4x8xf32>
    %cst_215 = arith.constant dense<0.000000e+00> : vector<64x8xf32>
    %188 = tpu.matmul %185, %187, %cst_215 {dimension_numbers = #tpu.dot_dimension_numbers<[1], [0], [0], [1], [0, 0, 1, 1], [], []>} : vector<64x4xf32>, vector<4x8xf32>, vector<64x8xf32> -> vector<64x8xf32>
    %189 = arith.addf %182, %188 : vector<64x8xf32>
    %c0_216 = arith.constant 0 : index
    %c0_217 = arith.constant 0 : index
    %190 = vector.load %arg6[%c0_216, %c0_217] : memref<1x8xf32, #tpu.memory_space<vmem>>, vector<1x8xf32>
    %191 = vector.broadcast %190 : vector<1x8xf32> to vector<64x8xf32>
    %192 = arith.addf %189, %191 : vector<64x8xf32>
    %cst_218 = arith.constant 0.000000e+00 : f32
    %193 = vector.broadcast %cst_218 : f32 to vector<64x8xf32>
    %194 = arith.maximumf %192, %193 : vector<64x8xf32>
    %c0_219 = arith.constant 0 : index
    %c0_220 = arith.constant 0 : index
    %c0_221 = arith.constant 0 : index
    %c0_222 = arith.constant 0 : index
    %195 = vector.load %arg7[%c0_219, %c0_220, %c0_221, %c0_222] : memref<1x1x64x8xf32, #tpu.memory_space<vmem>>, vector<1x1x64x8xf32>
    %196 = vector.shape_cast %195 : vector<1x1x64x8xf32> to vector<64x8xf32>
    %197 = vector.shape_cast %194 : vector<64x8xf32> to vector<1x1x64x8xf32>
    tpu.vector_store %arg7[%c0_219, %c0_220, %c0_221, %c0_222], %197 {strides = array<i32>} : memref<1x1x64x8xf32, #tpu.memory_space<vmem>>, vector<1x1x64x8xf32>,
    return
  }
  func.func @transform_0(%arg0: i32, %arg1: i32) -> (i32, i32, i32, i32, i32) {
    %c0_i32 = arith.constant 0 : i32
    %0 = arith.addi %arg1, %c0_i32 : i32
    %c0_i32_0 = arith.constant 0 : i32
    %c0_i32_1 = arith.constant 0 : i32
    %c0_i32_2 = arith.constant 0 : i32
    %c0_i32_3 = arith.constant 0 : i32
    return %arg0, %0, %c0_i32_0, %c0_i32_1, %c0_i32_2 : i32, i32, i32, i32, i32
  }
  func.func @transform_1(%arg0: i32, %arg1: i32) -> (i32, i32, i32, i32, i32) {
    %c1_i32 = arith.constant 1 : i32
    %0 = arith.addi %arg1, %c1_i32 : i32
    %c0_i32 = arith.constant 0 : i32
    %c0_i32_0 = arith.constant 0 : i32
    %c0_i32_1 = arith.constant 0 : i32
    %c0_i32_2 = arith.constant 0 : i32
    return %arg0, %0, %c0_i32, %c0_i32_0, %c0_i32_1 : i32, i32, i32, i32, i32
  }
  func.func @transform_2(%arg0: i32, %arg1: i32) -> (i32, i32, i32, i32, i32) {
    %c2_i32 = arith.constant 2 : i32
    %0 = arith.addi %arg1, %c2_i32 : i32
    %c0_i32 = arith.constant 0 : i32
    %c0_i32_0 = arith.constant 0 : i32
    %c0_i32_1 = arith.constant 0 : i32
    %c0_i32_2 = arith.constant 0 : i32
    return %arg0, %0, %c0_i32, %c0_i32_0, %c0_i32_1 : i32, i32, i32, i32, i32
  }
  func.func @transform_3(%arg0: i32, %arg1: i32) -> (i32, i32, i32) {
    %c0_i32 = arith.constant 0 : i32
    %c0_i32_0 = arith.constant 0 : i32
    %c0_i32_1 = arith.constant 0 : i32
    %c0_i32_2 = arith.constant 0 : i32
    return %c0_i32, %c0_i32_0, %c0_i32_1 : i32, i32, i32
  }
  func.func @transform_4(%arg0: i32, %arg1: i32) -> (i32, i32) {
    %c0_i32 = arith.constant 0 : i32
    %c0_i32_0 = arith.constant 0 : i32
    %c0_i32_1 = arith.constant 0 : i32
    return %c0_i32, %c0_i32_0 : i32, i32
  }
  func.func @transform_5(%arg0: i32, %arg1: i32) -> (i32, i32, i32, i32) {
    %c0_i32 = arith.constant 0 : i32
    %c0_i32_0 = arith.constant 0 : i32
    %c0_i32_1 = arith.constant 0 : i32
    return %arg0, %arg1, %c0_i32, %c0_i32_0 : i32, i32, i32, i32
  }
}

module attributes {stable_mosaic.version = 11 : i64} {
  func.func @_maxpool3x3x3_conv1x1_relu_kernel(%arg0: i32, %arg1: i32, %arg2: memref<1x1x10x10x4xf32, #tpu.memory_space<vmem>>, %arg3: memref<1x1x10x10x4xf32, #tpu.memory_space<vmem>>, %arg4: memref<1x1x10x10x4xf32, #tpu.memory_space<vmem>>, %arg5: memref<4x8xf32, #tpu.memory_space<vmem>>, %arg6: memref<1x8xf32, #tpu.memory_space<vmem>>, %arg7: memref<1x1x64x8xf32, #tpu.memory_space<vmem>>) attributes {dimension_semantics = [#tpu.dimension_semantics<parallel>, #tpu.dimension_semantics<parallel>], iteration_bounds = array<i64: 2, 4>, scalar_prefetch = 0 : i64, scratch_operands = 0 : i64, tpu.core_type = #tpu.core_type<tc>, window_params = [{transform_indices = @transform_0, window_bounds = array<i64: 1, 1, 10, 10, 4>}, {transform_indices = @transform_1, window_bounds = array<i64: 1, 1, 10, 10, 4>}, {transform_indices = @transform_2, window_bounds = array<i64: 1, 1, 10, 10, 4>}, {pipeline_mode = #tpu.pipeline_mode<synchronous>, transform_indices = @transform_3, window_bounds = array<i64: 4, 8>}, {pipeline_mode = #tpu.pipeline_mode<synchronous>, transform_indices = @transform_4, window_bounds = array<i64: 1, 8>}, {transform_indices = @transform_5, window_bounds = array<i64: 1, 1, 64, 8>}]} {
    %c0 = arith.constant 0 : index
    %c0_0 = arith.constant 0 : index
    %c0_1 = arith.constant 0 : index
    %c0_2 = arith.constant 0 : index
    %c0_3 = arith.constant 0 : index
    %0 = vector.load %arg2[%c0, %c0_0, %c0_1, %c0_2, %c0_3] : memref<1x1x10x10x4xf32, #tpu.memory_space<vmem>>, vector<1x1x8x8x4xf32>
    %1 = vector.shape_cast %0 : vector<1x1x8x8x4xf32> to vector<8x8x4xf32>
    %c0_4 = arith.constant 0 : index
    %c0_5 = arith.constant 0 : index
    %c0_6 = arith.constant 0 : index
    %c1 = arith.constant 1 : index
    %c0_7 = arith.constant 0 : index
    %2 = vector.load %arg2[%c0_4, %c0_5, %c0_6, %c1, %c0_7] : memref<1x1x10x10x4xf32, #tpu.memory_space<vmem>>, vector<1x1x8x8x4xf32>
    %3 = vector.shape_cast %2 : vector<1x1x8x8x4xf32> to vector<8x8x4xf32>
    %4 = arith.maximumf %1, %3 : vector<8x8x4xf32>
    %c0_8 = arith.constant 0 : index
    %c0_9 = arith.constant 0 : index
    %c0_10 = arith.constant 0 : index
    %c2 = arith.constant 2 : index
    %c0_11 = arith.constant 0 : index
    %5 = vector.load %arg2[%c0_8, %c0_9, %c0_10, %c2, %c0_11] : memref<1x1x10x10x4xf32, #tpu.memory_space<vmem>>, vector<1x1x8x8x4xf32>
    %6 = vector.shape_cast %5 : vector<1x1x8x8x4xf32> to vector<8x8x4xf32>
    %7 = arith.maximumf %4, %6 : vector<8x8x4xf32>
    %c0_12 = arith.constant 0 : index
    %c0_13 = arith.constant 0 : index
    %c1_14 = arith.constant 1 : index
    %c0_15 = arith.constant 0 : index
    %c0_16 = arith.constant 0 : index
    %8 = vector.load %arg2[%c0_12, %c0_13, %c1_14, %c0_15, %c0_16] : memref<1x1x10x10x4xf32, #tpu.memory_space<vmem>>, vector<1x1x8x8x4xf32>
    %9 = vector.shape_cast %8 : vector<1x1x8x8x4xf32> to vector<8x8x4xf32>
    %10 = arith.maximumf %7, %9 : vector<8x8x4xf32>
    %c0_17 = arith.constant 0 : index
    %c0_18 = arith.constant 0 : index
    %c1_19 = arith.constant 1 : index
    %c1_20 = arith.constant 1 : index
    %c0_21 = arith.constant 0 : index
    %11 = vector.load %arg2[%c0_17, %c0_18, %c1_19, %c1_20, %c0_21] : memref<1x1x10x10x4xf32, #tpu.memory_space<vmem>>, vector<1x1x8x8x4xf32>
    %12 = vector.shape_cast %11 : vector<1x1x8x8x4xf32> to vector<8x8x4xf32>
    %13 = arith.maximumf %10, %12 : vector<8x8x4xf32>
    %c0_22 = arith.constant 0 : index
    %c0_23 = arith.constant 0 : index
    %c1_24 = arith.constant 1 : index
    %c2_25 = arith.constant 2 : index
    %c0_26 = arith.constant 0 : index
    %14 = vector.load %arg2[%c0_22, %c0_23, %c1_24, %c2_25, %c0_26] : memref<1x1x10x10x4xf32, #tpu.memory_space<vmem>>, vector<1x1x8x8x4xf32>
    %15 = vector.shape_cast %14 : vector<1x1x8x8x4xf32> to vector<8x8x4xf32>
    %16 = arith.maximumf %13, %15 : vector<8x8x4xf32>
    %c0_27 = arith.constant 0 : index
    %c0_28 = arith.constant 0 : index
    %c2_29 = arith.constant 2 : index
    %c0_30 = arith.constant 0 : index
    %c0_31 = arith.constant 0 : index
    %17 = vector.load %arg2[%c0_27, %c0_28, %c2_29, %c0_30, %c0_31] : memref<1x1x10x10x4xf32, #tpu.memory_space<vmem>>, vector<1x1x8x8x4xf32>
    %18 = vector.shape_cast %17 : vector<1x1x8x8x4xf32> to vector<8x8x4xf32>
    %19 = arith.maximumf %16, %18 : vector<8x8x4xf32>
    %c0_32 = arith.constant 0 : index
    %c0_33 = arith.constant 0 : index
    %c2_34 = arith.constant 2 : index
    %c1_35 = arith.constant 1 : index
    %c0_36 = arith.constant 0 : index
    %20 = vector.load %arg2[%c0_32, %c0_33, %c2_34, %c1_35, %c0_36] : memref<1x1x10x10x4xf32, #tpu.memory_space<vmem>>, vector<1x1x8x8x4xf32>
    %21 = vector.shape_cast %20 : vector<1x1x8x8x4xf32> to vector<8x8x4xf32>
    %22 = arith.maximumf %19, %21 : vector<8x8x4xf32>
    %c0_37 = arith.constant 0 : index
    %c0_38 = arith.constant 0 : index
    %c2_39 = arith.constant 2 : index
    %c2_40 = arith.constant 2 : index
    %c0_41 = arith.constant 0 : index
    %23 = vector.load %arg2[%c0_37, %c0_38, %c2_39, %c2_40, %c0_41] : memref<1x1x10x10x4xf32, #tpu.memory_space<vmem>>, vector<1x1x8x8x4xf32>
    %24 = vector.shape_cast %23 : vector<1x1x8x8x4xf32> to vector<8x8x4xf32>
    %25 = arith.maximumf %22, %24 : vector<8x8x4xf32>
    %c0_42 = arith.constant 0 : index
    %c0_43 = arith.constant 0 : index
    %c0_44 = arith.constant 0 : index
    %c0_45 = arith.constant 0 : index
    %c0_46 = arith.constant 0 : index
    %26 = vector.load %arg3[%c0_42, %c0_43, %c0_44, %c0_45, %c0_46] : memref<1x1x10x10x4xf32, #tpu.memory_space<vmem>>, vector<1x1x8x8x4xf32>
    %27 = vector.shape_cast %26 : vector<1x1x8x8x4xf32> to vector<8x8x4xf32>
    %28 = arith.maximumf %25, %27 : vector<8x8x4xf32>
    %c0_47 = arith.constant 0 : index
    %c0_48 = arith.constant 0 : index
    %c0_49 = arith.constant 0 : index
    %c1_50 = arith.constant 1 : index
    %c0_51 = arith.constant 0 : index
    %29 = vector.load %arg3[%c0_47, %c0_48, %c0_49, %c1_50, %c0_51] : memref<1x1x10x10x4xf32, #tpu.memory_space<vmem>>, vector<1x1x8x8x4xf32>
    %30 = vector.shape_cast %29 : vector<1x1x8x8x4xf32> to vector<8x8x4xf32>
    %31 = arith.maximumf %28, %30 : vector<8x8x4xf32>
    %c0_52 = arith.constant 0 : index
    %c0_53 = arith.constant 0 : index
    %c0_54 = arith.constant 0 : index
    %c2_55 = arith.constant 2 : index
    %c0_56 = arith.constant 0 : index
    %32 = vector.load %arg3[%c0_52, %c0_53, %c0_54, %c2_55, %c0_56] : memref<1x1x10x10x4xf32, #tpu.memory_space<vmem>>, vector<1x1x8x8x4xf32>
    %33 = vector.shape_cast %32 : vector<1x1x8x8x4xf32> to vector<8x8x4xf32>
    %34 = arith.maximumf %31, %33 : vector<8x8x4xf32>
    %c0_57 = arith.constant 0 : index
    %c0_58 = arith.constant 0 : index
    %c1_59 = arith.constant 1 : index
    %c0_60 = arith.constant 0 : index
    %c0_61 = arith.constant 0 : index
    %35 = vector.load %arg3[%c0_57, %c0_58, %c1_59, %c0_60, %c0_61] : memref<1x1x10x10x4xf32, #tpu.memory_space<vmem>>, vector<1x1x8x8x4xf32>
    %36 = vector.shape_cast %35 : vector<1x1x8x8x4xf32> to vector<8x8x4xf32>
    %37 = arith.maximumf %34, %36 : vector<8x8x4xf32>
    %c0_62 = arith.constant 0 : index
    %c0_63 = arith.constant 0 : index
    %c1_64 = arith.constant 1 : index
    %c1_65 = arith.constant 1 : index
    %c0_66 = arith.constant 0 : index
    %38 = vector.load %arg3[%c0_62, %c0_63, %c1_64, %c1_65, %c0_66] : memref<1x1x10x10x4xf32, #tpu.memory_space<vmem>>, vector<1x1x8x8x4xf32>
    %39 = vector.shape_cast %38 : vector<1x1x8x8x4xf32> to vector<8x8x4xf32>
    %40 = arith.maximumf %37, %39 : vector<8x8x4xf32>
    %c0_67 = arith.constant 0 : index
    %c0_68 = arith.constant 0 : index
    %c1_69 = arith.constant 1 : index
    %c2_70 = arith.constant 2 : index
    %c0_71 = arith.constant 0 : index
    %41 = vector.load %arg3[%c0_67, %c0_68, %c1_69, %c2_70, %c0_71] : memref<1x1x10x10x4xf32, #tpu.memory_space<vmem>>, vector<1x1x8x8x4xf32>
    %42 = vector.shape_cast %41 : vector<1x1x8x8x4xf32> to vector<8x8x4xf32>
    %43 = arith.maximumf %40, %42 : vector<8x8x4xf32>
    %c0_72 = arith.constant 0 : index
    %c0_73 = arith.constant 0 : index
    %c2_74 = arith.constant 2 : index
    %c0_75 = arith.constant 0 : index
    %c0_76 = arith.constant 0 : index
    %44 = vector.load %arg3[%c0_72, %c0_73, %c2_74, %c0_75, %c0_76] : memref<1x1x10x10x4xf32, #tpu.memory_space<vmem>>, vector<1x1x8x8x4xf32>
    %45 = vector.shape_cast %44 : vector<1x1x8x8x4xf32> to vector<8x8x4xf32>
    %46 = arith.maximumf %43, %45 : vector<8x8x4xf32>
    %c0_77 = arith.constant 0 : index
    %c0_78 = arith.constant 0 : index
    %c2_79 = arith.constant 2 : index
    %c1_80 = arith.constant 1 : index
    %c0_81 = arith.constant 0 : index
    %47 = vector.load %arg3[%c0_77, %c0_78, %c2_79, %c1_80, %c0_81] : memref<1x1x10x10x4xf32, #tpu.memory_space<vmem>>, vector<1x1x8x8x4xf32>
    %48 = vector.shape_cast %47 : vector<1x1x8x8x4xf32> to vector<8x8x4xf32>
    %49 = arith.maximumf %46, %48 : vector<8x8x4xf32>
    %c0_82 = arith.constant 0 : index
    %c0_83 = arith.constant 0 : index
    %c2_84 = arith.constant 2 : index
    %c2_85 = arith.constant 2 : index
    %c0_86 = arith.constant 0 : index
    %50 = vector.load %arg3[%c0_82, %c0_83, %c2_84, %c2_85, %c0_86] : memref<1x1x10x10x4xf32, #tpu.memory_space<vmem>>, vector<1x1x8x8x4xf32>
    %51 = vector.shape_cast %50 : vector<1x1x8x8x4xf32> to vector<8x8x4xf32>
    %52 = arith.maximumf %49, %51 : vector<8x8x4xf32>
    %c0_87 = arith.constant 0 : index
    %c0_88 = arith.constant 0 : index
    %c0_89 = arith.constant 0 : index
    %c0_90 = arith.constant 0 : index
    %c0_91 = arith.constant 0 : index
    %53 = vector.load %arg4[%c0_87, %c0_88, %c0_89, %c0_90, %c0_91] : memref<1x1x10x10x4xf32, #tpu.memory_space<vmem>>, vector<1x1x8x8x4xf32>
    %54 = vector.shape_cast %53 : vector<1x1x8x8x4xf32> to vector<8x8x4xf32>
    %55 = arith.maximumf %52, %54 : vector<8x8x4xf32>
    %c0_92 = arith.constant 0 : index
    %c0_93 = arith.constant 0 : index
    %c0_94 = arith.constant 0 : index
    %c1_95 = arith.constant 1 : index
    %c0_96 = arith.constant 0 : index
    %56 = vector.load %arg4[%c0_92, %c0_93, %c0_94, %c1_95, %c0_96] : memref<1x1x10x10x4xf32, #tpu.memory_space<vmem>>, vector<1x1x8x8x4xf32>
    %57 = vector.shape_cast %56 : vector<1x1x8x8x4xf32> to vector<8x8x4xf32>
    %58 = arith.maximumf %55, %57 : vector<8x8x4xf32>
    %c0_97 = arith.constant 0 : index
    %c0_98 = arith.constant 0 : index
    %c0_99 = arith.constant 0 : index
    %c2_100 = arith.constant 2 : index
    %c0_101 = arith.constant 0 : index
    %59 = vector.load %arg4[%c0_97, %c0_98, %c0_99, %c2_100, %c0_101] : memref<1x1x10x10x4xf32, #tpu.memory_space<vmem>>, vector<1x1x8x8x4xf32>
    %60 = vector.shape_cast %59 : vector<1x1x8x8x4xf32> to vector<8x8x4xf32>
    %61 = arith.maximumf %58, %60 : vector<8x8x4xf32>
    %c0_102 = arith.constant 0 : index
    %c0_103 = arith.constant 0 : index
    %c1_104 = arith.constant 1 : index
    %c0_105 = arith.constant 0 : index
    %c0_106 = arith.constant 0 : index
    %62 = vector.load %arg4[%c0_102, %c0_103, %c1_104, %c0_105, %c0_106] : memref<1x1x10x10x4xf32, #tpu.memory_space<vmem>>, vector<1x1x8x8x4xf32>
    %63 = vector.shape_cast %62 : vector<1x1x8x8x4xf32> to vector<8x8x4xf32>
    %64 = arith.maximumf %61, %63 : vector<8x8x4xf32>
    %c0_107 = arith.constant 0 : index
    %c0_108 = arith.constant 0 : index
    %c1_109 = arith.constant 1 : index
    %c1_110 = arith.constant 1 : index
    %c0_111 = arith.constant 0 : index
    %65 = vector.load %arg4[%c0_107, %c0_108, %c1_109, %c1_110, %c0_111] : memref<1x1x10x10x4xf32, #tpu.memory_space<vmem>>, vector<1x1x8x8x4xf32>
    %66 = vector.shape_cast %65 : vector<1x1x8x8x4xf32> to vector<8x8x4xf32>
    %67 = arith.maximumf %64, %66 : vector<8x8x4xf32>
    %c0_112 = arith.constant 0 : index
    %c0_113 = arith.constant 0 : index
    %c1_114 = arith.constant 1 : index
    %c2_115 = arith.constant 2 : index
    %c0_116 = arith.constant 0 : index
    %68 = vector.load %arg4[%c0_112, %c0_113, %c1_114, %c2_115, %c0_116] : memref<1x1x10x10x4xf32, #tpu.memory_space<vmem>>, vector<1x1x8x8x4xf32>
    %69 = vector.shape_cast %68 : vector<1x1x8x8x4xf32> to vector<8x8x4xf32>
    %70 = arith.maximumf %67, %69 : vector<8x8x4xf32>
    %c0_117 = arith.constant 0 : index
    %c0_118 = arith.constant 0 : index
    %c2_119 = arith.constant 2 : index
    %c0_120 = arith.constant 0 : index
    %c0_121 = arith.constant 0 : index
    %71 = vector.load %arg4[%c0_117, %c0_118, %c2_119, %c0_120, %c0_121] : memref<1x1x10x10x4xf32, #tpu.memory_space<vmem>>, vector<1x1x8x8x4xf32>
    %72 = vector.shape_cast %71 : vector<1x1x8x8x4xf32> to vector<8x8x4xf32>
    %73 = arith.maximumf %70, %72 : vector<8x8x4xf32>
    %c0_122 = arith.constant 0 : index
    %c0_123 = arith.constant 0 : index
    %c2_124 = arith.constant 2 : index
    %c1_125 = arith.constant 1 : index
    %c0_126 = arith.constant 0 : index
    %74 = vector.load %arg4[%c0_122, %c0_123, %c2_124, %c1_125, %c0_126] : memref<1x1x10x10x4xf32, #tpu.memory_space<vmem>>, vector<1x1x8x8x4xf32>
    %75 = vector.shape_cast %74 : vector<1x1x8x8x4xf32> to vector<8x8x4xf32>
    %76 = arith.maximumf %73, %75 : vector<8x8x4xf32>
    %c0_127 = arith.constant 0 : index
    %c0_128 = arith.constant 0 : index
    %c2_129 = arith.constant 2 : index
    %c2_130 = arith.constant 2 : index
    %c0_131 = arith.constant 0 : index
    %77 = vector.load %arg4[%c0_127, %c0_128, %c2_129, %c2_130, %c0_131] : memref<1x1x10x10x4xf32, #tpu.memory_space<vmem>>, vector<1x1x8x8x4xf32>
    %78 = vector.shape_cast %77 : vector<1x1x8x8x4xf32> to vector<8x8x4xf32>
    %79 = arith.maximumf %76, %78 : vector<8x8x4xf32>
    %80 = vector.shape_cast %79 : vector<8x8x4xf32> to vector<64x4xf32>
    %c0_132 = arith.constant 0 : index
    %c0_133 = arith.constant 0 : index
    %81 = vector.load %arg5[%c0_132, %c0_133] : memref<4x8xf32, #tpu.memory_space<vmem>>, vector<4x8xf32>
    %cst = arith.constant dense<0.000000e+00> : vector<64x8xf32>
    %82 = tpu.matmul %80, %81, %cst {dimension_numbers = #tpu.dot_dimension_numbers<[1], [0], [0], [1], [0, 0, 1, 1], [], []>} : vector<64x4xf32>, vector<4x8xf32>, vector<64x8xf32> -> vector<64x8xf32>
    %c0_134 = arith.constant 0 : index
    %c0_135 = arith.constant 0 : index
    %83 = vector.load %arg6[%c0_134, %c0_135] : memref<1x8xf32, #tpu.memory_space<vmem>>, vector<1x8xf32>
    %84 = vector.broadcast %83 : vector<1x8xf32> to vector<64x8xf32>
    %85 = arith.addf %82, %84 : vector<64x8xf32>
    %cst_136 = arith.constant 0.000000e+00 : f32
    %86 = vector.broadcast %cst_136 : f32 to vector<64x8xf32>
    %87 = arith.maximumf %85, %86 : vector<64x8xf32>
    %c0_137 = arith.constant 0 : index
    %c0_138 = arith.constant 0 : index
    %c0_139 = arith.constant 0 : index
    %c0_140 = arith.constant 0 : index
    %88 = vector.load %arg7[%c0_137, %c0_138, %c0_139, %c0_140] : memref<1x1x64x8xf32, #tpu.memory_space<vmem>>, vector<1x1x64x8xf32>
    %89 = vector.shape_cast %88 : vector<1x1x64x8xf32> to vector<64x8xf32>
    %90 = vector.shape_cast %87 : vector<64x8xf32> to vector<1x1x64x8xf32>
    tpu.vector_store %arg7[%c0_137, %c0_138, %c0_139, %c0_140], %90 {strides = array<i32>} : memref<1x1x64x8xf32, #tpu.memory_space<vmem>>, vector<1x1x64x8xf32>,
    return
  }
  func.func @transform_0(%arg0: i32, %arg1: i32) -> (i32, i32, i32, i32, i32) {
    %c0_i32 = arith.constant 0 : i32
    %0 = arith.addi %arg1, %c0_i32 : i32
    %c0_i32_0 = arith.constant 0 : i32
    %c0_i32_1 = arith.constant 0 : i32
    %c0_i32_2 = arith.constant 0 : i32
    %c0_i32_3 = arith.constant 0 : i32
    return %arg0, %0, %c0_i32_0, %c0_i32_1, %c0_i32_2 : i32, i32, i32, i32, i32
  }
  func.func @transform_1(%arg0: i32, %arg1: i32) -> (i32, i32, i32, i32, i32) {
    %c1_i32 = arith.constant 1 : i32
    %0 = arith.addi %arg1, %c1_i32 : i32
    %c0_i32 = arith.constant 0 : i32
    %c0_i32_0 = arith.constant 0 : i32
    %c0_i32_1 = arith.constant 0 : i32
    %c0_i32_2 = arith.constant 0 : i32
    return %arg0, %0, %c0_i32, %c0_i32_0, %c0_i32_1 : i32, i32, i32, i32, i32
  }
  func.func @transform_2(%arg0: i32, %arg1: i32) -> (i32, i32, i32, i32, i32) {
    %c2_i32 = arith.constant 2 : i32
    %0 = arith.addi %arg1, %c2_i32 : i32
    %c0_i32 = arith.constant 0 : i32
    %c0_i32_0 = arith.constant 0 : i32
    %c0_i32_1 = arith.constant 0 : i32
    %c0_i32_2 = arith.constant 0 : i32
    return %arg0, %0, %c0_i32, %c0_i32_0, %c0_i32_1 : i32, i32, i32, i32, i32
  }
  func.func @transform_3(%arg0: i32, %arg1: i32) -> (i32, i32) {
    %c0_i32 = arith.constant 0 : i32
    %c0_i32_0 = arith.constant 0 : i32
    %c0_i32_1 = arith.constant 0 : i32
    return %c0_i32, %c0_i32_0 : i32, i32
  }
  func.func @transform_4(%arg0: i32, %arg1: i32) -> (i32, i32) {
    %c0_i32 = arith.constant 0 : i32
    %c0_i32_0 = arith.constant 0 : i32
    %c0_i32_1 = arith.constant 0 : i32
    return %c0_i32, %c0_i32_0 : i32, i32
  }
  func.func @transform_5(%arg0: i32, %arg1: i32) -> (i32, i32, i32, i32) {
    %c0_i32 = arith.constant 0 : i32
    %c0_i32_0 = arith.constant 0 : i32
    %c0_i32_1 = arith.constant 0 : i32
    return %arg0, %arg1, %c0_i32, %c0_i32_0 : i32, i32, i32, i32
  }
}

</mosaic_0001>

<llo_original>
// kernel: inception_module.4
$region0: #{inception_module.4}
  #allocation0 [shape = 'u32[]', space=smem, size = 0x4, offset = 0x4, fixed_abs, tag = 'smem constant byte address 0x4 - core index']
  #allocation1 [shape = 'u32[144,128]{1,0:T(1,128)}', space=vmem, size = 0x12000, scoped, tag = 'internal scratch']
  %s0 = inlined_call_operand.vmem [shape: f32[512,4], index: 0, kind: input, shape index: {}]
  %s1 = inlined_call_operand.vmem [shape: f32[4,16], index: 1, kind: input, shape index: {}]
  %s2 = inlined_call_operand.vmem [shape: f32[1,16], index: 2, kind: input, shape index: {}]
  %s3 = inlined_call_operand.vmem [shape: f32[512,16], index: 3, kind: output, shape index: {}]
  %s4 = sld [smem:[#allocation0]]
  $region45: #{inception_module.4} parent=0
    _
  %s6 = ssub.s32 1, %s4
  %s7 = scalar_select 0, %s6, %s4
  loop: start=0, step=1, limit=4
  $region2: #{inception_module.4} parent=0 // loop_pre_header
    _
  $region3: #{inception_module.4} parent=0 // loop_header
    %s9 = sphi 0, %s13
    %p10 = scmp.ge.s32.totalorder %s9, 4
    %s19 = sphi 0, %s21
    %s22 = sphi 0, %s19
    %s23 = sphi 0, %s22
    %s39 = sphi 0, %s23
    %s43 = sphi 0, %s43
    %s45 = sphi 0, %s43
    %s46 = sphi 0, %s45
    %s60 = sphi 0, %s46
    %s64 = sphi 0, %s64
    %s66 = sphi 0, %s64
    %s67 = sphi 0, %s66
    %s81 = sphi 0, %s67
    %s87 = sphi 0, %s89
    %s90 = sphi 0, %s87
    %s91 = sphi 0, %s90
    %s107 = sphi 0, %s91
  $region4: #{inception_module.4} parent=0 // loop_header_branch
    %12 = sbr.rel (%p10) target = $region8
  $region5: #{inception_module.4} parent=0 // loop_body
    %s14 = ssub.s32 %s9, 1
    %s15 = ssub.s32 %s9, 2
    %s16 = sadd.s32 %s9, 1
    %s17 = ssub.s32 %s9, %s16
    %p18 = scmp.eq.s32.totalorder %s17, 0
    %s20 = sadd.s32 %s19, 1
    %s21 = scalar_select %p18, %s19, %s20
    %p24 = pneg %p18
    %p25 = scmp.eq.s32.totalorder %s9, 1
    %p26 = por %p24, %p25
    %p27 = scmp.ne.s32.totalorder %s19, %s22
    %p28 = scmp.eq.s32.totalorder %s9, 0
    %p29 = por %p27, %p28
    %p30 = scmp.ne.s32.totalorder %s19, %s22
    %p31 = scmp.eq.s32.totalorder %s14, 1
    %p32 = por %p30, %p31
    %p33 = scmp.ne.s32.totalorder %s22, %s23
    %p34 = scmp.eq.s32.totalorder %s14, 0
    %p35 = por %p33, %p34
    %p36 = scmp.ne.s32.totalorder %s22, %s23
    %p37 = scmp.eq.s32.totalorder %s15, 1
    %p38 = por %p36, %p37
    %p40 = scmp.ne.s32.totalorder %s23, %s39
    %p41 = scmp.eq.s32.totalorder %s15, 0
    %p42 = por %p40, %p41
    %s44 = sadd.s32 %s43, 1
    %p47 = scmp.eq.s32.totalorder %s9, 1
    %p48 = scmp.ne.s32.totalorder %s43, %s45
    %p49 = scmp.eq.s32.totalorder %s9, 0
    %p50 = por %p48, %p49
    %p51 = scmp.ne.s32.totalorder %s43, %s45
    %p52 = scmp.eq.s32.totalorder %s14, 1
    %p53 = por %p51, %p52
    %p54 = scmp.ne.s32.totalorder %s45, %s46
    %p55 = scmp.eq.s32.totalorder %s14, 0
    %p56 = por %p54, %p55
    %p57 = scmp.ne.s32.totalorder %s45, %s46
    %p58 = scmp.eq.s32.totalorder %s15, 1
    %p59 = por %p57, %p58
    %p61 = scmp.ne.s32.totalorder %s46, %s60
    %p62 = scmp.eq.s32.totalorder %s15, 0
    %p63 = por %p61, %p62
    %s65 = sadd.s32 %s64, 1
    %p68 = scmp.eq.s32.totalorder %s9, 1
    %p69 = scmp.ne.s32.totalorder %s64, %s66
    %p70 = scmp.eq.s32.totalorder %s9, 0
    %p71 = por %p69, %p70
    %p72 = scmp.ne.s32.totalorder %s64, %s66
    %p73 = scmp.eq.s32.totalorder %s14, 1
    %p74 = por %p72, %p73
    %p75 = scmp.ne.s32.totalorder %s66, %s67
    %p76 = scmp.eq.s32.totalorder %s14, 0
    %p77 = por %p75, %p76
    %p78 = scmp.ne.s32.totalorder %s66, %s67
    %p79 = scmp.eq.s32.totalorder %s15, 1
    %p80 = por %p78, %p79
    %p82 = scmp.ne.s32.totalorder %s67, %s81
    %p83 = scmp.eq.s32.totalorder %s15, 0
    %p84 = por %p82, %p83
    %s85 = ssub.s32 %s9, %s16
    %p86 = scmp.eq.s32.totalorder %s85, 0
    %s88 = sadd.s32 %s87, 1
    %s89 = scalar_select %p86, %s87, %s88
    %p92 = pneg %p86
    %p93 = scmp.eq.s32.totalorder %s9, 1
    %p94 = por %p92, %p93
    %p95 = scmp.ne.s32.totalorder %s87, %s90
    %p96 = scmp.eq.s32.totalorder %s9, 0
    %p97 = por %p95, %p96
    %p98 = scmp.ne.s32.totalorder %s87, %s90
    %p99 = scmp.eq.s32.totalorder %s14, 1
    %p100 = por %p98, %p99
    %p101 = scmp.ne.s32.totalorder %s90, %s91
    %p102 = scmp.eq.s32.totalorder %s14, 0
    %p103 = por %p101, %p102
    %p104 = scmp.ne.s32.totalorder %s90, %s91
    %p105 = scmp.eq.s32.totalorder %s15, 1
    %p106 = por %p104, %p105
    %p108 = scmp.ne.s32.totalorder %s91, %s107
    %p109 = scmp.eq.s32.totalorder %s15, 0
    %p110 = por %p108, %p109
    %p111 = scmp.le.s32.totalorder 1, %s9
    %p112 = scmp.lt.s32.totalorder %s9, 3
    %p113 = pnand %p111, %p112
    %p114 = pneg %p113
    // Predicated region
    $region9: #{inception_module.4} parent=5 // pred_check
      _
    $region10: #{inception_module.4} parent=5 // pred_check_branch
      %116 = sbr.rel (%p113) target = $region12
    $region11: #{inception_module.4} parent=5 // pred_region
      %s117 = ssub.s32 %s9, 1
      // Predicated region
      $region13: #{inception_module.4} parent=11 // pred_check
        %p118 = pneg %p56
      $region14: #{inception_module.4} parent=11 // pred_check_branch
        %120 = sbr.rel (%p118) target = $region16
      $region15: #{inception_module.4} parent=11 // pred_region
        _
      $region16: #{inception_module.4} parent=11 // pred_fallthru
        _
      // Predicated region
      $region17: #{inception_module.4} parent=11 // pred_check
        %p121 = pneg %p77
      $region18: #{inception_module.4} parent=11 // pred_check_branch
        %123 = sbr.rel (%p121) target = $region20
      $region19: #{inception_module.4} parent=11 // pred_region
        _
      $region20: #{inception_module.4} parent=11 // pred_fallthru
        _
    $region12: #{inception_module.4} parent=5 // pred_fallthru
      _
    %p124 = scmp.lt.s32.totalorder %s9, 2
    // Predicated region
    $region21: #{inception_module.4} parent=5 // pred_check
      %p125 = pneg %p124
    $region22: #{inception_module.4} parent=5 // pred_check_branch
      %127 = sbr.rel (%p125) target = $region24
    $region23: #{inception_module.4} parent=5 // pred_region
      // Predicated region
      $region25: #{inception_module.4} parent=23 // pred_check
        %p128 = pneg %p29
      $region26: #{inception_module.4} parent=23 // pred_check_branch
        %130 = sbr.rel (%p128) target = $region28
      $region27: #{inception_module.4} parent=23 // pred_region
        %s131 = smul.u32 32, %s9
        %p132 = scmp.lt.s32.totalorder %s131, 63
        %s133 = scalar_select %p132, %s131, 63
        %s134 = smul.addr %s133, 8
        %s135 = scalar_lea.vmem %s0, %s134
        %s136 = smul.u32 32, %s9
      $region28: #{inception_module.4} parent=23 // pred_fallthru
        _
    $region24: #{inception_module.4} parent=5 // pred_fallthru
      _
    %p137 = scmp.le.s32.totalorder 1, %s9
    %p138 = scmp.lt.s32.totalorder %s9, 3
    %p139 = pnand %p137, %p138
    %p140 = pneg %p139
    // Predicated region
    $region29: #{inception_module.4} parent=5 // pred_check
      _
    $region30: #{inception_module.4} parent=5 // pred_check_branch
      %142 = sbr.rel (%p139) target = $region32
    $region31: #{inception_module.4} parent=5 // pred_region
      %s143 = ssub.s32 %s9, 1
      %s144 = smul.u32 32, %s14
      %p145 = scmp.lt.s32.totalorder %s144, 63
      %s146 = scalar_select %p145, %s144, 63
      %s147 = smul.addr %s146, 8
      %s148 = scalar_lea.vmem %s0, %s147
      %p149 = pneg %p35
      %p150 = pneg %p32
      %p151 = pneg %p56
      %p152 = pneg %p53
      %p153 = pneg %p77
      %p154 = pneg %p74
      %p155 = pneg %p103
      %p156 = pneg %p100
      %s157 = smul.u32 32, %s14
      %p158 = scmp.lt.s32.totalorder %s157, 63
      %s159 = scalar_select %p158, %s157, 63
      %s160 = smul.addr %s159, 8
      %s161 = scalar_lea.vmem %s3, %s160
      %s162 = smul.u32 32, %s14
      %p163 = scmp.lt.s32.totalorder %s162, 63
      %s164 = scalar_select %p163, %s162, 63
      %s165 = smul.addr %s164, 8
      %s166 = scalar_lea.vmem %s0, %s165
      %s167 = smul.u32 32, %s14
      %s168 = smul.u32 32, %s14
      %p169 = scmp.lt.s32.totalorder %s168, 63
      %s170 = scalar_select %p169, %s168, 63
      %s171 = smul.addr %s170, 8
      %s172 = scalar_lea.vmem %s3, %s171
      %s173 = smul.u32 32, %s14
      %v174 = vld [vmem:[%s166] sm:$0xff]
      %v175 = vld [vmem:[%s166 + $0x8] sm:$0xff]
      %v176 = vld [vmem:[%s166 + $0x10] sm:$0xff]
      %v177 = vld [vmem:[%s166 + $0x18] sm:$0xff]
      %v178 = vld [vmem:[%s166 + $0x20] sm:$0xff]
      %v179 = vld [vmem:[%s166 + $0x28] sm:$0xff]
      %v180 = vld [vmem:[%s166 + $0x30] sm:$0xff]
      %v181 = vld [vmem:[%s166 + $0x38] sm:$0xff]
      %v182 = vld [vmem:[%s166 + $0x40] sm:$0xff]
      %v183 = vld [vmem:[%s166 + $0x48] sm:$0xff]
      %v184 = vld [vmem:[%s166 + $0x50] sm:$0xff]
      %v185 = vld [vmem:[%s166 + $0x58] sm:$0xff]
      %v186 = vld [vmem:[%s166 + $0x60] sm:$0xff]
      %v187 = vld [vmem:[%s166 + $0x68] sm:$0xff]
      %v188 = vld [vmem:[%s166 + $0x70] sm:$0xff]
      %v189 = vld [vmem:[%s166 + $0x78] sm:$0xff]
      %v190 = vld [vmem:[%s166 + $0x80] sm:$0xff]
      %v191 = vld [vmem:[%s166 + $0x88] sm:$0xff]
      %v192 = vld [vmem:[%s166 + $0x90] sm:$0xff]
      %v193 = vld [vmem:[%s166 + $0x98] sm:$0xff]
      %v194 = vld [vmem:[%s166 + $0xa0] sm:$0xff]
      %v195 = vld [vmem:[%s166 + $0xa8] sm:$0xff]
      %v196 = vld [vmem:[%s166 + $0xb0] sm:$0xff]
      %v197 = vld [vmem:[%s166 + $0xb8] sm:$0xff]
      %v198 = vld [vmem:[%s166 + $0xc0] sm:$0xff]
      %v199 = vld [vmem:[%s166 + $0xc8] sm:$0xff]
      %v200 = vld [vmem:[%s166 + $0xd0] sm:$0xff]
      %v201 = vld [vmem:[%s166 + $0xd8] sm:$0xff]
      %v202 = vld [vmem:[%s166 + $0xe0] sm:$0xff]
      %v203 = vld [vmem:[%s166 + $0xe8] sm:$0xff]
      %v204 = vld [vmem:[%s166 + $0xf0] sm:$0xff]
      %v205 = vld [vmem:[%s166 + $0xf8] sm:$0xff]
      %v206 = vld [vmem:[%s1] sm:$0xf]
      %v207 = vld [vmem:[%s2] sm:$0x1]
      %v209 = vlaneseq
      %v210 = vshrl.u32 %v209, 7
      %v211 = vsub.s32 0, %v210
      %v212 = vrot.slane %v207, %v211
      %vm214 = vcmask 31744
      %v216 = vsel %vm214, %v174, 0
      %v219 = vsel %vm214, %v175, 0
      %v222 = vsel %vm214, %v176, 0
      %v225 = vsel %vm214, %v177, 0
      %v228 = vsel %vm214, %v178, 0
      %v231 = vsel %vm214, %v179, 0
      %v234 = vsel %vm214, %v180, 0
      %v237 = vsel %vm214, %v181, 0
      %v240 = vsel %vm214, %v182, 0
      %v243 = vsel %vm214, %v183, 0
      %v246 = vsel %vm214, %v184, 0
      %v249 = vsel %vm214, %v185, 0
      %v252 = vsel %vm214, %v186, 0
      %v255 = vsel %vm214, %v187, 0
      %v258 = vsel %vm214, %v188, 0
      %v261 = vsel %vm214, %v189, 0
      %v264 = vsel %vm214, %v190, 0
      %v267 = vsel %vm214, %v191, 0
      %v270 = vsel %vm214, %v192, 0
      %v273 = vsel %vm214, %v193, 0
      %v276 = vsel %vm214, %v194, 0
      %v279 = vsel %vm214, %v195, 0
      %v282 = vsel %vm214, %v196, 0
      %v285 = vsel %vm214, %v197, 0
      %v288 = vsel %vm214, %v198, 0
      %v291 = vsel %vm214, %v199, 0
      %v294 = vsel %vm214, %v200, 0
      %v297 = vsel %vm214, %v201, 0
      %v300 = vsel %vm214, %v202, 0
      %v303 = vsel %vm214, %v203, 0
      %v306 = vsel %vm214, %v204, 0
      %v309 = vsel %vm214, %v205, 0
      %vm311 = vcmask 1043456
      %v313 = vsel %vm311, %v206, 0
      %315 = vmatprep.subr.mxu0 0.0
      %316 = vmatpush1.msra.mxu0 0.0
      %317 = vmatprep.subr.mxu0 0.0
      %318 = vmatpush1.msra.mxu0 0.0
      %319 = vmatprep.subr.mxu0 0.0
      %320 = vmatpush1.msra.mxu0 0.0
      %321 = vmatprep.subr.mxu0 0.0
      %322 = vmatpush1.msra.mxu0 0.0
      %323 = vmatprep.subr.mxu0 0.0
      %324 = vmatpush1.msra.mxu0 0.0
      %325 = vmatprep.subr.mxu0 0.0
      %326 = vmatpush1.msra.mxu0 0.0
      %327 = vmatprep.subr.mxu0 0.0
      %328 = vmatpush1.msra.mxu0 0.0
      %329 = vmatprep.subr.mxu0 0.0
      %330 = vmatpush1.msra.mxu0 0.0
      %331 = vmatprep.subr.mxu0 0.0
      %332 = vmatpush1.msra.mxu0 0.0
      %333 = vmatprep.subr.mxu0 0.0
      %334 = vmatpush1.msra.mxu0 0.0
      %335 = vmatprep.subr.mxu0 0.0
      %336 = vmatpush1.msra.mxu0 0.0
      %337 = vmatprep.subr.mxu0 0.0
      %338 = vmatpush1.msra.mxu0 0.0
      %339 = vmatprep.subr.mxu0 0.0
      %340 = vmatpush1.msra.mxu0 0.0
      %341 = vmatprep.subr.mxu0 0.0
      %342 = vmatpush1.msra.mxu0 0.0
      %343 = vmatprep.subr.mxu0 0.0
      %344 = vmatpush1.msra.mxu0 0.0
      %345 = vmatprep.subr.mxu0 0.0
      %346 = vmatpush1.msra.mxu0 %v313
      %347 = vmatprep.subr.mxu0 0.0
      %348 = vmatpush2.msra.mxu0 0.0
      %349 = vmatprep.subr.mxu0 0.0
      %350 = vmatpush2.msra.mxu0 0.0
      %351 = vmatprep.subr.mxu0 0.0
      %352 = vmatpush2.msra.mxu0 0.0
      %353 = vmatprep.subr.mxu0 0.0
      %354 = vmatpush2.msra.mxu0 0.0
      %355 = vmatprep.subr.mxu0 0.0
      %356 = vmatpush2.msra.mxu0 0.0
      %357 = vmatprep.subr.mxu0 0.0
      %358 = vmatpush2.msra.mxu0 0.0
      %359 = vmatprep.subr.mxu0 0.0
      %360 = vmatpush2.msra.mxu0 0.0
      %361 = vmatprep.subr.mxu0 0.0
      %362 = vmatpush2.msra.mxu0 0.0
      %363 = vmatprep.subr.mxu0 0.0
      %364 = vmatpush2.msra.mxu0 0.0
      %365 = vmatprep.subr.mxu0 0.0
      %366 = vmatpush2.msra.mxu0 0.0
      %367 = vmatprep.subr.mxu0 0.0
      %368 = vmatpush2.msra.mxu0 0.0
      %369 = vmatprep.subr.mxu0 0.0
      %370 = vmatpush2.msra.mxu0 0.0
      %371 = vmatprep.subr.mxu0 0.0
      %372 = vmatpush2.msra.mxu0 0.0
      %373 = vmatprep.subr.mxu0 0.0
      %374 = vmatpush2.msra.mxu0 0.0
      %375 = vmatprep.subr.mxu0 0.0
      %376 = vmatpush2.msra.mxu0 0.0
      %377 = vmatprep.subr.mxu0 0.0
      %378 = vmatpush2.msra.mxu0 0.0
      %379 = vmatprep.mubr.f32.mxu0 0.0
      %380 = vmatmul.mubr.f32.gmra.mxu0 %v216
      %v381 = vpop.f32.mrf.mxu0
      %v382 = vadd.f32 %v212, %v381
      %v383 = vpop.f32.mrf.mxu0
      %384 = vmatprep.mubr.f32.mxu0 0.0
      %385 = vmatmul.mubr.f32.gmra.mxu0 %v219
      %v386 = vpop.f32.mrf.mxu0
      %v387 = vadd.f32 %v212, %v386
      %v388 = vpop.f32.mrf.mxu0
      %389 = vmatprep.mubr.f32.mxu0 0.0
      %390 = vmatmul.mubr.f32.gmra.mxu0 %v222
      %v391 = vpop.f32.mrf.mxu0
      %v392 = vadd.f32 %v212, %v391
      %v393 = vpop.f32.mrf.mxu0
      %394 = vmatprep.mubr.f32.mxu0 0.0
      %395 = vmatmul.mubr.f32.gmra.mxu0 %v225
      %v396 = vpop.f32.mrf.mxu0
      %v397 = vadd.f32 %v212, %v396
      %v398 = vpop.f32.mrf.mxu0
      %399 = vmatprep.mubr.f32.mxu0 0.0
      %400 = vmatmul.mubr.f32.gmra.mxu0 %v228
      %v401 = vpop.f32.mrf.mxu0
      %v402 = vadd.f32 %v212, %v401
      %v403 = vpop.f32.mrf.mxu0
      %404 = vmatprep.mubr.f32.mxu0 0.0
      %405 = vmatmul.mubr.f32.gmra.mxu0 %v231
      %v406 = vpop.f32.mrf.mxu0
      %v407 = vadd.f32 %v212, %v406
      %v408 = vpop.f32.mrf.mxu0
      %409 = vmatprep.mubr.f32.mxu0 0.0
      %410 = vmatmul.mubr.f32.gmra.mxu0 %v234
      %v411 = vpop.f32.mrf.mxu0
      %v412 = vadd.f32 %v212, %v411
      %v413 = vpop.f32.mrf.mxu0
      %414 = vmatprep.mubr.f32.mxu0 0.0
      %415 = vmatmul.mubr.f32.gmra.mxu0 %v237
      %v416 = vpop.f32.mrf.mxu0
      %v417 = vadd.f32 %v212, %v416
      %v418 = vpop.f32.mrf.mxu0
      %419 = vmatprep.mubr.f32.mxu0 0.0
      %420 = vmatmul.mubr.f32.gmra.mxu0 %v240
      %v421 = vpop.f32.mrf.mxu0
      %v422 = vadd.f32 %v212, %v421
      %v423 = vpop.f32.mrf.mxu0
      %424 = vmatprep.mubr.f32.mxu0 0.0
      %425 = vmatmul.mubr.f32.gmra.mxu0 %v243
      %v426 = vpop.f32.mrf.mxu0
      %v427 = vadd.f32 %v212, %v426
      %v428 = vpop.f32.mrf.mxu0
      %429 = vmatprep.mubr.f32.mxu0 0.0
      %430 = vmatmul.mubr.f32.gmra.mxu0 %v246
      %v431 = vpop.f32.mrf.mxu0
      %v432 = vadd.f32 %v212, %v431
      %v433 = vpop.f32.mrf.mxu0
      %434 = vmatprep.mubr.f32.mxu0 0.0
      %435 = vmatmul.mubr.f32.gmra.mxu0 %v249
      %v436 = vpop.f32.mrf.mxu0
      %v437 = vadd.f32 %v212, %v436
      %v438 = vpop.f32.mrf.mxu0
      %439 = vmatprep.mubr.f32.mxu0 0.0
      %440 = vmatmul.mubr.f32.gmra.mxu0 %v252
      %v441 = vpop.f32.mrf.mxu0
      %v442 = vadd.f32 %v212, %v441
      %v443 = vpop.f32.mrf.mxu0
      %444 = vmatprep.mubr.f32.mxu0 0.0
      %445 = vmatmul.mubr.f32.gmra.mxu0 %v255
      %v446 = vpop.f32.mrf.mxu0
      %v447 = vadd.f32 %v212, %v446
      %v448 = vpop.f32.mrf.mxu0
      %449 = vmatprep.mubr.f32.mxu0 0.0
      %450 = vmatmul.mubr.f32.gmra.mxu0 %v258
      %v451 = vpop.f32.mrf.mxu0
      %v452 = vadd.f32 %v212, %v451
      %v453 = vpop.f32.mrf.mxu0
      %454 = vmatprep.mubr.f32.mxu0 0.0
      %455 = vmatmul.mubr.f32.gmra.mxu0 %v261
      %v456 = vpop.f32.mrf.mxu0
      %v457 = vadd.f32 %v212, %v456
      %v458 = vpop.f32.mrf.mxu0
      %459 = vmatprep.mubr.f32.mxu0 0.0
      %460 = vmatmul.mubr.f32.gmra.mxu0 %v264
      %v461 = vpop.f32.mrf.mxu0
      %v462 = vadd.f32 %v212, %v461
      %v463 = vpop.f32.mrf.mxu0
      %464 = vmatprep.mubr.f32.mxu0 0.0
      %465 = vmatmul.mubr.f32.gmra.mxu0 %v267
      %v466 = vpop.f32.mrf.mxu0
      %v467 = vadd.f32 %v212, %v466
      %v468 = vpop.f32.mrf.mxu0
      %469 = vmatprep.mubr.f32.mxu0 0.0
      %470 = vmatmul.mubr.f32.gmra.mxu0 %v270
      %v471 = vpop.f32.mrf.mxu0
      %v472 = vadd.f32 %v212, %v471
      %v473 = vpop.f32.mrf.mxu0
      %474 = vmatprep.mubr.f32.mxu0 0.0
      %475 = vmatmul.mubr.f32.gmra.mxu0 %v273
      %v476 = vpop.f32.mrf.mxu0
      %v477 = vadd.f32 %v212, %v476
      %v478 = vpop.f32.mrf.mxu0
      %479 = vmatprep.mubr.f32.mxu0 0.0
      %480 = vmatmul.mubr.f32.gmra.mxu0 %v276
      %v481 = vpop.f32.mrf.mxu0
      %v482 = vadd.f32 %v212, %v481
      %v483 = vpop.f32.mrf.mxu0
      %484 = vmatprep.mubr.f32.mxu0 0.0
      %485 = vmatmul.mubr.f32.gmra.mxu0 %v279
      %v486 = vpop.f32.mrf.mxu0
      %v487 = vadd.f32 %v212, %v486
      %v488 = vpop.f32.mrf.mxu0
      %489 = vmatprep.mubr.f32.mxu0 0.0
      %490 = vmatmul.mubr.f32.gmra.mxu0 %v282
      %v491 = vpop.f32.mrf.mxu0
      %v492 = vadd.f32 %v212, %v491
      %v493 = vpop.f32.mrf.mxu0
      %494 = vmatprep.mubr.f32.mxu0 0.0
      %495 = vmatmul.mubr.f32.gmra.mxu0 %v285
      %v496 = vpop.f32.mrf.mxu0
      %v497 = vadd.f32 %v212, %v496
      %v498 = vpop.f32.mrf.mxu0
      %499 = vmatprep.mubr.f32.mxu0 0.0
      %500 = vmatmul.mubr.f32.gmra.mxu0 %v288
      %v501 = vpop.f32.mrf.mxu0
      %v502 = vadd.f32 %v212, %v501
      %v503 = vpop.f32.mrf.mxu0
      %504 = vmatprep.mubr.f32.mxu0 0.0
      %505 = vmatmul.mubr.f32.gmra.mxu0 %v291
      %v506 = vpop.f32.mrf.mxu0
      %v507 = vadd.f32 %v212, %v506
      %v508 = vpop.f32.mrf.mxu0
      %509 = vmatprep.mubr.f32.mxu0 0.0
      %510 = vmatmul.mubr.f32.gmra.mxu0 %v294
      %v511 = vpop.f32.mrf.mxu0
      %v512 = vadd.f32 %v212, %v511
      %v513 = vpop.f32.mrf.mxu0
      %514 = vmatprep.mubr.f32.mxu0 0.0
      %515 = vmatmul.mubr.f32.gmra.mxu0 %v297
      %v516 = vpop.f32.mrf.mxu0
      %v517 = vadd.f32 %v212, %v516
      %v518 = vpop.f32.mrf.mxu0
      %519 = vmatprep.mubr.f32.mxu0 0.0
      %520 = vmatmul.mubr.f32.gmra.mxu0 %v300
      %v521 = vpop.f32.mrf.mxu0
      %v522 = vadd.f32 %v212, %v521
      %v523 = vpop.f32.mrf.mxu0
      %524 = vmatprep.mubr.f32.mxu0 0.0
      %525 = vmatmul.mubr.f32.gmra.mxu0 %v303
      %v526 = vpop.f32.mrf.mxu0
      %v527 = vadd.f32 %v212, %v526
      %v528 = vpop.f32.mrf.mxu0
      %529 = vmatprep.mubr.f32.mxu0 0.0
      %530 = vmatmul.mubr.f32.gmra.mxu0 %v306
      %v531 = vpop.f32.mrf.mxu0
      %v532 = vadd.f32 %v212, %v531
      %v533 = vpop.f32.mrf.mxu0
      %534 = vmatprep.mubr.f32.mxu0 0.0
      %535 = vmatmul.mubr.f32.gmra.mxu0 %v309
      %v536 = vpop.f32.mrf.mxu0
      %v537 = vadd.f32 %v212, %v536
      %v538 = vpop.f32.mrf.mxu0
      %539 = vdwg.mxu0
      %v540 = vmax.f32 %v382, 0.0
      %v541 = vmax.f32 %v387, 0.0
      %v542 = vmax.f32 %v392, 0.0
      %v543 = vmax.f32 %v397, 0.0
      %v544 = vmax.f32 %v402, 0.0
      %v545 = vmax.f32 %v407, 0.0
      %v546 = vmax.f32 %v412, 0.0
      %v547 = vmax.f32 %v417, 0.0
      %v548 = vmax.f32 %v422, 0.0
      %v549 = vmax.f32 %v427, 0.0
      %v550 = vmax.f32 %v432, 0.0
      %v551 = vmax.f32 %v437, 0.0
      %v552 = vmax.f32 %v442, 0.0
      %v553 = vmax.f32 %v447, 0.0
      %v554 = vmax.f32 %v452, 0.0
      %v555 = vmax.f32 %v457, 0.0
      %v556 = vmax.f32 %v462, 0.0
      %v557 = vmax.f32 %v467, 0.0
      %v558 = vmax.f32 %v472, 0.0
      %v559 = vmax.f32 %v477, 0.0
      %v560 = vmax.f32 %v482, 0.0
      %v561 = vmax.f32 %v487, 0.0
      %v562 = vmax.f32 %v492, 0.0
      %v563 = vmax.f32 %v497, 0.0
      %v564 = vmax.f32 %v502, 0.0
      %v565 = vmax.f32 %v507, 0.0
      %v566 = vmax.f32 %v512, 0.0
      %v567 = vmax.f32 %v517, 0.0
      %v568 = vmax.f32 %v522, 0.0
      %v569 = vmax.f32 %v527, 0.0
      %v570 = vmax.f32 %v532, 0.0
      %v571 = vmax.f32 %v537, 0.0
      %vm572 = vcmask 130048
      %573 = vst.msk [vmem:[%s172] sm:$0xff] %vm572, %v540
      %574 = vst.msk [vmem:[%s172 + $0x8] sm:$0xff] %vm572, %v541
      %575 = vst.msk [vmem:[%s172 + $0x10] sm:$0xff] %vm572, %v542
      %576 = vst.msk [vmem:[%s172 + $0x18] sm:$0xff] %vm572, %v543
      %577 = vst.msk [vmem:[%s172 + $0x20] sm:$0xff] %vm572, %v544
      %578 = vst.msk [vmem:[%s172 + $0x28] sm:$0xff] %vm572, %v545
      %579 = vst.msk [vmem:[%s172 + $0x30] sm:$0xff] %vm572, %v546
      %580 = vst.msk [vmem:[%s172 + $0x38] sm:$0xff] %vm572, %v547
      %581 = vst.msk [vmem:[%s172 + $0x40] sm:$0xff] %vm572, %v548
      %582 = vst.msk [vmem:[%s172 + $0x48] sm:$0xff] %vm572, %v549
      %583 = vst.msk [vmem:[%s172 + $0x50] sm:$0xff] %vm572, %v550
      %584 = vst.msk [vmem:[%s172 + $0x58] sm:$0xff] %vm572, %v551
      %585 = vst.msk [vmem:[%s172 + $0x60] sm:$0xff] %vm572, %v552
      %586 = vst.msk [vmem:[%s172 + $0x68] sm:$0xff] %vm572, %v553
      %587 = vst.msk [vmem:[%s172 + $0x70] sm:$0xff] %vm572, %v554
      %588 = vst.msk [vmem:[%s172 + $0x78] sm:$0xff] %vm572, %v555
      %589 = vst.msk [vmem:[%s172 + $0x80] sm:$0xff] %vm572, %v556
      %590 = vst.msk [vmem:[%s172 + $0x88] sm:$0xff] %vm572, %v557
      %591 = vst.msk [vmem:[%s172 + $0x90] sm:$0xff] %vm572, %v558
      %592 = vst.msk [vmem:[%s172 + $0x98] sm:$0xff] %vm572, %v559
      %593 = vst.msk [vmem:[%s172 + $0xa0] sm:$0xff] %vm572, %v560
      %594 = vst.msk [vmem:[%s172 + $0xa8] sm:$0xff] %vm572, %v561
      %595 = vst.msk [vmem:[%s172 + $0xb0] sm:$0xff] %vm572, %v562
      %596 = vst.msk [vmem:[%s172 + $0xb8] sm:$0xff] %vm572, %v563
      %597 = vst.msk [vmem:[%s172 + $0xc0] sm:$0xff] %vm572, %v564
      %598 = vst.msk [vmem:[%s172 + $0xc8] sm:$0xff] %vm572, %v565
      %599 = vst.msk [vmem:[%s172 + $0xd0] sm:$0xff] %vm572, %v566
      %600 = vst.msk [vmem:[%s172 + $0xd8] sm:$0xff] %vm572, %v567
      %601 = vst.msk [vmem:[%s172 + $0xe0] sm:$0xff] %vm572, %v568
      %602 = vst.msk [vmem:[%s172 + $0xe8] sm:$0xff] %vm572, %v569
      %603 = vst.msk [vmem:[%s172 + $0xf0] sm:$0xff] %vm572, %v570
      %604 = vst.msk [vmem:[%s172 + $0xf8] sm:$0xff] %vm572, %v571
      %s605 = smul.u32 32, %s14
      %p606 = scmp.lt.s32.totalorder %s605, 63
      %s607 = scalar_select %p606, %s605, 63
      %s608 = smul.addr %s607, 8
      %s609 = scalar_lea.vmem %s3, %s608
      // Predicated region
      $region33: #{inception_module.4} parent=31 // pred_check
        %p610 = pneg %p100
      $region34: #{inception_module.4} parent=31 // pred_check_branch
        %612 = sbr.rel (%p610) target = $region36
      $region35: #{inception_module.4} parent=31 // pred_region
        %s613 = smul.u32 32, %s14
      $region36: #{inception_module.4} parent=31 // pred_fallthru
        _
    $region32: #{inception_module.4} parent=5 // pred_fallthru
      _
    %p614 = scmp.le.s32.totalorder 2, %s9
    // Predicated region
    $region37: #{inception_module.4} parent=5 // pred_check
      %p615 = pneg %p614
    $region38: #{inception_module.4} parent=5 // pred_check_branch
      %617 = sbr.rel (%p615) target = $region40
    $region39: #{inception_module.4} parent=5 // pred_region
      %s618 = ssub.s32 %s9, 2
      // Predicated region
      $region41: #{inception_module.4} parent=39 // pred_check
        %p619 = pneg %p106
      $region42: #{inception_module.4} parent=39 // pred_check_branch
        %621 = sbr.rel (%p619) target = $region44
      $region43: #{inception_module.4} parent=39 // pred_region
        %s622 = smul.u32 32, %s15
        %p623 = scmp.lt.s32.totalorder %s622, 63
        %s624 = scalar_select %p623, %s622, 63
        %s625 = smul.addr %s624, 8
        %s626 = scalar_lea.vmem %s3, %s625
      $region44: #{inception_module.4} parent=39 // pred_fallthru
        _
    $region40: #{inception_module.4} parent=5 // pred_fallthru
      _
  $region6: #{inception_module.4} parent=0 // loop_footer
    %s13 = sadd.s32 1, %s9
  $region7: #{inception_module.4} parent=0 // loop_footer_branch
    %8 = sbr.rel target = $region3
  $region8: #{inception_module.4} parent=0 // loop_exit
    _

// kernel: inception_module.7
$region0: #{inception_module.7}
  #allocation0 [shape = 'u32[]', space=smem, size = 0x4, offset = 0x4, fixed_abs, tag = 'smem constant byte address 0x4 - core index']
  #allocation1 [shape = 'u32[144,128]{1,0:T(1,128)}', space=vmem, size = 0x12000, scoped, tag = 'internal scratch']
  %s0 = inlined_call_operand.vmem [shape: f32[2,6,10,10,4], index: 0, kind: input, shape index: {}, may-alias: {0,1,2}]
  %s1 = inlined_call_operand.vmem [shape: f32[2,6,10,10,4], index: 1, kind: input, shape index: {}, may-alias: {0,1,2}]
  %s2 = inlined_call_operand.vmem [shape: f32[2,6,10,10,4], index: 2, kind: input, shape index: {}, may-alias: {0,1,2}]
  %s3 = inlined_call_operand.vmem [shape: f32[4,8], index: 3, kind: input, shape index: {}]
  %s4 = inlined_call_operand.vmem [shape: f32[1,8], index: 4, kind: input, shape index: {}]
  %s5 = inlined_call_operand.vmem [shape: f32[2,4,64,8], index: 5, kind: output, shape index: {}]
  %s6 = sld [smem:[#allocation0]]
  $region53: #{inception_module.7} parent=0
    _
  %s8 = ssub.s32 1, %s6
  %s9 = scalar_select 0, %s8, %s6
  loop: start=0, step=1, limit=10
  $region2: #{inception_module.7} parent=0 // loop_pre_header
    _
  $region3: #{inception_module.7} parent=0 // loop_header
    %s11 = sphi 0, %s15
    %p12 = scmp.ge.s32.totalorder %s11, 10
    %s18 = sphi 0, %s30
    %s19 = sphi 0, %s26
    %s20 = sphi 0, %s18
    %s21 = sphi 0, %s19
    %s22 = sphi 0, %s20
    %s23 = sphi 0, %s21
    %s35 = sphi 0, %s37
    %s38 = sphi 0, %s35
    %s39 = sphi 0, %s38
    %s55 = sphi 0, %s39
    %s65 = sphi 0, %s67
    %s68 = sphi 0, %s65
    %s69 = sphi 0, %s68
    %s85 = sphi 0, %s69
    %s95 = sphi 0, %s97
    %s98 = sphi 0, %s95
    %s99 = sphi 0, %s98
    %s115 = sphi 0, %s99
    %s119 = sphi 0, %s119
    %s121 = sphi 0, %s119
    %s122 = sphi 0, %s121
    %s136 = sphi 0, %s122
    %s140 = sphi 0, %s140
    %s142 = sphi 0, %s140
    %s143 = sphi 0, %s142
    %s157 = sphi 0, %s143
    %s165 = sphi 0, %s167
    %s168 = sphi 0, %s165
    %s169 = sphi 0, %s168
    %s185 = sphi 0, %s169
  $region4: #{inception_module.7} parent=0 // loop_header_branch
    %14 = sbr.rel (%p12) target = $region8
  $region5: #{inception_module.7} parent=0 // loop_body
    %s16 = ssub.s32 %s11, 1
    %s17 = ssub.s32 %s11, 2
    %s24 = sadd.s32 1, %s19
    %p25 = scmp.ge.s32.totalorder %s24, 4
    %s26 = scalar_select %p25, 0, %s24
    %s27 = sadd.s32 1, %s18
    %s28 = scalar_select %p25, %s27, %s18
    %p29 = scmp.ge.s32.totalorder %s28, 2
    %s30 = scalar_select %p29, 0, %s28
    %s31 = ssub.s32 %s18, %s30
    %s32 = ssub.s32 %s19, %s26
    %s33 = sor.u32 %s31, %s32
    %p34 = scmp.eq.s32.totalorder %s33, 0
    %s36 = sadd.s32 %s35, 1
    %s37 = scalar_select %p34, %s35, %s36
    %p40 = pneg %p34
    %p41 = scmp.eq.s32.totalorder %s11, 7
    %p42 = por %p40, %p41
    %p43 = scmp.ne.s32.totalorder %s35, %s38
    %p44 = scmp.eq.s32.totalorder %s11, 0
    %p45 = por %p43, %p44
    %p46 = scmp.ne.s32.totalorder %s35, %s38
    %p47 = scmp.eq.s32.totalorder %s16, 7
    %p48 = por %p46, %p47
    %p49 = scmp.ne.s32.totalorder %s38, %s39
    %p50 = scmp.eq.s32.totalorder %s16, 0
    %p51 = por %p49, %p50
    %p52 = scmp.ne.s32.totalorder %s38, %s39
    %p53 = scmp.eq.s32.totalorder %s17, 7
    %p54 = por %p52, %p53
    %p56 = scmp.ne.s32.totalorder %s39, %s55
    %p57 = scmp.eq.s32.totalorder %s17, 0
    %p58 = por %p56, %p57
    %s59 = sadd.s32 %s19, 1
    %s60 = sadd.s32 %s26, 1
    %s61 = ssub.s32 %s18, %s30
    %s62 = ssub.s32 %s59, %s60
    %s63 = sor.u32 %s61, %s62
    %p64 = scmp.eq.s32.totalorder %s63, 0
    %s66 = sadd.s32 %s65, 1
    %s67 = scalar_select %p64, %s65, %s66
    %p70 = pneg %p64
    %p71 = scmp.eq.s32.totalorder %s11, 7
    %p72 = por %p70, %p71
    %p73 = scmp.ne.s32.totalorder %s65, %s68
    %p74 = scmp.eq.s32.totalorder %s11, 0
    %p75 = por %p73, %p74
    %p76 = scmp.ne.s32.totalorder %s65, %s68
    %p77 = scmp.eq.s32.totalorder %s16, 7
    %p78 = por %p76, %p77
    %p79 = scmp.ne.s32.totalorder %s68, %s69
    %p80 = scmp.eq.s32.totalorder %s16, 0
    %p81 = por %p79, %p80
    %p82 = scmp.ne.s32.totalorder %s68, %s69
    %p83 = scmp.eq.s32.totalorder %s17, 7
    %p84 = por %p82, %p83
    %p86 = scmp.ne.s32.totalorder %s69, %s85
    %p87 = scmp.eq.s32.totalorder %s17, 0
    %p88 = por %p86, %p87
    %s89 = sadd.s32 %s19, 2
    %s90 = sadd.s32 %s26, 2
    %s91 = ssub.s32 %s18, %s30
    %s92 = ssub.s32 %s89, %s90
    %s93 = sor.u32 %s91, %s92
    %p94 = scmp.eq.s32.totalorder %s93, 0
    %s96 = sadd.s32 %s95, 1
    %s97 = scalar_select %p94, %s95, %s96
    %p100 = pneg %p94
    %p101 = scmp.eq.s32.totalorder %s11, 7
    %p102 = por %p100, %p101
    %p103 = scmp.ne.s32.totalorder %s95, %s98
    %p104 = scmp.eq.s32.totalorder %s11, 0
    %p105 = por %p103, %p104
    %p106 = scmp.ne.s32.totalorder %s95, %s98
    %p107 = scmp.eq.s32.totalorder %s16, 7
    %p108 = por %p106, %p107
    %p109 = scmp.ne.s32.totalorder %s98, %s99
    %p110 = scmp.eq.s32.totalorder %s16, 0
    %p111 = por %p109, %p110
    %p112 = scmp.ne.s32.totalorder %s98, %s99
    %p113 = scmp.eq.s32.totalorder %s17, 7
    %p114 = por %p112, %p113
    %p116 = scmp.ne.s32.totalorder %s99, %s115
    %p117 = scmp.eq.s32.totalorder %s17, 0
    %p118 = por %p116, %p117
    %s120 = sadd.s32 %s119, 1
    %p123 = scmp.eq.s32.totalorder %s11, 7
    %p124 = scmp.ne.s32.totalorder %s119, %s121
    %p125 = scmp.eq.s32.totalorder %s11, 0
    %p126 = por %p124, %p125
    %p127 = scmp.ne.s32.totalorder %s119, %s121
    %p128 = scmp.eq.s32.totalorder %s16, 7
    %p129 = por %p127, %p128
    %p130 = scmp.ne.s32.totalorder %s121, %s122
    %p131 = scmp.eq.s32.totalorder %s16, 0
    %p132 = por %p130, %p131
    %p133 = scmp.ne.s32.totalorder %s121, %s122
    %p134 = scmp.eq.s32.totalorder %s17, 7
    %p135 = por %p133, %p134
    %p137 = scmp.ne.s32.totalorder %s122, %s136
    %p138 = scmp.eq.s32.totalorder %s17, 0
    %p139 = por %p137, %p138
    %s141 = sadd.s32 %s140, 1
    %p144 = scmp.eq.s32.totalorder %s11, 7
    %p145 = scmp.ne.s32.totalorder %s140, %s142
    %p146 = scmp.eq.s32.totalorder %s11, 0
    %p147 = por %p145, %p146
    %p148 = scmp.ne.s32.totalorder %s140, %s142
    %p149 = scmp.eq.s32.totalorder %s16, 7
    %p150 = por %p148, %p149
    %p151 = scmp.ne.s32.totalorder %s142, %s143
    %p152 = scmp.eq.s32.totalorder %s16, 0
    %p153 = por %p151, %p152
    %p154 = scmp.ne.s32.totalorder %s142, %s143
    %p155 = scmp.eq.s32.totalorder %s17, 7
    %p156 = por %p154, %p155
    %p158 = scmp.ne.s32.totalorder %s143, %s157
    %p159 = scmp.eq.s32.totalorder %s17, 0
    %p160 = por %p158, %p159
    %s161 = ssub.s32 %s18, %s30
    %s162 = ssub.s32 %s19, %s26
    %s163 = sor.u32 %s161, %s162
    %p164 = scmp.eq.s32.totalorder %s163, 0
    %s166 = sadd.s32 %s165, 1
    %s167 = scalar_select %p164, %s165, %s166
    %p170 = pneg %p164
    %p171 = scmp.eq.s32.totalorder %s11, 7
    %p172 = por %p170, %p171
    %p173 = scmp.ne.s32.totalorder %s165, %s168
    %p174 = scmp.eq.s32.totalorder %s11, 0
    %p175 = por %p173, %p174
    %p176 = scmp.ne.s32.totalorder %s165, %s168
    %p177 = scmp.eq.s32.totalorder %s16, 7
    %p178 = por %p176, %p177
    %p179 = scmp.ne.s32.totalorder %s168, %s169
    %p180 = scmp.eq.s32.totalorder %s16, 0
    %p181 = por %p179, %p180
    %p182 = scmp.ne.s32.totalorder %s168, %s169
    %p183 = scmp.eq.s32.totalorder %s17, 7
    %p184 = por %p182, %p183
    %p186 = scmp.ne.s32.totalorder %s169, %s185
    %p187 = scmp.eq.s32.totalorder %s17, 0
    %p188 = por %p186, %p187
    %p189 = scmp.le.s32.totalorder 1, %s11
    %p190 = scmp.lt.s32.totalorder %s11, 9
    %p191 = pnand %p189, %p190
    %p192 = pneg %p191
    // Predicated region
    $region9: #{inception_module.7} parent=5 // pred_check
      _
    $region10: #{inception_module.7} parent=5 // pred_check_branch
      %194 = sbr.rel (%p191) target = $region12
    $region11: #{inception_module.7} parent=5 // pred_region
      %s195 = ssub.s32 %s11, 1
      // Predicated region
      $region13: #{inception_module.7} parent=11 // pred_check
        %p196 = pneg %p132
      $region14: #{inception_module.7} parent=11 // pred_check_branch
        %198 = sbr.rel (%p196) target = $region16
      $region15: #{inception_module.7} parent=11 // pred_region
        _
      $region16: #{inception_module.7} parent=11 // pred_fallthru
        _
      // Predicated region
      $region17: #{inception_module.7} parent=11 // pred_check
        %p199 = pneg %p153
      $region18: #{inception_module.7} parent=11 // pred_check_branch
        %201 = sbr.rel (%p199) target = $region20
      $region19: #{inception_module.7} parent=11 // pred_region
        _
      $region20: #{inception_module.7} parent=11 // pred_fallthru
        _
    $region12: #{inception_module.7} parent=5 // pred_fallthru
      _
    %p202 = scmp.lt.s32.totalorder %s11, 8
    // Predicated region
    $region21: #{inception_module.7} parent=5 // pred_check
      %p203 = pneg %p202
    $region22: #{inception_module.7} parent=5 // pred_check_branch
      %205 = sbr.rel (%p203) target = $region24
    $region23: #{inception_module.7} parent=5 // pred_region
      // Predicated region
      $region25: #{inception_module.7} parent=23 // pred_check
        %p206 = pneg %p45
      $region26: #{inception_module.7} parent=23 // pred_check_branch
        %208 = sbr.rel (%p206) target = $region28
      $region27: #{inception_module.7} parent=23 // pred_region
        %p209 = scmp.lt.s32.totalorder %s18, 1
        %s210 = scalar_select %p209, %s18, 1
        %p211 = scmp.lt.s32.totalorder %s19, 5
        %s212 = scalar_select %p211, %s19, 5
        %s213 = smul.addr %s212, 20
        %s214 = smul.addr %s210, 120
        %s215 = sadd.s32 %s213, %s214
        %s216 = smul.addr %s215, 8
        %s217 = scalar_lea.vmem %s0, %s216
      $region28: #{inception_module.7} parent=23 // pred_fallthru
        _
      // Predicated region
      $region29: #{inception_module.7} parent=23 // pred_check
        %p218 = pneg %p75
      $region30: #{inception_module.7} parent=23 // pred_check_branch
        %220 = sbr.rel (%p218) target = $region32
      $region31: #{inception_module.7} parent=23 // pred_region
        %s221 = sadd.s32 %s19, 1
        %p222 = scmp.lt.s32.totalorder %s18, 1
        %s223 = scalar_select %p222, %s18, 1
        %p224 = scmp.lt.s32.totalorder %s221, 5
        %s225 = scalar_select %p224, %s221, 5
        %s226 = smul.addr %s225, 20
        %s227 = smul.addr %s223, 120
        %s228 = sadd.s32 %s226, %s227
        %s229 = smul.addr %s228, 8
        %s230 = scalar_lea.vmem %s1, %s229
        %s231 = sadd.s32 %s19, 1
      $region32: #{inception_module.7} parent=23 // pred_fallthru
        _
      // Predicated region
      $region33: #{inception_module.7} parent=23 // pred_check
        %p232 = pneg %p105
      $region34: #{inception_module.7} parent=23 // pred_check_branch
        %234 = sbr.rel (%p232) target = $region36
      $region35: #{inception_module.7} parent=23 // pred_region
        %s235 = sadd.s32 %s19, 2
        %p236 = scmp.lt.s32.totalorder %s18, 1
        %s237 = scalar_select %p236, %s18, 1
        %p238 = scmp.lt.s32.totalorder %s235, 5
        %s239 = scalar_select %p238, %s235, 5
        %s240 = smul.addr %s239, 20
        %s241 = smul.addr %s237, 120
        %s242 = sadd.s32 %s240, %s241
        %s243 = smul.addr %s242, 8
        %s244 = scalar_lea.vmem %s2, %s243
        %s245 = sadd.s32 %s19, 2
      $region36: #{inception_module.7} parent=23 // pred_fallthru
        _
    $region24: #{inception_module.7} parent=5 // pred_fallthru
      _
    %p246 = scmp.le.s32.totalorder 1, %s11
    %p247 = scmp.lt.s32.totalorder %s11, 9
    %p248 = pnand %p246, %p247
    %p249 = pneg %p248
    // Predicated region
    $region37: #{inception_module.7} parent=5 // pred_check
      _
    $region38: #{inception_module.7} parent=5 // pred_check_branch
      %251 = sbr.rel (%p248) target = $region40
    $region39: #{inception_module.7} parent=5 // pred_region
      %s252 = ssub.s32 %s11, 1
      %p253 = scmp.lt.s32.totalorder %s20, 1
      %s254 = scalar_select %p253, %s20, 1
      %p255 = scmp.lt.s32.totalorder %s21, 5
      %s256 = scalar_select %p255, %s21, 5
      %s257 = smul.addr %s256, 20
      %s258 = smul.addr %s254, 120
      %s259 = sadd.s32 %s257, %s258
      %s260 = smul.addr %s259, 8
      %s261 = scalar_lea.vmem %s0, %s260
      %p262 = pneg %p51
      %p263 = pneg %p48
      %s264 = sadd.s32 %s21, 1
      %p265 = scmp.lt.s32.totalorder %s20, 1
      %s266 = scalar_select %p265, %s20, 1
      %p267 = scmp.lt.s32.totalorder %s264, 5
      %s268 = scalar_select %p267, %s264, 5
      %s269 = smul.addr %s268, 20
      %s270 = smul.addr %s266, 120
      %s271 = sadd.s32 %s269, %s270
      %s272 = smul.addr %s271, 8
      %s273 = scalar_lea.vmem %s1, %s272
      %p274 = pneg %p81
      %p275 = pneg %p78
      %s276 = sadd.s32 %s21, 2
      %p277 = scmp.lt.s32.totalorder %s20, 1
      %s278 = scalar_select %p277, %s20, 1
      %p279 = scmp.lt.s32.totalorder %s276, 5
      %s280 = scalar_select %p279, %s276, 5
      %s281 = smul.addr %s280, 20
      %s282 = smul.addr %s278, 120
      %s283 = sadd.s32 %s281, %s282
      %s284 = smul.addr %s283, 8
      %s285 = scalar_lea.vmem %s2, %s284
      %p286 = pneg %p111
      %p287 = pneg %p108
      %p288 = pneg %p132
      %p289 = pneg %p129
      %p290 = pneg %p153
      %p291 = pneg %p150
      %p292 = pneg %p181
      %p293 = pneg %p178
      %p294 = scmp.lt.s32.totalorder %s20, 1
      %s295 = scalar_select %p294, %s20, 1
      %p296 = scmp.lt.s32.totalorder %s21, 3
      %s297 = scalar_select %p296, %s21, 3
      %s298 = smul.addr %s297, 8
      %s299 = smul.addr %s295, 32
      %s300 = sadd.s32 %s298, %s299
      %s301 = smul.addr %s300, 8
      %s302 = scalar_lea.vmem %s5, %s301
      %p303 = scmp.lt.s32.totalorder %s20, 1
      %s304 = scalar_select %p303, %s20, 1
      %p305 = scmp.lt.s32.totalorder %s21, 5
      %s306 = scalar_select %p305, %s21, 5
      %s307 = smul.addr %s306, 20
      %s308 = smul.addr %s304, 120
      %s309 = sadd.s32 %s307, %s308
      %s310 = smul.addr %s309, 8
      %s311 = scalar_lea.vmem %s0, %s310
      %s312 = sadd.s32 %s21, 1
      %p313 = scmp.lt.s32.totalorder %s20, 1
      %s314 = scalar_select %p313, %s20, 1
      %p315 = scmp.lt.s32.totalorder %s312, 5
      %s316 = scalar_select %p315, %s312, 5
      %s317 = smul.addr %s316, 20
      %s318 = smul.addr %s314, 120
      %s319 = sadd.s32 %s317, %s318
      %s320 = smul.addr %s319, 8
      %s321 = scalar_lea.vmem %s1, %s320
      %s322 = sadd.s32 %s21, 1
      %s323 = sadd.s32 %s21, 2
      %p324 = scmp.lt.s32.totalorder %s20, 1
      %s325 = scalar_select %p324, %s20, 1
      %p326 = scmp.lt.s32.totalorder %s323, 5
      %s327 = scalar_select %p326, %s323, 5
      %s328 = smul.addr %s327, 20
      %s329 = smul.addr %s325, 120
      %s330 = sadd.s32 %s328, %s329
      %s331 = smul.addr %s330, 8
      %s332 = scalar_lea.vmem %s2, %s331
      %s333 = sadd.s32 %s21, 2
      %p334 = scmp.lt.s32.totalorder %s20, 1
      %s335 = scalar_select %p334, %s20, 1
      %p336 = scmp.lt.s32.totalorder %s21, 3
      %s337 = scalar_select %p336, %s21, 3
      %s338 = smul.addr %s337, 8
      %s339 = smul.addr %s335, 32
      %s340 = sadd.s32 %s338, %s339
      %s341 = smul.addr %s340, 8
      %s342 = scalar_lea.vmem %s5, %s341
      %v343 = vld [vmem:[%s311] sm:$0xff]
      %v344 = vld [vmem:[%s311 + $0x10] sm:$0xff]
      %v345 = vld [vmem:[%s311 + $0x20] sm:$0xff]
      %v346 = vld [vmem:[%s311 + $0x30] sm:$0xff]
      %v347 = vld [vmem:[%s311 + $0x40] sm:$0xff]
      %v348 = vld [vmem:[%s311 + $0x50] sm:$0xff]
      %v349 = vld [vmem:[%s311 + $0x60] sm:$0xff]
      %v350 = vld [vmem:[%s311 + $0x70] sm:$0xff]
      %v351 = vld [vmem:[%s311 + $0x1] sm:$0xff]
      %v352 = vld [vmem:[%s311 + $0x11] sm:$0xff]
      %v353 = vld [vmem:[%s311 + $0x21] sm:$0xff]
      %v354 = vld [vmem:[%s311 + $0x31] sm:$0xff]
      %v355 = vld [vmem:[%s311 + $0x41] sm:$0xff]
      %v356 = vld [vmem:[%s311 + $0x51] sm:$0xff]
      %v357 = vld [vmem:[%s311 + $0x61] sm:$0xff]
      %v358 = vld [vmem:[%s311 + $0x71] sm:$0xff]
      %v359 = vmax.f32 %v343, %v351
      %v360 = vmax.f32 %v344, %v352
      %v361 = vmax.f32 %v345, %v353
      %v362 = vmax.f32 %v346, %v354
      %v363 = vmax.f32 %v347, %v355
      %v364 = vmax.f32 %v348, %v356
      %v365 = vmax.f32 %v349, %v357
      %v366 = vmax.f32 %v350, %v358
      %v367 = vld [vmem:[%s311 + $0x2] sm:$0xff]
      %v368 = vld [vmem:[%s311 + $0x12] sm:$0xff]
      %v369 = vld [vmem:[%s311 + $0x22] sm:$0xff]
      %v370 = vld [vmem:[%s311 + $0x32] sm:$0xff]
      %v371 = vld [vmem:[%s311 + $0x42] sm:$0xff]
      %v372 = vld [vmem:[%s311 + $0x52] sm:$0xff]
      %v373 = vld [vmem:[%s311 + $0x62] sm:$0xff]
      %v374 = vld [vmem:[%s311 + $0x72] sm:$0xff]
      %v375 = vmax.f32 %v359, %v367
      %v376 = vmax.f32 %v360, %v368
      %v377 = vmax.f32 %v361, %v369
      %v378 = vmax.f32 %v362, %v370
      %v379 = vmax.f32 %v363, %v371
      %v380 = vmax.f32 %v364, %v372
      %v381 = vmax.f32 %v365, %v373
      %v382 = vmax.f32 %v366, %v374
      %s383 = scalar_lea.vmem %s311, 16
      %v384 = vld [vmem:[%s383] sm:$0xff]
      %v385 = vld [vmem:[%s383 + $0x10] sm:$0xff]
      %v386 = vld [vmem:[%s383 + $0x20] sm:$0xff]
      %v387 = vld [vmem:[%s383 + $0x30] sm:$0xff]
      %v388 = vld [vmem:[%s383 + $0x40] sm:$0xff]
      %v389 = vld [vmem:[%s383 + $0x50] sm:$0xff]
      %v390 = vld [vmem:[%s383 + $0x60] sm:$0xff]
      %v391 = vld [vmem:[%s383 + $0x70] sm:$0xff]
      %v392 = vmax.f32 %v375, %v384
      %v393 = vmax.f32 %v376, %v385
      %v394 = vmax.f32 %v377, %v386
      %v395 = vmax.f32 %v378, %v387
      %v396 = vmax.f32 %v379, %v388
      %v397 = vmax.f32 %v380, %v389
      %v398 = vmax.f32 %v381, %v390
      %v399 = vmax.f32 %v382, %v391
      %v400 = vld [vmem:[%s383 + $0x1] sm:$0xff]
      %v401 = vld [vmem:[%s383 + $0x11] sm:$0xff]
      %v402 = vld [vmem:[%s383 + $0x21] sm:$0xff]
      %v403 = vld [vmem:[%s383 + $0x31] sm:$0xff]
      %v404 = vld [vmem:[%s383 + $0x41] sm:$0xff]
      %v405 = vld [vmem:[%s383 + $0x51] sm:$0xff]
      %v406 = vld [vmem:[%s383 + $0x61] sm:$0xff]
      %v407 = vld [vmem:[%s383 + $0x71] sm:$0xff]
      %v408 = vmax.f32 %v392, %v400
      %v409 = vmax.f32 %v393, %v401
      %v410 = vmax.f32 %v394, %v402
      %v411 = vmax.f32 %v395, %v403
      %v412 = vmax.f32 %v396, %v404
      %v413 = vmax.f32 %v397, %v405
      %v414 = vmax.f32 %v398, %v406
      %v415 = vmax.f32 %v399, %v407
      %v416 = vld [vmem:[%s383 + $0x2] sm:$0xff]
      %v417 = vld [vmem:[%s383 + $0x12] sm:$0xff]
      %v418 = vld [vmem:[%s383 + $0x22] sm:$0xff]
      %v419 = vld [vmem:[%s383 + $0x32] sm:$0xff]
      %v420 = vld [vmem:[%s383 + $0x42] sm:$0xff]
      %v421 = vld [vmem:[%s383 + $0x52] sm:$0xff]
      %v422 = vld [vmem:[%s383 + $0x62] sm:$0xff]
      %v423 = vld [vmem:[%s383 + $0x72] sm:$0xff]
      %v424 = vmax.f32 %v408, %v416
      %v425 = vmax.f32 %v409, %v417
      %v426 = vmax.f32 %v410, %v418
      %v427 = vmax.f32 %v411, %v419
      %v428 = vmax.f32 %v412, %v420
      %v429 = vmax.f32 %v413, %v421
      %v430 = vmax.f32 %v414, %v422
      %v431 = vmax.f32 %v415, %v423
      %s432 = scalar_lea.vmem %s311, 32
      %v433 = vld [vmem:[%s432] sm:$0xff]
      %v434 = vld [vmem:[%s432 + $0x10] sm:$0xff]
      %v435 = vld [vmem:[%s432 + $0x20] sm:$0xff]
      %v436 = vld [vmem:[%s432 + $0x30] sm:$0xff]
      %v437 = vld [vmem:[%s432 + $0x40] sm:$0xff]
      %v438 = vld [vmem:[%s432 + $0x50] sm:$0xff]
      %v439 = vld [vmem:[%s432 + $0x60] sm:$0xff]
      %v440 = vld [vmem:[%s432 + $0x70] sm:$0xff]
      %v441 = vmax.f32 %v424, %v433
      %v442 = vmax.f32 %v425, %v434
      %v443 = vmax.f32 %v426, %v435
      %v444 = vmax.f32 %v427, %v436
      %v445 = vmax.f32 %v428, %v437
      %v446 = vmax.f32 %v429, %v438
      %v447 = vmax.f32 %v430, %v439
      %v448 = vmax.f32 %v431, %v440
      %v449 = vld [vmem:[%s432 + $0x1] sm:$0xff]
      %v450 = vld [vmem:[%s432 + $0x11] sm:$0xff]
      %v451 = vld [vmem:[%s432 + $0x21] sm:$0xff]
      %v452 = vld [vmem:[%s432 + $0x31] sm:$0xff]
      %v453 = vld [vmem:[%s432 + $0x41] sm:$0xff]
      %v454 = vld [vmem:[%s432 + $0x51] sm:$0xff]
      %v455 = vld [vmem:[%s432 + $0x61] sm:$0xff]
      %v456 = vld [vmem:[%s432 + $0x71] sm:$0xff]
      %v457 = vmax.f32 %v441, %v449
      %v458 = vmax.f32 %v442, %v450
      %v459 = vmax.f32 %v443, %v451
      %v460 = vmax.f32 %v444, %v452
      %v461 = vmax.f32 %v445, %v453
      %v462 = vmax.f32 %v446, %v454
      %v463 = vmax.f32 %v447, %v455
      %v464 = vmax.f32 %v448, %v456
      %v465 = vld [vmem:[%s432 + $0x2] sm:$0xff]
      %v466 = vld [vmem:[%s432 + $0x12] sm:$0xff]
      %v467 = vld [vmem:[%s432 + $0x22] sm:$0xff]
      %v468 = vld [vmem:[%s432 + $0x32] sm:$0xff]
      %v469 = vld [vmem:[%s432 + $0x42] sm:$0xff]
      %v470 = vld [vmem:[%s432 + $0x52] sm:$0xff]
      %v471 = vld [vmem:[%s432 + $0x62] sm:$0xff]
      %v472 = vld [vmem:[%s432 + $0x72] sm:$0xff]
      %v473 = vmax.f32 %v457, %v465
      %v474 = vmax.f32 %v458, %v466
      %v475 = vmax.f32 %v459, %v467
      %v476 = vmax.f32 %v460, %v468
      %v477 = vmax.f32 %v461, %v469
      %v478 = vmax.f32 %v462, %v470
      %v479 = vmax.f32 %v463, %v471
      %v480 = vmax.f32 %v464, %v472
      %v481 = vld [vmem:[%s321] sm:$0xff]
      %v482 = vld [vmem:[%s321 + $0x10] sm:$0xff]
      %v483 = vld [vmem:[%s321 + $0x20] sm:$0xff]
      %v484 = vld [vmem:[%s321 + $0x30] sm:$0xff]
      %v485 = vld [vmem:[%s321 + $0x40] sm:$0xff]
      %v486 = vld [vmem:[%s321 + $0x50] sm:$0xff]
      %v487 = vld [vmem:[%s321 + $0x60] sm:$0xff]
      %v488 = vld [vmem:[%s321 + $0x70] sm:$0xff]
      %v489 = vmax.f32 %v473, %v481
      %v490 = vmax.f32 %v474, %v482
      %v491 = vmax.f32 %v475, %v483
      %v492 = vmax.f32 %v476, %v484
      %v493 = vmax.f32 %v477, %v485
      %v494 = vmax.f32 %v478, %v486
      %v495 = vmax.f32 %v479, %v487
      %v496 = vmax.f32 %v480, %v488
      %v497 = vld [vmem:[%s321 + $0x1] sm:$0xff]
      %v498 = vld [vmem:[%s321 + $0x11] sm:$0xff]
      %v499 = vld [vmem:[%s321 + $0x21] sm:$0xff]
      %v500 = vld [vmem:[%s321 + $0x31] sm:$0xff]
      %v501 = vld [vmem:[%s321 + $0x41] sm:$0xff]
      %v502 = vld [vmem:[%s321 + $0x51] sm:$0xff]
      %v503 = vld [vmem:[%s321 + $0x61] sm:$0xff]
      %v504 = vld [vmem:[%s321 + $0x71] sm:$0xff]
      %v505 = vmax.f32 %v489, %v497
      %v506 = vmax.f32 %v490, %v498
      %v507 = vmax.f32 %v491, %v499
      %v508 = vmax.f32 %v492, %v500
      %v509 = vmax.f32 %v493, %v501
      %v510 = vmax.f32 %v494, %v502
      %v511 = vmax.f32 %v495, %v503
      %v512 = vmax.f32 %v496, %v504
      %v513 = vld [vmem:[%s321 + $0x2] sm:$0xff]
      %v514 = vld [vmem:[%s321 + $0x12] sm:$0xff]
      %v515 = vld [vmem:[%s321 + $0x22] sm:$0xff]
      %v516 = vld [vmem:[%s321 + $0x32] sm:$0xff]
      %v517 = vld [vmem:[%s321 + $0x42] sm:$0xff]
      %v518 = vld [vmem:[%s321 + $0x52] sm:$0xff]
      %v519 = vld [vmem:[%s321 + $0x62] sm:$0xff]
      %v520 = vld [vmem:[%s321 + $0x72] sm:$0xff]
      %v521 = vmax.f32 %v505, %v513
      %v522 = vmax.f32 %v506, %v514
      %v523 = vmax.f32 %v507, %v515
      %v524 = vmax.f32 %v508, %v516
      %v525 = vmax.f32 %v509, %v517
      %v526 = vmax.f32 %v510, %v518
      %v527 = vmax.f32 %v511, %v519
      %v528 = vmax.f32 %v512, %v520
      %s529 = scalar_lea.vmem %s321, 16
      %v530 = vld [vmem:[%s529] sm:$0xff]
      %v531 = vld [vmem:[%s529 + $0x10] sm:$0xff]
      %v532 = vld [vmem:[%s529 + $0x20] sm:$0xff]
      %v533 = vld [vmem:[%s529 + $0x30] sm:$0xff]
      %v534 = vld [vmem:[%s529 + $0x40] sm:$0xff]
      %v535 = vld [vmem:[%s529 + $0x50] sm:$0xff]
      %v536 = vld [vmem:[%s529 + $0x60] sm:$0xff]
      %v537 = vld [vmem:[%s529 + $0x70] sm:$0xff]
      %v538 = vmax.f32 %v521, %v530
      %v539 = vmax.f32 %v522, %v531
      %v540 = vmax.f32 %v523, %v532
      %v541 = vmax.f32 %v524, %v533
      %v542 = vmax.f32 %v525, %v534
      %v543 = vmax.f32 %v526, %v535
      %v544 = vmax.f32 %v527, %v536
      %v545 = vmax.f32 %v528, %v537
      %v546 = vld [vmem:[%s529 + $0x1] sm:$0xff]
      %v547 = vld [vmem:[%s529 + $0x11] sm:$0xff]
      %v548 = vld [vmem:[%s529 + $0x21] sm:$0xff]
      %v549 = vld [vmem:[%s529 + $0x31] sm:$0xff]
      %v550 = vld [vmem:[%s529 + $0x41] sm:$0xff]
      %v551 = vld [vmem:[%s529 + $0x51] sm:$0xff]
      %v552 = vld [vmem:[%s529 + $0x61] sm:$0xff]
      %v553 = vld [vmem:[%s529 + $0x71] sm:$0xff]
      %v554 = vmax.f32 %v538, %v546
      %v555 = vmax.f32 %v539, %v547
      %v556 = vmax.f32 %v540, %v548
      %v557 = vmax.f32 %v541, %v549
      %v558 = vmax.f32 %v542, %v550
      %v559 = vmax.f32 %v543, %v551
      %v560 = vmax.f32 %v544, %v552
      %v561 = vmax.f32 %v545, %v553
      %v562 = vld [vmem:[%s529 + $0x2] sm:$0xff]
      %v563 = vld [vmem:[%s529 + $0x12] sm:$0xff]
      %v564 = vld [vmem:[%s529 + $0x22] sm:$0xff]
      %v565 = vld [vmem:[%s529 + $0x32] sm:$0xff]
      %v566 = vld [vmem:[%s529 + $0x42] sm:$0xff]
      %v567 = vld [vmem:[%s529 + $0x52] sm:$0xff]
      %v568 = vld [vmem:[%s529 + $0x62] sm:$0xff]
      %v569 = vld [vmem:[%s529 + $0x72] sm:$0xff]
      %v570 = vmax.f32 %v554, %v562
      %v571 = vmax.f32 %v555, %v563
      %v572 = vmax.f32 %v556, %v564
      %v573 = vmax.f32 %v557, %v565
      %v574 = vmax.f32 %v558, %v566
      %v575 = vmax.f32 %v559, %v567
      %v576 = vmax.f32 %v560, %v568
      %v577 = vmax.f32 %v561, %v569
      %s578 = scalar_lea.vmem %s321, 32
      %v579 = vld [vmem:[%s578] sm:$0xff]
      %v580 = vld [vmem:[%s578 + $0x10] sm:$0xff]
      %v581 = vld [vmem:[%s578 + $0x20] sm:$0xff]
      %v582 = vld [vmem:[%s578 + $0x30] sm:$0xff]
      %v583 = vld [vmem:[%s578 + $0x40] sm:$0xff]
      %v584 = vld [vmem:[%s578 + $0x50] sm:$0xff]
      %v585 = vld [vmem:[%s578 + $0x60] sm:$0xff]
      %v586 = vld [vmem:[%s578 + $0x70] sm:$0xff]
      %v587 = vmax.f32 %v570, %v579
      %v588 = vmax.f32 %v571, %v580
      %v589 = vmax.f32 %v572, %v581
      %v590 = vmax.f32 %v573, %v582
      %v591 = vmax.f32 %v574, %v583
      %v592 = vmax.f32 %v575, %v584
      %v593 = vmax.f32 %v576, %v585
      %v594 = vmax.f32 %v577, %v586
      %v595 = vld [vmem:[%s578 + $0x1] sm:$0xff]
      %v596 = vld [vmem:[%s578 + $0x11] sm:$0xff]
      %v597 = vld [vmem:[%s578 + $0x21] sm:$0xff]
      %v598 = vld [vmem:[%s578 + $0x31] sm:$0xff]
      %v599 = vld [vmem:[%s578 + $0x41] sm:$0xff]
      %v600 = vld [vmem:[%s578 + $0x51] sm:$0xff]
      %v601 = vld [vmem:[%s578 + $0x61] sm:$0xff]
      %v602 = vld [vmem:[%s578 + $0x71] sm:$0xff]
      %v603 = vmax.f32 %v587, %v595
      %v604 = vmax.f32 %v588, %v596
      %v605 = vmax.f32 %v589, %v597
      %v606 = vmax.f32 %v590, %v598
      %v607 = vmax.f32 %v591, %v599
      %v608 = vmax.f32 %v592, %v600
      %v609 = vmax.f32 %v593, %v601
      %v610 = vmax.f32 %v594, %v602
      %v611 = vld [vmem:[%s578 + $0x2] sm:$0xff]
      %v612 = vld [vmem:[%s578 + $0x12] sm:$0xff]
      %v613 = vld [vmem:[%s578 + $0x22] sm:$0xff]
      %v614 = vld [vmem:[%s578 + $0x32] sm:$0xff]
      %v615 = vld [vmem:[%s578 + $0x42] sm:$0xff]
      %v616 = vld [vmem:[%s578 + $0x52] sm:$0xff]
      %v617 = vld [vmem:[%s578 + $0x62] sm:$0xff]
      %v618 = vld [vmem:[%s578 + $0x72] sm:$0xff]
      %v619 = vmax.f32 %v603, %v611
      %v620 = vmax.f32 %v604, %v612
      %v621 = vmax.f32 %v605, %v613
      %v622 = vmax.f32 %v606, %v614
      %v623 = vmax.f32 %v607, %v615
      %v624 = vmax.f32 %v608, %v616
      %v625 = vmax.f32 %v609, %v617
      %v626 = vmax.f32 %v610, %v618
      %v627 = vld [vmem:[%s332] sm:$0xff]
      %v628 = vld [vmem:[%s332 + $0x10] sm:$0xff]
      %v629 = vld [vmem:[%s332 + $0x20] sm:$0xff]
      %v630 = vld [vmem:[%s332 + $0x30] sm:$0xff]
      %v631 = vld [vmem:[%s332 + $0x40] sm:$0xff]
      %v632 = vld [vmem:[%s332 + $0x50] sm:$0xff]
      %v633 = vld [vmem:[%s332 + $0x60] sm:$0xff]
      %v634 = vld [vmem:[%s332 + $0x70] sm:$0xff]
      %v635 = vmax.f32 %v619, %v627
      %v636 = vmax.f32 %v620, %v628
      %v637 = vmax.f32 %v621, %v629
      %v638 = vmax.f32 %v622, %v630
      %v639 = vmax.f32 %v623, %v631
      %v640 = vmax.f32 %v624, %v632
      %v641 = vmax.f32 %v625, %v633
      %v642 = vmax.f32 %v626, %v634
      %v643 = vld [vmem:[%s332 + $0x1] sm:$0xff]
      %v644 = vld [vmem:[%s332 + $0x11] sm:$0xff]
      %v645 = vld [vmem:[%s332 + $0x21] sm:$0xff]
      %v646 = vld [vmem:[%s332 + $0x31] sm:$0xff]
      %v647 = vld [vmem:[%s332 + $0x41] sm:$0xff]
      %v648 = vld [vmem:[%s332 + $0x51] sm:$0xff]
      %v649 = vld [vmem:[%s332 + $0x61] sm:$0xff]
      %v650 = vld [vmem:[%s332 + $0x71] sm:$0xff]
      %v651 = vmax.f32 %v635, %v643
      %v652 = vmax.f32 %v636, %v644
      %v653 = vmax.f32 %v637, %v645
      %v654 = vmax.f32 %v638, %v646
      %v655 = vmax.f32 %v639, %v647
      %v656 = vmax.f32 %v640, %v648
      %v657 = vmax.f32 %v641, %v649
      %v658 = vmax.f32 %v642, %v650
      %v659 = vld [vmem:[%s332 + $0x2] sm:$0xff]
      %v660 = vld [vmem:[%s332 + $0x12] sm:$0xff]
      %v661 = vld [vmem:[%s332 + $0x22] sm:$0xff]
      %v662 = vld [vmem:[%s332 + $0x32] sm:$0xff]
      %v663 = vld [vmem:[%s332 + $0x42] sm:$0xff]
      %v664 = vld [vmem:[%s332 + $0x52] sm:$0xff]
      %v665 = vld [vmem:[%s332 + $0x62] sm:$0xff]
      %v666 = vld [vmem:[%s332 + $0x72] sm:$0xff]
      %v667 = vmax.f32 %v651, %v659
      %v668 = vmax.f32 %v652, %v660
      %v669 = vmax.f32 %v653, %v661
      %v670 = vmax.f32 %v654, %v662
      %v671 = vmax.f32 %v655, %v663
      %v672 = vmax.f32 %v656, %v664
      %v673 = vmax.f32 %v657, %v665
      %v674 = vmax.f32 %v658, %v666
      %s675 = scalar_lea.vmem %s332, 16
      %v676 = vld [vmem:[%s675] sm:$0xff]
      %v677 = vld [vmem:[%s675 + $0x10] sm:$0xff]
      %v678 = vld [vmem:[%s675 + $0x20] sm:$0xff]
      %v679 = vld [vmem:[%s675 + $0x30] sm:$0xff]
      %v680 = vld [vmem:[%s675 + $0x40] sm:$0xff]
      %v681 = vld [vmem:[%s675 + $0x50] sm:$0xff]
      %v682 = vld [vmem:[%s675 + $0x60] sm:$0xff]
      %v683 = vld [vmem:[%s675 + $0x70] sm:$0xff]
      %v684 = vmax.f32 %v667, %v676
      %v685 = vmax.f32 %v668, %v677
      %v686 = vmax.f32 %v669, %v678
      %v687 = vmax.f32 %v670, %v679
      %v688 = vmax.f32 %v671, %v680
      %v689 = vmax.f32 %v672, %v681
      %v690 = vmax.f32 %v673, %v682
      %v691 = vmax.f32 %v674, %v683
      %v692 = vld [vmem:[%s675 + $0x1] sm:$0xff]
      %v693 = vld [vmem:[%s675 + $0x11] sm:$0xff]
      %v694 = vld [vmem:[%s675 + $0x21] sm:$0xff]
      %v695 = vld [vmem:[%s675 + $0x31] sm:$0xff]
      %v696 = vld [vmem:[%s675 + $0x41] sm:$0xff]
      %v697 = vld [vmem:[%s675 + $0x51] sm:$0xff]
      %v698 = vld [vmem:[%s675 + $0x61] sm:$0xff]
      %v699 = vld [vmem:[%s675 + $0x71] sm:$0xff]
      %v700 = vmax.f32 %v684, %v692
      %v701 = vmax.f32 %v685, %v693
      %v702 = vmax.f32 %v686, %v694
      %v703 = vmax.f32 %v687, %v695
      %v704 = vmax.f32 %v688, %v696
      %v705 = vmax.f32 %v689, %v697
      %v706 = vmax.f32 %v690, %v698
      %v707 = vmax.f32 %v691, %v699
      %v708 = vld [vmem:[%s675 + $0x2] sm:$0xff]
      %v709 = vld [vmem:[%s675 + $0x12] sm:$0xff]
      %v710 = vld [vmem:[%s675 + $0x22] sm:$0xff]
      %v711 = vld [vmem:[%s675 + $0x32] sm:$0xff]
      %v712 = vld [vmem:[%s675 + $0x42] sm:$0xff]
      %v713 = vld [vmem:[%s675 + $0x52] sm:$0xff]
      %v714 = vld [vmem:[%s675 + $0x62] sm:$0xff]
      %v715 = vld [vmem:[%s675 + $0x72] sm:$0xff]
      %v716 = vmax.f32 %v700, %v708
      %v717 = vmax.f32 %v701, %v709
      %v718 = vmax.f32 %v702, %v710
      %v719 = vmax.f32 %v703, %v711
      %v720 = vmax.f32 %v704, %v712
      %v721 = vmax.f32 %v705, %v713
      %v722 = vmax.f32 %v706, %v714
      %v723 = vmax.f32 %v707, %v715
      %s724 = scalar_lea.vmem %s332, 32
      %v725 = vld [vmem:[%s724] sm:$0xff]
      %v726 = vld [vmem:[%s724 + $0x10] sm:$0xff]
      %v727 = vld [vmem:[%s724 + $0x20] sm:$0xff]
      %v728 = vld [vmem:[%s724 + $0x30] sm:$0xff]
      %v729 = vld [vmem:[%s724 + $0x40] sm:$0xff]
      %v730 = vld [vmem:[%s724 + $0x50] sm:$0xff]
      %v731 = vld [vmem:[%s724 + $0x60] sm:$0xff]
      %v732 = vld [vmem:[%s724 + $0x70] sm:$0xff]
      %v733 = vmax.f32 %v716, %v725
      %v734 = vmax.f32 %v717, %v726
      %v735 = vmax.f32 %v718, %v727
      %v736 = vmax.f32 %v719, %v728
      %v737 = vmax.f32 %v720, %v729
      %v738 = vmax.f32 %v721, %v730
      %v739 = vmax.f32 %v722, %v731
      %v740 = vmax.f32 %v723, %v732
      %v741 = vld [vmem:[%s724 + $0x1] sm:$0xff]
      %v742 = vld [vmem:[%s724 + $0x11] sm:$0xff]
      %v743 = vld [vmem:[%s724 + $0x21] sm:$0xff]
      %v744 = vld [vmem:[%s724 + $0x31] sm:$0xff]
      %v745 = vld [vmem:[%s724 + $0x41] sm:$0xff]
      %v746 = vld [vmem:[%s724 + $0x51] sm:$0xff]
      %v747 = vld [vmem:[%s724 + $0x61] sm:$0xff]
      %v748 = vld [vmem:[%s724 + $0x71] sm:$0xff]
      %v749 = vmax.f32 %v733, %v741
      %v750 = vmax.f32 %v734, %v742
      %v751 = vmax.f32 %v735, %v743
      %v752 = vmax.f32 %v736, %v744
      %v753 = vmax.f32 %v737, %v745
      %v754 = vmax.f32 %v738, %v746
      %v755 = vmax.f32 %v739, %v747
      %v756 = vmax.f32 %v740, %v748
      %v757 = vld [vmem:[%s724 + $0x2] sm:$0xff]
      %v758 = vld [vmem:[%s724 + $0x12] sm:$0xff]
      %v759 = vld [vmem:[%s724 + $0x22] sm:$0xff]
      %v760 = vld [vmem:[%s724 + $0x32] sm:$0xff]
      %v761 = vld [vmem:[%s724 + $0x42] sm:$0xff]
      %v762 = vld [vmem:[%s724 + $0x52] sm:$0xff]
      %v763 = vld [vmem:[%s724 + $0x62] sm:$0xff]
      %v764 = vld [vmem:[%s724 + $0x72] sm:$0xff]
      %v765 = vmax.f32 %v749, %v757
      %v766 = vmax.f32 %v750, %v758
      %v767 = vmax.f32 %v751, %v759
      %v768 = vmax.f32 %v752, %v760
      %v769 = vmax.f32 %v753, %v761
      %v770 = vmax.f32 %v754, %v762
      %v771 = vmax.f32 %v755, %v763
      %v772 = vmax.f32 %v756, %v764
      %v773 = vld [vmem:[%s3] sm:$0xf]
      %v774 = vld [vmem:[%s4] sm:$0x1]
      %v776 = vlaneseq
      %v777 = vshrl.u32 %v776, 7
      %v778 = vsub.s32 0, %v777
      %v779 = vrot.slane %v774, %v778
      %vm781 = vcmask 31744
      %v783 = vsel %vm781, %v765, 0
      %v786 = vsel %vm781, %v766, 0
      %v789 = vsel %vm781, %v767, 0
      %v792 = vsel %vm781, %v768, 0
      %v795 = vsel %vm781, %v769, 0
      %v798 = vsel %vm781, %v770, 0
      %v801 = vsel %vm781, %v771, 0
      %v804 = vsel %vm781, %v772, 0
      %vm806 = vcmask 1043456
      %v808 = vsel %vm806, %v773, 0
      %810 = vmatprep.subr.mxu0 0.0
      %811 = vmatpush1.msra.mxu0 0.0
      %812 = vmatprep.subr.mxu0 0.0
      %813 = vmatpush1.msra.mxu0 0.0
      %814 = vmatprep.subr.mxu0 0.0
      %815 = vmatpush1.msra.mxu0 0.0
      %816 = vmatprep.subr.mxu0 0.0
      %817 = vmatpush1.msra.mxu0 0.0
      %818 = vmatprep.subr.mxu0 0.0
      %819 = vmatpush1.msra.mxu0 0.0
      %820 = vmatprep.subr.mxu0 0.0
      %821 = vmatpush1.msra.mxu0 0.0
      %822 = vmatprep.subr.mxu0 0.0
      %823 = vmatpush1.msra.mxu0 0.0
      %824 = vmatprep.subr.mxu0 0.0
      %825 = vmatpush1.msra.mxu0 0.0
      %826 = vmatprep.subr.mxu0 0.0
      %827 = vmatpush1.msra.mxu0 0.0
      %828 = vmatprep.subr.mxu0 0.0
      %829 = vmatpush1.msra.mxu0 0.0
      %830 = vmatprep.subr.mxu0 0.0
      %831 = vmatpush1.msra.mxu0 0.0
      %832 = vmatprep.subr.mxu0 0.0
      %833 = vmatpush1.msra.mxu0 0.0
      %834 = vmatprep.subr.mxu0 0.0
      %835 = vmatpush1.msra.mxu0 0.0
      %836 = vmatprep.subr.mxu0 0.0
      %837 = vmatpush1.msra.mxu0 0.0
      %838 = vmatprep.subr.mxu0 0.0
      %839 = vmatpush1.msra.mxu0 0.0
      %840 = vmatprep.subr.mxu0 0.0
      %841 = vmatpush1.msra.mxu0 %v808
      %842 = vmatprep.subr.mxu0 0.0
      %843 = vmatpush2.msra.mxu0 0.0
      %844 = vmatprep.subr.mxu0 0.0
      %845 = vmatpush2.msra.mxu0 0.0
      %846 = vmatprep.subr.mxu0 0.0
      %847 = vmatpush2.msra.mxu0 0.0
      %848 = vmatprep.subr.mxu0 0.0
      %849 = vmatpush2.msra.mxu0 0.0
      %850 = vmatprep.subr.mxu0 0.0
      %851 = vmatpush2.msra.mxu0 0.0
      %852 = vmatprep.subr.mxu0 0.0
      %853 = vmatpush2.msra.mxu0 0.0
      %854 = vmatprep.subr.mxu0 0.0
      %855 = vmatpush2.msra.mxu0 0.0
      %856 = vmatprep.subr.mxu0 0.0
      %857 = vmatpush2.msra.mxu0 0.0
      %858 = vmatprep.subr.mxu0 0.0
      %859 = vmatpush2.msra.mxu0 0.0
      %860 = vmatprep.subr.mxu0 0.0
      %861 = vmatpush2.msra.mxu0 0.0
      %862 = vmatprep.subr.mxu0 0.0
      %863 = vmatpush2.msra.mxu0 0.0
      %864 = vmatprep.subr.mxu0 0.0
      %865 = vmatpush2.msra.mxu0 0.0
      %866 = vmatprep.subr.mxu0 0.0
      %867 = vmatpush2.msra.mxu0 0.0
      %868 = vmatprep.subr.mxu0 0.0
      %869 = vmatpush2.msra.mxu0 0.0
      %870 = vmatprep.subr.mxu0 0.0
      %871 = vmatpush2.msra.mxu0 0.0
      %872 = vmatprep.subr.mxu0 0.0
      %873 = vmatpush2.msra.mxu0 0.0
      %874 = vmatprep.mubr.f32.mxu0 0.0
      %875 = vmatmul.mubr.f32.gmra.mxu0 %v783
      %v876 = vpop.f32.mrf.mxu0
      %v877 = vadd.f32 %v779, %v876
      %v878 = vpop.f32.mrf.mxu0
      %879 = vmatprep.mubr.f32.mxu0 0.0
      %880 = vmatmul.mubr.f32.gmra.mxu0 %v786
      %v881 = vpop.f32.mrf.mxu0
      %v882 = vadd.f32 %v779, %v881
      %v883 = vpop.f32.mrf.mxu0
      %884 = vmatprep.mubr.f32.mxu0 0.0
      %885 = vmatmul.mubr.f32.gmra.mxu0 %v789
      %v886 = vpop.f32.mrf.mxu0
      %v887 = vadd.f32 %v779, %v886
      %v888 = vpop.f32.mrf.mxu0
      %889 = vmatprep.mubr.f32.mxu0 0.0
      %890 = vmatmul.mubr.f32.gmra.mxu0 %v792
      %v891 = vpop.f32.mrf.mxu0
      %v892 = vadd.f32 %v779, %v891
      %v893 = vpop.f32.mrf.mxu0
      %894 = vmatprep.mubr.f32.mxu0 0.0
      %895 = vmatmul.mubr.f32.gmra.mxu0 %v795
      %v896 = vpop.f32.mrf.mxu0
      %v897 = vadd.f32 %v779, %v896
      %v898 = vpop.f32.mrf.mxu0
      %899 = vmatprep.mubr.f32.mxu0 0.0
      %900 = vmatmul.mubr.f32.gmra.mxu0 %v798
      %v901 = vpop.f32.mrf.mxu0
      %v902 = vadd.f32 %v779, %v901
      %v903 = vpop.f32.mrf.mxu0
      %904 = vmatprep.mubr.f32.mxu0 0.0
      %905 = vmatmul.mubr.f32.gmra.mxu0 %v801
      %v906 = vpop.f32.mrf.mxu0
      %v907 = vadd.f32 %v779, %v906
      %v908 = vpop.f32.mrf.mxu0
      %909 = vmatprep.mubr.f32.mxu0 0.0
      %910 = vmatmul.mubr.f32.gmra.mxu0 %v804
      %v911 = vpop.f32.mrf.mxu0
      %v912 = vadd.f32 %v779, %v911
      %v913 = vpop.f32.mrf.mxu0
      %914 = vdwg.mxu0
      %v915 = vmax.f32 %v877, 0.0
      %v916 = vmax.f32 %v882, 0.0
      %v917 = vmax.f32 %v887, 0.0
      %v918 = vmax.f32 %v892, 0.0
      %v919 = vmax.f32 %v897, 0.0
      %v920 = vmax.f32 %v902, 0.0
      %v921 = vmax.f32 %v907, 0.0
      %v922 = vmax.f32 %v912, 0.0
      %vm923 = vcmask 64512
      %924 = vst.msk [vmem:[%s342] sm:$0xff] %vm923, %v915
      %925 = vst.msk [vmem:[%s342 + $0x8] sm:$0xff] %vm923, %v916
      %926 = vst.msk [vmem:[%s342 + $0x10] sm:$0xff] %vm923, %v917
      %927 = vst.msk [vmem:[%s342 + $0x18] sm:$0xff] %vm923, %v918
      %928 = vst.msk [vmem:[%s342 + $0x20] sm:$0xff] %vm923, %v919
      %929 = vst.msk [vmem:[%s342 + $0x28] sm:$0xff] %vm923, %v920
      %930 = vst.msk [vmem:[%s342 + $0x30] sm:$0xff] %vm923, %v921
      %931 = vst.msk [vmem:[%s342 + $0x38] sm:$0xff] %vm923, %v922
      %p932 = scmp.lt.s32.totalorder %s20, 1
      %s933 = scalar_select %p932, %s20, 1
      %p934 = scmp.lt.s32.totalorder %s21, 3
      %s935 = scalar_select %p934, %s21, 3
      %s936 = smul.addr %s935, 8
      %s937 = smul.addr %s933, 32
      %s938 = sadd.s32 %s936, %s937
      %s939 = smul.addr %s938, 8
      %s940 = scalar_lea.vmem %s5, %s939
      // Predicated region
      $region41: #{inception_module.7} parent=39 // pred_check
        %p941 = pneg %p178
      $region42: #{inception_module.7} parent=39 // pred_check_branch
        %943 = sbr.rel (%p941) target = $region44
      $region43: #{inception_module.7} parent=39 // pred_region
        _
      $region44: #{inception_module.7} parent=39 // pred_fallthru
        _
    $region40: #{inception_module.7} parent=5 // pred_fallthru
      _
    %p944 = scmp.le.s32.totalorder 2, %s11
    // Predicated region
    $region45: #{inception_module.7} parent=5 // pred_check
      %p945 = pneg %p944
    $region46: #{inception_module.7} parent=5 // pred_check_branch
      %947 = sbr.rel (%p945) target = $region48
    $region47: #{inception_module.7} parent=5 // pred_region
      %s948 = ssub.s32 %s11, 2
      // Predicated region
      $region49: #{inception_module.7} parent=47 // pred_check
        %p949 = pneg %p184
      $region50: #{inception_module.7} parent=47 // pred_check_branch
        %951 = sbr.rel (%p949) target = $region52
      $region51: #{inception_module.7} parent=47 // pred_region
        %p952 = scmp.lt.s32.totalorder %s22, 1
        %s953 = scalar_select %p952, %s22, 1
        %p954 = scmp.lt.s32.totalorder %s23, 3
        %s955 = scalar_select %p954, %s23, 3
        %s956 = smul.addr %s955, 8
        %s957 = smul.addr %s953, 32
        %s958 = sadd.s32 %s956, %s957
        %s959 = smul.addr %s958, 8
        %s960 = scalar_lea.vmem %s5, %s959
      $region52: #{inception_module.7} parent=47 // pred_fallthru
        _
    $region48: #{inception_module.7} parent=5 // pred_fallthru
      _
  $region6: #{inception_module.7} parent=0 // loop_footer
    %s15 = sadd.s32 1, %s11
  $region7: #{inception_module.7} parent=0 // loop_footer_branch
    %10 = sbr.rel target = $region3
  $region8: #{inception_module.7} parent=0 // loop_exit
    _

// kernel: inception_module.5
$region0: #{inception_module.5}
  #allocation0 [shape = 'u32[]', space=smem, size = 0x4, offset = 0x4, fixed_abs, tag = 'smem constant byte address 0x4 - core index']
  #allocation1 [shape = 'u32[144,128]{1,0:T(1,128)}', space=vmem, size = 0x12000, scoped, tag = 'internal scratch']
  %s0 = inlined_call_operand.vmem [shape: f32[2,6,10,10,4], index: 0, kind: input, shape index: {}, may-alias: {0,1,2}]
  %s1 = inlined_call_operand.vmem [shape: f32[2,6,10,10,4], index: 1, kind: input, shape index: {}, may-alias: {0,1,2}]
  %s2 = inlined_call_operand.vmem [shape: f32[2,6,10,10,4], index: 2, kind: input, shape index: {}, may-alias: {0,1,2}]
  %s3 = inlined_call_operand.vmem [shape: f32[27,4,8], index: 3, kind: input, shape index: {}]
  %s4 = inlined_call_operand.vmem [shape: f32[1,8], index: 4, kind: input, shape index: {}]
  %s5 = inlined_call_operand.vmem [shape: f32[2,4,64,8], index: 5, kind: output, shape index: {}]
  %s6 = sld [smem:[#allocation0]]
  $region53: #{inception_module.5} parent=0
    _
  %s8 = ssub.s32 1, %s6
  %s9 = scalar_select 0, %s8, %s6
  loop: start=0, step=1, limit=10
  $region2: #{inception_module.5} parent=0 // loop_pre_header
    _
  $region3: #{inception_module.5} parent=0 // loop_header
    %s11 = sphi 0, %s15
    %p12 = scmp.ge.s32.totalorder %s11, 10
    %s18 = sphi 0, %s30
    %s19 = sphi 0, %s26
    %s20 = sphi 0, %s18
    %s21 = sphi 0, %s19
    %s22 = sphi 0, %s20
    %s23 = sphi 0, %s21
    %s35 = sphi 0, %s37
    %s38 = sphi 0, %s35
    %s39 = sphi 0, %s38
    %s55 = sphi 0, %s39
    %s65 = sphi 0, %s67
    %s68 = sphi 0, %s65
    %s69 = sphi 0, %s68
    %s85 = sphi 0, %s69
    %s95 = sphi 0, %s97
    %s98 = sphi 0, %s95
    %s99 = sphi 0, %s98
    %s115 = sphi 0, %s99
    %s119 = sphi 0, %s119
    %s121 = sphi 0, %s119
    %s122 = sphi 0, %s121
    %s136 = sphi 0, %s122
    %s140 = sphi 0, %s140
    %s142 = sphi 0, %s140
    %s143 = sphi 0, %s142
    %s157 = sphi 0, %s143
    %s165 = sphi 0, %s167
    %s168 = sphi 0, %s165
    %s169 = sphi 0, %s168
    %s185 = sphi 0, %s169
  $region4: #{inception_module.5} parent=0 // loop_header_branch
    %14 = sbr.rel (%p12) target = $region8
  $region5: #{inception_module.5} parent=0 // loop_body
    %s16 = ssub.s32 %s11, 1
    %s17 = ssub.s32 %s11, 2
    %s24 = sadd.s32 1, %s19
    %p25 = scmp.ge.s32.totalorder %s24, 4
    %s26 = scalar_select %p25, 0, %s24
    %s27 = sadd.s32 1, %s18
    %s28 = scalar_select %p25, %s27, %s18
    %p29 = scmp.ge.s32.totalorder %s28, 2
    %s30 = scalar_select %p29, 0, %s28
    %s31 = ssub.s32 %s18, %s30
    %s32 = ssub.s32 %s19, %s26
    %s33 = sor.u32 %s31, %s32
    %p34 = scmp.eq.s32.totalorder %s33, 0
    %s36 = sadd.s32 %s35, 1
    %s37 = scalar_select %p34, %s35, %s36
    %p40 = pneg %p34
    %p41 = scmp.eq.s32.totalorder %s11, 7
    %p42 = por %p40, %p41
    %p43 = scmp.ne.s32.totalorder %s35, %s38
    %p44 = scmp.eq.s32.totalorder %s11, 0
    %p45 = por %p43, %p44
    %p46 = scmp.ne.s32.totalorder %s35, %s38
    %p47 = scmp.eq.s32.totalorder %s16, 7
    %p48 = por %p46, %p47
    %p49 = scmp.ne.s32.totalorder %s38, %s39
    %p50 = scmp.eq.s32.totalorder %s16, 0
    %p51 = por %p49, %p50
    %p52 = scmp.ne.s32.totalorder %s38, %s39
    %p53 = scmp.eq.s32.totalorder %s17, 7
    %p54 = por %p52, %p53
    %p56 = scmp.ne.s32.totalorder %s39, %s55
    %p57 = scmp.eq.s32.totalorder %s17, 0
    %p58 = por %p56, %p57
    %s59 = sadd.s32 %s19, 1
    %s60 = sadd.s32 %s26, 1
    %s61 = ssub.s32 %s18, %s30
    %s62 = ssub.s32 %s59, %s60
    %s63 = sor.u32 %s61, %s62
    %p64 = scmp.eq.s32.totalorder %s63, 0
    %s66 = sadd.s32 %s65, 1
    %s67 = scalar_select %p64, %s65, %s66
    %p70 = pneg %p64
    %p71 = scmp.eq.s32.totalorder %s11, 7
    %p72 = por %p70, %p71
    %p73 = scmp.ne.s32.totalorder %s65, %s68
    %p74 = scmp.eq.s32.totalorder %s11, 0
    %p75 = por %p73, %p74
    %p76 = scmp.ne.s32.totalorder %s65, %s68
    %p77 = scmp.eq.s32.totalorder %s16, 7
    %p78 = por %p76, %p77
    %p79 = scmp.ne.s32.totalorder %s68, %s69
    %p80 = scmp.eq.s32.totalorder %s16, 0
    %p81 = por %p79, %p80
    %p82 = scmp.ne.s32.totalorder %s68, %s69
    %p83 = scmp.eq.s32.totalorder %s17, 7
    %p84 = por %p82, %p83
    %p86 = scmp.ne.s32.totalorder %s69, %s85
    %p87 = scmp.eq.s32.totalorder %s17, 0
    %p88 = por %p86, %p87
    %s89 = sadd.s32 %s19, 2
    %s90 = sadd.s32 %s26, 2
    %s91 = ssub.s32 %s18, %s30
    %s92 = ssub.s32 %s89, %s90
    %s93 = sor.u32 %s91, %s92
    %p94 = scmp.eq.s32.totalorder %s93, 0
    %s96 = sadd.s32 %s95, 1
    %s97 = scalar_select %p94, %s95, %s96
    %p100 = pneg %p94
    %p101 = scmp.eq.s32.totalorder %s11, 7
    %p102 = por %p100, %p101
    %p103 = scmp.ne.s32.totalorder %s95, %s98
    %p104 = scmp.eq.s32.totalorder %s11, 0
    %p105 = por %p103, %p104
    %p106 = scmp.ne.s32.totalorder %s95, %s98
    %p107 = scmp.eq.s32.totalorder %s16, 7
    %p108 = por %p106, %p107
    %p109 = scmp.ne.s32.totalorder %s98, %s99
    %p110 = scmp.eq.s32.totalorder %s16, 0
    %p111 = por %p109, %p110
    %p112 = scmp.ne.s32.totalorder %s98, %s99
    %p113 = scmp.eq.s32.totalorder %s17, 7
    %p114 = por %p112, %p113
    %p116 = scmp.ne.s32.totalorder %s99, %s115
    %p117 = scmp.eq.s32.totalorder %s17, 0
    %p118 = por %p116, %p117
    %s120 = sadd.s32 %s119, 1
    %p123 = scmp.eq.s32.totalorder %s11, 7
    %p124 = scmp.ne.s32.totalorder %s119, %s121
    %p125 = scmp.eq.s32.totalorder %s11, 0
    %p126 = por %p124, %p125
    %p127 = scmp.ne.s32.totalorder %s119, %s121
    %p128 = scmp.eq.s32.totalorder %s16, 7
    %p129 = por %p127, %p128
    %p130 = scmp.ne.s32.totalorder %s121, %s122
    %p131 = scmp.eq.s32.totalorder %s16, 0
    %p132 = por %p130, %p131
    %p133 = scmp.ne.s32.totalorder %s121, %s122
    %p134 = scmp.eq.s32.totalorder %s17, 7
    %p135 = por %p133, %p134
    %p137 = scmp.ne.s32.totalorder %s122, %s136
    %p138 = scmp.eq.s32.totalorder %s17, 0
    %p139 = por %p137, %p138
    %s141 = sadd.s32 %s140, 1
    %p144 = scmp.eq.s32.totalorder %s11, 7
    %p145 = scmp.ne.s32.totalorder %s140, %s142
    %p146 = scmp.eq.s32.totalorder %s11, 0
    %p147 = por %p145, %p146
    %p148 = scmp.ne.s32.totalorder %s140, %s142
    %p149 = scmp.eq.s32.totalorder %s16, 7
    %p150 = por %p148, %p149
    %p151 = scmp.ne.s32.totalorder %s142, %s143
    %p152 = scmp.eq.s32.totalorder %s16, 0
    %p153 = por %p151, %p152
    %p154 = scmp.ne.s32.totalorder %s142, %s143
    %p155 = scmp.eq.s32.totalorder %s17, 7
    %p156 = por %p154, %p155
    %p158 = scmp.ne.s32.totalorder %s143, %s157
    %p159 = scmp.eq.s32.totalorder %s17, 0
    %p160 = por %p158, %p159
    %s161 = ssub.s32 %s18, %s30
    %s162 = ssub.s32 %s19, %s26
    %s163 = sor.u32 %s161, %s162
    %p164 = scmp.eq.s32.totalorder %s163, 0
    %s166 = sadd.s32 %s165, 1
    %s167 = scalar_select %p164, %s165, %s166
    %p170 = pneg %p164
    %p171 = scmp.eq.s32.totalorder %s11, 7
    %p172 = por %p170, %p171
    %p173 = scmp.ne.s32.totalorder %s165, %s168
    %p174 = scmp.eq.s32.totalorder %s11, 0
    %p175 = por %p173, %p174
    %p176 = scmp.ne.s32.totalorder %s165, %s168
    %p177 = scmp.eq.s32.totalorder %s16, 7
    %p178 = por %p176, %p177
    %p179 = scmp.ne.s32.totalorder %s168, %s169
    %p180 = scmp.eq.s32.totalorder %s16, 0
    %p181 = por %p179, %p180
    %p182 = scmp.ne.s32.totalorder %s168, %s169
    %p183 = scmp.eq.s32.totalorder %s17, 7
    %p184 = por %p182, %p183
    %p186 = scmp.ne.s32.totalorder %s169, %s185
    %p187 = scmp.eq.s32.totalorder %s17, 0
    %p188 = por %p186, %p187
    %p189 = scmp.le.s32.totalorder 1, %s11
    %p190 = scmp.lt.s32.totalorder %s11, 9
    %p191 = pnand %p189, %p190
    %p192 = pneg %p191
    // Predicated region
    $region9: #{inception_module.5} parent=5 // pred_check
      _
    $region10: #{inception_module.5} parent=5 // pred_check_branch
      %194 = sbr.rel (%p191) target = $region12
    $region11: #{inception_module.5} parent=5 // pred_region
      %s195 = ssub.s32 %s11, 1
      // Predicated region
      $region13: #{inception_module.5} parent=11 // pred_check
        %p196 = pneg %p132
      $region14: #{inception_module.5} parent=11 // pred_check_branch
        %198 = sbr.rel (%p196) target = $region16
      $region15: #{inception_module.5} parent=11 // pred_region
        _
      $region16: #{inception_module.5} parent=11 // pred_fallthru
        _
      // Predicated region
      $region17: #{inception_module.5} parent=11 // pred_check
        %p199 = pneg %p153
      $region18: #{inception_module.5} parent=11 // pred_check_branch
        %201 = sbr.rel (%p199) target = $region20
      $region19: #{inception_module.5} parent=11 // pred_region
        _
      $region20: #{inception_module.5} parent=11 // pred_fallthru
        _
    $region12: #{inception_module.5} parent=5 // pred_fallthru
      _
    %p202 = scmp.lt.s32.totalorder %s11, 8
    // Predicated region
    $region21: #{inception_module.5} parent=5 // pred_check
      %p203 = pneg %p202
    $region22: #{inception_module.5} parent=5 // pred_check_branch
      %205 = sbr.rel (%p203) target = $region24
    $region23: #{inception_module.5} parent=5 // pred_region
      // Predicated region
      $region25: #{inception_module.5} parent=23 // pred_check
        %p206 = pneg %p45
      $region26: #{inception_module.5} parent=23 // pred_check_branch
        %208 = sbr.rel (%p206) target = $region28
      $region27: #{inception_module.5} parent=23 // pred_region
        %p209 = scmp.lt.s32.totalorder %s18, 1
        %s210 = scalar_select %p209, %s18, 1
        %p211 = scmp.lt.s32.totalorder %s19, 5
        %s212 = scalar_select %p211, %s19, 5
        %s213 = smul.addr %s212, 20
        %s214 = smul.addr %s210, 120
        %s215 = sadd.s32 %s213, %s214
        %s216 = smul.addr %s215, 8
        %s217 = scalar_lea.vmem %s0, %s216
      $region28: #{inception_module.5} parent=23 // pred_fallthru
        _
      // Predicated region
      $region29: #{inception_module.5} parent=23 // pred_check
        %p218 = pneg %p75
      $region30: #{inception_module.5} parent=23 // pred_check_branch
        %220 = sbr.rel (%p218) target = $region32
      $region31: #{inception_module.5} parent=23 // pred_region
        %s221 = sadd.s32 %s19, 1
        %p222 = scmp.lt.s32.totalorder %s18, 1
        %s223 = scalar_select %p222, %s18, 1
        %p224 = scmp.lt.s32.totalorder %s221, 5
        %s225 = scalar_select %p224, %s221, 5
        %s226 = smul.addr %s225, 20
        %s227 = smul.addr %s223, 120
        %s228 = sadd.s32 %s226, %s227
        %s229 = smul.addr %s228, 8
        %s230 = scalar_lea.vmem %s1, %s229
        %s231 = sadd.s32 %s19, 1
      $region32: #{inception_module.5} parent=23 // pred_fallthru
        _
      // Predicated region
      $region33: #{inception_module.5} parent=23 // pred_check
        %p232 = pneg %p105
      $region34: #{inception_module.5} parent=23 // pred_check_branch
        %234 = sbr.rel (%p232) target = $region36
      $region35: #{inception_module.5} parent=23 // pred_region
        %s235 = sadd.s32 %s19, 2
        %p236 = scmp.lt.s32.totalorder %s18, 1
        %s237 = scalar_select %p236, %s18, 1
        %p238 = scmp.lt.s32.totalorder %s235, 5
        %s239 = scalar_select %p238, %s235, 5
        %s240 = smul.addr %s239, 20
        %s241 = smul.addr %s237, 120
        %s242 = sadd.s32 %s240, %s241
        %s243 = smul.addr %s242, 8
        %s244 = scalar_lea.vmem %s2, %s243
        %s245 = sadd.s32 %s19, 2
      $region36: #{inception_module.5} parent=23 // pred_fallthru
        _
    $region24: #{inception_module.5} parent=5 // pred_fallthru
      _
    %p246 = scmp.le.s32.totalorder 1, %s11
    %p247 = scmp.lt.s32.totalorder %s11, 9
    %p248 = pnand %p246, %p247
    %p249 = pneg %p248
    // Predicated region
    $region37: #{inception_module.5} parent=5 // pred_check
      _
    $region38: #{inception_module.5} parent=5 // pred_check_branch
      %251 = sbr.rel (%p248) target = $region40
    $region39: #{inception_module.5} parent=5 // pred_region
      %s252 = ssub.s32 %s11, 1
      %p253 = scmp.lt.s32.totalorder %s20, 1
      %s254 = scalar_select %p253, %s20, 1
      %p255 = scmp.lt.s32.totalorder %s21, 5
      %s256 = scalar_select %p255, %s21, 5
      %s257 = smul.addr %s256, 20
      %s258 = smul.addr %s254, 120
      %s259 = sadd.s32 %s257, %s258
      %s260 = smul.addr %s259, 8
      %s261 = scalar_lea.vmem %s0, %s260
      %p262 = pneg %p51
      %p263 = pneg %p48
      %s264 = sadd.s32 %s21, 1
      %p265 = scmp.lt.s32.totalorder %s20, 1
      %s266 = scalar_select %p265, %s20, 1
      %p267 = scmp.lt.s32.totalorder %s264, 5
      %s268 = scalar_select %p267, %s264, 5
      %s269 = smul.addr %s268, 20
      %s270 = smul.addr %s266, 120
      %s271 = sadd.s32 %s269, %s270
      %s272 = smul.addr %s271, 8
      %s273 = scalar_lea.vmem %s1, %s272
      %p274 = pneg %p81
      %p275 = pneg %p78
      %s276 = sadd.s32 %s21, 2
      %p277 = scmp.lt.s32.totalorder %s20, 1
      %s278 = scalar_select %p277, %s20, 1
      %p279 = scmp.lt.s32.totalorder %s276, 5
      %s280 = scalar_select %p279, %s276, 5
      %s281 = smul.addr %s280, 20
      %s282 = smul.addr %s278, 120
      %s283 = sadd.s32 %s281, %s282
      %s284 = smul.addr %s283, 8
      %s285 = scalar_lea.vmem %s2, %s284
      %p286 = pneg %p111
      %p287 = pneg %p108
      %p288 = pneg %p132
      %p289 = pneg %p129
      %p290 = pneg %p153
      %p291 = pneg %p150
      %p292 = pneg %p181
      %p293 = pneg %p178
      %p294 = scmp.lt.s32.totalorder %s20, 1
      %s295 = scalar_select %p294, %s20, 1
      %p296 = scmp.lt.s32.totalorder %s21, 3
      %s297 = scalar_select %p296, %s21, 3
      %s298 = smul.addr %s297, 8
      %s299 = smul.addr %s295, 32
      %s300 = sadd.s32 %s298, %s299
      %s301 = smul.addr %s300, 8
      %s302 = scalar_lea.vmem %s5, %s301
      %p303 = scmp.lt.s32.totalorder %s20, 1
      %s304 = scalar_select %p303, %s20, 1
      %p305 = scmp.lt.s32.totalorder %s21, 5
      %s306 = scalar_select %p305, %s21, 5
      %s307 = smul.addr %s306, 20
      %s308 = smul.addr %s304, 120
      %s309 = sadd.s32 %s307, %s308
      %s310 = smul.addr %s309, 8
      %s311 = scalar_lea.vmem %s0, %s310
      %s312 = sadd.s32 %s21, 1
      %p313 = scmp.lt.s32.totalorder %s20, 1
      %s314 = scalar_select %p313, %s20, 1
      %p315 = scmp.lt.s32.totalorder %s312, 5
      %s316 = scalar_select %p315, %s312, 5
      %s317 = smul.addr %s316, 20
      %s318 = smul.addr %s314, 120
      %s319 = sadd.s32 %s317, %s318
      %s320 = smul.addr %s319, 8
      %s321 = scalar_lea.vmem %s1, %s320
      %s322 = sadd.s32 %s21, 1
      %s323 = sadd.s32 %s21, 2
      %p324 = scmp.lt.s32.totalorder %s20, 1
      %s325 = scalar_select %p324, %s20, 1
      %p326 = scmp.lt.s32.totalorder %s323, 5
      %s327 = scalar_select %p326, %s323, 5
      %s328 = smul.addr %s327, 20
      %s329 = smul.addr %s325, 120
      %s330 = sadd.s32 %s328, %s329
      %s331 = smul.addr %s330, 8
      %s332 = scalar_lea.vmem %s2, %s331
      %s333 = sadd.s32 %s21, 2
      %p334 = scmp.lt.s32.totalorder %s20, 1
      %s335 = scalar_select %p334, %s20, 1
      %p336 = scmp.lt.s32.totalorder %s21, 3
      %s337 = scalar_select %p336, %s21, 3
      %s338 = smul.addr %s337, 8
      %s339 = smul.addr %s335, 32
      %s340 = sadd.s32 %s338, %s339
      %s341 = smul.addr %s340, 8
      %s342 = scalar_lea.vmem %s5, %s341
      %v343 = vld [vmem:[%s311] sm:$0xff]
      %v344 = vld [vmem:[%s311 + $0x10] sm:$0xff]
      %v345 = vld [vmem:[%s311 + $0x20] sm:$0xff]
      %v346 = vld [vmem:[%s311 + $0x30] sm:$0xff]
      %v347 = vld [vmem:[%s311 + $0x40] sm:$0xff]
      %v348 = vld [vmem:[%s311 + $0x50] sm:$0xff]
      %v349 = vld [vmem:[%s311 + $0x60] sm:$0xff]
      %v350 = vld [vmem:[%s311 + $0x70] sm:$0xff]
      %v351 = vld [vmem:[%s3] sm:$0xf]
      %v352 = vld [vmem:[%s311 + $0x1] sm:$0xff]
      %v353 = vld [vmem:[%s311 + $0x11] sm:$0xff]
      %v354 = vld [vmem:[%s311 + $0x21] sm:$0xff]
      %v355 = vld [vmem:[%s311 + $0x31] sm:$0xff]
      %v356 = vld [vmem:[%s311 + $0x41] sm:$0xff]
      %v357 = vld [vmem:[%s311 + $0x51] sm:$0xff]
      %v358 = vld [vmem:[%s311 + $0x61] sm:$0xff]
      %v359 = vld [vmem:[%s311 + $0x71] sm:$0xff]
      %s360 = scalar_lea.vmem %s3, 4
      %v361 = vld [vmem:[%s360] sm:$0xf]
      %vm362 = vcmask 31744
      %v364 = vsel %vm362, %v352, 0
      %v367 = vsel %vm362, %v353, 0
      %v370 = vsel %vm362, %v354, 0
      %v373 = vsel %vm362, %v355, 0
      %v376 = vsel %vm362, %v356, 0
      %v379 = vsel %vm362, %v357, 0
      %v382 = vsel %vm362, %v358, 0
      %v385 = vsel %vm362, %v359, 0
      %vm387 = vcmask 1043456
      %v389 = vsel %vm387, %v361, 0
      %391 = vmatprep.subr.mxu0 0.0
      %392 = vmatpush1.msra.mxu0 0.0
      %393 = vmatprep.subr.mxu0 0.0
      %394 = vmatpush1.msra.mxu0 0.0
      %395 = vmatprep.subr.mxu0 0.0
      %396 = vmatpush1.msra.mxu0 0.0
      %397 = vmatprep.subr.mxu0 0.0
      %398 = vmatpush1.msra.mxu0 0.0
      %399 = vmatprep.subr.mxu0 0.0
      %400 = vmatpush1.msra.mxu0 0.0
      %401 = vmatprep.subr.mxu0 0.0
      %402 = vmatpush1.msra.mxu0 0.0
      %403 = vmatprep.subr.mxu0 0.0
      %404 = vmatpush1.msra.mxu0 0.0
      %405 = vmatprep.subr.mxu0 0.0
      %406 = vmatpush1.msra.mxu0 0.0
      %407 = vmatprep.subr.mxu0 0.0
      %408 = vmatpush1.msra.mxu0 0.0
      %409 = vmatprep.subr.mxu0 0.0
      %410 = vmatpush1.msra.mxu0 0.0
      %411 = vmatprep.subr.mxu0 0.0
      %412 = vmatpush1.msra.mxu0 0.0
      %413 = vmatprep.subr.mxu0 0.0
      %414 = vmatpush1.msra.mxu0 0.0
      %415 = vmatprep.subr.mxu0 0.0
      %416 = vmatpush1.msra.mxu0 0.0
      %417 = vmatprep.subr.mxu0 0.0
      %418 = vmatpush1.msra.mxu0 0.0
      %419 = vmatprep.subr.mxu0 0.0
      %420 = vmatpush1.msra.mxu0 0.0
      %421 = vmatprep.subr.mxu0 0.0
      %422 = vmatpush1.msra.mxu0 %v389
      %423 = vmatprep.subr.mxu0 0.0
      %424 = vmatpush2.msra.mxu0 0.0
      %425 = vmatprep.subr.mxu0 0.0
      %426 = vmatpush2.msra.mxu0 0.0
      %427 = vmatprep.subr.mxu0 0.0
      %428 = vmatpush2.msra.mxu0 0.0
      %429 = vmatprep.subr.mxu0 0.0
      %430 = vmatpush2.msra.mxu0 0.0
      %431 = vmatprep.subr.mxu0 0.0
      %432 = vmatpush2.msra.mxu0 0.0
      %433 = vmatprep.subr.mxu0 0.0
      %434 = vmatpush2.msra.mxu0 0.0
      %435 = vmatprep.subr.mxu0 0.0
      %436 = vmatpush2.msra.mxu0 0.0
      %437 = vmatprep.subr.mxu0 0.0
      %438 = vmatpush2.msra.mxu0 0.0
      %439 = vmatprep.subr.mxu0 0.0
      %440 = vmatpush2.msra.mxu0 0.0
      %441 = vmatprep.subr.mxu0 0.0
      %442 = vmatpush2.msra.mxu0 0.0
      %443 = vmatprep.subr.mxu0 0.0
      %444 = vmatpush2.msra.mxu0 0.0
      %445 = vmatprep.subr.mxu0 0.0
      %446 = vmatpush2.msra.mxu0 0.0
      %447 = vmatprep.subr.mxu0 0.0
      %448 = vmatpush2.msra.mxu0 0.0
      %449 = vmatprep.subr.mxu0 0.0
      %450 = vmatpush2.msra.mxu0 0.0
      %451 = vmatprep.subr.mxu0 0.0
      %452 = vmatpush2.msra.mxu0 0.0
      %453 = vmatprep.subr.mxu0 0.0
      %454 = vmatpush2.msra.mxu0 0.0
      %455 = vmatprep.mubr.f32.mxu0 0.0
      %456 = vmatmul.mubr.f32.gmra.mxu0 %v364
      %v457 = vpop.f32.mrf.mxu0
      %v458 = vadd.f32 0.0, %v457
      %v459 = vpop.f32.mrf.mxu0
      %460 = vmatprep.mubr.f32.mxu0 0.0
      %461 = vmatmul.mubr.f32.gmra.mxu0 %v367
      %v462 = vpop.f32.mrf.mxu0
      %v463 = vadd.f32 0.0, %v462
      %v464 = vpop.f32.mrf.mxu0
      %465 = vmatprep.mubr.f32.mxu0 0.0
      %466 = vmatmul.mubr.f32.gmra.mxu0 %v370
      %v467 = vpop.f32.mrf.mxu0
      %v468 = vadd.f32 0.0, %v467
      %v469 = vpop.f32.mrf.mxu0
      %470 = vmatprep.mubr.f32.mxu0 0.0
      %471 = vmatmul.mubr.f32.gmra.mxu0 %v373
      %v472 = vpop.f32.mrf.mxu0
      %v473 = vadd.f32 0.0, %v472
      %v474 = vpop.f32.mrf.mxu0
      %475 = vmatprep.mubr.f32.mxu0 0.0
      %476 = vmatmul.mubr.f32.gmra.mxu0 %v376
      %v477 = vpop.f32.mrf.mxu0
      %v478 = vadd.f32 0.0, %v477
      %v479 = vpop.f32.mrf.mxu0
      %480 = vmatprep.mubr.f32.mxu0 0.0
      %481 = vmatmul.mubr.f32.gmra.mxu0 %v379
      %v482 = vpop.f32.mrf.mxu0
      %v483 = vadd.f32 0.0, %v482
      %v484 = vpop.f32.mrf.mxu0
      %485 = vmatprep.mubr.f32.mxu0 0.0
      %486 = vmatmul.mubr.f32.gmra.mxu0 %v382
      %v487 = vpop.f32.mrf.mxu0
      %v488 = vadd.f32 0.0, %v487
      %v489 = vpop.f32.mrf.mxu0
      %490 = vmatprep.mubr.f32.mxu0 0.0
      %491 = vmatmul.mubr.f32.gmra.mxu0 %v385
      %v492 = vpop.f32.mrf.mxu0
      %v493 = vadd.f32 0.0, %v492
      %v494 = vpop.f32.mrf.mxu0
      %495 = vdwg.mxu0
      %v497 = vsel %vm362, %v343, 0
      %v500 = vsel %vm362, %v344, 0
      %v503 = vsel %vm362, %v345, 0
      %v506 = vsel %vm362, %v346, 0
      %v509 = vsel %vm362, %v347, 0
      %v512 = vsel %vm362, %v348, 0
      %v515 = vsel %vm362, %v349, 0
      %v518 = vsel %vm362, %v350, 0
      %v521 = vsel %vm387, %v351, 0
      %523 = vmatprep.subr.mxu0 0.0
      %524 = vmatpush1.msra.mxu0 0.0
      %525 = vmatprep.subr.mxu0 0.0
      %526 = vmatpush1.msra.mxu0 0.0
      %527 = vmatprep.subr.mxu0 0.0
      %528 = vmatpush1.msra.mxu0 0.0
      %529 = vmatprep.subr.mxu0 0.0
      %530 = vmatpush1.msra.mxu0 0.0
      %531 = vmatprep.subr.mxu0 0.0
      %532 = vmatpush1.msra.mxu0 0.0
      %533 = vmatprep.subr.mxu0 0.0
      %534 = vmatpush1.msra.mxu0 0.0
      %535 = vmatprep.subr.mxu0 0.0
      %536 = vmatpush1.msra.mxu0 0.0
      %537 = vmatprep.subr.mxu0 0.0
      %538 = vmatpush1.msra.mxu0 0.0
      %539 = vmatprep.subr.mxu0 0.0
      %540 = vmatpush1.msra.mxu0 0.0
      %541 = vmatprep.subr.mxu0 0.0
      %542 = vmatpush1.msra.mxu0 0.0
      %543 = vmatprep.subr.mxu0 0.0
      %544 = vmatpush1.msra.mxu0 0.0
      %545 = vmatprep.subr.mxu0 0.0
      %546 = vmatpush1.msra.mxu0 0.0
      %547 = vmatprep.subr.mxu0 0.0
      %548 = vmatpush1.msra.mxu0 0.0
      %549 = vmatprep.subr.mxu0 0.0
      %550 = vmatpush1.msra.mxu0 0.0
      %551 = vmatprep.subr.mxu0 0.0
      %552 = vmatpush1.msra.mxu0 0.0
      %553 = vmatprep.subr.mxu0 0.0
      %554 = vmatpush1.msra.mxu0 %v521
      %555 = vmatprep.subr.mxu0 0.0
      %556 = vmatpush2.msra.mxu0 0.0
      %557 = vmatprep.subr.mxu0 0.0
      %558 = vmatpush2.msra.mxu0 0.0
      %559 = vmatprep.subr.mxu0 0.0
      %560 = vmatpush2.msra.mxu0 0.0
      %561 = vmatprep.subr.mxu0 0.0
      %562 = vmatpush2.msra.mxu0 0.0
      %563 = vmatprep.subr.mxu0 0.0
      %564 = vmatpush2.msra.mxu0 0.0
      %565 = vmatprep.subr.mxu0 0.0
      %566 = vmatpush2.msra.mxu0 0.0
      %567 = vmatprep.subr.mxu0 0.0
      %568 = vmatpush2.msra.mxu0 0.0
      %569 = vmatprep.subr.mxu0 0.0
      %570 = vmatpush2.msra.mxu0 0.0
      %571 = vmatprep.subr.mxu0 0.0
      %572 = vmatpush2.msra.mxu0 0.0
      %573 = vmatprep.subr.mxu0 0.0
      %574 = vmatpush2.msra.mxu0 0.0
      %575 = vmatprep.subr.mxu0 0.0
      %576 = vmatpush2.msra.mxu0 0.0
      %577 = vmatprep.subr.mxu0 0.0
      %578 = vmatpush2.msra.mxu0 0.0
      %579 = vmatprep.subr.mxu0 0.0
      %580 = vmatpush2.msra.mxu0 0.0
      %581 = vmatprep.subr.mxu0 0.0
      %582 = vmatpush2.msra.mxu0 0.0
      %583 = vmatprep.subr.mxu0 0.0
      %584 = vmatpush2.msra.mxu0 0.0
      %585 = vmatprep.subr.mxu0 0.0
      %586 = vmatpush2.msra.mxu0 0.0
      %587 = vmatprep.mubr.f32.mxu0 0.0
      %588 = vmatmul.mubr.f32.gmra.mxu0 %v497
      %v589 = vpop.f32.mrf.mxu0
      %v590 = vadd.f32 %v458, %v589
      %v591 = vpop.f32.mrf.mxu0
      %592 = vmatprep.mubr.f32.mxu0 0.0
      %593 = vmatmul.mubr.f32.gmra.mxu0 %v500
      %v594 = vpop.f32.mrf.mxu0
      %v595 = vadd.f32 %v463, %v594
      %v596 = vpop.f32.mrf.mxu0
      %597 = vmatprep.mubr.f32.mxu0 0.0
      %598 = vmatmul.mubr.f32.gmra.mxu0 %v503
      %v599 = vpop.f32.mrf.mxu0
      %v600 = vadd.f32 %v468, %v599
      %v601 = vpop.f32.mrf.mxu0
      %602 = vmatprep.mubr.f32.mxu0 0.0
      %603 = vmatmul.mubr.f32.gmra.mxu0 %v506
      %v604 = vpop.f32.mrf.mxu0
      %v605 = vadd.f32 %v473, %v604
      %v606 = vpop.f32.mrf.mxu0
      %607 = vmatprep.mubr.f32.mxu0 0.0
      %608 = vmatmul.mubr.f32.gmra.mxu0 %v509
      %v609 = vpop.f32.mrf.mxu0
      %v610 = vadd.f32 %v478, %v609
      %v611 = vpop.f32.mrf.mxu0
      %612 = vmatprep.mubr.f32.mxu0 0.0
      %613 = vmatmul.mubr.f32.gmra.mxu0 %v512
      %v614 = vpop.f32.mrf.mxu0
      %v615 = vadd.f32 %v483, %v614
      %v616 = vpop.f32.mrf.mxu0
      %617 = vmatprep.mubr.f32.mxu0 0.0
      %618 = vmatmul.mubr.f32.gmra.mxu0 %v515
      %v619 = vpop.f32.mrf.mxu0
      %v620 = vadd.f32 %v488, %v619
      %v621 = vpop.f32.mrf.mxu0
      %622 = vmatprep.mubr.f32.mxu0 0.0
      %623 = vmatmul.mubr.f32.gmra.mxu0 %v518
      %v624 = vpop.f32.mrf.mxu0
      %v625 = vadd.f32 %v493, %v624
      %v626 = vpop.f32.mrf.mxu0
      %627 = vdwg.mxu0
      %v628 = vld [vmem:[%s311 + $0x2] sm:$0xff]
      %v629 = vld [vmem:[%s311 + $0x12] sm:$0xff]
      %v630 = vld [vmem:[%s311 + $0x22] sm:$0xff]
      %v631 = vld [vmem:[%s311 + $0x32] sm:$0xff]
      %v632 = vld [vmem:[%s311 + $0x42] sm:$0xff]
      %v633 = vld [vmem:[%s311 + $0x52] sm:$0xff]
      %v634 = vld [vmem:[%s311 + $0x62] sm:$0xff]
      %v635 = vld [vmem:[%s311 + $0x72] sm:$0xff]
      %s636 = scalar_lea.vmem %s3, 8
      %v637 = vld [vmem:[%s636] sm:$0xf]
      %v639 = vsel %vm362, %v628, 0
      %v642 = vsel %vm362, %v629, 0
      %v645 = vsel %vm362, %v630, 0
      %v648 = vsel %vm362, %v631, 0
      %v651 = vsel %vm362, %v632, 0
      %v654 = vsel %vm362, %v633, 0
      %v657 = vsel %vm362, %v634, 0
      %v660 = vsel %vm362, %v635, 0
      %v663 = vsel %vm387, %v637, 0
      %665 = vmatprep.subr.mxu0 0.0
      %666 = vmatpush1.msra.mxu0 0.0
      %667 = vmatprep.subr.mxu0 0.0
      %668 = vmatpush1.msra.mxu0 0.0
      %669 = vmatprep.subr.mxu0 0.0
      %670 = vmatpush1.msra.mxu0 0.0
      %671 = vmatprep.subr.mxu0 0.0
      %672 = vmatpush1.msra.mxu0 0.0
      %673 = vmatprep.subr.mxu0 0.0
      %674 = vmatpush1.msra.mxu0 0.0
      %675 = vmatprep.subr.mxu0 0.0
      %676 = vmatpush1.msra.mxu0 0.0
      %677 = vmatprep.subr.mxu0 0.0
      %678 = vmatpush1.msra.mxu0 0.0
      %679 = vmatprep.subr.mxu0 0.0
      %680 = vmatpush1.msra.mxu0 0.0
      %681 = vmatprep.subr.mxu0 0.0
      %682 = vmatpush1.msra.mxu0 0.0
      %683 = vmatprep.subr.mxu0 0.0
      %684 = vmatpush1.msra.mxu0 0.0
      %685 = vmatprep.subr.mxu0 0.0
      %686 = vmatpush1.msra.mxu0 0.0
      %687 = vmatprep.subr.mxu0 0.0
      %688 = vmatpush1.msra.mxu0 0.0
      %689 = vmatprep.subr.mxu0 0.0
      %690 = vmatpush1.msra.mxu0 0.0
      %691 = vmatprep.subr.mxu0 0.0
      %692 = vmatpush1.msra.mxu0 0.0
      %693 = vmatprep.subr.mxu0 0.0
      %694 = vmatpush1.msra.mxu0 0.0
      %695 = vmatprep.subr.mxu0 0.0
      %696 = vmatpush1.msra.mxu0 %v663
      %697 = vmatprep.subr.mxu0 0.0
      %698 = vmatpush2.msra.mxu0 0.0
      %699 = vmatprep.subr.mxu0 0.0
      %700 = vmatpush2.msra.mxu0 0.0
      %701 = vmatprep.subr.mxu0 0.0
      %702 = vmatpush2.msra.mxu0 0.0
      %703 = vmatprep.subr.mxu0 0.0
      %704 = vmatpush2.msra.mxu0 0.0
      %705 = vmatprep.subr.mxu0 0.0
      %706 = vmatpush2.msra.mxu0 0.0
      %707 = vmatprep.subr.mxu0 0.0
      %708 = vmatpush2.msra.mxu0 0.0
      %709 = vmatprep.subr.mxu0 0.0
      %710 = vmatpush2.msra.mxu0 0.0
      %711 = vmatprep.subr.mxu0 0.0
      %712 = vmatpush2.msra.mxu0 0.0
      %713 = vmatprep.subr.mxu0 0.0
      %714 = vmatpush2.msra.mxu0 0.0
      %715 = vmatprep.subr.mxu0 0.0
      %716 = vmatpush2.msra.mxu0 0.0
      %717 = vmatprep.subr.mxu0 0.0
      %718 = vmatpush2.msra.mxu0 0.0
      %719 = vmatprep.subr.mxu0 0.0
      %720 = vmatpush2.msra.mxu0 0.0
      %721 = vmatprep.subr.mxu0 0.0
      %722 = vmatpush2.msra.mxu0 0.0
      %723 = vmatprep.subr.mxu0 0.0
      %724 = vmatpush2.msra.mxu0 0.0
      %725 = vmatprep.subr.mxu0 0.0
      %726 = vmatpush2.msra.mxu0 0.0
      %727 = vmatprep.subr.mxu0 0.0
      %728 = vmatpush2.msra.mxu0 0.0
      %729 = vmatprep.mubr.f32.mxu0 0.0
      %730 = vmatmul.mubr.f32.gmra.mxu0 %v639
      %v731 = vpop.f32.mrf.mxu0
      %v732 = vadd.f32 0.0, %v731
      %v733 = vpop.f32.mrf.mxu0
      %734 = vmatprep.mubr.f32.mxu0 0.0
      %735 = vmatmul.mubr.f32.gmra.mxu0 %v642
      %v736 = vpop.f32.mrf.mxu0
      %v737 = vadd.f32 0.0, %v736
      %v738 = vpop.f32.mrf.mxu0
      %739 = vmatprep.mubr.f32.mxu0 0.0
      %740 = vmatmul.mubr.f32.gmra.mxu0 %v645
      %v741 = vpop.f32.mrf.mxu0
      %v742 = vadd.f32 0.0, %v741
      %v743 = vpop.f32.mrf.mxu0
      %744 = vmatprep.mubr.f32.mxu0 0.0
      %745 = vmatmul.mubr.f32.gmra.mxu0 %v648
      %v746 = vpop.f32.mrf.mxu0
      %v747 = vadd.f32 0.0, %v746
      %v748 = vpop.f32.mrf.mxu0
      %749 = vmatprep.mubr.f32.mxu0 0.0
      %750 = vmatmul.mubr.f32.gmra.mxu0 %v651
      %v751 = vpop.f32.mrf.mxu0
      %v752 = vadd.f32 0.0, %v751
      %v753 = vpop.f32.mrf.mxu0
      %754 = vmatprep.mubr.f32.mxu0 0.0
      %755 = vmatmul.mubr.f32.gmra.mxu0 %v654
      %v756 = vpop.f32.mrf.mxu0
      %v757 = vadd.f32 0.0, %v756
      %v758 = vpop.f32.mrf.mxu0
      %759 = vmatprep.mubr.f32.mxu0 0.0
      %760 = vmatmul.mubr.f32.gmra.mxu0 %v657
      %v761 = vpop.f32.mrf.mxu0
      %v762 = vadd.f32 0.0, %v761
      %v763 = vpop.f32.mrf.mxu0
      %764 = vmatprep.mubr.f32.mxu0 0.0
      %765 = vmatmul.mubr.f32.gmra.mxu0 %v660
      %v766 = vpop.f32.mrf.mxu0
      %v767 = vadd.f32 0.0, %v766
      %v768 = vpop.f32.mrf.mxu0
      %769 = vdwg.mxu0
      %v770 = vadd.f32 %v590, %v732
      %v771 = vadd.f32 %v595, %v737
      %v772 = vadd.f32 %v600, %v742
      %v773 = vadd.f32 %v605, %v747
      %v774 = vadd.f32 %v610, %v752
      %v775 = vadd.f32 %v615, %v757
      %v776 = vadd.f32 %v620, %v762
      %v777 = vadd.f32 %v625, %v767
      %s778 = scalar_lea.vmem %s311, 16
      %v779 = vld [vmem:[%s778] sm:$0xff]
      %v780 = vld [vmem:[%s778 + $0x10] sm:$0xff]
      %v781 = vld [vmem:[%s778 + $0x20] sm:$0xff]
      %v782 = vld [vmem:[%s778 + $0x30] sm:$0xff]
      %v783 = vld [vmem:[%s778 + $0x40] sm:$0xff]
      %v784 = vld [vmem:[%s778 + $0x50] sm:$0xff]
      %v785 = vld [vmem:[%s778 + $0x60] sm:$0xff]
      %v786 = vld [vmem:[%s778 + $0x70] sm:$0xff]
      %s787 = scalar_lea.vmem %s3, 12
      %v788 = vld [vmem:[%s787] sm:$0xf]
      %v790 = vsel %vm362, %v779, 0
      %v793 = vsel %vm362, %v780, 0
      %v796 = vsel %vm362, %v781, 0
      %v799 = vsel %vm362, %v782, 0
      %v802 = vsel %vm362, %v783, 0
      %v805 = vsel %vm362, %v784, 0
      %v808 = vsel %vm362, %v785, 0
      %v811 = vsel %vm362, %v786, 0
      %v814 = vsel %vm387, %v788, 0
      %816 = vmatprep.subr.mxu0 0.0
      %817 = vmatpush1.msra.mxu0 0.0
      %818 = vmatprep.subr.mxu0 0.0
      %819 = vmatpush1.msra.mxu0 0.0
      %820 = vmatprep.subr.mxu0 0.0
      %821 = vmatpush1.msra.mxu0 0.0
      %822 = vmatprep.subr.mxu0 0.0
      %823 = vmatpush1.msra.mxu0 0.0
      %824 = vmatprep.subr.mxu0 0.0
      %825 = vmatpush1.msra.mxu0 0.0
      %826 = vmatprep.subr.mxu0 0.0
      %827 = vmatpush1.msra.mxu0 0.0
      %828 = vmatprep.subr.mxu0 0.0
      %829 = vmatpush1.msra.mxu0 0.0
      %830 = vmatprep.subr.mxu0 0.0
      %831 = vmatpush1.msra.mxu0 0.0
      %832 = vmatprep.subr.mxu0 0.0
      %833 = vmatpush1.msra.mxu0 0.0
      %834 = vmatprep.subr.mxu0 0.0
      %835 = vmatpush1.msra.mxu0 0.0
      %836 = vmatprep.subr.mxu0 0.0
      %837 = vmatpush1.msra.mxu0 0.0
      %838 = vmatprep.subr.mxu0 0.0
      %839 = vmatpush1.msra.mxu0 0.0
      %840 = vmatprep.subr.mxu0 0.0
      %841 = vmatpush1.msra.mxu0 0.0
      %842 = vmatprep.subr.mxu0 0.0
      %843 = vmatpush1.msra.mxu0 0.0
      %844 = vmatprep.subr.mxu0 0.0
      %845 = vmatpush1.msra.mxu0 0.0
      %846 = vmatprep.subr.mxu0 0.0
      %847 = vmatpush1.msra.mxu0 %v814
      %848 = vmatprep.subr.mxu0 0.0
      %849 = vmatpush2.msra.mxu0 0.0
      %850 = vmatprep.subr.mxu0 0.0
      %851 = vmatpush2.msra.mxu0 0.0
      %852 = vmatprep.subr.mxu0 0.0
      %853 = vmatpush2.msra.mxu0 0.0
      %854 = vmatprep.subr.mxu0 0.0
      %855 = vmatpush2.msra.mxu0 0.0
      %856 = vmatprep.subr.mxu0 0.0
      %857 = vmatpush2.msra.mxu0 0.0
      %858 = vmatprep.subr.mxu0 0.0
      %859 = vmatpush2.msra.mxu0 0.0
      %860 = vmatprep.subr.mxu0 0.0
      %861 = vmatpush2.msra.mxu0 0.0
      %862 = vmatprep.subr.mxu0 0.0
      %863 = vmatpush2.msra.mxu0 0.0
      %864 = vmatprep.subr.mxu0 0.0
      %865 = vmatpush2.msra.mxu0 0.0
      %866 = vmatprep.subr.mxu0 0.0
      %867 = vmatpush2.msra.mxu0 0.0
      %868 = vmatprep.subr.mxu0 0.0
      %869 = vmatpush2.msra.mxu0 0.0
      %870 = vmatprep.subr.mxu0 0.0
      %871 = vmatpush2.msra.mxu0 0.0
      %872 = vmatprep.subr.mxu0 0.0
      %873 = vmatpush2.msra.mxu0 0.0
      %874 = vmatprep.subr.mxu0 0.0
      %875 = vmatpush2.msra.mxu0 0.0
      %876 = vmatprep.subr.mxu0 0.0
      %877 = vmatpush2.msra.mxu0 0.0
      %878 = vmatprep.subr.mxu0 0.0
      %879 = vmatpush2.msra.mxu0 0.0
      %880 = vmatprep.mubr.f32.mxu0 0.0
      %881 = vmatmul.mubr.f32.gmra.mxu0 %v790
      %v882 = vpop.f32.mrf.mxu0
      %v883 = vadd.f32 0.0, %v882
      %v884 = vpop.f32.mrf.mxu0
      %885 = vmatprep.mubr.f32.mxu0 0.0
      %886 = vmatmul.mubr.f32.gmra.mxu0 %v793
      %v887 = vpop.f32.mrf.mxu0
      %v888 = vadd.f32 0.0, %v887
      %v889 = vpop.f32.mrf.mxu0
      %890 = vmatprep.mubr.f32.mxu0 0.0
      %891 = vmatmul.mubr.f32.gmra.mxu0 %v796
      %v892 = vpop.f32.mrf.mxu0
      %v893 = vadd.f32 0.0, %v892
      %v894 = vpop.f32.mrf.mxu0
      %895 = vmatprep.mubr.f32.mxu0 0.0
      %896 = vmatmul.mubr.f32.gmra.mxu0 %v799
      %v897 = vpop.f32.mrf.mxu0
      %v898 = vadd.f32 0.0, %v897
      %v899 = vpop.f32.mrf.mxu0
      %900 = vmatprep.mubr.f32.mxu0 0.0
      %901 = vmatmul.mubr.f32.gmra.mxu0 %v802
      %v902 = vpop.f32.mrf.mxu0
      %v903 = vadd.f32 0.0, %v902
      %v904 = vpop.f32.mrf.mxu0
      %905 = vmatprep.mubr.f32.mxu0 0.0
      %906 = vmatmul.mubr.f32.gmra.mxu0 %v805
      %v907 = vpop.f32.mrf.mxu0
      %v908 = vadd.f32 0.0, %v907
      %v909 = vpop.f32.mrf.mxu0
      %910 = vmatprep.mubr.f32.mxu0 0.0
      %911 = vmatmul.mubr.f32.gmra.mxu0 %v808
      %v912 = vpop.f32.mrf.mxu0
      %v913 = vadd.f32 0.0, %v912
      %v914 = vpop.f32.mrf.mxu0
      %915 = vmatprep.mubr.f32.mxu0 0.0
      %916 = vmatmul.mubr.f32.gmra.mxu0 %v811
      %v917 = vpop.f32.mrf.mxu0
      %v918 = vadd.f32 0.0, %v917
      %v919 = vpop.f32.mrf.mxu0
      %920 = vdwg.mxu0
      %v921 = vadd.f32 %v770, %v883
      %v922 = vadd.f32 %v771, %v888
      %v923 = vadd.f32 %v772, %v893
      %v924 = vadd.f32 %v773, %v898
      %v925 = vadd.f32 %v774, %v903
      %v926 = vadd.f32 %v775, %v908
      %v927 = vadd.f32 %v776, %v913
      %v928 = vadd.f32 %v777, %v918
      %v929 = vld [vmem:[%s778 + $0x1] sm:$0xff]
      %v930 = vld [vmem:[%s778 + $0x11] sm:$0xff]
      %v931 = vld [vmem:[%s778 + $0x21] sm:$0xff]
      %v932 = vld [vmem:[%s778 + $0x31] sm:$0xff]
      %v933 = vld [vmem:[%s778 + $0x41] sm:$0xff]
      %v934 = vld [vmem:[%s778 + $0x51] sm:$0xff]
      %v935 = vld [vmem:[%s778 + $0x61] sm:$0xff]
      %v936 = vld [vmem:[%s778 + $0x71] sm:$0xff]
      %s937 = scalar_lea.vmem %s3, 16
      %v938 = vld [vmem:[%s937] sm:$0xf]
      %v940 = vsel %vm362, %v929, 0
      %v943 = vsel %vm362, %v930, 0
      %v946 = vsel %vm362, %v931, 0
      %v949 = vsel %vm362, %v932, 0
      %v952 = vsel %vm362, %v933, 0
      %v955 = vsel %vm362, %v934, 0
      %v958 = vsel %vm362, %v935, 0
      %v961 = vsel %vm362, %v936, 0
      %v964 = vsel %vm387, %v938, 0
      %966 = vmatprep.subr.mxu0 0.0
      %967 = vmatpush1.msra.mxu0 0.0
      %968 = vmatprep.subr.mxu0 0.0
      %969 = vmatpush1.msra.mxu0 0.0
      %970 = vmatprep.subr.mxu0 0.0
      %971 = vmatpush1.msra.mxu0 0.0
      %972 = vmatprep.subr.mxu0 0.0
      %973 = vmatpush1.msra.mxu0 0.0
      %974 = vmatprep.subr.mxu0 0.0
      %975 = vmatpush1.msra.mxu0 0.0
      %976 = vmatprep.subr.mxu0 0.0
      %977 = vmatpush1.msra.mxu0 0.0
      %978 = vmatprep.subr.mxu0 0.0
      %979 = vmatpush1.msra.mxu0 0.0
      %980 = vmatprep.subr.mxu0 0.0
      %981 = vmatpush1.msra.mxu0 0.0
      %982 = vmatprep.subr.mxu0 0.0
      %983 = vmatpush1.msra.mxu0 0.0
      %984 = vmatprep.subr.mxu0 0.0
      %985 = vmatpush1.msra.mxu0 0.0
      %986 = vmatprep.subr.mxu0 0.0
      %987 = vmatpush1.msra.mxu0 0.0
      %988 = vmatprep.subr.mxu0 0.0
      %989 = vmatpush1.msra.mxu0 0.0
      %990 = vmatprep.subr.mxu0 0.0
      %991 = vmatpush1.msra.mxu0 0.0
      %992 = vmatprep.subr.mxu0 0.0
      %993 = vmatpush1.msra.mxu0 0.0
      %994 = vmatprep.subr.mxu0 0.0
      %995 = vmatpush1.msra.mxu0 0.0
      %996 = vmatprep.subr.mxu0 0.0
      %997 = vmatpush1.msra.mxu0 %v964
      %998 = vmatprep.subr.mxu0 0.0
      %999 = vmatpush2.msra.mxu0 0.0
      %1000 = vmatprep.subr.mxu0 0.0
      %1001 = vmatpush2.msra.mxu0 0.0
      %1002 = vmatprep.subr.mxu0 0.0
      %1003 = vmatpush2.msra.mxu0 0.0
      %1004 = vmatprep.subr.mxu0 0.0
      %1005 = vmatpush2.msra.mxu0 0.0
      %1006 = vmatprep.subr.mxu0 0.0
      %1007 = vmatpush2.msra.mxu0 0.0
      %1008 = vmatprep.subr.mxu0 0.0
      %1009 = vmatpush2.msra.mxu0 0.0
      %1010 = vmatprep.subr.mxu0 0.0
      %1011 = vmatpush2.msra.mxu0 0.0
      %1012 = vmatprep.subr.mxu0 0.0
      %1013 = vmatpush2.msra.mxu0 0.0
      %1014 = vmatprep.subr.mxu0 0.0
      %1015 = vmatpush2.msra.mxu0 0.0
      %1016 = vmatprep.subr.mxu0 0.0
      %1017 = vmatpush2.msra.mxu0 0.0
      %1018 = vmatprep.subr.mxu0 0.0
      %1019 = vmatpush2.msra.mxu0 0.0
      %1020 = vmatprep.subr.mxu0 0.0
      %1021 = vmatpush2.msra.mxu0 0.0
      %1022 = vmatprep.subr.mxu0 0.0
      %1023 = vmatpush2.msra.mxu0 0.0
      %1024 = vmatprep.subr.mxu0 0.0
      %1025 = vmatpush2.msra.mxu0 0.0
      %1026 = vmatprep.subr.mxu0 0.0
      %1027 = vmatpush2.msra.mxu0 0.0
      %1028 = vmatprep.subr.mxu0 0.0
      %1029 = vmatpush2.msra.mxu0 0.0
      %1030 = vmatprep.mubr.f32.mxu0 0.0
      %1031 = vmatmul.mubr.f32.gmra.mxu0 %v940
      %v1032 = vpop.f32.mrf.mxu0
      %v1033 = vadd.f32 0.0, %v1032
      %v1034 = vpop.f32.mrf.mxu0
      %1035 = vmatprep.mubr.f32.mxu0 0.0
      %1036 = vmatmul.mubr.f32.gmra.mxu0 %v943
      %v1037 = vpop.f32.mrf.mxu0
      %v1038 = vadd.f32 0.0, %v1037
      %v1039 = vpop.f32.mrf.mxu0
      %1040 = vmatprep.mubr.f32.mxu0 0.0
      %1041 = vmatmul.mubr.f32.gmra.mxu0 %v946
      %v1042 = vpop.f32.mrf.mxu0
      %v1043 = vadd.f32 0.0, %v1042
      %v1044 = vpop.f32.mrf.mxu0
      %1045 = vmatprep.mubr.f32.mxu0 0.0
      %1046 = vmatmul.mubr.f32.gmra.mxu0 %v949
      %v1047 = vpop.f32.mrf.mxu0
      %v1048 = vadd.f32 0.0, %v1047
      %v1049 = vpop.f32.mrf.mxu0
      %1050 = vmatprep.mubr.f32.mxu0 0.0
      %1051 = vmatmul.mubr.f32.gmra.mxu0 %v952
      %v1052 = vpop.f32.mrf.mxu0
      %v1053 = vadd.f32 0.0, %v1052
      %v1054 = vpop.f32.mrf.mxu0
      %1055 = vmatprep.mubr.f32.mxu0 0.0
      %1056 = vmatmul.mubr.f32.gmra.mxu0 %v955
      %v1057 = vpop.f32.mrf.mxu0
      %v1058 = vadd.f32 0.0, %v1057
      %v1059 = vpop.f32.mrf.mxu0
      %1060 = vmatprep.mubr.f32.mxu0 0.0
      %1061 = vmatmul.mubr.f32.gmra.mxu0 %v958
      %v1062 = vpop.f32.mrf.mxu0
      %v1063 = vadd.f32 0.0, %v1062
      %v1064 = vpop.f32.mrf.mxu0
      %1065 = vmatprep.mubr.f32.mxu0 0.0
      %1066 = vmatmul.mubr.f32.gmra.mxu0 %v961
      %v1067 = vpop.f32.mrf.mxu0
      %v1068 = vadd.f32 0.0, %v1067
      %v1069 = vpop.f32.mrf.mxu0
      %1070 = vdwg.mxu0
      %v1071 = vadd.f32 %v921, %v1033
      %v1072 = vadd.f32 %v922, %v1038
      %v1073 = vadd.f32 %v923, %v1043
      %v1074 = vadd.f32 %v924, %v1048
      %v1075 = vadd.f32 %v925, %v1053
      %v1076 = vadd.f32 %v926, %v1058
      %v1077 = vadd.f32 %v927, %v1063
      %v1078 = vadd.f32 %v928, %v1068
      %v1079 = vld [vmem:[%s778 + $0x2] sm:$0xff]
      %v1080 = vld [vmem:[%s778 + $0x12] sm:$0xff]
      %v1081 = vld [vmem:[%s778 + $0x22] sm:$0xff]
      %v1082 = vld [vmem:[%s778 + $0x32] sm:$0xff]
      %v1083 = vld [vmem:[%s778 + $0x42] sm:$0xff]
      %v1084 = vld [vmem:[%s778 + $0x52] sm:$0xff]
      %v1085 = vld [vmem:[%s778 + $0x62] sm:$0xff]
      %v1086 = vld [vmem:[%s778 + $0x72] sm:$0xff]
      %s1087 = scalar_lea.vmem %s3, 20
      %v1088 = vld [vmem:[%s1087] sm:$0xf]
      %v1090 = vsel %vm362, %v1079, 0
      %v1093 = vsel %vm362, %v1080, 0
      %v1096 = vsel %vm362, %v1081, 0
      %v1099 = vsel %vm362, %v1082, 0
      %v1102 = vsel %vm362, %v1083, 0
      %v1105 = vsel %vm362, %v1084, 0
      %v1108 = vsel %vm362, %v1085, 0
      %v1111 = vsel %vm362, %v1086, 0
      %v1114 = vsel %vm387, %v1088, 0
      %1116 = vmatprep.subr.mxu0 0.0
      %1117 = vmatpush1.msra.mxu0 0.0
      %1118 = vmatprep.subr.mxu0 0.0
      %1119 = vmatpush1.msra.mxu0 0.0
      %1120 = vmatprep.subr.mxu0 0.0
      %1121 = vmatpush1.msra.mxu0 0.0
      %1122 = vmatprep.subr.mxu0 0.0
      %1123 = vmatpush1.msra.mxu0 0.0
      %1124 = vmatprep.subr.mxu0 0.0
      %1125 = vmatpush1.msra.mxu0 0.0
      %1126 = vmatprep.subr.mxu0 0.0
      %1127 = vmatpush1.msra.mxu0 0.0
      %1128 = vmatprep.subr.mxu0 0.0
      %1129 = vmatpush1.msra.mxu0 0.0
      %1130 = vmatprep.subr.mxu0 0.0
      %1131 = vmatpush1.msra.mxu0 0.0
      %1132 = vmatprep.subr.mxu0 0.0
      %1133 = vmatpush1.msra.mxu0 0.0
      %1134 = vmatprep.subr.mxu0 0.0
      %1135 = vmatpush1.msra.mxu0 0.0
      %1136 = vmatprep.subr.mxu0 0.0
      %1137 = vmatpush1.msra.mxu0 0.0
      %1138 = vmatprep.subr.mxu0 0.0
      %1139 = vmatpush1.msra.mxu0 0.0
      %1140 = vmatprep.subr.mxu0 0.0
      %1141 = vmatpush1.msra.mxu0 0.0
      %1142 = vmatprep.subr.mxu0 0.0
      %1143 = vmatpush1.msra.mxu0 0.0
      %1144 = vmatprep.subr.mxu0 0.0
      %1145 = vmatpush1.msra.mxu0 0.0
      %1146 = vmatprep.subr.mxu0 0.0
      %1147 = vmatpush1.msra.mxu0 %v1114
      %1148 = vmatprep.subr.mxu0 0.0
      %1149 = vmatpush2.msra.mxu0 0.0
      %1150 = vmatprep.subr.mxu0 0.0
      %1151 = vmatpush2.msra.mxu0 0.0
      %1152 = vmatprep.subr.mxu0 0.0
      %1153 = vmatpush2.msra.mxu0 0.0
      %1154 = vmatprep.subr.mxu0 0.0
      %1155 = vmatpush2.msra.mxu0 0.0
      %1156 = vmatprep.subr.mxu0 0.0
      %1157 = vmatpush2.msra.mxu0 0.0
      %1158 = vmatprep.subr.mxu0 0.0
      %1159 = vmatpush2.msra.mxu0 0.0
      %1160 = vmatprep.subr.mxu0 0.0
      %1161 = vmatpush2.msra.mxu0 0.0
      %1162 = vmatprep.subr.mxu0 0.0
      %1163 = vmatpush2.msra.mxu0 0.0
      %1164 = vmatprep.subr.mxu0 0.0
      %1165 = vmatpush2.msra.mxu0 0.0
      %1166 = vmatprep.subr.mxu0 0.0
      %1167 = vmatpush2.msra.mxu0 0.0
      %1168 = vmatprep.subr.mxu0 0.0
      %1169 = vmatpush2.msra.mxu0 0.0
      %1170 = vmatprep.subr.mxu0 0.0
      %1171 = vmatpush2.msra.mxu0 0.0
      %1172 = vmatprep.subr.mxu0 0.0
      %1173 = vmatpush2.msra.mxu0 0.0
      %1174 = vmatprep.subr.mxu0 0.0
      %1175 = vmatpush2.msra.mxu0 0.0
      %1176 = vmatprep.subr.mxu0 0.0
      %1177 = vmatpush2.msra.mxu0 0.0
      %1178 = vmatprep.subr.mxu0 0.0
      %1179 = vmatpush2.msra.mxu0 0.0
      %1180 = vmatprep.mubr.f32.mxu0 0.0
      %1181 = vmatmul.mubr.f32.gmra.mxu0 %v1090
      %v1182 = vpop.f32.mrf.mxu0
      %v1183 = vadd.f32 0.0, %v1182
      %v1184 = vpop.f32.mrf.mxu0
      %1185 = vmatprep.mubr.f32.mxu0 0.0
      %1186 = vmatmul.mubr.f32.gmra.mxu0 %v1093
      %v1187 = vpop.f32.mrf.mxu0
      %v1188 = vadd.f32 0.0, %v1187
      %v1189 = vpop.f32.mrf.mxu0
      %1190 = vmatprep.mubr.f32.mxu0 0.0
      %1191 = vmatmul.mubr.f32.gmra.mxu0 %v1096
      %v1192 = vpop.f32.mrf.mxu0
      %v1193 = vadd.f32 0.0, %v1192
      %v1194 = vpop.f32.mrf.mxu0
      %1195 = vmatprep.mubr.f32.mxu0 0.0
      %1196 = vmatmul.mubr.f32.gmra.mxu0 %v1099
      %v1197 = vpop.f32.mrf.mxu0
      %v1198 = vadd.f32 0.0, %v1197
      %v1199 = vpop.f32.mrf.mxu0
      %1200 = vmatprep.mubr.f32.mxu0 0.0
      %1201 = vmatmul.mubr.f32.gmra.mxu0 %v1102
      %v1202 = vpop.f32.mrf.mxu0
      %v1203 = vadd.f32 0.0, %v1202
      %v1204 = vpop.f32.mrf.mxu0
      %1205 = vmatprep.mubr.f32.mxu0 0.0
      %1206 = vmatmul.mubr.f32.gmra.mxu0 %v1105
      %v1207 = vpop.f32.mrf.mxu0
      %v1208 = vadd.f32 0.0, %v1207
      %v1209 = vpop.f32.mrf.mxu0
      %1210 = vmatprep.mubr.f32.mxu0 0.0
      %1211 = vmatmul.mubr.f32.gmra.mxu0 %v1108
      %v1212 = vpop.f32.mrf.mxu0
      %v1213 = vadd.f32 0.0, %v1212
      %v1214 = vpop.f32.mrf.mxu0
      %1215 = vmatprep.mubr.f32.mxu0 0.0
      %1216 = vmatmul.mubr.f32.gmra.mxu0 %v1111
      %v1217 = vpop.f32.mrf.mxu0
      %v1218 = vadd.f32 0.0, %v1217
      %v1219 = vpop.f32.mrf.mxu0
      %1220 = vdwg.mxu0
      %v1221 = vadd.f32 %v1071, %v1183
      %v1222 = vadd.f32 %v1072, %v1188
      %v1223 = vadd.f32 %v1073, %v1193
      %v1224 = vadd.f32 %v1074, %v1198
      %v1225 = vadd.f32 %v1075, %v1203
      %v1226 = vadd.f32 %v1076, %v1208
      %v1227 = vadd.f32 %v1077, %v1213
      %v1228 = vadd.f32 %v1078, %v1218
      %s1229 = scalar_lea.vmem %s311, 32
      %v1230 = vld [vmem:[%s1229] sm:$0xff]
      %v1231 = vld [vmem:[%s1229 + $0x10] sm:$0xff]
      %v1232 = vld [vmem:[%s1229 + $0x20] sm:$0xff]
      %v1233 = vld [vmem:[%s1229 + $0x30] sm:$0xff]
      %v1234 = vld [vmem:[%s1229 + $0x40] sm:$0xff]
      %v1235 = vld [vmem:[%s1229 + $0x50] sm:$0xff]
      %v1236 = vld [vmem:[%s1229 + $0x60] sm:$0xff]
      %v1237 = vld [vmem:[%s1229 + $0x70] sm:$0xff]
      %s1238 = scalar_lea.vmem %s3, 24
      %v1239 = vld [vmem:[%s1238] sm:$0xf]
      %v1241 = vsel %vm362, %v1230, 0
      %v1244 = vsel %vm362, %v1231, 0
      %v1247 = vsel %vm362, %v1232, 0
      %v1250 = vsel %vm362, %v1233, 0
      %v1253 = vsel %vm362, %v1234, 0
      %v1256 = vsel %vm362, %v1235, 0
      %v1259 = vsel %vm362, %v1236, 0
      %v1262 = vsel %vm362, %v1237, 0
      %v1265 = vsel %vm387, %v1239, 0
      %1267 = vmatprep.subr.mxu0 0.0
      %1268 = vmatpush1.msra.mxu0 0.0
      %1269 = vmatprep.subr.mxu0 0.0
      %1270 = vmatpush1.msra.mxu0 0.0
      %1271 = vmatprep.subr.mxu0 0.0
      %1272 = vmatpush1.msra.mxu0 0.0
      %1273 = vmatprep.subr.mxu0 0.0
      %1274 = vmatpush1.msra.mxu0 0.0
      %1275 = vmatprep.subr.mxu0 0.0
      %1276 = vmatpush1.msra.mxu0 0.0
      %1277 = vmatprep.subr.mxu0 0.0
      %1278 = vmatpush1.msra.mxu0 0.0
      %1279 = vmatprep.subr.mxu0 0.0
      %1280 = vmatpush1.msra.mxu0 0.0
      %1281 = vmatprep.subr.mxu0 0.0
      %1282 = vmatpush1.msra.mxu0 0.0
      %1283 = vmatprep.subr.mxu0 0.0
      %1284 = vmatpush1.msra.mxu0 0.0
      %1285 = vmatprep.subr.mxu0 0.0
      %1286 = vmatpush1.msra.mxu0 0.0
      %1287 = vmatprep.subr.mxu0 0.0
      %1288 = vmatpush1.msra.mxu0 0.0
      %1289 = vmatprep.subr.mxu0 0.0
      %1290 = vmatpush1.msra.mxu0 0.0
      %1291 = vmatprep.subr.mxu0 0.0
      %1292 = vmatpush1.msra.mxu0 0.0
      %1293 = vmatprep.subr.mxu0 0.0
      %1294 = vmatpush1.msra.mxu0 0.0
      %1295 = vmatprep.subr.mxu0 0.0
      %1296 = vmatpush1.msra.mxu0 0.0
      %1297 = vmatprep.subr.mxu0 0.0
      %1298 = vmatpush1.msra.mxu0 %v1265
      %1299 = vmatprep.subr.mxu0 0.0
      %1300 = vmatpush2.msra.mxu0 0.0
      %1301 = vmatprep.subr.mxu0 0.0
      %1302 = vmatpush2.msra.mxu0 0.0
      %1303 = vmatprep.subr.mxu0 0.0
      %1304 = vmatpush2.msra.mxu0 0.0
      %1305 = vmatprep.subr.mxu0 0.0
      %1306 = vmatpush2.msra.mxu0 0.0
      %1307 = vmatprep.subr.mxu0 0.0
      %1308 = vmatpush2.msra.mxu0 0.0
      %1309 = vmatprep.subr.mxu0 0.0
      %1310 = vmatpush2.msra.mxu0 0.0
      %1311 = vmatprep.subr.mxu0 0.0
      %1312 = vmatpush2.msra.mxu0 0.0
      %1313 = vmatprep.subr.mxu0 0.0
      %1314 = vmatpush2.msra.mxu0 0.0
      %1315 = vmatprep.subr.mxu0 0.0
      %1316 = vmatpush2.msra.mxu0 0.0
      %1317 = vmatprep.subr.mxu0 0.0
      %1318 = vmatpush2.msra.mxu0 0.0
      %1319 = vmatprep.subr.mxu0 0.0
      %1320 = vmatpush2.msra.mxu0 0.0
      %1321 = vmatprep.subr.mxu0 0.0
      %1322 = vmatpush2.msra.mxu0 0.0
      %1323 = vmatprep.subr.mxu0 0.0
      %1324 = vmatpush2.msra.mxu0 0.0
      %1325 = vmatprep.subr.mxu0 0.0
      %1326 = vmatpush2.msra.mxu0 0.0
      %1327 = vmatprep.subr.mxu0 0.0
      %1328 = vmatpush2.msra.mxu0 0.0
      %1329 = vmatprep.subr.mxu0 0.0
      %1330 = vmatpush2.msra.mxu0 0.0
      %1331 = vmatprep.mubr.f32.mxu0 0.0
      %1332 = vmatmul.mubr.f32.gmra.mxu0 %v1241
      %v1333 = vpop.f32.mrf.mxu0
      %v1334 = vadd.f32 0.0, %v1333
      %v1335 = vpop.f32.mrf.mxu0
      %1336 = vmatprep.mubr.f32.mxu0 0.0
      %1337 = vmatmul.mubr.f32.gmra.mxu0 %v1244
      %v1338 = vpop.f32.mrf.mxu0
      %v1339 = vadd.f32 0.0, %v1338
      %v1340 = vpop.f32.mrf.mxu0
      %1341 = vmatprep.mubr.f32.mxu0 0.0
      %1342 = vmatmul.mubr.f32.gmra.mxu0 %v1247
      %v1343 = vpop.f32.mrf.mxu0
      %v1344 = vadd.f32 0.0, %v1343
      %v1345 = vpop.f32.mrf.mxu0
      %1346 = vmatprep.mubr.f32.mxu0 0.0
      %1347 = vmatmul.mubr.f32.gmra.mxu0 %v1250
      %v1348 = vpop.f32.mrf.mxu0
      %v1349 = vadd.f32 0.0, %v1348
      %v1350 = vpop.f32.mrf.mxu0
      %1351 = vmatprep.mubr.f32.mxu0 0.0
      %1352 = vmatmul.mubr.f32.gmra.mxu0 %v1253
      %v1353 = vpop.f32.mrf.mxu0
      %v1354 = vadd.f32 0.0, %v1353
      %v1355 = vpop.f32.mrf.mxu0
      %1356 = vmatprep.mubr.f32.mxu0 0.0
      %1357 = vmatmul.mubr.f32.gmra.mxu0 %v1256
      %v1358 = vpop.f32.mrf.mxu0
      %v1359 = vadd.f32 0.0, %v1358
      %v1360 = vpop.f32.mrf.mxu0
      %1361 = vmatprep.mubr.f32.mxu0 0.0
      %1362 = vmatmul.mubr.f32.gmra.mxu0 %v1259
      %v1363 = vpop.f32.mrf.mxu0
      %v1364 = vadd.f32 0.0, %v1363
      %v1365 = vpop.f32.mrf.mxu0
      %1366 = vmatprep.mubr.f32.mxu0 0.0
      %1367 = vmatmul.mubr.f32.gmra.mxu0 %v1262
      %v1368 = vpop.f32.mrf.mxu0
      %v1369 = vadd.f32 0.0, %v1368
      %v1370 = vpop.f32.mrf.mxu0
      %1371 = vdwg.mxu0
      %v1372 = vadd.f32 %v1221, %v1334
      %v1373 = vadd.f32 %v1222, %v1339
      %v1374 = vadd.f32 %v1223, %v1344
      %v1375 = vadd.f32 %v1224, %v1349
      %v1376 = vadd.f32 %v1225, %v1354
      %v1377 = vadd.f32 %v1226, %v1359
      %v1378 = vadd.f32 %v1227, %v1364
      %v1379 = vadd.f32 %v1228, %v1369
      %v1380 = vld [vmem:[%s1229 + $0x1] sm:$0xff]
      %v1381 = vld [vmem:[%s1229 + $0x11] sm:$0xff]
      %v1382 = vld [vmem:[%s1229 + $0x21] sm:$0xff]
      %v1383 = vld [vmem:[%s1229 + $0x31] sm:$0xff]
      %v1384 = vld [vmem:[%s1229 + $0x41] sm:$0xff]
      %v1385 = vld [vmem:[%s1229 + $0x51] sm:$0xff]
      %v1386 = vld [vmem:[%s1229 + $0x61] sm:$0xff]
      %v1387 = vld [vmem:[%s1229 + $0x71] sm:$0xff]
      %s1388 = scalar_lea.vmem %s3, 28
      %v1389 = vld [vmem:[%s1388] sm:$0xf]
      %v1391 = vsel %vm362, %v1380, 0
      %v1394 = vsel %vm362, %v1381, 0
      %v1397 = vsel %vm362, %v1382, 0
      %v1400 = vsel %vm362, %v1383, 0
      %v1403 = vsel %vm362, %v1384, 0
      %v1406 = vsel %vm362, %v1385, 0
      %v1409 = vsel %vm362, %v1386, 0
      %v1412 = vsel %vm362, %v1387, 0
      %v1415 = vsel %vm387, %v1389, 0
      %1417 = vmatprep.subr.mxu0 0.0
      %1418 = vmatpush1.msra.mxu0 0.0
      %1419 = vmatprep.subr.mxu0 0.0
      %1420 = vmatpush1.msra.mxu0 0.0
      %1421 = vmatprep.subr.mxu0 0.0
      %1422 = vmatpush1.msra.mxu0 0.0
      %1423 = vmatprep.subr.mxu0 0.0
      %1424 = vmatpush1.msra.mxu0 0.0
      %1425 = vmatprep.subr.mxu0 0.0
      %1426 = vmatpush1.msra.mxu0 0.0
      %1427 = vmatprep.subr.mxu0 0.0
      %1428 = vmatpush1.msra.mxu0 0.0
      %1429 = vmatprep.subr.mxu0 0.0
      %1430 = vmatpush1.msra.mxu0 0.0
      %1431 = vmatprep.subr.mxu0 0.0
      %1432 = vmatpush1.msra.mxu0 0.0
      %1433 = vmatprep.subr.mxu0 0.0
      %1434 = vmatpush1.msra.mxu0 0.0
      %1435 = vmatprep.subr.mxu0 0.0
      %1436 = vmatpush1.msra.mxu0 0.0
      %1437 = vmatprep.subr.mxu0 0.0
      %1438 = vmatpush1.msra.mxu0 0.0
      %1439 = vmatprep.subr.mxu0 0.0
      %1440 = vmatpush1.msra.mxu0 0.0
      %1441 = vmatprep.subr.mxu0 0.0
      %1442 = vmatpush1.msra.mxu0 0.0
      %1443 = vmatprep.subr.mxu0 0.0
      %1444 = vmatpush1.msra.mxu0 0.0
      %1445 = vmatprep.subr.mxu0 0.0
      %1446 = vmatpush1.msra.mxu0 0.0
      %1447 = vmatprep.subr.mxu0 0.0
      %1448 = vmatpush1.msra.mxu0 %v1415
      %1449 = vmatprep.subr.mxu0 0.0
      %1450 = vmatpush2.msra.mxu0 0.0
      %1451 = vmatprep.subr.mxu0 0.0
      %1452 = vmatpush2.msra.mxu0 0.0
      %1453 = vmatprep.subr.mxu0 0.0
      %1454 = vmatpush2.msra.mxu0 0.0
      %1455 = vmatprep.subr.mxu0 0.0
      %1456 = vmatpush2.msra.mxu0 0.0
      %1457 = vmatprep.subr.mxu0 0.0
      %1458 = vmatpush2.msra.mxu0 0.0
      %1459 = vmatprep.subr.mxu0 0.0
      %1460 = vmatpush2.msra.mxu0 0.0
      %1461 = vmatprep.subr.mxu0 0.0
      %1462 = vmatpush2.msra.mxu0 0.0
      %1463 = vmatprep.subr.mxu0 0.0
      %1464 = vmatpush2.msra.mxu0 0.0
      %1465 = vmatprep.subr.mxu0 0.0
      %1466 = vmatpush2.msra.mxu0 0.0
      %1467 = vmatprep.subr.mxu0 0.0
      %1468 = vmatpush2.msra.mxu0 0.0
      %1469 = vmatprep.subr.mxu0 0.0
      %1470 = vmatpush2.msra.mxu0 0.0
      %1471 = vmatprep.subr.mxu0 0.0
      %1472 = vmatpush2.msra.mxu0 0.0
      %1473 = vmatprep.subr.mxu0 0.0
      %1474 = vmatpush2.msra.mxu0 0.0
      %1475 = vmatprep.subr.mxu0 0.0
      %1476 = vmatpush2.msra.mxu0 0.0
      %1477 = vmatprep.subr.mxu0 0.0
      %1478 = vmatpush2.msra.mxu0 0.0
      %1479 = vmatprep.subr.mxu0 0.0
      %1480 = vmatpush2.msra.mxu0 0.0
      %1481 = vmatprep.mubr.f32.mxu0 0.0
      %1482 = vmatmul.mubr.f32.gmra.mxu0 %v1391
      %v1483 = vpop.f32.mrf.mxu0
      %v1484 = vadd.f32 0.0, %v1483
      %v1485 = vpop.f32.mrf.mxu0
      %1486 = vmatprep.mubr.f32.mxu0 0.0
      %1487 = vmatmul.mubr.f32.gmra.mxu0 %v1394
      %v1488 = vpop.f32.mrf.mxu0
      %v1489 = vadd.f32 0.0, %v1488
      %v1490 = vpop.f32.mrf.mxu0
      %1491 = vmatprep.mubr.f32.mxu0 0.0
      %1492 = vmatmul.mubr.f32.gmra.mxu0 %v1397
      %v1493 = vpop.f32.mrf.mxu0
      %v1494 = vadd.f32 0.0, %v1493
      %v1495 = vpop.f32.mrf.mxu0
      %1496 = vmatprep.mubr.f32.mxu0 0.0
      %1497 = vmatmul.mubr.f32.gmra.mxu0 %v1400
      %v1498 = vpop.f32.mrf.mxu0
      %v1499 = vadd.f32 0.0, %v1498
      %v1500 = vpop.f32.mrf.mxu0
      %1501 = vmatprep.mubr.f32.mxu0 0.0
      %1502 = vmatmul.mubr.f32.gmra.mxu0 %v1403
      %v1503 = vpop.f32.mrf.mxu0
      %v1504 = vadd.f32 0.0, %v1503
      %v1505 = vpop.f32.mrf.mxu0
      %1506 = vmatprep.mubr.f32.mxu0 0.0
      %1507 = vmatmul.mubr.f32.gmra.mxu0 %v1406
      %v1508 = vpop.f32.mrf.mxu0
      %v1509 = vadd.f32 0.0, %v1508
      %v1510 = vpop.f32.mrf.mxu0
      %1511 = vmatprep.mubr.f32.mxu0 0.0
      %1512 = vmatmul.mubr.f32.gmra.mxu0 %v1409
      %v1513 = vpop.f32.mrf.mxu0
      %v1514 = vadd.f32 0.0, %v1513
      %v1515 = vpop.f32.mrf.mxu0
      %1516 = vmatprep.mubr.f32.mxu0 0.0
      %1517 = vmatmul.mubr.f32.gmra.mxu0 %v1412
      %v1518 = vpop.f32.mrf.mxu0
      %v1519 = vadd.f32 0.0, %v1518
      %v1520 = vpop.f32.mrf.mxu0
      %1521 = vdwg.mxu0
      %v1522 = vadd.f32 %v1372, %v1484
      %v1523 = vadd.f32 %v1373, %v1489
      %v1524 = vadd.f32 %v1374, %v1494
      %v1525 = vadd.f32 %v1375, %v1499
      %v1526 = vadd.f32 %v1376, %v1504
      %v1527 = vadd.f32 %v1377, %v1509
      %v1528 = vadd.f32 %v1378, %v1514
      %v1529 = vadd.f32 %v1379, %v1519
      %v1530 = vld [vmem:[%s1229 + $0x2] sm:$0xff]
      %v1531 = vld [vmem:[%s1229 + $0x12] sm:$0xff]
      %v1532 = vld [vmem:[%s1229 + $0x22] sm:$0xff]
      %v1533 = vld [vmem:[%s1229 + $0x32] sm:$0xff]
      %v1534 = vld [vmem:[%s1229 + $0x42] sm:$0xff]
      %v1535 = vld [vmem:[%s1229 + $0x52] sm:$0xff]
      %v1536 = vld [vmem:[%s1229 + $0x62] sm:$0xff]
      %v1537 = vld [vmem:[%s1229 + $0x72] sm:$0xff]
      %s1538 = scalar_lea.vmem %s3, 32
      %v1539 = vld [vmem:[%s1538] sm:$0xf]
      %v1541 = vsel %vm362, %v1530, 0
      %v1544 = vsel %vm362, %v1531, 0
      %v1547 = vsel %vm362, %v1532, 0
      %v1550 = vsel %vm362, %v1533, 0
      %v1553 = vsel %vm362, %v1534, 0
      %v1556 = vsel %vm362, %v1535, 0
      %v1559 = vsel %vm362, %v1536, 0
      %v1562 = vsel %vm362, %v1537, 0
      %v1565 = vsel %vm387, %v1539, 0
      %1567 = vmatprep.subr.mxu0 0.0
      %1568 = vmatpush1.msra.mxu0 0.0
      %1569 = vmatprep.subr.mxu0 0.0
      %1570 = vmatpush1.msra.mxu0 0.0
      %1571 = vmatprep.subr.mxu0 0.0
      %1572 = vmatpush1.msra.mxu0 0.0
      %1573 = vmatprep.subr.mxu0 0.0
      %1574 = vmatpush1.msra.mxu0 0.0
      %1575 = vmatprep.subr.mxu0 0.0
      %1576 = vmatpush1.msra.mxu0 0.0
      %1577 = vmatprep.subr.mxu0 0.0
      %1578 = vmatpush1.msra.mxu0 0.0
      %1579 = vmatprep.subr.mxu0 0.0
      %1580 = vmatpush1.msra.mxu0 0.0
      %1581 = vmatprep.subr.mxu0 0.0
      %1582 = vmatpush1.msra.mxu0 0.0
      %1583 = vmatprep.subr.mxu0 0.0
      %1584 = vmatpush1.msra.mxu0 0.0
      %1585 = vmatprep.subr.mxu0 0.0
      %1586 = vmatpush1.msra.mxu0 0.0
      %1587 = vmatprep.subr.mxu0 0.0
      %1588 = vmatpush1.msra.mxu0 0.0
      %1589 = vmatprep.subr.mxu0 0.0
      %1590 = vmatpush1.msra.mxu0 0.0
      %1591 = vmatprep.subr.mxu0 0.0
      %1592 = vmatpush1.msra.mxu0 0.0
      %1593 = vmatprep.subr.mxu0 0.0
      %1594 = vmatpush1.msra.mxu0 0.0
      %1595 = vmatprep.subr.mxu0 0.0
      %1596 = vmatpush1.msra.mxu0 0.0
      %1597 = vmatprep.subr.mxu0 0.0
      %1598 = vmatpush1.msra.mxu0 %v1565
      %1599 = vmatprep.subr.mxu0 0.0
      %1600 = vmatpush2.msra.mxu0 0.0
      %1601 = vmatprep.subr.mxu0 0.0
      %1602 = vmatpush2.msra.mxu0 0.0
      %1603 = vmatprep.subr.mxu0 0.0
      %1604 = vmatpush2.msra.mxu0 0.0
      %1605 = vmatprep.subr.mxu0 0.0
      %1606 = vmatpush2.msra.mxu0 0.0
      %1607 = vmatprep.subr.mxu0 0.0
      %1608 = vmatpush2.msra.mxu0 0.0
      %1609 = vmatprep.subr.mxu0 0.0
      %1610 = vmatpush2.msra.mxu0 0.0
      %1611 = vmatprep.subr.mxu0 0.0
      %1612 = vmatpush2.msra.mxu0 0.0
      %1613 = vmatprep.subr.mxu0 0.0
      %1614 = vmatpush2.msra.mxu0 0.0
      %1615 = vmatprep.subr.mxu0 0.0
      %1616 = vmatpush2.msra.mxu0 0.0
      %1617 = vmatprep.subr.mxu0 0.0
      %1618 = vmatpush2.msra.mxu0 0.0
      %1619 = vmatprep.subr.mxu0 0.0
      %1620 = vmatpush2.msra.mxu0 0.0
      %1621 = vmatprep.subr.mxu0 0.0
      %1622 = vmatpush2.msra.mxu0 0.0
      %1623 = vmatprep.subr.mxu0 0.0
      %1624 = vmatpush2.msra.mxu0 0.0
      %1625 = vmatprep.subr.mxu0 0.0
      %1626 = vmatpush2.msra.mxu0 0.0
      %1627 = vmatprep.subr.mxu0 0.0
      %1628 = vmatpush2.msra.mxu0 0.0
      %1629 = vmatprep.subr.mxu0 0.0
      %1630 = vmatpush2.msra.mxu0 0.0
      %1631 = vmatprep.mubr.f32.mxu0 0.0
      %1632 = vmatmul.mubr.f32.gmra.mxu0 %v1541
      %v1633 = vpop.f32.mrf.mxu0
      %v1634 = vadd.f32 0.0, %v1633
      %v1635 = vpop.f32.mrf.mxu0
      %1636 = vmatprep.mubr.f32.mxu0 0.0
      %1637 = vmatmul.mubr.f32.gmra.mxu0 %v1544
      %v1638 = vpop.f32.mrf.mxu0
      %v1639 = vadd.f32 0.0, %v1638
      %v1640 = vpop.f32.mrf.mxu0
      %1641 = vmatprep.mubr.f32.mxu0 0.0
      %1642 = vmatmul.mubr.f32.gmra.mxu0 %v1547
      %v1643 = vpop.f32.mrf.mxu0
      %v1644 = vadd.f32 0.0, %v1643
      %v1645 = vpop.f32.mrf.mxu0
      %1646 = vmatprep.mubr.f32.mxu0 0.0
      %1647 = vmatmul.mubr.f32.gmra.mxu0 %v1550
      %v1648 = vpop.f32.mrf.mxu0
      %v1649 = vadd.f32 0.0, %v1648
      %v1650 = vpop.f32.mrf.mxu0
      %1651 = vmatprep.mubr.f32.mxu0 0.0
      %1652 = vmatmul.mubr.f32.gmra.mxu0 %v1553
      %v1653 = vpop.f32.mrf.mxu0
      %v1654 = vadd.f32 0.0, %v1653
      %v1655 = vpop.f32.mrf.mxu0
      %1656 = vmatprep.mubr.f32.mxu0 0.0
      %1657 = vmatmul.mubr.f32.gmra.mxu0 %v1556
      %v1658 = vpop.f32.mrf.mxu0
      %v1659 = vadd.f32 0.0, %v1658
      %v1660 = vpop.f32.mrf.mxu0
      %1661 = vmatprep.mubr.f32.mxu0 0.0
      %1662 = vmatmul.mubr.f32.gmra.mxu0 %v1559
      %v1663 = vpop.f32.mrf.mxu0
      %v1664 = vadd.f32 0.0, %v1663
      %v1665 = vpop.f32.mrf.mxu0
      %1666 = vmatprep.mubr.f32.mxu0 0.0
      %1667 = vmatmul.mubr.f32.gmra.mxu0 %v1562
      %v1668 = vpop.f32.mrf.mxu0
      %v1669 = vadd.f32 0.0, %v1668
      %v1670 = vpop.f32.mrf.mxu0
      %1671 = vdwg.mxu0
      %v1672 = vadd.f32 %v1522, %v1634
      %v1673 = vadd.f32 %v1523, %v1639
      %v1674 = vadd.f32 %v1524, %v1644
      %v1675 = vadd.f32 %v1525, %v1649
      %v1676 = vadd.f32 %v1526, %v1654
      %v1677 = vadd.f32 %v1527, %v1659
      %v1678 = vadd.f32 %v1528, %v1664
      %v1679 = vadd.f32 %v1529, %v1669
      %v1680 = vld [vmem:[%s321] sm:$0xff]
      %v1681 = vld [vmem:[%s321 + $0x10] sm:$0xff]
      %v1682 = vld [vmem:[%s321 + $0x20] sm:$0xff]
      %v1683 = vld [vmem:[%s321 + $0x30] sm:$0xff]
      %v1684 = vld [vmem:[%s321 + $0x40] sm:$0xff]
      %v1685 = vld [vmem:[%s321 + $0x50] sm:$0xff]
      %v1686 = vld [vmem:[%s321 + $0x60] sm:$0xff]
      %v1687 = vld [vmem:[%s321 + $0x70] sm:$0xff]
      %s1688 = scalar_lea.vmem %s3, 36
      %v1689 = vld [vmem:[%s1688] sm:$0xf]
      %v1691 = vsel %vm362, %v1680, 0
      %v1694 = vsel %vm362, %v1681, 0
      %v1697 = vsel %vm362, %v1682, 0
      %v1700 = vsel %vm362, %v1683, 0
      %v1703 = vsel %vm362, %v1684, 0
      %v1706 = vsel %vm362, %v1685, 0
      %v1709 = vsel %vm362, %v1686, 0
      %v1712 = vsel %vm362, %v1687, 0
      %v1715 = vsel %vm387, %v1689, 0
      %1717 = vmatprep.subr.mxu0 0.0
      %1718 = vmatpush1.msra.mxu0 0.0
      %1719 = vmatprep.subr.mxu0 0.0
      %1720 = vmatpush1.msra.mxu0 0.0
      %1721 = vmatprep.subr.mxu0 0.0
      %1722 = vmatpush1.msra.mxu0 0.0
      %1723 = vmatprep.subr.mxu0 0.0
      %1724 = vmatpush1.msra.mxu0 0.0
      %1725 = vmatprep.subr.mxu0 0.0
      %1726 = vmatpush1.msra.mxu0 0.0
      %1727 = vmatprep.subr.mxu0 0.0
      %1728 = vmatpush1.msra.mxu0 0.0
      %1729 = vmatprep.subr.mxu0 0.0
      %1730 = vmatpush1.msra.mxu0 0.0
      %1731 = vmatprep.subr.mxu0 0.0
      %1732 = vmatpush1.msra.mxu0 0.0
      %1733 = vmatprep.subr.mxu0 0.0
      %1734 = vmatpush1.msra.mxu0 0.0
      %1735 = vmatprep.subr.mxu0 0.0
      %1736 = vmatpush1.msra.mxu0 0.0
      %1737 = vmatprep.subr.mxu0 0.0
      %1738 = vmatpush1.msra.mxu0 0.0
      %1739 = vmatprep.subr.mxu0 0.0
      %1740 = vmatpush1.msra.mxu0 0.0
      %1741 = vmatprep.subr.mxu0 0.0
      %1742 = vmatpush1.msra.mxu0 0.0
      %1743 = vmatprep.subr.mxu0 0.0
      %1744 = vmatpush1.msra.mxu0 0.0
      %1745 = vmatprep.subr.mxu0 0.0
      %1746 = vmatpush1.msra.mxu0 0.0
      %1747 = vmatprep.subr.mxu0 0.0
      %1748 = vmatpush1.msra.mxu0 %v1715
      %1749 = vmatprep.subr.mxu0 0.0
      %1750 = vmatpush2.msra.mxu0 0.0
      %1751 = vmatprep.subr.mxu0 0.0
      %1752 = vmatpush2.msra.mxu0 0.0
      %1753 = vmatprep.subr.mxu0 0.0
      %1754 = vmatpush2.msra.mxu0 0.0
      %1755 = vmatprep.subr.mxu0 0.0
      %1756 = vmatpush2.msra.mxu0 0.0
      %1757 = vmatprep.subr.mxu0 0.0
      %1758 = vmatpush2.msra.mxu0 0.0
      %1759 = vmatprep.subr.mxu0 0.0
      %1760 = vmatpush2.msra.mxu0 0.0
      %1761 = vmatprep.subr.mxu0 0.0
      %1762 = vmatpush2.msra.mxu0 0.0
      %1763 = vmatprep.subr.mxu0 0.0
      %1764 = vmatpush2.msra.mxu0 0.0
      %1765 = vmatprep.subr.mxu0 0.0
      %1766 = vmatpush2.msra.mxu0 0.0
      %1767 = vmatprep.subr.mxu0 0.0
      %1768 = vmatpush2.msra.mxu0 0.0
      %1769 = vmatprep.subr.mxu0 0.0
      %1770 = vmatpush2.msra.mxu0 0.0
      %1771 = vmatprep.subr.mxu0 0.0
      %1772 = vmatpush2.msra.mxu0 0.0
      %1773 = vmatprep.subr.mxu0 0.0
      %1774 = vmatpush2.msra.mxu0 0.0
      %1775 = vmatprep.subr.mxu0 0.0
      %1776 = vmatpush2.msra.mxu0 0.0
      %1777 = vmatprep.subr.mxu0 0.0
      %1778 = vmatpush2.msra.mxu0 0.0
      %1779 = vmatprep.subr.mxu0 0.0
      %1780 = vmatpush2.msra.mxu0 0.0
      %1781 = vmatprep.mubr.f32.mxu0 0.0
      %1782 = vmatmul.mubr.f32.gmra.mxu0 %v1691
      %v1783 = vpop.f32.mrf.mxu0
      %v1784 = vadd.f32 0.0, %v1783
      %v1785 = vpop.f32.mrf.mxu0
      %1786 = vmatprep.mubr.f32.mxu0 0.0
      %1787 = vmatmul.mubr.f32.gmra.mxu0 %v1694
      %v1788 = vpop.f32.mrf.mxu0
      %v1789 = vadd.f32 0.0, %v1788
      %v1790 = vpop.f32.mrf.mxu0
      %1791 = vmatprep.mubr.f32.mxu0 0.0
      %1792 = vmatmul.mubr.f32.gmra.mxu0 %v1697
      %v1793 = vpop.f32.mrf.mxu0
      %v1794 = vadd.f32 0.0, %v1793
      %v1795 = vpop.f32.mrf.mxu0
      %1796 = vmatprep.mubr.f32.mxu0 0.0
      %1797 = vmatmul.mubr.f32.gmra.mxu0 %v1700
      %v1798 = vpop.f32.mrf.mxu0
      %v1799 = vadd.f32 0.0, %v1798
      %v1800 = vpop.f32.mrf.mxu0
      %1801 = vmatprep.mubr.f32.mxu0 0.0
      %1802 = vmatmul.mubr.f32.gmra.mxu0 %v1703
      %v1803 = vpop.f32.mrf.mxu0
      %v1804 = vadd.f32 0.0, %v1803
      %v1805 = vpop.f32.mrf.mxu0
      %1806 = vmatprep.mubr.f32.mxu0 0.0
      %1807 = vmatmul.mubr.f32.gmra.mxu0 %v1706
      %v1808 = vpop.f32.mrf.mxu0
      %v1809 = vadd.f32 0.0, %v1808
      %v1810 = vpop.f32.mrf.mxu0
      %1811 = vmatprep.mubr.f32.mxu0 0.0
      %1812 = vmatmul.mubr.f32.gmra.mxu0 %v1709
      %v1813 = vpop.f32.mrf.mxu0
      %v1814 = vadd.f32 0.0, %v1813
      %v1815 = vpop.f32.mrf.mxu0
      %1816 = vmatprep.mubr.f32.mxu0 0.0
      %1817 = vmatmul.mubr.f32.gmra.mxu0 %v1712
      %v1818 = vpop.f32.mrf.mxu0
      %v1819 = vadd.f32 0.0, %v1818
      %v1820 = vpop.f32.mrf.mxu0
      %1821 = vdwg.mxu0
      %v1822 = vadd.f32 %v1672, %v1784
      %v1823 = vadd.f32 %v1673, %v1789
      %v1824 = vadd.f32 %v1674, %v1794
      %v1825 = vadd.f32 %v1675, %v1799
      %v1826 = vadd.f32 %v1676, %v1804
      %v1827 = vadd.f32 %v1677, %v1809
      %v1828 = vadd.f32 %v1678, %v1814
      %v1829 = vadd.f32 %v1679, %v1819
      %v1830 = vld [vmem:[%s321 + $0x1] sm:$0xff]
      %v1831 = vld [vmem:[%s321 + $0x11] sm:$0xff]
      %v1832 = vld [vmem:[%s321 + $0x21] sm:$0xff]
      %v1833 = vld [vmem:[%s321 + $0x31] sm:$0xff]
      %v1834 = vld [vmem:[%s321 + $0x41] sm:$0xff]
      %v1835 = vld [vmem:[%s321 + $0x51] sm:$0xff]
      %v1836 = vld [vmem:[%s321 + $0x61] sm:$0xff]
      %v1837 = vld [vmem:[%s321 + $0x71] sm:$0xff]
      %s1838 = scalar_lea.vmem %s3, 40
      %v1839 = vld [vmem:[%s1838] sm:$0xf]
      %v1841 = vsel %vm362, %v1830, 0
      %v1844 = vsel %vm362, %v1831, 0
      %v1847 = vsel %vm362, %v1832, 0
      %v1850 = vsel %vm362, %v1833, 0
      %v1853 = vsel %vm362, %v1834, 0
      %v1856 = vsel %vm362, %v1835, 0
      %v1859 = vsel %vm362, %v1836, 0
      %v1862 = vsel %vm362, %v1837, 0
      %v1865 = vsel %vm387, %v1839, 0
      %1867 = vmatprep.subr.mxu0 0.0
      %1868 = vmatpush1.msra.mxu0 0.0
      %1869 = vmatprep.subr.mxu0 0.0
      %1870 = vmatpush1.msra.mxu0 0.0
      %1871 = vmatprep.subr.mxu0 0.0
      %1872 = vmatpush1.msra.mxu0 0.0
      %1873 = vmatprep.subr.mxu0 0.0
      %1874 = vmatpush1.msra.mxu0 0.0
      %1875 = vmatprep.subr.mxu0 0.0
      %1876 = vmatpush1.msra.mxu0 0.0
      %1877 = vmatprep.subr.mxu0 0.0
      %1878 = vmatpush1.msra.mxu0 0.0
      %1879 = vmatprep.subr.mxu0 0.0
      %1880 = vmatpush1.msra.mxu0 0.0
      %1881 = vmatprep.subr.mxu0 0.0
      %1882 = vmatpush1.msra.mxu0 0.0
      %1883 = vmatprep.subr.mxu0 0.0
      %1884 = vmatpush1.msra.mxu0 0.0
      %1885 = vmatprep.subr.mxu0 0.0
      %1886 = vmatpush1.msra.mxu0 0.0
      %1887 = vmatprep.subr.mxu0 0.0
      %1888 = vmatpush1.msra.mxu0 0.0
      %1889 = vmatprep.subr.mxu0 0.0
      %1890 = vmatpush1.msra.mxu0 0.0
      %1891 = vmatprep.subr.mxu0 0.0
      %1892 = vmatpush1.msra.mxu0 0.0
      %1893 = vmatprep.subr.mxu0 0.0
      %1894 = vmatpush1.msra.mxu0 0.0
      %1895 = vmatprep.subr.mxu0 0.0
      %1896 = vmatpush1.msra.mxu0 0.0
      %1897 = vmatprep.subr.mxu0 0.0
      %1898 = vmatpush1.msra.mxu0 %v1865
      %1899 = vmatprep.subr.mxu0 0.0
      %1900 = vmatpush2.msra.mxu0 0.0
      %1901 = vmatprep.subr.mxu0 0.0
      %1902 = vmatpush2.msra.mxu0 0.0
      %1903 = vmatprep.subr.mxu0 0.0
      %1904 = vmatpush2.msra.mxu0 0.0
      %1905 = vmatprep.subr.mxu0 0.0
      %1906 = vmatpush2.msra.mxu0 0.0
      %1907 = vmatprep.subr.mxu0 0.0
      %1908 = vmatpush2.msra.mxu0 0.0
      %1909 = vmatprep.subr.mxu0 0.0
      %1910 = vmatpush2.msra.mxu0 0.0
      %1911 = vmatprep.subr.mxu0 0.0
      %1912 = vmatpush2.msra.mxu0 0.0
      %1913 = vmatprep.subr.mxu0 0.0
      %1914 = vmatpush2.msra.mxu0 0.0
      %1915 = vmatprep.subr.mxu0 0.0
      %1916 = vmatpush2.msra.mxu0 0.0
      %1917 = vmatprep.subr.mxu0 0.0
      %1918 = vmatpush2.msra.mxu0 0.0
      %1919 = vmatprep.subr.mxu0 0.0
      %1920 = vmatpush2.msra.mxu0 0.0
      %1921 = vmatprep.subr.mxu0 0.0
      %1922 = vmatpush2.msra.mxu0 0.0
      %1923 = vmatprep.subr.mxu0 0.0
      %1924 = vmatpush2.msra.mxu0 0.0
      %1925 = vmatprep.subr.mxu0 0.0
      %1926 = vmatpush2.msra.mxu0 0.0
      %1927 = vmatprep.subr.mxu0 0.0
      %1928 = vmatpush2.msra.mxu0 0.0
      %1929 = vmatprep.subr.mxu0 0.0
      %1930 = vmatpush2.msra.mxu0 0.0
      %1931 = vmatprep.mubr.f32.mxu0 0.0
      %1932 = vmatmul.mubr.f32.gmra.mxu0 %v1841
      %v1933 = vpop.f32.mrf.mxu0
      %v1934 = vadd.f32 0.0, %v1933
      %v1935 = vpop.f32.mrf.mxu0
      %1936 = vmatprep.mubr.f32.mxu0 0.0
      %1937 = vmatmul.mubr.f32.gmra.mxu0 %v1844
      %v1938 = vpop.f32.mrf.mxu0
      %v1939 = vadd.f32 0.0, %v1938
      %v1940 = vpop.f32.mrf.mxu0
      %1941 = vmatprep.mubr.f32.mxu0 0.0
      %1942 = vmatmul.mubr.f32.gmra.mxu0 %v1847
      %v1943 = vpop.f32.mrf.mxu0
      %v1944 = vadd.f32 0.0, %v1943
      %v1945 = vpop.f32.mrf.mxu0
      %1946 = vmatprep.mubr.f32.mxu0 0.0
      %1947 = vmatmul.mubr.f32.gmra.mxu0 %v1850
      %v1948 = vpop.f32.mrf.mxu0
      %v1949 = vadd.f32 0.0, %v1948
      %v1950 = vpop.f32.mrf.mxu0
      %1951 = vmatprep.mubr.f32.mxu0 0.0
      %1952 = vmatmul.mubr.f32.gmra.mxu0 %v1853
      %v1953 = vpop.f32.mrf.mxu0
      %v1954 = vadd.f32 0.0, %v1953
      %v1955 = vpop.f32.mrf.mxu0
      %1956 = vmatprep.mubr.f32.mxu0 0.0
      %1957 = vmatmul.mubr.f32.gmra.mxu0 %v1856
      %v1958 = vpop.f32.mrf.mxu0
      %v1959 = vadd.f32 0.0, %v1958
      %v1960 = vpop.f32.mrf.mxu0
      %1961 = vmatprep.mubr.f32.mxu0 0.0
      %1962 = vmatmul.mubr.f32.gmra.mxu0 %v1859
      %v1963 = vpop.f32.mrf.mxu0
      %v1964 = vadd.f32 0.0, %v1963
      %v1965 = vpop.f32.mrf.mxu0
      %1966 = vmatprep.mubr.f32.mxu0 0.0
      %1967 = vmatmul.mubr.f32.gmra.mxu0 %v1862
      %v1968 = vpop.f32.mrf.mxu0
      %v1969 = vadd.f32 0.0, %v1968
      %v1970 = vpop.f32.mrf.mxu0
      %1971 = vdwg.mxu0
      %v1972 = vadd.f32 %v1822, %v1934
      %v1973 = vadd.f32 %v1823, %v1939
      %v1974 = vadd.f32 %v1824, %v1944
      %v1975 = vadd.f32 %v1825, %v1949
      %v1976 = vadd.f32 %v1826, %v1954
      %v1977 = vadd.f32 %v1827, %v1959
      %v1978 = vadd.f32 %v1828, %v1964
      %v1979 = vadd.f32 %v1829, %v1969
      %v1980 = vld [vmem:[%s321 + $0x2] sm:$0xff]
      %v1981 = vld [vmem:[%s321 + $0x12] sm:$0xff]
      %v1982 = vld [vmem:[%s321 + $0x22] sm:$0xff]
      %v1983 = vld [vmem:[%s321 + $0x32] sm:$0xff]
      %v1984 = vld [vmem:[%s321 + $0x42] sm:$0xff]
      %v1985 = vld [vmem:[%s321 + $0x52] sm:$0xff]
      %v1986 = vld [vmem:[%s321 + $0x62] sm:$0xff]
      %v1987 = vld [vmem:[%s321 + $0x72] sm:$0xff]
      %s1988 = scalar_lea.vmem %s3, 44
      %v1989 = vld [vmem:[%s1988] sm:$0xf]
      %v1991 = vsel %vm362, %v1980, 0
      %v1994 = vsel %vm362, %v1981, 0
      %v1997 = vsel %vm362, %v1982, 0
      %v2000 = vsel %vm362, %v1983, 0
      %v2003 = vsel %vm362, %v1984, 0
      %v2006 = vsel %vm362, %v1985, 0
      %v2009 = vsel %vm362, %v1986, 0
      %v2012 = vsel %vm362, %v1987, 0
      %v2015 = vsel %vm387, %v1989, 0
      %2017 = vmatprep.subr.mxu0 0.0
      %2018 = vmatpush1.msra.mxu0 0.0
      %2019 = vmatprep.subr.mxu0 0.0
      %2020 = vmatpush1.msra.mxu0 0.0
      %2021 = vmatprep.subr.mxu0 0.0
      %2022 = vmatpush1.msra.mxu0 0.0
      %2023 = vmatprep.subr.mxu0 0.0
      %2024 = vmatpush1.msra.mxu0 0.0
      %2025 = vmatprep.subr.mxu0 0.0
      %2026 = vmatpush1.msra.mxu0 0.0
      %2027 = vmatprep.subr.mxu0 0.0
      %2028 = vmatpush1.msra.mxu0 0.0
      %2029 = vmatprep.subr.mxu0 0.0
      %2030 = vmatpush1.msra.mxu0 0.0
      %2031 = vmatprep.subr.mxu0 0.0
      %2032 = vmatpush1.msra.mxu0 0.0
      %2033 = vmatprep.subr.mxu0 0.0
      %2034 = vmatpush1.msra.mxu0 0.0
      %2035 = vmatprep.subr.mxu0 0.0
      %2036 = vmatpush1.msra.mxu0 0.0
      %2037 = vmatprep.subr.mxu0 0.0
      %2038 = vmatpush1.msra.mxu0 0.0
      %2039 = vmatprep.subr.mxu0 0.0
      %2040 = vmatpush1.msra.mxu0 0.0
      %2041 = vmatprep.subr.mxu0 0.0
      %2042 = vmatpush1.msra.mxu0 0.0
      %2043 = vmatprep.subr.mxu0 0.0
      %2044 = vmatpush1.msra.mxu0 0.0
      %2045 = vmatprep.subr.mxu0 0.0
      %2046 = vmatpush1.msra.mxu0 0.0
      %2047 = vmatprep.subr.mxu0 0.0
      %2048 = vmatpush1.msra.mxu0 %v2015
      %2049 = vmatprep.subr.mxu0 0.0
      %2050 = vmatpush2.msra.mxu0 0.0
      %2051 = vmatprep.subr.mxu0 0.0
      %2052 = vmatpush2.msra.mxu0 0.0
      %2053 = vmatprep.subr.mxu0 0.0
      %2054 = vmatpush2.msra.mxu0 0.0
      %2055 = vmatprep.subr.mxu0 0.0
      %2056 = vmatpush2.msra.mxu0 0.0
      %2057 = vmatprep.subr.mxu0 0.0
      %2058 = vmatpush2.msra.mxu0 0.0
      %2059 = vmatprep.subr.mxu0 0.0
      %2060 = vmatpush2.msra.mxu0 0.0
      %2061 = vmatprep.subr.mxu0 0.0
      %2062 = vmatpush2.msra.mxu0 0.0
      %2063 = vmatprep.subr.mxu0 0.0
      %2064 = vmatpush2.msra.mxu0 0.0
      %2065 = vmatprep.subr.mxu0 0.0
      %2066 = vmatpush2.msra.mxu0 0.0
      %2067 = vmatprep.subr.mxu0 0.0
      %2068 = vmatpush2.msra.mxu0 0.0
      %2069 = vmatprep.subr.mxu0 0.0
      %2070 = vmatpush2.msra.mxu0 0.0
      %2071 = vmatprep.subr.mxu0 0.0
      %2072 = vmatpush2.msra.mxu0 0.0
      %2073 = vmatprep.subr.mxu0 0.0
      %2074 = vmatpush2.msra.mxu0 0.0
      %2075 = vmatprep.subr.mxu0 0.0
      %2076 = vmatpush2.msra.mxu0 0.0
      %2077 = vmatprep.subr.mxu0 0.0
      %2078 = vmatpush2.msra.mxu0 0.0
      %2079 = vmatprep.subr.mxu0 0.0
      %2080 = vmatpush2.msra.mxu0 0.0
      %2081 = vmatprep.mubr.f32.mxu0 0.0
      %2082 = vmatmul.mubr.f32.gmra.mxu0 %v1991
      %v2083 = vpop.f32.mrf.mxu0
      %v2084 = vadd.f32 0.0, %v2083
      %v2085 = vpop.f32.mrf.mxu0
      %2086 = vmatprep.mubr.f32.mxu0 0.0
      %2087 = vmatmul.mubr.f32.gmra.mxu0 %v1994
      %v2088 = vpop.f32.mrf.mxu0
      %v2089 = vadd.f32 0.0, %v2088
      %v2090 = vpop.f32.mrf.mxu0
      %2091 = vmatprep.mubr.f32.mxu0 0.0
      %2092 = vmatmul.mubr.f32.gmra.mxu0 %v1997
      %v2093 = vpop.f32.mrf.mxu0
      %v2094 = vadd.f32 0.0, %v2093
      %v2095 = vpop.f32.mrf.mxu0
      %2096 = vmatprep.mubr.f32.mxu0 0.0
      %2097 = vmatmul.mubr.f32.gmra.mxu0 %v2000
      %v2098 = vpop.f32.mrf.mxu0
      %v2099 = vadd.f32 0.0, %v2098
      %v2100 = vpop.f32.mrf.mxu0
      %2101 = vmatprep.mubr.f32.mxu0 0.0
      %2102 = vmatmul.mubr.f32.gmra.mxu0 %v2003
      %v2103 = vpop.f32.mrf.mxu0
      %v2104 = vadd.f32 0.0, %v2103
      %v2105 = vpop.f32.mrf.mxu0
      %2106 = vmatprep.mubr.f32.mxu0 0.0
      %2107 = vmatmul.mubr.f32.gmra.mxu0 %v2006
      %v2108 = vpop.f32.mrf.mxu0
      %v2109 = vadd.f32 0.0, %v2108
      %v2110 = vpop.f32.mrf.mxu0
      %2111 = vmatprep.mubr.f32.mxu0 0.0
      %2112 = vmatmul.mubr.f32.gmra.mxu0 %v2009
      %v2113 = vpop.f32.mrf.mxu0
      %v2114 = vadd.f32 0.0, %v2113
      %v2115 = vpop.f32.mrf.mxu0
      %2116 = vmatprep.mubr.f32.mxu0 0.0
      %2117 = vmatmul.mubr.f32.gmra.mxu0 %v2012
      %v2118 = vpop.f32.mrf.mxu0
      %v2119 = vadd.f32 0.0, %v2118
      %v2120 = vpop.f32.mrf.mxu0
      %2121 = vdwg.mxu0
      %v2122 = vadd.f32 %v1972, %v2084
      %v2123 = vadd.f32 %v1973, %v2089
      %v2124 = vadd.f32 %v1974, %v2094
      %v2125 = vadd.f32 %v1975, %v2099
      %v2126 = vadd.f32 %v1976, %v2104
      %v2127 = vadd.f32 %v1977, %v2109
      %v2128 = vadd.f32 %v1978, %v2114
      %v2129 = vadd.f32 %v1979, %v2119
      %s2130 = scalar_lea.vmem %s321, 16
      %v2131 = vld [vmem:[%s2130] sm:$0xff]
      %v2132 = vld [vmem:[%s2130 + $0x10] sm:$0xff]
      %v2133 = vld [vmem:[%s2130 + $0x20] sm:$0xff]
      %v2134 = vld [vmem:[%s2130 + $0x30] sm:$0xff]
      %v2135 = vld [vmem:[%s2130 + $0x40] sm:$0xff]
      %v2136 = vld [vmem:[%s2130 + $0x50] sm:$0xff]
      %v2137 = vld [vmem:[%s2130 + $0x60] sm:$0xff]
      %v2138 = vld [vmem:[%s2130 + $0x70] sm:$0xff]
      %s2139 = scalar_lea.vmem %s3, 48
      %v2140 = vld [vmem:[%s2139] sm:$0xf]
      %v2142 = vsel %vm362, %v2131, 0
      %v2145 = vsel %vm362, %v2132, 0
      %v2148 = vsel %vm362, %v2133, 0
      %v2151 = vsel %vm362, %v2134, 0
      %v2154 = vsel %vm362, %v2135, 0
      %v2157 = vsel %vm362, %v2136, 0
      %v2160 = vsel %vm362, %v2137, 0
      %v2163 = vsel %vm362, %v2138, 0
      %v2166 = vsel %vm387, %v2140, 0
      %2168 = vmatprep.subr.mxu0 0.0
      %2169 = vmatpush1.msra.mxu0 0.0
      %2170 = vmatprep.subr.mxu0 0.0
      %2171 = vmatpush1.msra.mxu0 0.0
      %2172 = vmatprep.subr.mxu0 0.0
      %2173 = vmatpush1.msra.mxu0 0.0
      %2174 = vmatprep.subr.mxu0 0.0
      %2175 = vmatpush1.msra.mxu0 0.0
      %2176 = vmatprep.subr.mxu0 0.0
      %2177 = vmatpush1.msra.mxu0 0.0
      %2178 = vmatprep.subr.mxu0 0.0
      %2179 = vmatpush1.msra.mxu0 0.0
      %2180 = vmatprep.subr.mxu0 0.0
      %2181 = vmatpush1.msra.mxu0 0.0
      %2182 = vmatprep.subr.mxu0 0.0
      %2183 = vmatpush1.msra.mxu0 0.0
      %2184 = vmatprep.subr.mxu0 0.0
      %2185 = vmatpush1.msra.mxu0 0.0
      %2186 = vmatprep.subr.mxu0 0.0
      %2187 = vmatpush1.msra.mxu0 0.0
      %2188 = vmatprep.subr.mxu0 0.0
      %2189 = vmatpush1.msra.mxu0 0.0
      %2190 = vmatprep.subr.mxu0 0.0
      %2191 = vmatpush1.msra.mxu0 0.0
      %2192 = vmatprep.subr.mxu0 0.0
      %2193 = vmatpush1.msra.mxu0 0.0
      %2194 = vmatprep.subr.mxu0 0.0
      %2195 = vmatpush1.msra.mxu0 0.0
      %2196 = vmatprep.subr.mxu0 0.0
      %2197 = vmatpush1.msra.mxu0 0.0
      %2198 = vmatprep.subr.mxu0 0.0
      %2199 = vmatpush1.msra.mxu0 %v2166
      %2200 = vmatprep.subr.mxu0 0.0
      %2201 = vmatpush2.msra.mxu0 0.0
      %2202 = vmatprep.subr.mxu0 0.0
      %2203 = vmatpush2.msra.mxu0 0.0
      %2204 = vmatprep.subr.mxu0 0.0
      %2205 = vmatpush2.msra.mxu0 0.0
      %2206 = vmatprep.subr.mxu0 0.0
      %2207 = vmatpush2.msra.mxu0 0.0
      %2208 = vmatprep.subr.mxu0 0.0
      %2209 = vmatpush2.msra.mxu0 0.0
      %2210 = vmatprep.subr.mxu0 0.0
      %2211 = vmatpush2.msra.mxu0 0.0
      %2212 = vmatprep.subr.mxu0 0.0
      %2213 = vmatpush2.msra.mxu0 0.0
      %2214 = vmatprep.subr.mxu0 0.0
      %2215 = vmatpush2.msra.mxu0 0.0
      %2216 = vmatprep.subr.mxu0 0.0
      %2217 = vmatpush2.msra.mxu0 0.0
      %2218 = vmatprep.subr.mxu0 0.0
      %2219 = vmatpush2.msra.mxu0 0.0
      %2220 = vmatprep.subr.mxu0 0.0
      %2221 = vmatpush2.msra.mxu0 0.0
      %2222 = vmatprep.subr.mxu0 0.0
      %2223 = vmatpush2.msra.mxu0 0.0
      %2224 = vmatprep.subr.mxu0 0.0
      %2225 = vmatpush2.msra.mxu0 0.0
      %2226 = vmatprep.subr.mxu0 0.0
      %2227 = vmatpush2.msra.mxu0 0.0
      %2228 = vmatprep.subr.mxu0 0.0
      %2229 = vmatpush2.msra.mxu0 0.0
      %2230 = vmatprep.subr.mxu0 0.0
      %2231 = vmatpush2.msra.mxu0 0.0
      %2232 = vmatprep.mubr.f32.mxu0 0.0
      %2233 = vmatmul.mubr.f32.gmra.mxu0 %v2142
      %v2234 = vpop.f32.mrf.mxu0
      %v2235 = vadd.f32 0.0, %v2234
      %v2236 = vpop.f32.mrf.mxu0
      %2237 = vmatprep.mubr.f32.mxu0 0.0
      %2238 = vmatmul.mubr.f32.gmra.mxu0 %v2145
      %v2239 = vpop.f32.mrf.mxu0
      %v2240 = vadd.f32 0.0, %v2239
      %v2241 = vpop.f32.mrf.mxu0
      %2242 = vmatprep.mubr.f32.mxu0 0.0
      %2243 = vmatmul.mubr.f32.gmra.mxu0 %v2148
      %v2244 = vpop.f32.mrf.mxu0
      %v2245 = vadd.f32 0.0, %v2244
      %v2246 = vpop.f32.mrf.mxu0
      %2247 = vmatprep.mubr.f32.mxu0 0.0
      %2248 = vmatmul.mubr.f32.gmra.mxu0 %v2151
      %v2249 = vpop.f32.mrf.mxu0
      %v2250 = vadd.f32 0.0, %v2249
      %v2251 = vpop.f32.mrf.mxu0
      %2252 = vmatprep.mubr.f32.mxu0 0.0
      %2253 = vmatmul.mubr.f32.gmra.mxu0 %v2154
      %v2254 = vpop.f32.mrf.mxu0
      %v2255 = vadd.f32 0.0, %v2254
      %v2256 = vpop.f32.mrf.mxu0
      %2257 = vmatprep.mubr.f32.mxu0 0.0
      %2258 = vmatmul.mubr.f32.gmra.mxu0 %v2157
      %v2259 = vpop.f32.mrf.mxu0
      %v2260 = vadd.f32 0.0, %v2259
      %v2261 = vpop.f32.mrf.mxu0
      %2262 = vmatprep.mubr.f32.mxu0 0.0
      %2263 = vmatmul.mubr.f32.gmra.mxu0 %v2160
      %v2264 = vpop.f32.mrf.mxu0
      %v2265 = vadd.f32 0.0, %v2264
      %v2266 = vpop.f32.mrf.mxu0
      %2267 = vmatprep.mubr.f32.mxu0 0.0
      %2268 = vmatmul.mubr.f32.gmra.mxu0 %v2163
      %v2269 = vpop.f32.mrf.mxu0
      %v2270 = vadd.f32 0.0, %v2269
      %v2271 = vpop.f32.mrf.mxu0
      %2272 = vdwg.mxu0
      %v2273 = vadd.f32 %v2122, %v2235
      %v2274 = vadd.f32 %v2123, %v2240
      %v2275 = vadd.f32 %v2124, %v2245
      %v2276 = vadd.f32 %v2125, %v2250
      %v2277 = vadd.f32 %v2126, %v2255
      %v2278 = vadd.f32 %v2127, %v2260
      %v2279 = vadd.f32 %v2128, %v2265
      %v2280 = vadd.f32 %v2129, %v2270
      %v2281 = vld [vmem:[%s2130 + $0x1] sm:$0xff]
      %v2282 = vld [vmem:[%s2130 + $0x11] sm:$0xff]
      %v2283 = vld [vmem:[%s2130 + $0x21] sm:$0xff]
      %v2284 = vld [vmem:[%s2130 + $0x31] sm:$0xff]
      %v2285 = vld [vmem:[%s2130 + $0x41] sm:$0xff]
      %v2286 = vld [vmem:[%s2130 + $0x51] sm:$0xff]
      %v2287 = vld [vmem:[%s2130 + $0x61] sm:$0xff]
      %v2288 = vld [vmem:[%s2130 + $0x71] sm:$0xff]
      %s2289 = scalar_lea.vmem %s3, 52
      %v2290 = vld [vmem:[%s2289] sm:$0xf]
      %v2292 = vsel %vm362, %v2281, 0
      %v2295 = vsel %vm362, %v2282, 0
      %v2298 = vsel %vm362, %v2283, 0
      %v2301 = vsel %vm362, %v2284, 0
      %v2304 = vsel %vm362, %v2285, 0
      %v2307 = vsel %vm362, %v2286, 0
      %v2310 = vsel %vm362, %v2287, 0
      %v2313 = vsel %vm362, %v2288, 0
      %v2316 = vsel %vm387, %v2290, 0
      %2318 = vmatprep.subr.mxu0 0.0
      %2319 = vmatpush1.msra.mxu0 0.0
      %2320 = vmatprep.subr.mxu0 0.0
      %2321 = vmatpush1.msra.mxu0 0.0
      %2322 = vmatprep.subr.mxu0 0.0
      %2323 = vmatpush1.msra.mxu0 0.0
      %2324 = vmatprep.subr.mxu0 0.0
      %2325 = vmatpush1.msra.mxu0 0.0
      %2326 = vmatprep.subr.mxu0 0.0
      %2327 = vmatpush1.msra.mxu0 0.0
      %2328 = vmatprep.subr.mxu0 0.0
      %2329 = vmatpush1.msra.mxu0 0.0
      %2330 = vmatprep.subr.mxu0 0.0
      %2331 = vmatpush1.msra.mxu0 0.0
      %2332 = vmatprep.subr.mxu0 0.0
      %2333 = vmatpush1.msra.mxu0 0.0
      %2334 = vmatprep.subr.mxu0 0.0
      %2335 = vmatpush1.msra.mxu0 0.0
      %2336 = vmatprep.subr.mxu0 0.0
      %2337 = vmatpush1.msra.mxu0 0.0
      %2338 = vmatprep.subr.mxu0 0.0
      %2339 = vmatpush1.msra.mxu0 0.0
      %2340 = vmatprep.subr.mxu0 0.0
      %2341 = vmatpush1.msra.mxu0 0.0
      %2342 = vmatprep.subr.mxu0 0.0
      %2343 = vmatpush1.msra.mxu0 0.0
      %2344 = vmatprep.subr.mxu0 0.0
      %2345 = vmatpush1.msra.mxu0 0.0
      %2346 = vmatprep.subr.mxu0 0.0
      %2347 = vmatpush1.msra.mxu0 0.0
      %2348 = vmatprep.subr.mxu0 0.0
      %2349 = vmatpush1.msra.mxu0 %v2316
      %2350 = vmatprep.subr.mxu0 0.0
      %2351 = vmatpush2.msra.mxu0 0.0
      %2352 = vmatprep.subr.mxu0 0.0
      %2353 = vmatpush2.msra.mxu0 0.0
      %2354 = vmatprep.subr.mxu0 0.0
      %2355 = vmatpush2.msra.mxu0 0.0
      %2356 = vmatprep.subr.mxu0 0.0
      %2357 = vmatpush2.msra.mxu0 0.0
      %2358 = vmatprep.subr.mxu0 0.0
      %2359 = vmatpush2.msra.mxu0 0.0
      %2360 = vmatprep.subr.mxu0 0.0
      %2361 = vmatpush2.msra.mxu0 0.0
      %2362 = vmatprep.subr.mxu0 0.0
      %2363 = vmatpush2.msra.mxu0 0.0
      %2364 = vmatprep.subr.mxu0 0.0
      %2365 = vmatpush2.msra.mxu0 0.0
      %2366 = vmatprep.subr.mxu0 0.0
      %2367 = vmatpush2.msra.mxu0 0.0
      %2368 = vmatprep.subr.mxu0 0.0
      %2369 = vmatpush2.msra.mxu0 0.0
      %2370 = vmatprep.subr.mxu0 0.0
      %2371 = vmatpush2.msra.mxu0 0.0
      %2372 = vmatprep.subr.mxu0 0.0
      %2373 = vmatpush2.msra.mxu0 0.0
      %2374 = vmatprep.subr.mxu0 0.0
      %2375 = vmatpush2.msra.mxu0 0.0
      %2376 = vmatprep.subr.mxu0 0.0
      %2377 = vmatpush2.msra.mxu0 0.0
      %2378 = vmatprep.subr.mxu0 0.0
      %2379 = vmatpush2.msra.mxu0 0.0
      %2380 = vmatprep.subr.mxu0 0.0
      %2381 = vmatpush2.msra.mxu0 0.0
      %2382 = vmatprep.mubr.f32.mxu0 0.0
      %2383 = vmatmul.mubr.f32.gmra.mxu0 %v2292
      %v2384 = vpop.f32.mrf.mxu0
      %v2385 = vadd.f32 0.0, %v2384
      %v2386 = vpop.f32.mrf.mxu0
      %2387 = vmatprep.mubr.f32.mxu0 0.0
      %2388 = vmatmul.mubr.f32.gmra.mxu0 %v2295
      %v2389 = vpop.f32.mrf.mxu0
      %v2390 = vadd.f32 0.0, %v2389
      %v2391 = vpop.f32.mrf.mxu0
      %2392 = vmatprep.mubr.f32.mxu0 0.0
      %2393 = vmatmul.mubr.f32.gmra.mxu0 %v2298
      %v2394 = vpop.f32.mrf.mxu0
      %v2395 = vadd.f32 0.0, %v2394
      %v2396 = vpop.f32.mrf.mxu0
      %2397 = vmatprep.mubr.f32.mxu0 0.0
      %2398 = vmatmul.mubr.f32.gmra.mxu0 %v2301
      %v2399 = vpop.f32.mrf.mxu0
      %v2400 = vadd.f32 0.0, %v2399
      %v2401 = vpop.f32.mrf.mxu0
      %2402 = vmatprep.mubr.f32.mxu0 0.0
      %2403 = vmatmul.mubr.f32.gmra.mxu0 %v2304
      %v2404 = vpop.f32.mrf.mxu0
      %v2405 = vadd.f32 0.0, %v2404
      %v2406 = vpop.f32.mrf.mxu0
      %2407 = vmatprep.mubr.f32.mxu0 0.0
      %2408 = vmatmul.mubr.f32.gmra.mxu0 %v2307
      %v2409 = vpop.f32.mrf.mxu0
      %v2410 = vadd.f32 0.0, %v2409
      %v2411 = vpop.f32.mrf.mxu0
      %2412 = vmatprep.mubr.f32.mxu0 0.0
      %2413 = vmatmul.mubr.f32.gmra.mxu0 %v2310
      %v2414 = vpop.f32.mrf.mxu0
      %v2415 = vadd.f32 0.0, %v2414
      %v2416 = vpop.f32.mrf.mxu0
      %2417 = vmatprep.mubr.f32.mxu0 0.0
      %2418 = vmatmul.mubr.f32.gmra.mxu0 %v2313
      %v2419 = vpop.f32.mrf.mxu0
      %v2420 = vadd.f32 0.0, %v2419
      %v2421 = vpop.f32.mrf.mxu0
      %2422 = vdwg.mxu0
      %v2423 = vadd.f32 %v2273, %v2385
      %v2424 = vadd.f32 %v2274, %v2390
      %v2425 = vadd.f32 %v2275, %v2395
      %v2426 = vadd.f32 %v2276, %v2400
      %v2427 = vadd.f32 %v2277, %v2405
      %v2428 = vadd.f32 %v2278, %v2410
      %v2429 = vadd.f32 %v2279, %v2415
      %v2430 = vadd.f32 %v2280, %v2420
      %v2431 = vld [vmem:[%s2130 + $0x2] sm:$0xff]
      %v2432 = vld [vmem:[%s2130 + $0x12] sm:$0xff]
      %v2433 = vld [vmem:[%s2130 + $0x22] sm:$0xff]
      %v2434 = vld [vmem:[%s2130 + $0x32] sm:$0xff]
      %v2435 = vld [vmem:[%s2130 + $0x42] sm:$0xff]
      %v2436 = vld [vmem:[%s2130 + $0x52] sm:$0xff]
      %v2437 = vld [vmem:[%s2130 + $0x62] sm:$0xff]
      %v2438 = vld [vmem:[%s2130 + $0x72] sm:$0xff]
      %s2439 = scalar_lea.vmem %s3, 56
      %v2440 = vld [vmem:[%s2439] sm:$0xf]
      %v2442 = vsel %vm362, %v2431, 0
      %v2445 = vsel %vm362, %v2432, 0
      %v2448 = vsel %vm362, %v2433, 0
      %v2451 = vsel %vm362, %v2434, 0
      %v2454 = vsel %vm362, %v2435, 0
      %v2457 = vsel %vm362, %v2436, 0
      %v2460 = vsel %vm362, %v2437, 0
      %v2463 = vsel %vm362, %v2438, 0
      %v2466 = vsel %vm387, %v2440, 0
      %2468 = vmatprep.subr.mxu0 0.0
      %2469 = vmatpush1.msra.mxu0 0.0
      %2470 = vmatprep.subr.mxu0 0.0
      %2471 = vmatpush1.msra.mxu0 0.0
      %2472 = vmatprep.subr.mxu0 0.0
      %2473 = vmatpush1.msra.mxu0 0.0
      %2474 = vmatprep.subr.mxu0 0.0
      %2475 = vmatpush1.msra.mxu0 0.0
      %2476 = vmatprep.subr.mxu0 0.0
      %2477 = vmatpush1.msra.mxu0 0.0
      %2478 = vmatprep.subr.mxu0 0.0
      %2479 = vmatpush1.msra.mxu0 0.0
      %2480 = vmatprep.subr.mxu0 0.0
      %2481 = vmatpush1.msra.mxu0 0.0
      %2482 = vmatprep.subr.mxu0 0.0
      %2483 = vmatpush1.msra.mxu0 0.0
      %2484 = vmatprep.subr.mxu0 0.0
      %2485 = vmatpush1.msra.mxu0 0.0
      %2486 = vmatprep.subr.mxu0 0.0
      %2487 = vmatpush1.msra.mxu0 0.0
      %2488 = vmatprep.subr.mxu0 0.0
      %2489 = vmatpush1.msra.mxu0 0.0
      %2490 = vmatprep.subr.mxu0 0.0
      %2491 = vmatpush1.msra.mxu0 0.0
      %2492 = vmatprep.subr.mxu0 0.0
      %2493 = vmatpush1.msra.mxu0 0.0
      %2494 = vmatprep.subr.mxu0 0.0
      %2495 = vmatpush1.msra.mxu0 0.0
      %2496 = vmatprep.subr.mxu0 0.0
      %2497 = vmatpush1.msra.mxu0 0.0
      %2498 = vmatprep.subr.mxu0 0.0
      %2499 = vmatpush1.msra.mxu0 %v2466
      %2500 = vmatprep.subr.mxu0 0.0
      %2501 = vmatpush2.msra.mxu0 0.0
      %2502 = vmatprep.subr.mxu0 0.0
      %2503 = vmatpush2.msra.mxu0 0.0
      %2504 = vmatprep.subr.mxu0 0.0
      %2505 = vmatpush2.msra.mxu0 0.0
      %2506 = vmatprep.subr.mxu0 0.0
      %2507 = vmatpush2.msra.mxu0 0.0
      %2508 = vmatprep.subr.mxu0 0.0
      %2509 = vmatpush2.msra.mxu0 0.0
      %2510 = vmatprep.subr.mxu0 0.0
      %2511 = vmatpush2.msra.mxu0 0.0
      %2512 = vmatprep.subr.mxu0 0.0
      %2513 = vmatpush2.msra.mxu0 0.0
      %2514 = vmatprep.subr.mxu0 0.0
      %2515 = vmatpush2.msra.mxu0 0.0
      %2516 = vmatprep.subr.mxu0 0.0
      %2517 = vmatpush2.msra.mxu0 0.0
      %2518 = vmatprep.subr.mxu0 0.0
      %2519 = vmatpush2.msra.mxu0 0.0
      %2520 = vmatprep.subr.mxu0 0.0
      %2521 = vmatpush2.msra.mxu0 0.0
      %2522 = vmatprep.subr.mxu0 0.0
      %2523 = vmatpush2.msra.mxu0 0.0
      %2524 = vmatprep.subr.mxu0 0.0
      %2525 = vmatpush2.msra.mxu0 0.0
      %2526 = vmatprep.subr.mxu0 0.0
      %2527 = vmatpush2.msra.mxu0 0.0
      %2528 = vmatprep.subr.mxu0 0.0
      %2529 = vmatpush2.msra.mxu0 0.0
      %2530 = vmatprep.subr.mxu0 0.0
      %2531 = vmatpush2.msra.mxu0 0.0
      %2532 = vmatprep.mubr.f32.mxu0 0.0
      %2533 = vmatmul.mubr.f32.gmra.mxu0 %v2442
      %v2534 = vpop.f32.mrf.mxu0
      %v2535 = vadd.f32 0.0, %v2534
      %v2536 = vpop.f32.mrf.mxu0
      %2537 = vmatprep.mubr.f32.mxu0 0.0
      %2538 = vmatmul.mubr.f32.gmra.mxu0 %v2445
      %v2539 = vpop.f32.mrf.mxu0
      %v2540 = vadd.f32 0.0, %v2539
      %v2541 = vpop.f32.mrf.mxu0
      %2542 = vmatprep.mubr.f32.mxu0 0.0
      %2543 = vmatmul.mubr.f32.gmra.mxu0 %v2448
      %v2544 = vpop.f32.mrf.mxu0
      %v2545 = vadd.f32 0.0, %v2544
      %v2546 = vpop.f32.mrf.mxu0
      %2547 = vmatprep.mubr.f32.mxu0 0.0
      %2548 = vmatmul.mubr.f32.gmra.mxu0 %v2451
      %v2549 = vpop.f32.mrf.mxu0
      %v2550 = vadd.f32 0.0, %v2549
      %v2551 = vpop.f32.mrf.mxu0
      %2552 = vmatprep.mubr.f32.mxu0 0.0
      %2553 = vmatmul.mubr.f32.gmra.mxu0 %v2454
      %v2554 = vpop.f32.mrf.mxu0
      %v2555 = vadd.f32 0.0, %v2554
      %v2556 = vpop.f32.mrf.mxu0
      %2557 = vmatprep.mubr.f32.mxu0 0.0
      %2558 = vmatmul.mubr.f32.gmra.mxu0 %v2457
      %v2559 = vpop.f32.mrf.mxu0
      %v2560 = vadd.f32 0.0, %v2559
      %v2561 = vpop.f32.mrf.mxu0
      %2562 = vmatprep.mubr.f32.mxu0 0.0
      %2563 = vmatmul.mubr.f32.gmra.mxu0 %v2460
      %v2564 = vpop.f32.mrf.mxu0
      %v2565 = vadd.f32 0.0, %v2564
      %v2566 = vpop.f32.mrf.mxu0
      %2567 = vmatprep.mubr.f32.mxu0 0.0
      %2568 = vmatmul.mubr.f32.gmra.mxu0 %v2463
      %v2569 = vpop.f32.mrf.mxu0
      %v2570 = vadd.f32 0.0, %v2569
      %v2571 = vpop.f32.mrf.mxu0
      %2572 = vdwg.mxu0
      %v2573 = vadd.f32 %v2423, %v2535
      %v2574 = vadd.f32 %v2424, %v2540
      %v2575 = vadd.f32 %v2425, %v2545
      %v2576 = vadd.f32 %v2426, %v2550
      %v2577 = vadd.f32 %v2427, %v2555
      %v2578 = vadd.f32 %v2428, %v2560
      %v2579 = vadd.f32 %v2429, %v2565
      %v2580 = vadd.f32 %v2430, %v2570
      %s2581 = scalar_lea.vmem %s321, 32
      %v2582 = vld [vmem:[%s2581] sm:$0xff]
      %v2583 = vld [vmem:[%s2581 + $0x10] sm:$0xff]
      %v2584 = vld [vmem:[%s2581 + $0x20] sm:$0xff]
      %v2585 = vld [vmem:[%s2581 + $0x30] sm:$0xff]
      %v2586 = vld [vmem:[%s2581 + $0x40] sm:$0xff]
      %v2587 = vld [vmem:[%s2581 + $0x50] sm:$0xff]
      %v2588 = vld [vmem:[%s2581 + $0x60] sm:$0xff]
      %v2589 = vld [vmem:[%s2581 + $0x70] sm:$0xff]
      %s2590 = scalar_lea.vmem %s3, 60
      %v2591 = vld [vmem:[%s2590] sm:$0xf]
      %v2593 = vsel %vm362, %v2582, 0
      %v2596 = vsel %vm362, %v2583, 0
      %v2599 = vsel %vm362, %v2584, 0
      %v2602 = vsel %vm362, %v2585, 0
      %v2605 = vsel %vm362, %v2586, 0
      %v2608 = vsel %vm362, %v2587, 0
      %v2611 = vsel %vm362, %v2588, 0
      %v2614 = vsel %vm362, %v2589, 0
      %v2617 = vsel %vm387, %v2591, 0
      %2619 = vmatprep.subr.mxu0 0.0
      %2620 = vmatpush1.msra.mxu0 0.0
      %2621 = vmatprep.subr.mxu0 0.0
      %2622 = vmatpush1.msra.mxu0 0.0
      %2623 = vmatprep.subr.mxu0 0.0
      %2624 = vmatpush1.msra.mxu0 0.0
      %2625 = vmatprep.subr.mxu0 0.0
      %2626 = vmatpush1.msra.mxu0 0.0
      %2627 = vmatprep.subr.mxu0 0.0
      %2628 = vmatpush1.msra.mxu0 0.0
      %2629 = vmatprep.subr.mxu0 0.0
      %2630 = vmatpush1.msra.mxu0 0.0
      %2631 = vmatprep.subr.mxu0 0.0
      %2632 = vmatpush1.msra.mxu0 0.0
      %2633 = vmatprep.subr.mxu0 0.0
      %2634 = vmatpush1.msra.mxu0 0.0
      %2635 = vmatprep.subr.mxu0 0.0
      %2636 = vmatpush1.msra.mxu0 0.0
      %2637 = vmatprep.subr.mxu0 0.0
      %2638 = vmatpush1.msra.mxu0 0.0
      %2639 = vmatprep.subr.mxu0 0.0
      %2640 = vmatpush1.msra.mxu0 0.0
      %2641 = vmatprep.subr.mxu0 0.0
      %2642 = vmatpush1.msra.mxu0 0.0
      %2643 = vmatprep.subr.mxu0 0.0
      %2644 = vmatpush1.msra.mxu0 0.0
      %2645 = vmatprep.subr.mxu0 0.0
      %2646 = vmatpush1.msra.mxu0 0.0
      %2647 = vmatprep.subr.mxu0 0.0
      %2648 = vmatpush1.msra.mxu0 0.0
      %2649 = vmatprep.subr.mxu0 0.0
      %2650 = vmatpush1.msra.mxu0 %v2617
      %2651 = vmatprep.subr.mxu0 0.0
      %2652 = vmatpush2.msra.mxu0 0.0
      %2653 = vmatprep.subr.mxu0 0.0
      %2654 = vmatpush2.msra.mxu0 0.0
      %2655 = vmatprep.subr.mxu0 0.0
      %2656 = vmatpush2.msra.mxu0 0.0
      %2657 = vmatprep.subr.mxu0 0.0
      %2658 = vmatpush2.msra.mxu0 0.0
      %2659 = vmatprep.subr.mxu0 0.0
      %2660 = vmatpush2.msra.mxu0 0.0
      %2661 = vmatprep.subr.mxu0 0.0
      %2662 = vmatpush2.msra.mxu0 0.0
      %2663 = vmatprep.subr.mxu0 0.0
      %2664 = vmatpush2.msra.mxu0 0.0
      %2665 = vmatprep.subr.mxu0 0.0
      %2666 = vmatpush2.msra.mxu0 0.0
      %2667 = vmatprep.subr.mxu0 0.0
      %2668 = vmatpush2.msra.mxu0 0.0
      %2669 = vmatprep.subr.mxu0 0.0
      %2670 = vmatpush2.msra.mxu0 0.0
      %2671 = vmatprep.subr.mxu0 0.0
      %2672 = vmatpush2.msra.mxu0 0.0
      %2673 = vmatprep.subr.mxu0 0.0
      %2674 = vmatpush2.msra.mxu0 0.0
      %2675 = vmatprep.subr.mxu0 0.0
      %2676 = vmatpush2.msra.mxu0 0.0
      %2677 = vmatprep.subr.mxu0 0.0
      %2678 = vmatpush2.msra.mxu0 0.0
      %2679 = vmatprep.subr.mxu0 0.0
      %2680 = vmatpush2.msra.mxu0 0.0
      %2681 = vmatprep.subr.mxu0 0.0
      %2682 = vmatpush2.msra.mxu0 0.0
      %2683 = vmatprep.mubr.f32.mxu0 0.0
      %2684 = vmatmul.mubr.f32.gmra.mxu0 %v2593
      %v2685 = vpop.f32.mrf.mxu0
      %v2686 = vadd.f32 0.0, %v2685
      %v2687 = vpop.f32.mrf.mxu0
      %2688 = vmatprep.mubr.f32.mxu0 0.0
      %2689 = vmatmul.mubr.f32.gmra.mxu0 %v2596
      %v2690 = vpop.f32.mrf.mxu0
      %v2691 = vadd.f32 0.0, %v2690
      %v2692 = vpop.f32.mrf.mxu0
      %2693 = vmatprep.mubr.f32.mxu0 0.0
      %2694 = vmatmul.mubr.f32.gmra.mxu0 %v2599
      %v2695 = vpop.f32.mrf.mxu0
      %v2696 = vadd.f32 0.0, %v2695
      %v2697 = vpop.f32.mrf.mxu0
      %2698 = vmatprep.mubr.f32.mxu0 0.0
      %2699 = vmatmul.mubr.f32.gmra.mxu0 %v2602
      %v2700 = vpop.f32.mrf.mxu0
      %v2701 = vadd.f32 0.0, %v2700
      %v2702 = vpop.f32.mrf.mxu0
      %2703 = vmatprep.mubr.f32.mxu0 0.0
      %2704 = vmatmul.mubr.f32.gmra.mxu0 %v2605
      %v2705 = vpop.f32.mrf.mxu0
      %v2706 = vadd.f32 0.0, %v2705
      %v2707 = vpop.f32.mrf.mxu0
      %2708 = vmatprep.mubr.f32.mxu0 0.0
      %2709 = vmatmul.mubr.f32.gmra.mxu0 %v2608
      %v2710 = vpop.f32.mrf.mxu0
      %v2711 = vadd.f32 0.0, %v2710
      %v2712 = vpop.f32.mrf.mxu0
      %2713 = vmatprep.mubr.f32.mxu0 0.0
      %2714 = vmatmul.mubr.f32.gmra.mxu0 %v2611
      %v2715 = vpop.f32.mrf.mxu0
      %v2716 = vadd.f32 0.0, %v2715
      %v2717 = vpop.f32.mrf.mxu0
      %2718 = vmatprep.mubr.f32.mxu0 0.0
      %2719 = vmatmul.mubr.f32.gmra.mxu0 %v2614
      %v2720 = vpop.f32.mrf.mxu0
      %v2721 = vadd.f32 0.0, %v2720
      %v2722 = vpop.f32.mrf.mxu0
      %2723 = vdwg.mxu0
      %v2724 = vadd.f32 %v2573, %v2686
      %v2725 = vadd.f32 %v2574, %v2691
      %v2726 = vadd.f32 %v2575, %v2696
      %v2727 = vadd.f32 %v2576, %v2701
      %v2728 = vadd.f32 %v2577, %v2706
      %v2729 = vadd.f32 %v2578, %v2711
      %v2730 = vadd.f32 %v2579, %v2716
      %v2731 = vadd.f32 %v2580, %v2721
      %v2732 = vld [vmem:[%s2581 + $0x1] sm:$0xff]
      %v2733 = vld [vmem:[%s2581 + $0x11] sm:$0xff]
      %v2734 = vld [vmem:[%s2581 + $0x21] sm:$0xff]
      %v2735 = vld [vmem:[%s2581 + $0x31] sm:$0xff]
      %v2736 = vld [vmem:[%s2581 + $0x41] sm:$0xff]
      %v2737 = vld [vmem:[%s2581 + $0x51] sm:$0xff]
      %v2738 = vld [vmem:[%s2581 + $0x61] sm:$0xff]
      %v2739 = vld [vmem:[%s2581 + $0x71] sm:$0xff]
      %s2740 = scalar_lea.vmem %s3, 64
      %v2741 = vld [vmem:[%s2740] sm:$0xf]
      %v2743 = vsel %vm362, %v2732, 0
      %v2746 = vsel %vm362, %v2733, 0
      %v2749 = vsel %vm362, %v2734, 0
      %v2752 = vsel %vm362, %v2735, 0
      %v2755 = vsel %vm362, %v2736, 0
      %v2758 = vsel %vm362, %v2737, 0
      %v2761 = vsel %vm362, %v2738, 0
      %v2764 = vsel %vm362, %v2739, 0
      %v2767 = vsel %vm387, %v2741, 0
      %2769 = vmatprep.subr.mxu0 0.0
      %2770 = vmatpush1.msra.mxu0 0.0
      %2771 = vmatprep.subr.mxu0 0.0
      %2772 = vmatpush1.msra.mxu0 0.0
      %2773 = vmatprep.subr.mxu0 0.0
      %2774 = vmatpush1.msra.mxu0 0.0
      %2775 = vmatprep.subr.mxu0 0.0
      %2776 = vmatpush1.msra.mxu0 0.0
      %2777 = vmatprep.subr.mxu0 0.0
      %2778 = vmatpush1.msra.mxu0 0.0
      %2779 = vmatprep.subr.mxu0 0.0
      %2780 = vmatpush1.msra.mxu0 0.0
      %2781 = vmatprep.subr.mxu0 0.0
      %2782 = vmatpush1.msra.mxu0 0.0
      %2783 = vmatprep.subr.mxu0 0.0
      %2784 = vmatpush1.msra.mxu0 0.0
      %2785 = vmatprep.subr.mxu0 0.0
      %2786 = vmatpush1.msra.mxu0 0.0
      %2787 = vmatprep.subr.mxu0 0.0
      %2788 = vmatpush1.msra.mxu0 0.0
      %2789 = vmatprep.subr.mxu0 0.0
      %2790 = vmatpush1.msra.mxu0 0.0
      %2791 = vmatprep.subr.mxu0 0.0
      %2792 = vmatpush1.msra.mxu0 0.0
      %2793 = vmatprep.subr.mxu0 0.0
      %2794 = vmatpush1.msra.mxu0 0.0
      %2795 = vmatprep.subr.mxu0 0.0
      %2796 = vmatpush1.msra.mxu0 0.0
      %2797 = vmatprep.subr.mxu0 0.0
      %2798 = vmatpush1.msra.mxu0 0.0
      %2799 = vmatprep.subr.mxu0 0.0
      %2800 = vmatpush1.msra.mxu0 %v2767
      %2801 = vmatprep.subr.mxu0 0.0
      %2802 = vmatpush2.msra.mxu0 0.0
      %2803 = vmatprep.subr.mxu0 0.0
      %2804 = vmatpush2.msra.mxu0 0.0
      %2805 = vmatprep.subr.mxu0 0.0
      %2806 = vmatpush2.msra.mxu0 0.0
      %2807 = vmatprep.subr.mxu0 0.0
      %2808 = vmatpush2.msra.mxu0 0.0
      %2809 = vmatprep.subr.mxu0 0.0
      %2810 = vmatpush2.msra.mxu0 0.0
      %2811 = vmatprep.subr.mxu0 0.0
      %2812 = vmatpush2.msra.mxu0 0.0
      %2813 = vmatprep.subr.mxu0 0.0
      %2814 = vmatpush2.msra.mxu0 0.0
      %2815 = vmatprep.subr.mxu0 0.0
      %2816 = vmatpush2.msra.mxu0 0.0
      %2817 = vmatprep.subr.mxu0 0.0
      %2818 = vmatpush2.msra.mxu0 0.0
      %2819 = vmatprep.subr.mxu0 0.0
      %2820 = vmatpush2.msra.mxu0 0.0
      %2821 = vmatprep.subr.mxu0 0.0
      %2822 = vmatpush2.msra.mxu0 0.0
      %2823 = vmatprep.subr.mxu0 0.0
      %2824 = vmatpush2.msra.mxu0 0.0
      %2825 = vmatprep.subr.mxu0 0.0
      %2826 = vmatpush2.msra.mxu0 0.0
      %2827 = vmatprep.subr.mxu0 0.0
      %2828 = vmatpush2.msra.mxu0 0.0
      %2829 = vmatprep.subr.mxu0 0.0
      %2830 = vmatpush2.msra.mxu0 0.0
      %2831 = vmatprep.subr.mxu0 0.0
      %2832 = vmatpush2.msra.mxu0 0.0
      %2833 = vmatprep.mubr.f32.mxu0 0.0
      %2834 = vmatmul.mubr.f32.gmra.mxu0 %v2743
      %v2835 = vpop.f32.mrf.mxu0
      %v2836 = vadd.f32 0.0, %v2835
      %v2837 = vpop.f32.mrf.mxu0
      %2838 = vmatprep.mubr.f32.mxu0 0.0
      %2839 = vmatmul.mubr.f32.gmra.mxu0 %v2746
      %v2840 = vpop.f32.mrf.mxu0
      %v2841 = vadd.f32 0.0, %v2840
      %v2842 = vpop.f32.mrf.mxu0
      %2843 = vmatprep.mubr.f32.mxu0 0.0
      %2844 = vmatmul.mubr.f32.gmra.mxu0 %v2749
      %v2845 = vpop.f32.mrf.mxu0
      %v2846 = vadd.f32 0.0, %v2845
      %v2847 = vpop.f32.mrf.mxu0
      %2848 = vmatprep.mubr.f32.mxu0 0.0
      %2849 = vmatmul.mubr.f32.gmra.mxu0 %v2752
      %v2850 = vpop.f32.mrf.mxu0
      %v2851 = vadd.f32 0.0, %v2850
      %v2852 = vpop.f32.mrf.mxu0
      %2853 = vmatprep.mubr.f32.mxu0 0.0
      %2854 = vmatmul.mubr.f32.gmra.mxu0 %v2755
      %v2855 = vpop.f32.mrf.mxu0
      %v2856 = vadd.f32 0.0, %v2855
      %v2857 = vpop.f32.mrf.mxu0
      %2858 = vmatprep.mubr.f32.mxu0 0.0
      %2859 = vmatmul.mubr.f32.gmra.mxu0 %v2758
      %v2860 = vpop.f32.mrf.mxu0
      %v2861 = vadd.f32 0.0, %v2860
      %v2862 = vpop.f32.mrf.mxu0
      %2863 = vmatprep.mubr.f32.mxu0 0.0
      %2864 = vmatmul.mubr.f32.gmra.mxu0 %v2761
      %v2865 = vpop.f32.mrf.mxu0
      %v2866 = vadd.f32 0.0, %v2865
      %v2867 = vpop.f32.mrf.mxu0
      %2868 = vmatprep.mubr.f32.mxu0 0.0
      %2869 = vmatmul.mubr.f32.gmra.mxu0 %v2764
      %v2870 = vpop.f32.mrf.mxu0
      %v2871 = vadd.f32 0.0, %v2870
      %v2872 = vpop.f32.mrf.mxu0
      %2873 = vdwg.mxu0
      %v2874 = vadd.f32 %v2724, %v2836
      %v2875 = vadd.f32 %v2725, %v2841
      %v2876 = vadd.f32 %v2726, %v2846
      %v2877 = vadd.f32 %v2727, %v2851
      %v2878 = vadd.f32 %v2728, %v2856
      %v2879 = vadd.f32 %v2729, %v2861
      %v2880 = vadd.f32 %v2730, %v2866
      %v2881 = vadd.f32 %v2731, %v2871
      %v2882 = vld [vmem:[%s2581 + $0x2] sm:$0xff]
      %v2883 = vld [vmem:[%s2581 + $0x12] sm:$0xff]
      %v2884 = vld [vmem:[%s2581 + $0x22] sm:$0xff]
      %v2885 = vld [vmem:[%s2581 + $0x32] sm:$0xff]
      %v2886 = vld [vmem:[%s2581 + $0x42] sm:$0xff]
      %v2887 = vld [vmem:[%s2581 + $0x52] sm:$0xff]
      %v2888 = vld [vmem:[%s2581 + $0x62] sm:$0xff]
      %v2889 = vld [vmem:[%s2581 + $0x72] sm:$0xff]
      %s2890 = scalar_lea.vmem %s3, 68
      %v2891 = vld [vmem:[%s2890] sm:$0xf]
      %v2893 = vsel %vm362, %v2882, 0
      %v2896 = vsel %vm362, %v2883, 0
      %v2899 = vsel %vm362, %v2884, 0
      %v2902 = vsel %vm362, %v2885, 0
      %v2905 = vsel %vm362, %v2886, 0
      %v2908 = vsel %vm362, %v2887, 0
      %v2911 = vsel %vm362, %v2888, 0
      %v2914 = vsel %vm362, %v2889, 0
      %v2917 = vsel %vm387, %v2891, 0
      %2919 = vmatprep.subr.mxu0 0.0
      %2920 = vmatpush1.msra.mxu0 0.0
      %2921 = vmatprep.subr.mxu0 0.0
      %2922 = vmatpush1.msra.mxu0 0.0
      %2923 = vmatprep.subr.mxu0 0.0
      %2924 = vmatpush1.msra.mxu0 0.0
      %2925 = vmatprep.subr.mxu0 0.0
      %2926 = vmatpush1.msra.mxu0 0.0
      %2927 = vmatprep.subr.mxu0 0.0
      %2928 = vmatpush1.msra.mxu0 0.0
      %2929 = vmatprep.subr.mxu0 0.0
      %2930 = vmatpush1.msra.mxu0 0.0
      %2931 = vmatprep.subr.mxu0 0.0
      %2932 = vmatpush1.msra.mxu0 0.0
      %2933 = vmatprep.subr.mxu0 0.0
      %2934 = vmatpush1.msra.mxu0 0.0
      %2935 = vmatprep.subr.mxu0 0.0
      %2936 = vmatpush1.msra.mxu0 0.0
      %2937 = vmatprep.subr.mxu0 0.0
      %2938 = vmatpush1.msra.mxu0 0.0
      %2939 = vmatprep.subr.mxu0 0.0
      %2940 = vmatpush1.msra.mxu0 0.0
      %2941 = vmatprep.subr.mxu0 0.0
      %2942 = vmatpush1.msra.mxu0 0.0
      %2943 = vmatprep.subr.mxu0 0.0
      %2944 = vmatpush1.msra.mxu0 0.0
      %2945 = vmatprep.subr.mxu0 0.0
      %2946 = vmatpush1.msra.mxu0 0.0
      %2947 = vmatprep.subr.mxu0 0.0
      %2948 = vmatpush1.msra.mxu0 0.0
      %2949 = vmatprep.subr.mxu0 0.0
      %2950 = vmatpush1.msra.mxu0 %v2917
      %2951 = vmatprep.subr.mxu0 0.0
      %2952 = vmatpush2.msra.mxu0 0.0
      %2953 = vmatprep.subr.mxu0 0.0
      %2954 = vmatpush2.msra.mxu0 0.0
      %2955 = vmatprep.subr.mxu0 0.0
      %2956 = vmatpush2.msra.mxu0 0.0
      %2957 = vmatprep.subr.mxu0 0.0
      %2958 = vmatpush2.msra.mxu0 0.0
      %2959 = vmatprep.subr.mxu0 0.0
      %2960 = vmatpush2.msra.mxu0 0.0
      %2961 = vmatprep.subr.mxu0 0.0
      %2962 = vmatpush2.msra.mxu0 0.0
      %2963 = vmatprep.subr.mxu0 0.0
      %2964 = vmatpush2.msra.mxu0 0.0
      %2965 = vmatprep.subr.mxu0 0.0
      %2966 = vmatpush2.msra.mxu0 0.0
      %2967 = vmatprep.subr.mxu0 0.0
      %2968 = vmatpush2.msra.mxu0 0.0
      %2969 = vmatprep.subr.mxu0 0.0
      %2970 = vmatpush2.msra.mxu0 0.0
      %2971 = vmatprep.subr.mxu0 0.0
      %2972 = vmatpush2.msra.mxu0 0.0
      %2973 = vmatprep.subr.mxu0 0.0
      %2974 = vmatpush2.msra.mxu0 0.0
      %2975 = vmatprep.subr.mxu0 0.0
      %2976 = vmatpush2.msra.mxu0 0.0
      %2977 = vmatprep.subr.mxu0 0.0
      %2978 = vmatpush2.msra.mxu0 0.0
      %2979 = vmatprep.subr.mxu0 0.0
      %2980 = vmatpush2.msra.mxu0 0.0
      %2981 = vmatprep.subr.mxu0 0.0
      %2982 = vmatpush2.msra.mxu0 0.0
      %2983 = vmatprep.mubr.f32.mxu0 0.0
      %2984 = vmatmul.mubr.f32.gmra.mxu0 %v2893
      %v2985 = vpop.f32.mrf.mxu0
      %v2986 = vadd.f32 0.0, %v2985
      %v2987 = vpop.f32.mrf.mxu0
      %2988 = vmatprep.mubr.f32.mxu0 0.0
      %2989 = vmatmul.mubr.f32.gmra.mxu0 %v2896
      %v2990 = vpop.f32.mrf.mxu0
      %v2991 = vadd.f32 0.0, %v2990
      %v2992 = vpop.f32.mrf.mxu0
      %2993 = vmatprep.mubr.f32.mxu0 0.0
      %2994 = vmatmul.mubr.f32.gmra.mxu0 %v2899
      %v2995 = vpop.f32.mrf.mxu0
      %v2996 = vadd.f32 0.0, %v2995
      %v2997 = vpop.f32.mrf.mxu0
      %2998 = vmatprep.mubr.f32.mxu0 0.0
      %2999 = vmatmul.mubr.f32.gmra.mxu0 %v2902
      %v3000 = vpop.f32.mrf.mxu0
      %v3001 = vadd.f32 0.0, %v3000
      %v3002 = vpop.f32.mrf.mxu0
      %3003 = vmatprep.mubr.f32.mxu0 0.0
      %3004 = vmatmul.mubr.f32.gmra.mxu0 %v2905
      %v3005 = vpop.f32.mrf.mxu0
      %v3006 = vadd.f32 0.0, %v3005
      %v3007 = vpop.f32.mrf.mxu0
      %3008 = vmatprep.mubr.f32.mxu0 0.0
      %3009 = vmatmul.mubr.f32.gmra.mxu0 %v2908
      %v3010 = vpop.f32.mrf.mxu0
      %v3011 = vadd.f32 0.0, %v3010
      %v3012 = vpop.f32.mrf.mxu0
      %3013 = vmatprep.mubr.f32.mxu0 0.0
      %3014 = vmatmul.mubr.f32.gmra.mxu0 %v2911
      %v3015 = vpop.f32.mrf.mxu0
      %v3016 = vadd.f32 0.0, %v3015
      %v3017 = vpop.f32.mrf.mxu0
      %3018 = vmatprep.mubr.f32.mxu0 0.0
      %3019 = vmatmul.mubr.f32.gmra.mxu0 %v2914
      %v3020 = vpop.f32.mrf.mxu0
      %v3021 = vadd.f32 0.0, %v3020
      %v3022 = vpop.f32.mrf.mxu0
      %3023 = vdwg.mxu0
      %v3024 = vadd.f32 %v2874, %v2986
      %v3025 = vadd.f32 %v2875, %v2991
      %v3026 = vadd.f32 %v2876, %v2996
      %v3027 = vadd.f32 %v2877, %v3001
      %v3028 = vadd.f32 %v2878, %v3006
      %v3029 = vadd.f32 %v2879, %v3011
      %v3030 = vadd.f32 %v2880, %v3016
      %v3031 = vadd.f32 %v2881, %v3021
      %v3032 = vld [vmem:[%s332] sm:$0xff]
      %v3033 = vld [vmem:[%s332 + $0x10] sm:$0xff]
      %v3034 = vld [vmem:[%s332 + $0x20] sm:$0xff]
      %v3035 = vld [vmem:[%s332 + $0x30] sm:$0xff]
      %v3036 = vld [vmem:[%s332 + $0x40] sm:$0xff]
      %v3037 = vld [vmem:[%s332 + $0x50] sm:$0xff]
      %v3038 = vld [vmem:[%s332 + $0x60] sm:$0xff]
      %v3039 = vld [vmem:[%s332 + $0x70] sm:$0xff]
      %s3040 = scalar_lea.vmem %s3, 72
      %v3041 = vld [vmem:[%s3040] sm:$0xf]
      %v3043 = vsel %vm362, %v3032, 0
      %v3046 = vsel %vm362, %v3033, 0
      %v3049 = vsel %vm362, %v3034, 0
      %v3052 = vsel %vm362, %v3035, 0
      %v3055 = vsel %vm362, %v3036, 0
      %v3058 = vsel %vm362, %v3037, 0
      %v3061 = vsel %vm362, %v3038, 0
      %v3064 = vsel %vm362, %v3039, 0
      %v3067 = vsel %vm387, %v3041, 0
      %3069 = vmatprep.subr.mxu0 0.0
      %3070 = vmatpush1.msra.mxu0 0.0
      %3071 = vmatprep.subr.mxu0 0.0
      %3072 = vmatpush1.msra.mxu0 0.0
      %3073 = vmatprep.subr.mxu0 0.0
      %3074 = vmatpush1.msra.mxu0 0.0
      %3075 = vmatprep.subr.mxu0 0.0
      %3076 = vmatpush1.msra.mxu0 0.0
      %3077 = vmatprep.subr.mxu0 0.0
      %3078 = vmatpush1.msra.mxu0 0.0
      %3079 = vmatprep.subr.mxu0 0.0
      %3080 = vmatpush1.msra.mxu0 0.0
      %3081 = vmatprep.subr.mxu0 0.0
      %3082 = vmatpush1.msra.mxu0 0.0
      %3083 = vmatprep.subr.mxu0 0.0
      %3084 = vmatpush1.msra.mxu0 0.0
      %3085 = vmatprep.subr.mxu0 0.0
      %3086 = vmatpush1.msra.mxu0 0.0
      %3087 = vmatprep.subr.mxu0 0.0
      %3088 = vmatpush1.msra.mxu0 0.0
      %3089 = vmatprep.subr.mxu0 0.0
      %3090 = vmatpush1.msra.mxu0 0.0
      %3091 = vmatprep.subr.mxu0 0.0
      %3092 = vmatpush1.msra.mxu0 0.0
      %3093 = vmatprep.subr.mxu0 0.0
      %3094 = vmatpush1.msra.mxu0 0.0
      %3095 = vmatprep.subr.mxu0 0.0
      %3096 = vmatpush1.msra.mxu0 0.0
      %3097 = vmatprep.subr.mxu0 0.0
      %3098 = vmatpush1.msra.mxu0 0.0
      %3099 = vmatprep.subr.mxu0 0.0
      %3100 = vmatpush1.msra.mxu0 %v3067
      %3101 = vmatprep.subr.mxu0 0.0
      %3102 = vmatpush2.msra.mxu0 0.0
      %3103 = vmatprep.subr.mxu0 0.0
      %3104 = vmatpush2.msra.mxu0 0.0
      %3105 = vmatprep.subr.mxu0 0.0
      %3106 = vmatpush2.msra.mxu0 0.0
      %3107 = vmatprep.subr.mxu0 0.0
      %3108 = vmatpush2.msra.mxu0 0.0
      %3109 = vmatprep.subr.mxu0 0.0
      %3110 = vmatpush2.msra.mxu0 0.0
      %3111 = vmatprep.subr.mxu0 0.0
      %3112 = vmatpush2.msra.mxu0 0.0
      %3113 = vmatprep.subr.mxu0 0.0
      %3114 = vmatpush2.msra.mxu0 0.0
      %3115 = vmatprep.subr.mxu0 0.0
      %3116 = vmatpush2.msra.mxu0 0.0
      %3117 = vmatprep.subr.mxu0 0.0
      %3118 = vmatpush2.msra.mxu0 0.0
      %3119 = vmatprep.subr.mxu0 0.0
      %3120 = vmatpush2.msra.mxu0 0.0
      %3121 = vmatprep.subr.mxu0 0.0
      %3122 = vmatpush2.msra.mxu0 0.0
      %3123 = vmatprep.subr.mxu0 0.0
      %3124 = vmatpush2.msra.mxu0 0.0
      %3125 = vmatprep.subr.mxu0 0.0
      %3126 = vmatpush2.msra.mxu0 0.0
      %3127 = vmatprep.subr.mxu0 0.0
      %3128 = vmatpush2.msra.mxu0 0.0
      %3129 = vmatprep.subr.mxu0 0.0
      %3130 = vmatpush2.msra.mxu0 0.0
      %3131 = vmatprep.subr.mxu0 0.0
      %3132 = vmatpush2.msra.mxu0 0.0
      %3133 = vmatprep.mubr.f32.mxu0 0.0
      %3134 = vmatmul.mubr.f32.gmra.mxu0 %v3043
      %v3135 = vpop.f32.mrf.mxu0
      %v3136 = vadd.f32 0.0, %v3135
      %v3137 = vpop.f32.mrf.mxu0
      %3138 = vmatprep.mubr.f32.mxu0 0.0
      %3139 = vmatmul.mubr.f32.gmra.mxu0 %v3046
      %v3140 = vpop.f32.mrf.mxu0
      %v3141 = vadd.f32 0.0, %v3140
      %v3142 = vpop.f32.mrf.mxu0
      %3143 = vmatprep.mubr.f32.mxu0 0.0
      %3144 = vmatmul.mubr.f32.gmra.mxu0 %v3049
      %v3145 = vpop.f32.mrf.mxu0
      %v3146 = vadd.f32 0.0, %v3145
      %v3147 = vpop.f32.mrf.mxu0
      %3148 = vmatprep.mubr.f32.mxu0 0.0
      %3149 = vmatmul.mubr.f32.gmra.mxu0 %v3052
      %v3150 = vpop.f32.mrf.mxu0
      %v3151 = vadd.f32 0.0, %v3150
      %v3152 = vpop.f32.mrf.mxu0
      %3153 = vmatprep.mubr.f32.mxu0 0.0
      %3154 = vmatmul.mubr.f32.gmra.mxu0 %v3055
      %v3155 = vpop.f32.mrf.mxu0
      %v3156 = vadd.f32 0.0, %v3155
      %v3157 = vpop.f32.mrf.mxu0
      %3158 = vmatprep.mubr.f32.mxu0 0.0
      %3159 = vmatmul.mubr.f32.gmra.mxu0 %v3058
      %v3160 = vpop.f32.mrf.mxu0
      %v3161 = vadd.f32 0.0, %v3160
      %v3162 = vpop.f32.mrf.mxu0
      %3163 = vmatprep.mubr.f32.mxu0 0.0
      %3164 = vmatmul.mubr.f32.gmra.mxu0 %v3061
      %v3165 = vpop.f32.mrf.mxu0
      %v3166 = vadd.f32 0.0, %v3165
      %v3167 = vpop.f32.mrf.mxu0
      %3168 = vmatprep.mubr.f32.mxu0 0.0
      %3169 = vmatmul.mubr.f32.gmra.mxu0 %v3064
      %v3170 = vpop.f32.mrf.mxu0
      %v3171 = vadd.f32 0.0, %v3170
      %v3172 = vpop.f32.mrf.mxu0
      %3173 = vdwg.mxu0
      %v3174 = vadd.f32 %v3024, %v3136
      %v3175 = vadd.f32 %v3025, %v3141
      %v3176 = vadd.f32 %v3026, %v3146
      %v3177 = vadd.f32 %v3027, %v3151
      %v3178 = vadd.f32 %v3028, %v3156
      %v3179 = vadd.f32 %v3029, %v3161
      %v3180 = vadd.f32 %v3030, %v3166
      %v3181 = vadd.f32 %v3031, %v3171
      %v3182 = vld [vmem:[%s332 + $0x1] sm:$0xff]
      %v3183 = vld [vmem:[%s332 + $0x11] sm:$0xff]
      %v3184 = vld [vmem:[%s332 + $0x21] sm:$0xff]
      %v3185 = vld [vmem:[%s332 + $0x31] sm:$0xff]
      %v3186 = vld [vmem:[%s332 + $0x41] sm:$0xff]
      %v3187 = vld [vmem:[%s332 + $0x51] sm:$0xff]
      %v3188 = vld [vmem:[%s332 + $0x61] sm:$0xff]
      %v3189 = vld [vmem:[%s332 + $0x71] sm:$0xff]
      %s3190 = scalar_lea.vmem %s3, 76
      %v3191 = vld [vmem:[%s3190] sm:$0xf]
      %v3193 = vsel %vm362, %v3182, 0
      %v3196 = vsel %vm362, %v3183, 0
      %v3199 = vsel %vm362, %v3184, 0
      %v3202 = vsel %vm362, %v3185, 0
      %v3205 = vsel %vm362, %v3186, 0
      %v3208 = vsel %vm362, %v3187, 0
      %v3211 = vsel %vm362, %v3188, 0
      %v3214 = vsel %vm362, %v3189, 0
      %v3217 = vsel %vm387, %v3191, 0
      %3219 = vmatprep.subr.mxu0 0.0
      %3220 = vmatpush1.msra.mxu0 0.0
      %3221 = vmatprep.subr.mxu0 0.0
      %3222 = vmatpush1.msra.mxu0 0.0
      %3223 = vmatprep.subr.mxu0 0.0
      %3224 = vmatpush1.msra.mxu0 0.0
      %3225 = vmatprep.subr.mxu0 0.0
      %3226 = vmatpush1.msra.mxu0 0.0
      %3227 = vmatprep.subr.mxu0 0.0
      %3228 = vmatpush1.msra.mxu0 0.0
      %3229 = vmatprep.subr.mxu0 0.0
      %3230 = vmatpush1.msra.mxu0 0.0
      %3231 = vmatprep.subr.mxu0 0.0
      %3232 = vmatpush1.msra.mxu0 0.0
      %3233 = vmatprep.subr.mxu0 0.0
      %3234 = vmatpush1.msra.mxu0 0.0
      %3235 = vmatprep.subr.mxu0 0.0
      %3236 = vmatpush1.msra.mxu0 0.0
      %3237 = vmatprep.subr.mxu0 0.0
      %3238 = vmatpush1.msra.mxu0 0.0
      %3239 = vmatprep.subr.mxu0 0.0
      %3240 = vmatpush1.msra.mxu0 0.0
      %3241 = vmatprep.subr.mxu0 0.0
      %3242 = vmatpush1.msra.mxu0 0.0
      %3243 = vmatprep.subr.mxu0 0.0
      %3244 = vmatpush1.msra.mxu0 0.0
      %3245 = vmatprep.subr.mxu0 0.0
      %3246 = vmatpush1.msra.mxu0 0.0
      %3247 = vmatprep.subr.mxu0 0.0
      %3248 = vmatpush1.msra.mxu0 0.0
      %3249 = vmatprep.subr.mxu0 0.0
      %3250 = vmatpush1.msra.mxu0 %v3217
      %3251 = vmatprep.subr.mxu0 0.0
      %3252 = vmatpush2.msra.mxu0 0.0
      %3253 = vmatprep.subr.mxu0 0.0
      %3254 = vmatpush2.msra.mxu0 0.0
      %3255 = vmatprep.subr.mxu0 0.0
      %3256 = vmatpush2.msra.mxu0 0.0
      %3257 = vmatprep.subr.mxu0 0.0
      %3258 = vmatpush2.msra.mxu0 0.0
      %3259 = vmatprep.subr.mxu0 0.0
      %3260 = vmatpush2.msra.mxu0 0.0
      %3261 = vmatprep.subr.mxu0 0.0
      %3262 = vmatpush2.msra.mxu0 0.0
      %3263 = vmatprep.subr.mxu0 0.0
      %3264 = vmatpush2.msra.mxu0 0.0
      %3265 = vmatprep.subr.mxu0 0.0
      %3266 = vmatpush2.msra.mxu0 0.0
      %3267 = vmatprep.subr.mxu0 0.0
      %3268 = vmatpush2.msra.mxu0 0.0
      %3269 = vmatprep.subr.mxu0 0.0
      %3270 = vmatpush2.msra.mxu0 0.0
      %3271 = vmatprep.subr.mxu0 0.0
      %3272 = vmatpush2.msra.mxu0 0.0
      %3273 = vmatprep.subr.mxu0 0.0
      %3274 = vmatpush2.msra.mxu0 0.0
      %3275 = vmatprep.subr.mxu0 0.0
      %3276 = vmatpush2.msra.mxu0 0.0
      %3277 = vmatprep.subr.mxu0 0.0
      %3278 = vmatpush2.msra.mxu0 0.0
      %3279 = vmatprep.subr.mxu0 0.0
      %3280 = vmatpush2.msra.mxu0 0.0
      %3281 = vmatprep.subr.mxu0 0.0
      %3282 = vmatpush2.msra.mxu0 0.0
      %3283 = vmatprep.mubr.f32.mxu0 0.0
      %3284 = vmatmul.mubr.f32.gmra.mxu0 %v3193
      %v3285 = vpop.f32.mrf.mxu0
      %v3286 = vadd.f32 0.0, %v3285
      %v3287 = vpop.f32.mrf.mxu0
      %3288 = vmatprep.mubr.f32.mxu0 0.0
      %3289 = vmatmul.mubr.f32.gmra.mxu0 %v3196
      %v3290 = vpop.f32.mrf.mxu0
      %v3291 = vadd.f32 0.0, %v3290
      %v3292 = vpop.f32.mrf.mxu0
      %3293 = vmatprep.mubr.f32.mxu0 0.0
      %3294 = vmatmul.mubr.f32.gmra.mxu0 %v3199
      %v3295 = vpop.f32.mrf.mxu0
      %v3296 = vadd.f32 0.0, %v3295
      %v3297 = vpop.f32.mrf.mxu0
      %3298 = vmatprep.mubr.f32.mxu0 0.0
      %3299 = vmatmul.mubr.f32.gmra.mxu0 %v3202
      %v3300 = vpop.f32.mrf.mxu0
      %v3301 = vadd.f32 0.0, %v3300
      %v3302 = vpop.f32.mrf.mxu0
      %3303 = vmatprep.mubr.f32.mxu0 0.0
      %3304 = vmatmul.mubr.f32.gmra.mxu0 %v3205
      %v3305 = vpop.f32.mrf.mxu0
      %v3306 = vadd.f32 0.0, %v3305
      %v3307 = vpop.f32.mrf.mxu0
      %3308 = vmatprep.mubr.f32.mxu0 0.0
      %3309 = vmatmul.mubr.f32.gmra.mxu0 %v3208
      %v3310 = vpop.f32.mrf.mxu0
      %v3311 = vadd.f32 0.0, %v3310
      %v3312 = vpop.f32.mrf.mxu0
      %3313 = vmatprep.mubr.f32.mxu0 0.0
      %3314 = vmatmul.mubr.f32.gmra.mxu0 %v3211
      %v3315 = vpop.f32.mrf.mxu0
      %v3316 = vadd.f32 0.0, %v3315
      %v3317 = vpop.f32.mrf.mxu0
      %3318 = vmatprep.mubr.f32.mxu0 0.0
      %3319 = vmatmul.mubr.f32.gmra.mxu0 %v3214
      %v3320 = vpop.f32.mrf.mxu0
      %v3321 = vadd.f32 0.0, %v3320
      %v3322 = vpop.f32.mrf.mxu0
      %3323 = vdwg.mxu0
      %v3324 = vadd.f32 %v3174, %v3286
      %v3325 = vadd.f32 %v3175, %v3291
      %v3326 = vadd.f32 %v3176, %v3296
      %v3327 = vadd.f32 %v3177, %v3301
      %v3328 = vadd.f32 %v3178, %v3306
      %v3329 = vadd.f32 %v3179, %v3311
      %v3330 = vadd.f32 %v3180, %v3316
      %v3331 = vadd.f32 %v3181, %v3321
      %v3332 = vld [vmem:[%s332 + $0x2] sm:$0xff]
      %v3333 = vld [vmem:[%s332 + $0x12] sm:$0xff]
      %v3334 = vld [vmem:[%s332 + $0x22] sm:$0xff]
      %v3335 = vld [vmem:[%s332 + $0x32] sm:$0xff]
      %v3336 = vld [vmem:[%s332 + $0x42] sm:$0xff]
      %v3337 = vld [vmem:[%s332 + $0x52] sm:$0xff]
      %v3338 = vld [vmem:[%s332 + $0x62] sm:$0xff]
      %v3339 = vld [vmem:[%s332 + $0x72] sm:$0xff]
      %s3340 = scalar_lea.vmem %s3, 80
      %v3341 = vld [vmem:[%s3340] sm:$0xf]
      %v3343 = vsel %vm362, %v3332, 0
      %v3346 = vsel %vm362, %v3333, 0
      %v3349 = vsel %vm362, %v3334, 0
      %v3352 = vsel %vm362, %v3335, 0
      %v3355 = vsel %vm362, %v3336, 0
      %v3358 = vsel %vm362, %v3337, 0
      %v3361 = vsel %vm362, %v3338, 0
      %v3364 = vsel %vm362, %v3339, 0
      %v3367 = vsel %vm387, %v3341, 0
      %3369 = vmatprep.subr.mxu0 0.0
      %3370 = vmatpush1.msra.mxu0 0.0
      %3371 = vmatprep.subr.mxu0 0.0
      %3372 = vmatpush1.msra.mxu0 0.0
      %3373 = vmatprep.subr.mxu0 0.0
      %3374 = vmatpush1.msra.mxu0 0.0
      %3375 = vmatprep.subr.mxu0 0.0
      %3376 = vmatpush1.msra.mxu0 0.0
      %3377 = vmatprep.subr.mxu0 0.0
      %3378 = vmatpush1.msra.mxu0 0.0
      %3379 = vmatprep.subr.mxu0 0.0
      %3380 = vmatpush1.msra.mxu0 0.0
      %3381 = vmatprep.subr.mxu0 0.0
      %3382 = vmatpush1.msra.mxu0 0.0
      %3383 = vmatprep.subr.mxu0 0.0
      %3384 = vmatpush1.msra.mxu0 0.0
      %3385 = vmatprep.subr.mxu0 0.0
      %3386 = vmatpush1.msra.mxu0 0.0
      %3387 = vmatprep.subr.mxu0 0.0
      %3388 = vmatpush1.msra.mxu0 0.0
      %3389 = vmatprep.subr.mxu0 0.0
      %3390 = vmatpush1.msra.mxu0 0.0
      %3391 = vmatprep.subr.mxu0 0.0
      %3392 = vmatpush1.msra.mxu0 0.0
      %3393 = vmatprep.subr.mxu0 0.0
      %3394 = vmatpush1.msra.mxu0 0.0
      %3395 = vmatprep.subr.mxu0 0.0
      %3396 = vmatpush1.msra.mxu0 0.0
      %3397 = vmatprep.subr.mxu0 0.0
      %3398 = vmatpush1.msra.mxu0 0.0
      %3399 = vmatprep.subr.mxu0 0.0
      %3400 = vmatpush1.msra.mxu0 %v3367
      %3401 = vmatprep.subr.mxu0 0.0
      %3402 = vmatpush2.msra.mxu0 0.0
      %3403 = vmatprep.subr.mxu0 0.0
      %3404 = vmatpush2.msra.mxu0 0.0
      %3405 = vmatprep.subr.mxu0 0.0
      %3406 = vmatpush2.msra.mxu0 0.0
      %3407 = vmatprep.subr.mxu0 0.0
      %3408 = vmatpush2.msra.mxu0 0.0
      %3409 = vmatprep.subr.mxu0 0.0
      %3410 = vmatpush2.msra.mxu0 0.0
      %3411 = vmatprep.subr.mxu0 0.0
      %3412 = vmatpush2.msra.mxu0 0.0
      %3413 = vmatprep.subr.mxu0 0.0
      %3414 = vmatpush2.msra.mxu0 0.0
      %3415 = vmatprep.subr.mxu0 0.0
      %3416 = vmatpush2.msra.mxu0 0.0
      %3417 = vmatprep.subr.mxu0 0.0
      %3418 = vmatpush2.msra.mxu0 0.0
      %3419 = vmatprep.subr.mxu0 0.0
      %3420 = vmatpush2.msra.mxu0 0.0
      %3421 = vmatprep.subr.mxu0 0.0
      %3422 = vmatpush2.msra.mxu0 0.0
      %3423 = vmatprep.subr.mxu0 0.0
      %3424 = vmatpush2.msra.mxu0 0.0
      %3425 = vmatprep.subr.mxu0 0.0
      %3426 = vmatpush2.msra.mxu0 0.0
      %3427 = vmatprep.subr.mxu0 0.0
      %3428 = vmatpush2.msra.mxu0 0.0
      %3429 = vmatprep.subr.mxu0 0.0
      %3430 = vmatpush2.msra.mxu0 0.0
      %3431 = vmatprep.subr.mxu0 0.0
      %3432 = vmatpush2.msra.mxu0 0.0
      %3433 = vmatprep.mubr.f32.mxu0 0.0
      %3434 = vmatmul.mubr.f32.gmra.mxu0 %v3343
      %v3435 = vpop.f32.mrf.mxu0
      %v3436 = vadd.f32 0.0, %v3435
      %v3437 = vpop.f32.mrf.mxu0
      %3438 = vmatprep.mubr.f32.mxu0 0.0
      %3439 = vmatmul.mubr.f32.gmra.mxu0 %v3346
      %v3440 = vpop.f32.mrf.mxu0
      %v3441 = vadd.f32 0.0, %v3440
      %v3442 = vpop.f32.mrf.mxu0
      %3443 = vmatprep.mubr.f32.mxu0 0.0
      %3444 = vmatmul.mubr.f32.gmra.mxu0 %v3349
      %v3445 = vpop.f32.mrf.mxu0
      %v3446 = vadd.f32 0.0, %v3445
      %v3447 = vpop.f32.mrf.mxu0
      %3448 = vmatprep.mubr.f32.mxu0 0.0
      %3449 = vmatmul.mubr.f32.gmra.mxu0 %v3352
      %v3450 = vpop.f32.mrf.mxu0
      %v3451 = vadd.f32 0.0, %v3450
      %v3452 = vpop.f32.mrf.mxu0
      %3453 = vmatprep.mubr.f32.mxu0 0.0
      %3454 = vmatmul.mubr.f32.gmra.mxu0 %v3355
      %v3455 = vpop.f32.mrf.mxu0
      %v3456 = vadd.f32 0.0, %v3455
      %v3457 = vpop.f32.mrf.mxu0
      %3458 = vmatprep.mubr.f32.mxu0 0.0
      %3459 = vmatmul.mubr.f32.gmra.mxu0 %v3358
      %v3460 = vpop.f32.mrf.mxu0
      %v3461 = vadd.f32 0.0, %v3460
      %v3462 = vpop.f32.mrf.mxu0
      %3463 = vmatprep.mubr.f32.mxu0 0.0
      %3464 = vmatmul.mubr.f32.gmra.mxu0 %v3361
      %v3465 = vpop.f32.mrf.mxu0
      %v3466 = vadd.f32 0.0, %v3465
      %v3467 = vpop.f32.mrf.mxu0
      %3468 = vmatprep.mubr.f32.mxu0 0.0
      %3469 = vmatmul.mubr.f32.gmra.mxu0 %v3364
      %v3470 = vpop.f32.mrf.mxu0
      %v3471 = vadd.f32 0.0, %v3470
      %v3472 = vpop.f32.mrf.mxu0
      %3473 = vdwg.mxu0
      %v3474 = vadd.f32 %v3324, %v3436
      %v3475 = vadd.f32 %v3325, %v3441
      %v3476 = vadd.f32 %v3326, %v3446
      %v3477 = vadd.f32 %v3327, %v3451
      %v3478 = vadd.f32 %v3328, %v3456
      %v3479 = vadd.f32 %v3329, %v3461
      %v3480 = vadd.f32 %v3330, %v3466
      %v3481 = vadd.f32 %v3331, %v3471
      %s3482 = scalar_lea.vmem %s332, 16
      %v3483 = vld [vmem:[%s3482] sm:$0xff]
      %v3484 = vld [vmem:[%s3482 + $0x10] sm:$0xff]
      %v3485 = vld [vmem:[%s3482 + $0x20] sm:$0xff]
      %v3486 = vld [vmem:[%s3482 + $0x30] sm:$0xff]
      %v3487 = vld [vmem:[%s3482 + $0x40] sm:$0xff]
      %v3488 = vld [vmem:[%s3482 + $0x50] sm:$0xff]
      %v3489 = vld [vmem:[%s3482 + $0x60] sm:$0xff]
      %v3490 = vld [vmem:[%s3482 + $0x70] sm:$0xff]
      %s3491 = scalar_lea.vmem %s3, 84
      %v3492 = vld [vmem:[%s3491] sm:$0xf]
      %v3494 = vsel %vm362, %v3483, 0
      %v3497 = vsel %vm362, %v3484, 0
      %v3500 = vsel %vm362, %v3485, 0
      %v3503 = vsel %vm362, %v3486, 0
      %v3506 = vsel %vm362, %v3487, 0
      %v3509 = vsel %vm362, %v3488, 0
      %v3512 = vsel %vm362, %v3489, 0
      %v3515 = vsel %vm362, %v3490, 0
      %v3518 = vsel %vm387, %v3492, 0
      %3520 = vmatprep.subr.mxu0 0.0
      %3521 = vmatpush1.msra.mxu0 0.0
      %3522 = vmatprep.subr.mxu0 0.0
      %3523 = vmatpush1.msra.mxu0 0.0
      %3524 = vmatprep.subr.mxu0 0.0
      %3525 = vmatpush1.msra.mxu0 0.0
      %3526 = vmatprep.subr.mxu0 0.0
      %3527 = vmatpush1.msra.mxu0 0.0
      %3528 = vmatprep.subr.mxu0 0.0
      %3529 = vmatpush1.msra.mxu0 0.0
      %3530 = vmatprep.subr.mxu0 0.0
      %3531 = vmatpush1.msra.mxu0 0.0
      %3532 = vmatprep.subr.mxu0 0.0
      %3533 = vmatpush1.msra.mxu0 0.0
      %3534 = vmatprep.subr.mxu0 0.0
      %3535 = vmatpush1.msra.mxu0 0.0
      %3536 = vmatprep.subr.mxu0 0.0
      %3537 = vmatpush1.msra.mxu0 0.0
      %3538 = vmatprep.subr.mxu0 0.0
      %3539 = vmatpush1.msra.mxu0 0.0
      %3540 = vmatprep.subr.mxu0 0.0
      %3541 = vmatpush1.msra.mxu0 0.0
      %3542 = vmatprep.subr.mxu0 0.0
      %3543 = vmatpush1.msra.mxu0 0.0
      %3544 = vmatprep.subr.mxu0 0.0
      %3545 = vmatpush1.msra.mxu0 0.0
      %3546 = vmatprep.subr.mxu0 0.0
      %3547 = vmatpush1.msra.mxu0 0.0
      %3548 = vmatprep.subr.mxu0 0.0
      %3549 = vmatpush1.msra.mxu0 0.0
      %3550 = vmatprep.subr.mxu0 0.0
      %3551 = vmatpush1.msra.mxu0 %v3518
      %3552 = vmatprep.subr.mxu0 0.0
      %3553 = vmatpush2.msra.mxu0 0.0
      %3554 = vmatprep.subr.mxu0 0.0
      %3555 = vmatpush2.msra.mxu0 0.0
      %3556 = vmatprep.subr.mxu0 0.0
      %3557 = vmatpush2.msra.mxu0 0.0
      %3558 = vmatprep.subr.mxu0 0.0
      %3559 = vmatpush2.msra.mxu0 0.0
      %3560 = vmatprep.subr.mxu0 0.0
      %3561 = vmatpush2.msra.mxu0 0.0
      %3562 = vmatprep.subr.mxu0 0.0
      %3563 = vmatpush2.msra.mxu0 0.0
      %3564 = vmatprep.subr.mxu0 0.0
      %3565 = vmatpush2.msra.mxu0 0.0
      %3566 = vmatprep.subr.mxu0 0.0
      %3567 = vmatpush2.msra.mxu0 0.0
      %3568 = vmatprep.subr.mxu0 0.0
      %3569 = vmatpush2.msra.mxu0 0.0
      %3570 = vmatprep.subr.mxu0 0.0
      %3571 = vmatpush2.msra.mxu0 0.0
      %3572 = vmatprep.subr.mxu0 0.0
      %3573 = vmatpush2.msra.mxu0 0.0
      %3574 = vmatprep.subr.mxu0 0.0
      %3575 = vmatpush2.msra.mxu0 0.0
      %3576 = vmatprep.subr.mxu0 0.0
      %3577 = vmatpush2.msra.mxu0 0.0
      %3578 = vmatprep.subr.mxu0 0.0
      %3579 = vmatpush2.msra.mxu0 0.0
      %3580 = vmatprep.subr.mxu0 0.0
      %3581 = vmatpush2.msra.mxu0 0.0
      %3582 = vmatprep.subr.mxu0 0.0
      %3583 = vmatpush2.msra.mxu0 0.0
      %3584 = vmatprep.mubr.f32.mxu0 0.0
      %3585 = vmatmul.mubr.f32.gmra.mxu0 %v3494
      %v3586 = vpop.f32.mrf.mxu0
      %v3587 = vadd.f32 0.0, %v3586
      %v3588 = vpop.f32.mrf.mxu0
      %3589 = vmatprep.mubr.f32.mxu0 0.0
      %3590 = vmatmul.mubr.f32.gmra.mxu0 %v3497
      %v3591 = vpop.f32.mrf.mxu0
      %v3592 = vadd.f32 0.0, %v3591
      %v3593 = vpop.f32.mrf.mxu0
      %3594 = vmatprep.mubr.f32.mxu0 0.0
      %3595 = vmatmul.mubr.f32.gmra.mxu0 %v3500
      %v3596 = vpop.f32.mrf.mxu0
      %v3597 = vadd.f32 0.0, %v3596
      %v3598 = vpop.f32.mrf.mxu0
      %3599 = vmatprep.mubr.f32.mxu0 0.0
      %3600 = vmatmul.mubr.f32.gmra.mxu0 %v3503
      %v3601 = vpop.f32.mrf.mxu0
      %v3602 = vadd.f32 0.0, %v3601
      %v3603 = vpop.f32.mrf.mxu0
      %3604 = vmatprep.mubr.f32.mxu0 0.0
      %3605 = vmatmul.mubr.f32.gmra.mxu0 %v3506
      %v3606 = vpop.f32.mrf.mxu0
      %v3607 = vadd.f32 0.0, %v3606
      %v3608 = vpop.f32.mrf.mxu0
      %3609 = vmatprep.mubr.f32.mxu0 0.0
      %3610 = vmatmul.mubr.f32.gmra.mxu0 %v3509
      %v3611 = vpop.f32.mrf.mxu0
      %v3612 = vadd.f32 0.0, %v3611
      %v3613 = vpop.f32.mrf.mxu0
      %3614 = vmatprep.mubr.f32.mxu0 0.0
      %3615 = vmatmul.mubr.f32.gmra.mxu0 %v3512
      %v3616 = vpop.f32.mrf.mxu0
      %v3617 = vadd.f32 0.0, %v3616
      %v3618 = vpop.f32.mrf.mxu0
      %3619 = vmatprep.mubr.f32.mxu0 0.0
      %3620 = vmatmul.mubr.f32.gmra.mxu0 %v3515
      %v3621 = vpop.f32.mrf.mxu0
      %v3622 = vadd.f32 0.0, %v3621
      %v3623 = vpop.f32.mrf.mxu0
      %3624 = vdwg.mxu0
      %v3625 = vadd.f32 %v3474, %v3587
      %v3626 = vadd.f32 %v3475, %v3592
      %v3627 = vadd.f32 %v3476, %v3597
      %v3628 = vadd.f32 %v3477, %v3602
      %v3629 = vadd.f32 %v3478, %v3607
      %v3630 = vadd.f32 %v3479, %v3612
      %v3631 = vadd.f32 %v3480, %v3617
      %v3632 = vadd.f32 %v3481, %v3622
      %v3633 = vld [vmem:[%s3482 + $0x1] sm:$0xff]
      %v3634 = vld [vmem:[%s3482 + $0x11] sm:$0xff]
      %v3635 = vld [vmem:[%s3482 + $0x21] sm:$0xff]
      %v3636 = vld [vmem:[%s3482 + $0x31] sm:$0xff]
      %v3637 = vld [vmem:[%s3482 + $0x41] sm:$0xff]
      %v3638 = vld [vmem:[%s3482 + $0x51] sm:$0xff]
      %v3639 = vld [vmem:[%s3482 + $0x61] sm:$0xff]
      %v3640 = vld [vmem:[%s3482 + $0x71] sm:$0xff]
      %s3641 = scalar_lea.vmem %s3, 88
      %v3642 = vld [vmem:[%s3641] sm:$0xf]
      %v3644 = vsel %vm362, %v3633, 0
      %v3647 = vsel %vm362, %v3634, 0
      %v3650 = vsel %vm362, %v3635, 0
      %v3653 = vsel %vm362, %v3636, 0
      %v3656 = vsel %vm362, %v3637, 0
      %v3659 = vsel %vm362, %v3638, 0
      %v3662 = vsel %vm362, %v3639, 0
      %v3665 = vsel %vm362, %v3640, 0
      %v3668 = vsel %vm387, %v3642, 0
      %3670 = vmatprep.subr.mxu0 0.0
      %3671 = vmatpush1.msra.mxu0 0.0
      %3672 = vmatprep.subr.mxu0 0.0
      %3673 = vmatpush1.msra.mxu0 0.0
      %3674 = vmatprep.subr.mxu0 0.0
      %3675 = vmatpush1.msra.mxu0 0.0
      %3676 = vmatprep.subr.mxu0 0.0
      %3677 = vmatpush1.msra.mxu0 0.0
      %3678 = vmatprep.subr.mxu0 0.0
      %3679 = vmatpush1.msra.mxu0 0.0
      %3680 = vmatprep.subr.mxu0 0.0
      %3681 = vmatpush1.msra.mxu0 0.0
      %3682 = vmatprep.subr.mxu0 0.0
      %3683 = vmatpush1.msra.mxu0 0.0
      %3684 = vmatprep.subr.mxu0 0.0
      %3685 = vmatpush1.msra.mxu0 0.0
      %3686 = vmatprep.subr.mxu0 0.0
      %3687 = vmatpush1.msra.mxu0 0.0
      %3688 = vmatprep.subr.mxu0 0.0
      %3689 = vmatpush1.msra.mxu0 0.0
      %3690 = vmatprep.subr.mxu0 0.0
      %3691 = vmatpush1.msra.mxu0 0.0
      %3692 = vmatprep.subr.mxu0 0.0
      %3693 = vmatpush1.msra.mxu0 0.0
      %3694 = vmatprep.subr.mxu0 0.0
      %3695 = vmatpush1.msra.mxu0 0.0
      %3696 = vmatprep.subr.mxu0 0.0
      %3697 = vmatpush1.msra.mxu0 0.0
      %3698 = vmatprep.subr.mxu0 0.0
      %3699 = vmatpush1.msra.mxu0 0.0
      %3700 = vmatprep.subr.mxu0 0.0
      %3701 = vmatpush1.msra.mxu0 %v3668
      %3702 = vmatprep.subr.mxu0 0.0
      %3703 = vmatpush2.msra.mxu0 0.0
      %3704 = vmatprep.subr.mxu0 0.0
      %3705 = vmatpush2.msra.mxu0 0.0
      %3706 = vmatprep.subr.mxu0 0.0
      %3707 = vmatpush2.msra.mxu0 0.0
      %3708 = vmatprep.subr.mxu0 0.0
      %3709 = vmatpush2.msra.mxu0 0.0
      %3710 = vmatprep.subr.mxu0 0.0
      %3711 = vmatpush2.msra.mxu0 0.0
      %3712 = vmatprep.subr.mxu0 0.0
      %3713 = vmatpush2.msra.mxu0 0.0
      %3714 = vmatprep.subr.mxu0 0.0
      %3715 = vmatpush2.msra.mxu0 0.0
      %3716 = vmatprep.subr.mxu0 0.0
      %3717 = vmatpush2.msra.mxu0 0.0
      %3718 = vmatprep.subr.mxu0 0.0
      %3719 = vmatpush2.msra.mxu0 0.0
      %3720 = vmatprep.subr.mxu0 0.0
      %3721 = vmatpush2.msra.mxu0 0.0
      %3722 = vmatprep.subr.mxu0 0.0
      %3723 = vmatpush2.msra.mxu0 0.0
      %3724 = vmatprep.subr.mxu0 0.0
      %3725 = vmatpush2.msra.mxu0 0.0
      %3726 = vmatprep.subr.mxu0 0.0
      %3727 = vmatpush2.msra.mxu0 0.0
      %3728 = vmatprep.subr.mxu0 0.0
      %3729 = vmatpush2.msra.mxu0 0.0
      %3730 = vmatprep.subr.mxu0 0.0
      %3731 = vmatpush2.msra.mxu0 0.0
      %3732 = vmatprep.subr.mxu0 0.0
      %3733 = vmatpush2.msra.mxu0 0.0
      %3734 = vmatprep.mubr.f32.mxu0 0.0
      %3735 = vmatmul.mubr.f32.gmra.mxu0 %v3644
      %v3736 = vpop.f32.mrf.mxu0
      %v3737 = vadd.f32 0.0, %v3736
      %v3738 = vpop.f32.mrf.mxu0
      %3739 = vmatprep.mubr.f32.mxu0 0.0
      %3740 = vmatmul.mubr.f32.gmra.mxu0 %v3647
      %v3741 = vpop.f32.mrf.mxu0
      %v3742 = vadd.f32 0.0, %v3741
      %v3743 = vpop.f32.mrf.mxu0
      %3744 = vmatprep.mubr.f32.mxu0 0.0
      %3745 = vmatmul.mubr.f32.gmra.mxu0 %v3650
      %v3746 = vpop.f32.mrf.mxu0
      %v3747 = vadd.f32 0.0, %v3746
      %v3748 = vpop.f32.mrf.mxu0
      %3749 = vmatprep.mubr.f32.mxu0 0.0
      %3750 = vmatmul.mubr.f32.gmra.mxu0 %v3653
      %v3751 = vpop.f32.mrf.mxu0
      %v3752 = vadd.f32 0.0, %v3751
      %v3753 = vpop.f32.mrf.mxu0
      %3754 = vmatprep.mubr.f32.mxu0 0.0
      %3755 = vmatmul.mubr.f32.gmra.mxu0 %v3656
      %v3756 = vpop.f32.mrf.mxu0
      %v3757 = vadd.f32 0.0, %v3756
      %v3758 = vpop.f32.mrf.mxu0
      %3759 = vmatprep.mubr.f32.mxu0 0.0
      %3760 = vmatmul.mubr.f32.gmra.mxu0 %v3659
      %v3761 = vpop.f32.mrf.mxu0
      %v3762 = vadd.f32 0.0, %v3761
      %v3763 = vpop.f32.mrf.mxu0
      %3764 = vmatprep.mubr.f32.mxu0 0.0
      %3765 = vmatmul.mubr.f32.gmra.mxu0 %v3662
      %v3766 = vpop.f32.mrf.mxu0
      %v3767 = vadd.f32 0.0, %v3766
      %v3768 = vpop.f32.mrf.mxu0
      %3769 = vmatprep.mubr.f32.mxu0 0.0
      %3770 = vmatmul.mubr.f32.gmra.mxu0 %v3665
      %v3771 = vpop.f32.mrf.mxu0
      %v3772 = vadd.f32 0.0, %v3771
      %v3773 = vpop.f32.mrf.mxu0
      %3774 = vdwg.mxu0
      %v3775 = vadd.f32 %v3625, %v3737
      %v3776 = vadd.f32 %v3626, %v3742
      %v3777 = vadd.f32 %v3627, %v3747
      %v3778 = vadd.f32 %v3628, %v3752
      %v3779 = vadd.f32 %v3629, %v3757
      %v3780 = vadd.f32 %v3630, %v3762
      %v3781 = vadd.f32 %v3631, %v3767
      %v3782 = vadd.f32 %v3632, %v3772
      %v3783 = vld [vmem:[%s3482 + $0x2] sm:$0xff]
      %v3784 = vld [vmem:[%s3482 + $0x12] sm:$0xff]
      %v3785 = vld [vmem:[%s3482 + $0x22] sm:$0xff]
      %v3786 = vld [vmem:[%s3482 + $0x32] sm:$0xff]
      %v3787 = vld [vmem:[%s3482 + $0x42] sm:$0xff]
      %v3788 = vld [vmem:[%s3482 + $0x52] sm:$0xff]
      %v3789 = vld [vmem:[%s3482 + $0x62] sm:$0xff]
      %v3790 = vld [vmem:[%s3482 + $0x72] sm:$0xff]
      %s3791 = scalar_lea.vmem %s3, 92
      %v3792 = vld [vmem:[%s3791] sm:$0xf]
      %v3794 = vsel %vm362, %v3783, 0
      %v3797 = vsel %vm362, %v3784, 0
      %v3800 = vsel %vm362, %v3785, 0
      %v3803 = vsel %vm362, %v3786, 0
      %v3806 = vsel %vm362, %v3787, 0
      %v3809 = vsel %vm362, %v3788, 0
      %v3812 = vsel %vm362, %v3789, 0
      %v3815 = vsel %vm362, %v3790, 0
      %v3818 = vsel %vm387, %v3792, 0
      %3820 = vmatprep.subr.mxu0 0.0
      %3821 = vmatpush1.msra.mxu0 0.0
      %3822 = vmatprep.subr.mxu0 0.0
      %3823 = vmatpush1.msra.mxu0 0.0
      %3824 = vmatprep.subr.mxu0 0.0
      %3825 = vmatpush1.msra.mxu0 0.0
      %3826 = vmatprep.subr.mxu0 0.0
      %3827 = vmatpush1.msra.mxu0 0.0
      %3828 = vmatprep.subr.mxu0 0.0
      %3829 = vmatpush1.msra.mxu0 0.0
      %3830 = vmatprep.subr.mxu0 0.0
      %3831 = vmatpush1.msra.mxu0 0.0
      %3832 = vmatprep.subr.mxu0 0.0
      %3833 = vmatpush1.msra.mxu0 0.0
      %3834 = vmatprep.subr.mxu0 0.0
      %3835 = vmatpush1.msra.mxu0 0.0
      %3836 = vmatprep.subr.mxu0 0.0
      %3837 = vmatpush1.msra.mxu0 0.0
      %3838 = vmatprep.subr.mxu0 0.0
      %3839 = vmatpush1.msra.mxu0 0.0
      %3840 = vmatprep.subr.mxu0 0.0
      %3841 = vmatpush1.msra.mxu0 0.0
      %3842 = vmatprep.subr.mxu0 0.0
      %3843 = vmatpush1.msra.mxu0 0.0
      %3844 = vmatprep.subr.mxu0 0.0
      %3845 = vmatpush1.msra.mxu0 0.0
      %3846 = vmatprep.subr.mxu0 0.0
      %3847 = vmatpush1.msra.mxu0 0.0
      %3848 = vmatprep.subr.mxu0 0.0
      %3849 = vmatpush1.msra.mxu0 0.0
      %3850 = vmatprep.subr.mxu0 0.0
      %3851 = vmatpush1.msra.mxu0 %v3818
      %3852 = vmatprep.subr.mxu0 0.0
      %3853 = vmatpush2.msra.mxu0 0.0
      %3854 = vmatprep.subr.mxu0 0.0
      %3855 = vmatpush2.msra.mxu0 0.0
      %3856 = vmatprep.subr.mxu0 0.0
      %3857 = vmatpush2.msra.mxu0 0.0
      %3858 = vmatprep.subr.mxu0 0.0
      %3859 = vmatpush2.msra.mxu0 0.0
      %3860 = vmatprep.subr.mxu0 0.0
      %3861 = vmatpush2.msra.mxu0 0.0
      %3862 = vmatprep.subr.mxu0 0.0
      %3863 = vmatpush2.msra.mxu0 0.0
      %3864 = vmatprep.subr.mxu0 0.0
      %3865 = vmatpush2.msra.mxu0 0.0
      %3866 = vmatprep.subr.mxu0 0.0
      %3867 = vmatpush2.msra.mxu0 0.0
      %3868 = vmatprep.subr.mxu0 0.0
      %3869 = vmatpush2.msra.mxu0 0.0
      %3870 = vmatprep.subr.mxu0 0.0
      %3871 = vmatpush2.msra.mxu0 0.0
      %3872 = vmatprep.subr.mxu0 0.0
      %3873 = vmatpush2.msra.mxu0 0.0
      %3874 = vmatprep.subr.mxu0 0.0
      %3875 = vmatpush2.msra.mxu0 0.0
      %3876 = vmatprep.subr.mxu0 0.0
      %3877 = vmatpush2.msra.mxu0 0.0
      %3878 = vmatprep.subr.mxu0 0.0
      %3879 = vmatpush2.msra.mxu0 0.0
      %3880 = vmatprep.subr.mxu0 0.0
      %3881 = vmatpush2.msra.mxu0 0.0
      %3882 = vmatprep.subr.mxu0 0.0
      %3883 = vmatpush2.msra.mxu0 0.0
      %3884 = vmatprep.mubr.f32.mxu0 0.0
      %3885 = vmatmul.mubr.f32.gmra.mxu0 %v3794
      %v3886 = vpop.f32.mrf.mxu0
      %v3887 = vadd.f32 0.0, %v3886
      %v3888 = vpop.f32.mrf.mxu0
      %3889 = vmatprep.mubr.f32.mxu0 0.0
      %3890 = vmatmul.mubr.f32.gmra.mxu0 %v3797
      %v3891 = vpop.f32.mrf.mxu0
      %v3892 = vadd.f32 0.0, %v3891
      %v3893 = vpop.f32.mrf.mxu0
      %3894 = vmatprep.mubr.f32.mxu0 0.0
      %3895 = vmatmul.mubr.f32.gmra.mxu0 %v3800
      %v3896 = vpop.f32.mrf.mxu0
      %v3897 = vadd.f32 0.0, %v3896
      %v3898 = vpop.f32.mrf.mxu0
      %3899 = vmatprep.mubr.f32.mxu0 0.0
      %3900 = vmatmul.mubr.f32.gmra.mxu0 %v3803
      %v3901 = vpop.f32.mrf.mxu0
      %v3902 = vadd.f32 0.0, %v3901
      %v3903 = vpop.f32.mrf.mxu0
      %3904 = vmatprep.mubr.f32.mxu0 0.0
      %3905 = vmatmul.mubr.f32.gmra.mxu0 %v3806
      %v3906 = vpop.f32.mrf.mxu0
      %v3907 = vadd.f32 0.0, %v3906
      %v3908 = vpop.f32.mrf.mxu0
      %3909 = vmatprep.mubr.f32.mxu0 0.0
      %3910 = vmatmul.mubr.f32.gmra.mxu0 %v3809
      %v3911 = vpop.f32.mrf.mxu0
      %v3912 = vadd.f32 0.0, %v3911
      %v3913 = vpop.f32.mrf.mxu0
      %3914 = vmatprep.mubr.f32.mxu0 0.0
      %3915 = vmatmul.mubr.f32.gmra.mxu0 %v3812
      %v3916 = vpop.f32.mrf.mxu0
      %v3917 = vadd.f32 0.0, %v3916
      %v3918 = vpop.f32.mrf.mxu0
      %3919 = vmatprep.mubr.f32.mxu0 0.0
      %3920 = vmatmul.mubr.f32.gmra.mxu0 %v3815
      %v3921 = vpop.f32.mrf.mxu0
      %v3922 = vadd.f32 0.0, %v3921
      %v3923 = vpop.f32.mrf.mxu0
      %3924 = vdwg.mxu0
      %v3925 = vadd.f32 %v3775, %v3887
      %v3926 = vadd.f32 %v3776, %v3892
      %v3927 = vadd.f32 %v3777, %v3897
      %v3928 = vadd.f32 %v3778, %v3902
      %v3929 = vadd.f32 %v3779, %v3907
      %v3930 = vadd.f32 %v3780, %v3912
      %v3931 = vadd.f32 %v3781, %v3917
      %v3932 = vadd.f32 %v3782, %v3922
      %s3933 = scalar_lea.vmem %s332, 32
      %v3934 = vld [vmem:[%s3933] sm:$0xff]
      %v3935 = vld [vmem:[%s3933 + $0x10] sm:$0xff]
      %v3936 = vld [vmem:[%s3933 + $0x20] sm:$0xff]
      %v3937 = vld [vmem:[%s3933 + $0x30] sm:$0xff]
      %v3938 = vld [vmem:[%s3933 + $0x40] sm:$0xff]
      %v3939 = vld [vmem:[%s3933 + $0x50] sm:$0xff]
      %v3940 = vld [vmem:[%s3933 + $0x60] sm:$0xff]
      %v3941 = vld [vmem:[%s3933 + $0x70] sm:$0xff]
      %s3942 = scalar_lea.vmem %s3, 96
      %v3943 = vld [vmem:[%s3942] sm:$0xf]
      %v3945 = vsel %vm362, %v3934, 0
      %v3948 = vsel %vm362, %v3935, 0
      %v3951 = vsel %vm362, %v3936, 0
      %v3954 = vsel %vm362, %v3937, 0
      %v3957 = vsel %vm362, %v3938, 0
      %v3960 = vsel %vm362, %v3939, 0
      %v3963 = vsel %vm362, %v3940, 0
      %v3966 = vsel %vm362, %v3941, 0
      %v3969 = vsel %vm387, %v3943, 0
      %3971 = vmatprep.subr.mxu0 0.0
      %3972 = vmatpush1.msra.mxu0 0.0
      %3973 = vmatprep.subr.mxu0 0.0
      %3974 = vmatpush1.msra.mxu0 0.0
      %3975 = vmatprep.subr.mxu0 0.0
      %3976 = vmatpush1.msra.mxu0 0.0
      %3977 = vmatprep.subr.mxu0 0.0
      %3978 = vmatpush1.msra.mxu0 0.0
      %3979 = vmatprep.subr.mxu0 0.0
      %3980 = vmatpush1.msra.mxu0 0.0
      %3981 = vmatprep.subr.mxu0 0.0
      %3982 = vmatpush1.msra.mxu0 0.0
      %3983 = vmatprep.subr.mxu0 0.0
      %3984 = vmatpush1.msra.mxu0 0.0
      %3985 = vmatprep.subr.mxu0 0.0
      %3986 = vmatpush1.msra.mxu0 0.0
      %3987 = vmatprep.subr.mxu0 0.0
      %3988 = vmatpush1.msra.mxu0 0.0
      %3989 = vmatprep.subr.mxu0 0.0
      %3990 = vmatpush1.msra.mxu0 0.0
      %3991 = vmatprep.subr.mxu0 0.0
      %3992 = vmatpush1.msra.mxu0 0.0
      %3993 = vmatprep.subr.mxu0 0.0
      %3994 = vmatpush1.msra.mxu0 0.0
      %3995 = vmatprep.subr.mxu0 0.0
      %3996 = vmatpush1.msra.mxu0 0.0
      %3997 = vmatprep.subr.mxu0 0.0
      %3998 = vmatpush1.msra.mxu0 0.0
      %3999 = vmatprep.subr.mxu0 0.0
      %4000 = vmatpush1.msra.mxu0 0.0
      %4001 = vmatprep.subr.mxu0 0.0
      %4002 = vmatpush1.msra.mxu0 %v3969
      %4003 = vmatprep.subr.mxu0 0.0
      %4004 = vmatpush2.msra.mxu0 0.0
      %4005 = vmatprep.subr.mxu0 0.0
      %4006 = vmatpush2.msra.mxu0 0.0
      %4007 = vmatprep.subr.mxu0 0.0
      %4008 = vmatpush2.msra.mxu0 0.0
      %4009 = vmatprep.subr.mxu0 0.0
      %4010 = vmatpush2.msra.mxu0 0.0
      %4011 = vmatprep.subr.mxu0 0.0
      %4012 = vmatpush2.msra.mxu0 0.0
      %4013 = vmatprep.subr.mxu0 0.0
      %4014 = vmatpush2.msra.mxu0 0.0
      %4015 = vmatprep.subr.mxu0 0.0
      %4016 = vmatpush2.msra.mxu0 0.0
      %4017 = vmatprep.subr.mxu0 0.0
      %4018 = vmatpush2.msra.mxu0 0.0
      %4019 = vmatprep.subr.mxu0 0.0
      %4020 = vmatpush2.msra.mxu0 0.0
      %4021 = vmatprep.subr.mxu0 0.0
      %4022 = vmatpush2.msra.mxu0 0.0
      %4023 = vmatprep.subr.mxu0 0.0
      %4024 = vmatpush2.msra.mxu0 0.0
      %4025 = vmatprep.subr.mxu0 0.0
      %4026 = vmatpush2.msra.mxu0 0.0
      %4027 = vmatprep.subr.mxu0 0.0
      %4028 = vmatpush2.msra.mxu0 0.0
      %4029 = vmatprep.subr.mxu0 0.0
      %4030 = vmatpush2.msra.mxu0 0.0
      %4031 = vmatprep.subr.mxu0 0.0
      %4032 = vmatpush2.msra.mxu0 0.0
      %4033 = vmatprep.subr.mxu0 0.0
      %4034 = vmatpush2.msra.mxu0 0.0
      %4035 = vmatprep.mubr.f32.mxu0 0.0
      %4036 = vmatmul.mubr.f32.gmra.mxu0 %v3945
      %v4037 = vpop.f32.mrf.mxu0
      %v4038 = vadd.f32 0.0, %v4037
      %v4039 = vpop.f32.mrf.mxu0
      %4040 = vmatprep.mubr.f32.mxu0 0.0
      %4041 = vmatmul.mubr.f32.gmra.mxu0 %v3948
      %v4042 = vpop.f32.mrf.mxu0
      %v4043 = vadd.f32 0.0, %v4042
      %v4044 = vpop.f32.mrf.mxu0
      %4045 = vmatprep.mubr.f32.mxu0 0.0
      %4046 = vmatmul.mubr.f32.gmra.mxu0 %v3951
      %v4047 = vpop.f32.mrf.mxu0
      %v4048 = vadd.f32 0.0, %v4047
      %v4049 = vpop.f32.mrf.mxu0
      %4050 = vmatprep.mubr.f32.mxu0 0.0
      %4051 = vmatmul.mubr.f32.gmra.mxu0 %v3954
      %v4052 = vpop.f32.mrf.mxu0
      %v4053 = vadd.f32 0.0, %v4052
      %v4054 = vpop.f32.mrf.mxu0
      %4055 = vmatprep.mubr.f32.mxu0 0.0
      %4056 = vmatmul.mubr.f32.gmra.mxu0 %v3957
      %v4057 = vpop.f32.mrf.mxu0
      %v4058 = vadd.f32 0.0, %v4057
      %v4059 = vpop.f32.mrf.mxu0
      %4060 = vmatprep.mubr.f32.mxu0 0.0
      %4061 = vmatmul.mubr.f32.gmra.mxu0 %v3960
      %v4062 = vpop.f32.mrf.mxu0
      %v4063 = vadd.f32 0.0, %v4062
      %v4064 = vpop.f32.mrf.mxu0
      %4065 = vmatprep.mubr.f32.mxu0 0.0
      %4066 = vmatmul.mubr.f32.gmra.mxu0 %v3963
      %v4067 = vpop.f32.mrf.mxu0
      %v4068 = vadd.f32 0.0, %v4067
      %v4069 = vpop.f32.mrf.mxu0
      %4070 = vmatprep.mubr.f32.mxu0 0.0
      %4071 = vmatmul.mubr.f32.gmra.mxu0 %v3966
      %v4072 = vpop.f32.mrf.mxu0
      %v4073 = vadd.f32 0.0, %v4072
      %v4074 = vpop.f32.mrf.mxu0
      %4075 = vdwg.mxu0
      %v4076 = vadd.f32 %v3925, %v4038
      %v4077 = vadd.f32 %v3926, %v4043
      %v4078 = vadd.f32 %v3927, %v4048
      %v4079 = vadd.f32 %v3928, %v4053
      %v4080 = vadd.f32 %v3929, %v4058
      %v4081 = vadd.f32 %v3930, %v4063
      %v4082 = vadd.f32 %v3931, %v4068
      %v4083 = vadd.f32 %v3932, %v4073
      %v4084 = vld [vmem:[%s3933 + $0x1] sm:$0xff]
      %v4085 = vld [vmem:[%s3933 + $0x11] sm:$0xff]
      %v4086 = vld [vmem:[%s3933 + $0x21] sm:$0xff]
      %v4087 = vld [vmem:[%s3933 + $0x31] sm:$0xff]
      %v4088 = vld [vmem:[%s3933 + $0x41] sm:$0xff]
      %v4089 = vld [vmem:[%s3933 + $0x51] sm:$0xff]
      %v4090 = vld [vmem:[%s3933 + $0x61] sm:$0xff]
      %v4091 = vld [vmem:[%s3933 + $0x71] sm:$0xff]
      %s4092 = scalar_lea.vmem %s3, 100
      %v4093 = vld [vmem:[%s4092] sm:$0xf]
      %v4095 = vsel %vm362, %v4084, 0
      %v4098 = vsel %vm362, %v4085, 0
      %v4101 = vsel %vm362, %v4086, 0
      %v4104 = vsel %vm362, %v4087, 0
      %v4107 = vsel %vm362, %v4088, 0
      %v4110 = vsel %vm362, %v4089, 0
      %v4113 = vsel %vm362, %v4090, 0
      %v4116 = vsel %vm362, %v4091, 0
      %v4119 = vsel %vm387, %v4093, 0
      %4121 = vmatprep.subr.mxu0 0.0
      %4122 = vmatpush1.msra.mxu0 0.0
      %4123 = vmatprep.subr.mxu0 0.0
      %4124 = vmatpush1.msra.mxu0 0.0
      %4125 = vmatprep.subr.mxu0 0.0
      %4126 = vmatpush1.msra.mxu0 0.0
      %4127 = vmatprep.subr.mxu0 0.0
      %4128 = vmatpush1.msra.mxu0 0.0
      %4129 = vmatprep.subr.mxu0 0.0
      %4130 = vmatpush1.msra.mxu0 0.0
      %4131 = vmatprep.subr.mxu0 0.0
      %4132 = vmatpush1.msra.mxu0 0.0
      %4133 = vmatprep.subr.mxu0 0.0
      %4134 = vmatpush1.msra.mxu0 0.0
      %4135 = vmatprep.subr.mxu0 0.0
      %4136 = vmatpush1.msra.mxu0 0.0
      %4137 = vmatprep.subr.mxu0 0.0
      %4138 = vmatpush1.msra.mxu0 0.0
      %4139 = vmatprep.subr.mxu0 0.0
      %4140 = vmatpush1.msra.mxu0 0.0
      %4141 = vmatprep.subr.mxu0 0.0
      %4142 = vmatpush1.msra.mxu0 0.0
      %4143 = vmatprep.subr.mxu0 0.0
      %4144 = vmatpush1.msra.mxu0 0.0
      %4145 = vmatprep.subr.mxu0 0.0
      %4146 = vmatpush1.msra.mxu0 0.0
      %4147 = vmatprep.subr.mxu0 0.0
      %4148 = vmatpush1.msra.mxu0 0.0
      %4149 = vmatprep.subr.mxu0 0.0
      %4150 = vmatpush1.msra.mxu0 0.0
      %4151 = vmatprep.subr.mxu0 0.0
      %4152 = vmatpush1.msra.mxu0 %v4119
      %4153 = vmatprep.subr.mxu0 0.0
      %4154 = vmatpush2.msra.mxu0 0.0
      %4155 = vmatprep.subr.mxu0 0.0
      %4156 = vmatpush2.msra.mxu0 0.0
      %4157 = vmatprep.subr.mxu0 0.0
      %4158 = vmatpush2.msra.mxu0 0.0
      %4159 = vmatprep.subr.mxu0 0.0
      %4160 = vmatpush2.msra.mxu0 0.0
      %4161 = vmatprep.subr.mxu0 0.0
      %4162 = vmatpush2.msra.mxu0 0.0
      %4163 = vmatprep.subr.mxu0 0.0
      %4164 = vmatpush2.msra.mxu0 0.0
      %4165 = vmatprep.subr.mxu0 0.0
      %4166 = vmatpush2.msra.mxu0 0.0
      %4167 = vmatprep.subr.mxu0 0.0
      %4168 = vmatpush2.msra.mxu0 0.0
      %4169 = vmatprep.subr.mxu0 0.0
      %4170 = vmatpush2.msra.mxu0 0.0
      %4171 = vmatprep.subr.mxu0 0.0
      %4172 = vmatpush2.msra.mxu0 0.0
      %4173 = vmatprep.subr.mxu0 0.0
      %4174 = vmatpush2.msra.mxu0 0.0
      %4175 = vmatprep.subr.mxu0 0.0
      %4176 = vmatpush2.msra.mxu0 0.0
      %4177 = vmatprep.subr.mxu0 0.0
      %4178 = vmatpush2.msra.mxu0 0.0
      %4179 = vmatprep.subr.mxu0 0.0
      %4180 = vmatpush2.msra.mxu0 0.0
      %4181 = vmatprep.subr.mxu0 0.0
      %4182 = vmatpush2.msra.mxu0 0.0
      %4183 = vmatprep.subr.mxu0 0.0
      %4184 = vmatpush2.msra.mxu0 0.0
      %4185 = vmatprep.mubr.f32.mxu0 0.0
      %4186 = vmatmul.mubr.f32.gmra.mxu0 %v4095
      %v4187 = vpop.f32.mrf.mxu0
      %v4188 = vadd.f32 0.0, %v4187
      %v4189 = vpop.f32.mrf.mxu0
      %4190 = vmatprep.mubr.f32.mxu0 0.0
      %4191 = vmatmul.mubr.f32.gmra.mxu0 %v4098
      %v4192 = vpop.f32.mrf.mxu0
      %v4193 = vadd.f32 0.0, %v4192
      %v4194 = vpop.f32.mrf.mxu0
      %4195 = vmatprep.mubr.f32.mxu0 0.0
      %4196 = vmatmul.mubr.f32.gmra.mxu0 %v4101
      %v4197 = vpop.f32.mrf.mxu0
      %v4198 = vadd.f32 0.0, %v4197
      %v4199 = vpop.f32.mrf.mxu0
      %4200 = vmatprep.mubr.f32.mxu0 0.0
      %4201 = vmatmul.mubr.f32.gmra.mxu0 %v4104
      %v4202 = vpop.f32.mrf.mxu0
      %v4203 = vadd.f32 0.0, %v4202
      %v4204 = vpop.f32.mrf.mxu0
      %4205 = vmatprep.mubr.f32.mxu0 0.0
      %4206 = vmatmul.mubr.f32.gmra.mxu0 %v4107
      %v4207 = vpop.f32.mrf.mxu0
      %v4208 = vadd.f32 0.0, %v4207
      %v4209 = vpop.f32.mrf.mxu0
      %4210 = vmatprep.mubr.f32.mxu0 0.0
      %4211 = vmatmul.mubr.f32.gmra.mxu0 %v4110
      %v4212 = vpop.f32.mrf.mxu0
      %v4213 = vadd.f32 0.0, %v4212
      %v4214 = vpop.f32.mrf.mxu0
      %4215 = vmatprep.mubr.f32.mxu0 0.0
      %4216 = vmatmul.mubr.f32.gmra.mxu0 %v4113
      %v4217 = vpop.f32.mrf.mxu0
      %v4218 = vadd.f32 0.0, %v4217
      %v4219 = vpop.f32.mrf.mxu0
      %4220 = vmatprep.mubr.f32.mxu0 0.0
      %4221 = vmatmul.mubr.f32.gmra.mxu0 %v4116
      %v4222 = vpop.f32.mrf.mxu0
      %v4223 = vadd.f32 0.0, %v4222
      %v4224 = vpop.f32.mrf.mxu0
      %4225 = vdwg.mxu0
      %v4226 = vadd.f32 %v4076, %v4188
      %v4227 = vadd.f32 %v4077, %v4193
      %v4228 = vadd.f32 %v4078, %v4198
      %v4229 = vadd.f32 %v4079, %v4203
      %v4230 = vadd.f32 %v4080, %v4208
      %v4231 = vadd.f32 %v4081, %v4213
      %v4232 = vadd.f32 %v4082, %v4218
      %v4233 = vadd.f32 %v4083, %v4223
      %v4234 = vld [vmem:[%s3933 + $0x2] sm:$0xff]
      %v4235 = vld [vmem:[%s3933 + $0x12] sm:$0xff]
      %v4236 = vld [vmem:[%s3933 + $0x22] sm:$0xff]
      %v4237 = vld [vmem:[%s3933 + $0x32] sm:$0xff]
      %v4238 = vld [vmem:[%s3933 + $0x42] sm:$0xff]
      %v4239 = vld [vmem:[%s3933 + $0x52] sm:$0xff]
      %v4240 = vld [vmem:[%s3933 + $0x62] sm:$0xff]
      %v4241 = vld [vmem:[%s3933 + $0x72] sm:$0xff]
      %s4242 = scalar_lea.vmem %s3, 104
      %v4243 = vld [vmem:[%s4242] sm:$0xf]
      %v4245 = vsel %vm362, %v4234, 0
      %v4248 = vsel %vm362, %v4235, 0
      %v4251 = vsel %vm362, %v4236, 0
      %v4254 = vsel %vm362, %v4237, 0
      %v4257 = vsel %vm362, %v4238, 0
      %v4260 = vsel %vm362, %v4239, 0
      %v4263 = vsel %vm362, %v4240, 0
      %v4266 = vsel %vm362, %v4241, 0
      %v4269 = vsel %vm387, %v4243, 0
      %4271 = vmatprep.subr.mxu0 0.0
      %4272 = vmatpush1.msra.mxu0 0.0
      %4273 = vmatprep.subr.mxu0 0.0
      %4274 = vmatpush1.msra.mxu0 0.0
      %4275 = vmatprep.subr.mxu0 0.0
      %4276 = vmatpush1.msra.mxu0 0.0
      %4277 = vmatprep.subr.mxu0 0.0
      %4278 = vmatpush1.msra.mxu0 0.0
      %4279 = vmatprep.subr.mxu0 0.0
      %4280 = vmatpush1.msra.mxu0 0.0
      %4281 = vmatprep.subr.mxu0 0.0
      %4282 = vmatpush1.msra.mxu0 0.0
      %4283 = vmatprep.subr.mxu0 0.0
      %4284 = vmatpush1.msra.mxu0 0.0
      %4285 = vmatprep.subr.mxu0 0.0
      %4286 = vmatpush1.msra.mxu0 0.0
      %4287 = vmatprep.subr.mxu0 0.0
      %4288 = vmatpush1.msra.mxu0 0.0
      %4289 = vmatprep.subr.mxu0 0.0
      %4290 = vmatpush1.msra.mxu0 0.0
      %4291 = vmatprep.subr.mxu0 0.0
      %4292 = vmatpush1.msra.mxu0 0.0
      %4293 = vmatprep.subr.mxu0 0.0
      %4294 = vmatpush1.msra.mxu0 0.0
      %4295 = vmatprep.subr.mxu0 0.0
      %4296 = vmatpush1.msra.mxu0 0.0
      %4297 = vmatprep.subr.mxu0 0.0
      %4298 = vmatpush1.msra.mxu0 0.0
      %4299 = vmatprep.subr.mxu0 0.0
      %4300 = vmatpush1.msra.mxu0 0.0
      %4301 = vmatprep.subr.mxu0 0.0
      %4302 = vmatpush1.msra.mxu0 %v4269
      %4303 = vmatprep.subr.mxu0 0.0
      %4304 = vmatpush2.msra.mxu0 0.0
      %4305 = vmatprep.subr.mxu0 0.0
      %4306 = vmatpush2.msra.mxu0 0.0
      %4307 = vmatprep.subr.mxu0 0.0
      %4308 = vmatpush2.msra.mxu0 0.0
      %4309 = vmatprep.subr.mxu0 0.0
      %4310 = vmatpush2.msra.mxu0 0.0
      %4311 = vmatprep.subr.mxu0 0.0
      %4312 = vmatpush2.msra.mxu0 0.0
      %4313 = vmatprep.subr.mxu0 0.0
      %4314 = vmatpush2.msra.mxu0 0.0
      %4315 = vmatprep.subr.mxu0 0.0
      %4316 = vmatpush2.msra.mxu0 0.0
      %4317 = vmatprep.subr.mxu0 0.0
      %4318 = vmatpush2.msra.mxu0 0.0
      %4319 = vmatprep.subr.mxu0 0.0
      %4320 = vmatpush2.msra.mxu0 0.0
      %4321 = vmatprep.subr.mxu0 0.0
      %4322 = vmatpush2.msra.mxu0 0.0
      %4323 = vmatprep.subr.mxu0 0.0
      %4324 = vmatpush2.msra.mxu0 0.0
      %4325 = vmatprep.subr.mxu0 0.0
      %4326 = vmatpush2.msra.mxu0 0.0
      %4327 = vmatprep.subr.mxu0 0.0
      %4328 = vmatpush2.msra.mxu0 0.0
      %4329 = vmatprep.subr.mxu0 0.0
      %4330 = vmatpush2.msra.mxu0 0.0
      %4331 = vmatprep.subr.mxu0 0.0
      %4332 = vmatpush2.msra.mxu0 0.0
      %4333 = vmatprep.subr.mxu0 0.0
      %4334 = vmatpush2.msra.mxu0 0.0
      %4335 = vmatprep.mubr.f32.mxu0 0.0
      %4336 = vmatmul.mubr.f32.gmra.mxu0 %v4245
      %v4337 = vpop.f32.mrf.mxu0
      %v4338 = vadd.f32 0.0, %v4337
      %v4339 = vpop.f32.mrf.mxu0
      %4340 = vmatprep.mubr.f32.mxu0 0.0
      %4341 = vmatmul.mubr.f32.gmra.mxu0 %v4248
      %v4342 = vpop.f32.mrf.mxu0
      %v4343 = vadd.f32 0.0, %v4342
      %v4344 = vpop.f32.mrf.mxu0
      %4345 = vmatprep.mubr.f32.mxu0 0.0
      %4346 = vmatmul.mubr.f32.gmra.mxu0 %v4251
      %v4347 = vpop.f32.mrf.mxu0
      %v4348 = vadd.f32 0.0, %v4347
      %v4349 = vpop.f32.mrf.mxu0
      %4350 = vmatprep.mubr.f32.mxu0 0.0
      %4351 = vmatmul.mubr.f32.gmra.mxu0 %v4254
      %v4352 = vpop.f32.mrf.mxu0
      %v4353 = vadd.f32 0.0, %v4352
      %v4354 = vpop.f32.mrf.mxu0
      %4355 = vmatprep.mubr.f32.mxu0 0.0
      %4356 = vmatmul.mubr.f32.gmra.mxu0 %v4257
      %v4357 = vpop.f32.mrf.mxu0
      %v4358 = vadd.f32 0.0, %v4357
      %v4359 = vpop.f32.mrf.mxu0
      %4360 = vmatprep.mubr.f32.mxu0 0.0
      %4361 = vmatmul.mubr.f32.gmra.mxu0 %v4260
      %v4362 = vpop.f32.mrf.mxu0
      %v4363 = vadd.f32 0.0, %v4362
      %v4364 = vpop.f32.mrf.mxu0
      %4365 = vmatprep.mubr.f32.mxu0 0.0
      %4366 = vmatmul.mubr.f32.gmra.mxu0 %v4263
      %v4367 = vpop.f32.mrf.mxu0
      %v4368 = vadd.f32 0.0, %v4367
      %v4369 = vpop.f32.mrf.mxu0
      %4370 = vmatprep.mubr.f32.mxu0 0.0
      %4371 = vmatmul.mubr.f32.gmra.mxu0 %v4266
      %v4372 = vpop.f32.mrf.mxu0
      %v4373 = vadd.f32 0.0, %v4372
      %v4374 = vpop.f32.mrf.mxu0
      %4375 = vdwg.mxu0
      %v4376 = vadd.f32 %v4226, %v4338
      %v4377 = vadd.f32 %v4227, %v4343
      %v4378 = vadd.f32 %v4228, %v4348
      %v4379 = vadd.f32 %v4229, %v4353
      %v4380 = vadd.f32 %v4230, %v4358
      %v4381 = vadd.f32 %v4231, %v4363
      %v4382 = vadd.f32 %v4232, %v4368
      %v4383 = vadd.f32 %v4233, %v4373
      %v4384 = vld [vmem:[%s4] sm:$0x1]
      %v4386 = vlaneseq
      %v4387 = vshrl.u32 %v4386, 7
      %v4388 = vsub.s32 0, %v4387
      %v4389 = vrot.slane %v4384, %v4388
      %v4391 = vadd.f32 %v4376, %v4389
      %v4392 = vadd.f32 %v4377, %v4389
      %v4393 = vadd.f32 %v4378, %v4389
      %v4394 = vadd.f32 %v4379, %v4389
      %v4395 = vadd.f32 %v4380, %v4389
      %v4396 = vadd.f32 %v4381, %v4389
      %v4397 = vadd.f32 %v4382, %v4389
      %v4398 = vadd.f32 %v4383, %v4389
      %v4399 = vmax.f32 %v4391, 0.0
      %v4400 = vmax.f32 %v4392, 0.0
      %v4401 = vmax.f32 %v4393, 0.0
      %v4402 = vmax.f32 %v4394, 0.0
      %v4403 = vmax.f32 %v4395, 0.0
      %v4404 = vmax.f32 %v4396, 0.0
      %v4405 = vmax.f32 %v4397, 0.0
      %v4406 = vmax.f32 %v4398, 0.0
      %vm4407 = vcmask 64512
      %4408 = vst.msk [vmem:[%s342] sm:$0xff] %vm4407, %v4399
      %4409 = vst.msk [vmem:[%s342 + $0x8] sm:$0xff] %vm4407, %v4400
      %4410 = vst.msk [vmem:[%s342 + $0x10] sm:$0xff] %vm4407, %v4401
      %4411 = vst.msk [vmem:[%s342 + $0x18] sm:$0xff] %vm4407, %v4402
      %4412 = vst.msk [vmem:[%s342 + $0x20] sm:$0xff] %vm4407, %v4403
      %4413 = vst.msk [vmem:[%s342 + $0x28] sm:$0xff] %vm4407, %v4404
      %4414 = vst.msk [vmem:[%s342 + $0x30] sm:$0xff] %vm4407, %v4405
      %4415 = vst.msk [vmem:[%s342 + $0x38] sm:$0xff] %vm4407, %v4406
      %p4416 = scmp.lt.s32.totalorder %s20, 1
      %s4417 = scalar_select %p4416, %s20, 1
      %p4418 = scmp.lt.s32.totalorder %s21, 3
      %s4419 = scalar_select %p4418, %s21, 3
      %s4420 = smul.addr %s4419, 8
      %s4421 = smul.addr %s4417, 32
      %s4422 = sadd.s32 %s4420, %s4421
      %s4423 = smul.addr %s4422, 8
      %s4424 = scalar_lea.vmem %s5, %s4423
      // Predicated region
      $region41: #{inception_module.5} parent=39 // pred_check
        %p4425 = pneg %p178
      $region42: #{inception_module.5} parent=39 // pred_check_branch
        %4427 = sbr.rel (%p4425) target = $region44
      $region43: #{inception_module.5} parent=39 // pred_region
        _
      $region44: #{inception_module.5} parent=39 // pred_fallthru
        _
    $region40: #{inception_module.5} parent=5 // pred_fallthru
      _
    %p4428 = scmp.le.s32.totalorder 2, %s11
    // Predicated region
    $region45: #{inception_module.5} parent=5 // pred_check
      %p4429 = pneg %p4428
    $region46: #{inception_module.5} parent=5 // pred_check_branch
      %4431 = sbr.rel (%p4429) target = $region48
    $region47: #{inception_module.5} parent=5 // pred_region
      %s4432 = ssub.s32 %s11, 2
      // Predicated region
      $region49: #{inception_module.5} parent=47 // pred_check
        %p4433 = pneg %p184
      $region50: #{inception_module.5} parent=47 // pred_check_branch
        %4435 = sbr.rel (%p4433) target = $region52
      $region51: #{inception_module.5} parent=47 // pred_region
        %p4436 = scmp.lt.s32.totalorder %s22, 1
        %s4437 = scalar_select %p4436, %s22, 1
        %p4438 = scmp.lt.s32.totalorder %s23, 3
        %s4439 = scalar_select %p4438, %s23, 3
        %s4440 = smul.addr %s4439, 8
        %s4441 = smul.addr %s4437, 32
        %s4442 = sadd.s32 %s4440, %s4441
        %s4443 = smul.addr %s4442, 8
        %s4444 = scalar_lea.vmem %s5, %s4443
      $region52: #{inception_module.5} parent=47 // pred_fallthru
        _
    $region48: #{inception_module.5} parent=5 // pred_fallthru
      _
  $region6: #{inception_module.5} parent=0 // loop_footer
    %s15 = sadd.s32 1, %s11
  $region7: #{inception_module.5} parent=0 // loop_footer_branch
    %10 = sbr.rel target = $region3
  $region8: #{inception_module.5} parent=0 // loop_exit
    _

</llo_original>
